<compile_context>
chip_gen: v5e
topology: v5e:2x2
jax: 0.10.0
libtpu: 0.0.40
codegen_flags: <defaults>
</compile_context>

<pallas_src>
import functools

import jax
import jax.numpy as jnp
from jax.experimental import pallas as pl
from jax.experimental.pallas import tpu as pltpu


def _round_up(x, m):
    return ((x + m - 1) // m) * m


# ------------------------------ kernel bodies ------------------------------ #

def _tp_combine(y, a, b, *, f2, h):
    """Reduce the fused TP matmul output over the attr channels.

    y: (T, f2*h) f32 -- output of ONE MXU matmul against W_r = (F1, f2*h)
    a: (T, f2)   f32 -- steering attributes
    b: (1, h)        -- bias
    out[n, c] = b[c] + sum_j a[n, j] * y[n, j*h + c]
    The f2-loop is a pure-VPU combine pass after the single matmul (f2 ~ 8).
    """
    out = jnp.broadcast_to(b.astype(jnp.float32), (y.shape[0], h))
    for j in range(f2):
        out = out + a[:, j:j + 1] * y[:, j * h:(j + 1) * h]
    return out


def _embed_kernel(x_ref, a_ref, w_ref, b_ref, o_ref, *, f2, h):
    """Embedding O3TensorProduct (no gate) over one node tile."""
    y = jnp.dot(x_ref[...], w_ref[...], preferred_element_type=jnp.float32)
    a = a_ref[...].astype(jnp.float32)
    o_ref[...] = _tp_combine(y, a, b_ref[...], f2=f2, h=h).astype(o_ref.dtype)


def _message_kernel(xi_ref, xj_ref, amf_ref, ea_ref,
                    w1i_ref, w1j_ref, w1a_ref, b1_ref, w2_ref, b2_ref,
                    m_ref, *, f2, h):
    """Fused message_layer_1 + message_layer_2 over one edge tile."""
    a = ea_ref[...].astype(jnp.float32)
    # TP(cat(x_i, x_j, msg_feat), edge_attr): concat fused as 3 partial matmuls.
    y = jnp.dot(xi_ref[...], w1i_ref[...], preferred_element_type=jnp.float32)
    y = y + jnp.dot(xj_ref[...], w1j_ref[...], preferred_element_type=jnp.float32)
    y = y + jnp.dot(amf_ref[...], w1a_ref[...], preferred_element_type=jnp.float32)
    m1 = _tp_combine(y, a, b1_ref[...], f2=f2, h=h)
    m1 = m1 * jax.nn.sigmoid(m1)                      # Swish gate (kept in f32)
    # TP(m1, edge_attr): intermediate stays in VMEM/vregs (bf16 MXU operand).
    y2 = jnp.dot(m1.astype(jnp.bfloat16), w2_ref[...],
                 preferred_element_type=jnp.float32)
    m2 = _tp_combine(y2, a, b2_ref[...], f2=f2, h=h)
    m2 = m2 * jax.nn.sigmoid(m2)
    m_ref[...] = m2.astype(m_ref.dtype)


def _update_kernel(x_ref, agg_ref, na_ref,
                   w1x_ref, w1g_ref, b1_ref, w2_ref, b2_ref,
                   o_ref, *, f2, h):
    """Fused update_layer_1 + update_layer_2 + residual over one node tile."""
    a = na_ref[...].astype(jnp.float32)
    y = jnp.dot(x_ref[...], w1x_ref[...], preferred_element_type=jnp.float32)
    y = y + jnp.dot(agg_ref[...], w1g_ref[...], preferred_element_type=jnp.float32)
    u = _tp_combine(y, a, b1_ref[...], f2=f2, h=h)
    u = u * jax.nn.sigmoid(u)                         # Swish gate
    y2 = jnp.dot(u.astype(jnp.bfloat16), w2_ref[...],
                 preferred_element_type=jnp.float32)
    u2 = _tp_combine(y2, a, b2_ref[...], f2=f2, h=h)  # no gate on update_layer_2
    o_ref[...] = (x_ref[...].astype(jnp.float32) + u2).astype(o_ref.dtype)


def _scatter_kernel(dst_ref, m_ref, o_ref, acc_ref, *, tn):
    """scatter_add(m, dst) as per-tile one-hot matmuls with f32 accumulation."""
    i = pl.program_id(0)          # node tile (parallel)
    k = pl.program_id(1)          # edge tile (reduction axis)

    @pl.when(k == 0)
    def _():
        acc_ref[...] = jnp.zeros_like(acc_ref)

    te = m_ref.shape[0]
    rows = jax.lax.broadcasted_iota(jnp.int32, (tn, te), 0) + i * tn
    onehot = jnp.broadcast_to(dst_ref[...], (tn, te)) == rows
    acc_ref[...] += jnp.dot(onehot.astype(m_ref.dtype), m_ref[...],
                            preferred_element_type=jnp.float32)

    @pl.when(k == pl.num_programs(1) - 1)
    def _():
        o_ref[...] = acc_ref[...].astype(o_ref.dtype)


# ------------------------------ pallas wrappers ----------------------------- #

def _row_spec(tile, d):
    return pl.BlockSpec((tile, d), lambda i: (i, 0))


def _resident_spec(arr):
    nd = arr.ndim                                  # constant index map -> resident
    return pl.BlockSpec(arr.shape, lambda *_: (0,) * nd)


def _o3_embed(x, attr, w, b, *, tile):
    m, f_in = x.shape
    f2 = attr.shape[1]
    h = b.shape[1]
    cost = pl.CostEstimate(
        flops=2 * m * f2 * h * (f_in + 1), transcendentals=0,
        bytes_accessed=2 * (x.size + attr.size + w.size + b.size + m * h))
    return pl.pallas_call(
        functools.partial(_embed_kernel, f2=f2, h=h),
        out_shape=jax.ShapeDtypeStruct((m, h), jnp.bfloat16),
        grid=(m // tile,),
        in_specs=[_row_spec(tile, f_in), _row_spec(tile, f2),
                  _resident_spec(w), _resident_spec(b)],
        out_specs=_row_spec(tile, h),
        compiler_params=pltpu.CompilerParams(dimension_semantics=("parallel",)),
        cost_estimate=cost,
    )(x, attr, w, b)


def _message(x_i, x_j, amf, edge_attr, lp, *, tile):
    e, h = x_i.shape
    fm = amf.shape[1]
    f2 = edge_attr.shape[1]
    w_bytes = 2 * sum(lp[k].size for k in ("msg1_w_xi", "msg1_w_xj", "msg1_w_amf",
                                           "msg1_b", "msg2_w", "msg2_b"))
    cost = pl.CostEstimate(
        flops=2 * e * f2 * h * (3 * h + fm + 2),
        transcendentals=2 * e * h,
        bytes_accessed=2 * (x_i.size + x_j.size + amf.size + edge_attr.size
                            + e * h) + w_bytes)
    return pl.pallas_call(
        functools.partial(_message_kernel, f2=f2, h=h),
        out_shape=jax.ShapeDtypeStruct((e, h), jnp.bfloat16),
        grid=(e // tile,),
        in_specs=[_row_spec(tile, h), _row_spec(tile, h), _row_spec(tile, fm),
                  _row_spec(tile, f2),
                  _resident_spec(lp["msg1_w_xi"]), _resident_spec(lp["msg1_w_xj"]),
                  _resident_spec(lp["msg1_w_amf"]), _resident_spec(lp["msg1_b"]),
                  _resident_spec(lp["msg2_w"]), _resident_spec(lp["msg2_b"])],
        out_specs=_row_spec(tile, h),
        compiler_params=pltpu.CompilerParams(dimension_semantics=("parallel",)),
        cost_estimate=cost,
    )(x_i, x_j, amf, edge_attr,
      lp["msg1_w_xi"], lp["msg1_w_xj"], lp["msg1_w_amf"], lp["msg1_b"],
      lp["msg2_w"], lp["msg2_b"])


def _update(x, agg, node_attr, lp, *, tile):
    n, h = x.shape
    f2 = node_attr.shape[1]
    w_bytes = 2 * sum(lp[k].size for k in ("upd1_w_x", "upd1_w_agg", "upd1_b",
                                           "upd2_w", "upd2_b"))
    cost = pl.CostEstimate(
        flops=2 * n * f2 * h * (3 * h + 2),
        transcendentals=n * h,
        bytes_accessed=2 * (2 * x.size + agg.size + node_attr.size) + w_bytes)
    return pl.pallas_call(
        functools.partial(_update_kernel, f2=f2, h=h),
        out_shape=jax.ShapeDtypeStruct((n, h), jnp.bfloat16),
        grid=(n // tile,),
        in_specs=[_row_spec(tile, h), _row_spec(tile, h), _row_spec(tile, f2),
                  _resident_spec(lp["upd1_w_x"]), _resident_spec(lp["upd1_w_agg"]),
                  _resident_spec(lp["upd1_b"]),
                  _resident_spec(lp["upd2_w"]), _resident_spec(lp["upd2_b"])],
        out_specs=_row_spec(tile, h),
        compiler_params=pltpu.CompilerParams(dimension_semantics=("parallel",)),
        cost_estimate=cost,
    )(x, agg, node_attr,
      lp["upd1_w_x"], lp["upd1_w_agg"], lp["upd1_b"], lp["upd2_w"], lp["upd2_b"])


def _scatter_add(dst_row, m, num_rows, *, node_tile, edge_tile):
    e_pad, h = m.shape
    grid = (num_rows // node_tile, e_pad // edge_tile)
    cost = pl.CostEstimate(
        flops=2 * num_rows * e_pad * h, transcendentals=0,
        bytes_accessed=2 * (m.size + num_rows * h) + 4 * e_pad * grid[0])
    return pl.pallas_call(
        functools.partial(_scatter_kernel, tn=node_tile),
        out_shape=jax.ShapeDtypeStruct((num_rows, h), jnp.bfloat16),
        grid=grid,
        in_specs=[pl.BlockSpec((1, edge_tile), lambda i, k: (0, k)),
                  pl.BlockSpec((edge_tile, h), lambda i, k: (k, 0))],
        out_specs=pl.BlockSpec((node_tile, h), lambda i, k: (i, 0)),
        scratch_shapes=[pltpu.VMEM((node_tile, h), jnp.float32)],
        compiler_params=pltpu.CompilerParams(
            dimension_semantics=("parallel", "arbitrary")),
        cost_estimate=cost,
    )(dst_row, m)


# ------------------------------ parameter set-up ---------------------------- #

def _init_tp_params(key, f_in, f_attr, hidden):
    kw, kb = jax.random.split(key)
    # W[j, i, h]; 1/sqrt(F1*F2) mimics e3nn's tensor-product path normalization.
    w = jax.random.normal(kw, (f_attr, f_in, hidden), jnp.float32) / jnp.sqrt(
        float(f_in * f_attr))
    b = 0.01 * jax.random.normal(kb, (1, hidden), jnp.float32)
    # Offline re-layout for ONE fused MXU matmul: W_r[i, j*H + h] = W[j, i, h].
    w_r = jnp.transpose(w, (1, 0, 2)).reshape(f_in, f_attr * hidden)
    return w_r.astype(jnp.bfloat16), b.astype(jnp.bfloat16)


def init_segnn_params(key, f_in, node_attr_dim, edge_attr_dim, msg_feat_dim,
                      hidden, num_layers):
    keys = jax.random.split(key, 1 + 4 * num_layers)
    ew, eb = _init_tp_params(keys[0], f_in, node_attr_dim, hidden)
    params = {"embedding": {"w": ew, "b": eb}, "layers": []}
    kidx = 1
    for _ in range(num_layers):
        m1w, m1b = _init_tp_params(keys[kidx + 0], 2 * hidden + msg_feat_dim,
                                   edge_attr_dim, hidden)
        m2w, m2b = _init_tp_params(keys[kidx + 1], hidden, edge_attr_dim, hidden)
        u1w, u1b = _init_tp_params(keys[kidx + 2], 2 * hidden, node_attr_dim,
                                   hidden)
        u2w, u2b = _init_tp_params(keys[kidx + 3], hidden, node_attr_dim, hidden)
        params["layers"].append({
            # message_layer_1 weight split along F1 = cat(x_i, x_j, msg_feat)
            "msg1_w_xi": m1w[:hidden],
            "msg1_w_xj": m1w[hidden:2 * hidden],
            "msg1_w_amf": m1w[2 * hidden:],
            "msg1_b": m1b,
            "msg2_w": m2w, "msg2_b": m2b,
            # update_layer_1 weight split along F1 = cat(x, agg)
            "upd1_w_x": u1w[:hidden],
            "upd1_w_agg": u1w[hidden:],
            "upd1_b": u1b,
            "upd2_w": u2w, "upd2_b": u2b,
        })
        kidx += 4
    return params


# ------------------------------- forward pass ------------------------------- #

def segnn_graph_layers_forward(params, x, edge_index, edge_attr, node_attr,
                               batch, additional_message_features,
                               *, node_tile=256, edge_tile=512):
    # `batch` only feeds the (disabled, norm=None) normalization layers.
    del batch
    n = x.shape[0]
    e = edge_index.shape[1]

    src = edge_index[0].astype(jnp.int32)   # PyG: row 0 = source, row 1 = target
    dst = edge_index[1].astype(jnp.int32)

    # Row tiles: multiples of 8 sublanes; small graphs collapse to one block.
    # Defaults keep the double-buffered per-tile working set (~ a few MiB with
    # these feature widths) well inside v7x's 32 MiB scoped VMEM; halve them if
    # the hidden width grows.
    node_tile = _round_up(node_tile, 8)
    edge_tile = _round_up(edge_tile, 8)
    tn = min(node_tile, _round_up(n, 8))
    te = min(edge_tile, _round_up(e, 8))
    n_pad = _round_up(n, tn)
    e_pad = _round_up(e, te)
    pad_n = n_pad - n
    pad_e = e_pad - e

    # bf16 activation storage (all accumulation happens in f32 inside kernels).
    xb = jnp.pad(x.astype(jnp.bfloat16), ((0, pad_n), (0, 0)))
    nab = jnp.pad(node_attr.astype(jnp.bfloat16), ((0, pad_n), (0, 0)))
    eab = jnp.pad(edge_attr.astype(jnp.bfloat16), ((0, pad_e), (0, 0)))
    amf = jnp.pad(additional_message_features.astype(jnp.bfloat16),
                  ((0, pad_e), (0, 0)))

    src_g = jnp.pad(src, (0, pad_e))                       # gather indices (clip)
    dst_g = jnp.pad(dst, (0, pad_e))
    dst_s = jnp.pad(dst, (0, pad_e), constant_values=-1)   # pad -> matches no node
    dst_s = dst_s.reshape(1, e_pad)

    emb = params["embedding"]
    xh = _o3_embed(xb, nab, emb["w"], emb["b"], tile=tn)

    for lp in params["layers"]:
        # TODO(synk): the x_i / x_j row gathers stay in XLA glue; a Pallas
        # version needs a manual-DMA gather (data-dependent indexing).
        x_i = jnp.take(xh, dst_g, axis=0, mode="clip")     # target-node features
        x_j = jnp.take(xh, src_g, axis=0, mode="clip")     # source-node features
        m = _message(x_i, x_j, amf, eab, lp, tile=te)
        agg = _scatter_add(dst_s, m, n_pad, node_tile=tn, edge_tile=te)
        xh = _update(xh, agg, nab, lp, tile=tn)

    return xh[:n].astype(x.dtype)


# --------------------------- pure-JAX reference ----------------------------- #

def _reference_forward(params, x, edge_index, edge_attr, node_attr, amf):
    """f32 reference implementing the same math (for a loose sanity check)."""
    def tp(feat, attr, w, b):
        f2 = attr.shape[1]
        h = b.shape[1]
        y = (feat @ w.astype(jnp.float32)).reshape(feat.shape[0], f2, h)
        return jnp.einsum("nj,njh->nh", attr, y) + b.astype(jnp.float32)

    def silu(v):
        return v * jax.nn.sigmoid(v)

    xf = x.astype(jnp.bfloat16).astype(jnp.float32)
    na = node_attr.astype(jnp.bfloat16).astype(jnp.float32)
    ea = edge_attr.astype(jnp.bfloat16).astype(jnp.float32)
    mf = amf.astype(jnp.bfloat16).astype(jnp.float32)
    src, dst = edge_index[0], edge_index[1]
    n = x.shape[0]

    emb = params["embedding"]
    xh = tp(xf, na, emb["w"], emb["b"])
    for lp in params["layers"]:
        x_i, x_j = xh[dst], xh[src]
        w1 = jnp.concatenate(
            [lp["msg1_w_xi"], lp["msg1_w_xj"], lp["msg1_w_amf"]], axis=0)
        m = silu(tp(jnp.concatenate([x_i, x_j, mf], axis=1), ea, w1, lp["msg1_b"]))
        m = silu(tp(m, ea, lp["msg2_w"], lp["msg2_b"]))
        agg = jnp.zeros((n, m.shape[1]), jnp.float32).at[dst].add(m)
        wu1 = jnp.concatenate([lp["upd1_w_x"], lp["upd1_w_agg"]], axis=0)
        u = silu(tp(jnp.concatenate([xh, agg], axis=1), na, wu1, lp["upd1_b"]))
        u = tp(u, na, lp["upd2_w"], lp["upd2_b"])
        xh = xh + u
    return xh


# ------------------------------------ main ----------------------------------- #

if __name__ == "__main__":
    key = jax.random.PRNGKey(0)
    k_p, k_x, k_na, k_ea, k_amf, k_ei = jax.random.split(key, 6)

    N, E = 64, 256            # nodes, edges
    F_IN = 8                  # raw node (atom) features
    NODE_ATTR = 8             # node steering attributes (l=0 channels)
    EDGE_ATTR = 8             # edge steering attributes (l=0 channels)
    MSG_FEAT = 2              # additional message features (e.g. distances)
    HIDDEN = 128              # hidden scalar-irreps width (lane-dense)
    NUM_LAYERS = 2

    params = init_segnn_params(k_p, F_IN, NODE_ATTR, EDGE_ATTR, MSG_FEAT,
                               HIDDEN, NUM_LAYERS)

    x = jax.random.normal(k_x, (N, F_IN), jnp.float32)
    node_attr = jax.random.normal(k_na, (N, NODE_ATTR), jnp.float32)
    edge_attr = jax.random.normal(k_ea, (E, EDGE_ATTR), jnp.float32)
    amf = jax.random.normal(k_amf, (E, MSG_FEAT), jnp.float32)
    edge_index = jax.random.randint(k_ei, (2, E), 0, N, jnp.int32)
    batch = jnp.zeros((N,), jnp.int32)

    fwd = jax.jit(segnn_graph_layers_forward,
                  static_argnames=("node_tile", "edge_tile"))
    out = fwd(params, x, edge_index, edge_attr, node_attr, batch, amf,
              node_tile=32, edge_tile=128)   # small tiles -> exercise the grids
    jax.block_until_ready(out)
    assert out.shape == (N, HIDDEN)

    # Loose sanity check vs the f32 reference (kernels store bf16 activations).
    ref = _reference_forward(params, x, edge_index, edge_attr, node_attr, amf)
    rel_rms = float(jnp.sqrt(jnp.mean((out - ref) ** 2) / jnp.mean(ref ** 2)))
    assert rel_rms < 5e-2, f"relative RMS error too large: {rel_rms}"
    print("KERNEL_OK")
</pallas_src>

<mosaic_0001>
module attributes {stable_mosaic.version = 11 : i64} {
  func.func @_embed_kernel(%arg0: i32, %arg1: memref<32x8xbf16, #tpu.memory_space<vmem>>, %arg2: memref<32x8xbf16, #tpu.memory_space<vmem>>, %arg3: memref<8x1024xbf16, #tpu.memory_space<vmem>>, %arg4: memref<1x128xbf16, #tpu.memory_space<vmem>>, %arg5: memref<32x128xbf16, #tpu.memory_space<vmem>>) attributes {dimension_semantics = [#tpu.dimension_semantics<parallel>], iteration_bounds = array<i64: 2>, scalar_prefetch = 0 : i64, scratch_operands = 0 : i64, tpu.core_type = #tpu.core_type<tc>, window_params = [{transform_indices = @transform_0, window_bounds = array<i64: 32, 8>}, {transform_indices = @transform_1, window_bounds = array<i64: 32, 8>}, {pipeline_mode = #tpu.pipeline_mode<synchronous>, transform_indices = @transform_2, window_bounds = array<i64: 8, 1024>}, {pipeline_mode = #tpu.pipeline_mode<synchronous>, transform_indices = @transform_3, window_bounds = array<i64: 1, 128>}, {transform_indices = @transform_4, window_bounds = array<i64: 32, 128>}]} {
    %c0 = arith.constant 0 : index
    %c0_0 = arith.constant 0 : index
    %0 = vector.load %arg1[%c0, %c0_0] : memref<32x8xbf16, #tpu.memory_space<vmem>>, vector<32x8xbf16>
    %c0_1 = arith.constant 0 : index
    %c0_2 = arith.constant 0 : index
    %1 = vector.load %arg3[%c0_1, %c0_2] : memref<8x1024xbf16, #tpu.memory_space<vmem>>, vector<8x1024xbf16>
    %cst = arith.constant dense<0.000000e+00> : vector<32x1024xf32>
    %2 = tpu.matmul %0, %1, %cst {dimension_numbers = #tpu.dot_dimension_numbers<[1], [0], [0], [1], [0, 0, 1, 1], [], []>} : vector<32x8xbf16>, vector<8x1024xbf16>, vector<32x1024xf32> -> vector<32x1024xf32>
    %c0_3 = arith.constant 0 : index
    %c0_4 = arith.constant 0 : index
    %3 = vector.load %arg2[%c0_3, %c0_4] : memref<32x8xbf16, #tpu.memory_space<vmem>>, vector<32x8xbf16>
    %4 = arith.extf %3 : vector<32x8xbf16> to vector<32x8xf32>
    %c0_5 = arith.constant 0 : index
    %c0_6 = arith.constant 0 : index
    %5 = vector.load %arg4[%c0_5, %c0_6] : memref<1x128xbf16, #tpu.memory_space<vmem>>, vector<1x128xbf16>
    %6 = arith.extf %5 : vector<1x128xbf16> to vector<1x128xf32>
    %7 = vector.shape_cast %6 : vector<1x128xf32> to vector<1x128xf32>
    %8 = vector.broadcast %7 : vector<1x128xf32> to vector<32x128xf32>
    %9 = vector.extract_strided_slice %4 {offsets = [0, 0], sizes = [32, 1], strides = [1, 1]} : vector<32x8xf32> to vector<32x1xf32>
    %10 = vector.extract_strided_slice %2 {offsets = [0, 0], sizes = [32, 128], strides = [1, 1]} : vector<32x1024xf32> to vector<32x128xf32>
    %11 = vector.broadcast %9 : vector<32x1xf32> to vector<32x128xf32>
    %12 = arith.mulf %11, %10 : vector<32x128xf32>
    %13 = arith.addf %8, %12 : vector<32x128xf32>
    %14 = vector.extract_strided_slice %4 {offsets = [0, 1], sizes = [32, 1], strides = [1, 1]} : vector<32x8xf32> to vector<32x1xf32>
    %15 = vector.extract_strided_slice %2 {offsets = [0, 128], sizes = [32, 128], strides = [1, 1]} : vector<32x1024xf32> to vector<32x128xf32>
    %16 = vector.broadcast %14 : vector<32x1xf32> to vector<32x128xf32>
    %17 = arith.mulf %16, %15 : vector<32x128xf32>
    %18 = arith.addf %13, %17 : vector<32x128xf32>
    %19 = vector.extract_strided_slice %4 {offsets = [0, 2], sizes = [32, 1], strides = [1, 1]} : vector<32x8xf32> to vector<32x1xf32>
    %20 = vector.extract_strided_slice %2 {offsets = [0, 256], sizes = [32, 128], strides = [1, 1]} : vector<32x1024xf32> to vector<32x128xf32>
    %21 = vector.broadcast %19 : vector<32x1xf32> to vector<32x128xf32>
    %22 = arith.mulf %21, %20 : vector<32x128xf32>
    %23 = arith.addf %18, %22 : vector<32x128xf32>
    %24 = vector.extract_strided_slice %4 {offsets = [0, 3], sizes = [32, 1], strides = [1, 1]} : vector<32x8xf32> to vector<32x1xf32>
    %25 = vector.extract_strided_slice %2 {offsets = [0, 384], sizes = [32, 128], strides = [1, 1]} : vector<32x1024xf32> to vector<32x128xf32>
    %26 = vector.broadcast %24 : vector<32x1xf32> to vector<32x128xf32>
    %27 = arith.mulf %26, %25 : vector<32x128xf32>
    %28 = arith.addf %23, %27 : vector<32x128xf32>
    %29 = vector.extract_strided_slice %4 {offsets = [0, 4], sizes = [32, 1], strides = [1, 1]} : vector<32x8xf32> to vector<32x1xf32>
    %30 = vector.extract_strided_slice %2 {offsets = [0, 512], sizes = [32, 128], strides = [1, 1]} : vector<32x1024xf32> to vector<32x128xf32>
    %31 = vector.broadcast %29 : vector<32x1xf32> to vector<32x128xf32>
    %32 = arith.mulf %31, %30 : vector<32x128xf32>
    %33 = arith.addf %28, %32 : vector<32x128xf32>
    %34 = vector.extract_strided_slice %4 {offsets = [0, 5], sizes = [32, 1], strides = [1, 1]} : vector<32x8xf32> to vector<32x1xf32>
    %35 = vector.extract_strided_slice %2 {offsets = [0, 640], sizes = [32, 128], strides = [1, 1]} : vector<32x1024xf32> to vector<32x128xf32>
    %36 = vector.broadcast %34 : vector<32x1xf32> to vector<32x128xf32>
    %37 = arith.mulf %36, %35 : vector<32x128xf32>
    %38 = arith.addf %33, %37 : vector<32x128xf32>
    %39 = vector.extract_strided_slice %4 {offsets = [0, 6], sizes = [32, 1], strides = [1, 1]} : vector<32x8xf32> to vector<32x1xf32>
    %40 = vector.extract_strided_slice %2 {offsets = [0, 768], sizes = [32, 128], strides = [1, 1]} : vector<32x1024xf32> to vector<32x128xf32>
    %41 = vector.broadcast %39 : vector<32x1xf32> to vector<32x128xf32>
    %42 = arith.mulf %41, %40 : vector<32x128xf32>
    %43 = arith.addf %38, %42 : vector<32x128xf32>
    %44 = vector.extract_strided_slice %4 {offsets = [0, 7], sizes = [32, 1], strides = [1, 1]} : vector<32x8xf32> to vector<32x1xf32>
    %45 = vector.extract_strided_slice %2 {offsets = [0, 896], sizes = [32, 128], strides = [1, 1]} : vector<32x1024xf32> to vector<32x128xf32>
    %46 = vector.broadcast %44 : vector<32x1xf32> to vector<32x128xf32>
    %47 = arith.mulf %46, %45 : vector<32x128xf32>
    %48 = arith.addf %43, %47 : vector<32x128xf32>
    %49 = arith.truncf %48 : vector<32x128xf32> to vector<32x128xbf16>
    %c0_7 = arith.constant 0 : index
    %c0_8 = arith.constant 0 : index
    %50 = vector.load %arg5[%c0_7, %c0_8] : memref<32x128xbf16, #tpu.memory_space<vmem>>, vector<32x128xbf16>
    tpu.vector_store %arg5[%c0_7, %c0_8], %49 {strides = array<i32>} : memref<32x128xbf16, #tpu.memory_space<vmem>>, vector<32x128xbf16>,
    return
  }
  func.func @transform_0(%arg0: i32) -> (i32, i32) {
    %c0_i32 = arith.constant 0 : i32
    %c0_i32_0 = arith.constant 0 : i32
    return %arg0, %c0_i32 : i32, i32
  }
  func.func @transform_1(%arg0: i32) -> (i32, i32) {
    %c0_i32 = arith.constant 0 : i32
    %c0_i32_0 = arith.constant 0 : i32
    return %arg0, %c0_i32 : i32, i32
  }
  func.func @transform_2(%arg0: i32) -> (i32, i32) {
    %c0_i32 = arith.constant 0 : i32
    %c0_i32_0 = arith.constant 0 : i32
    %c0_i32_1 = arith.constant 0 : i32
    return %c0_i32, %c0_i32_0 : i32, i32
  }
  func.func @transform_3(%arg0: i32) -> (i32, i32) {
    %c0_i32 = arith.constant 0 : i32
    %c0_i32_0 = arith.constant 0 : i32
    %c0_i32_1 = arith.constant 0 : i32
    return %c0_i32, %c0_i32_0 : i32, i32
  }
  func.func @transform_4(%arg0: i32) -> (i32, i32) {
    %c0_i32 = arith.constant 0 : i32
    %c0_i32_0 = arith.constant 0 : i32
    return %arg0, %c0_i32 : i32, i32
  }
}

module attributes {stable_mosaic.version = 11 : i64} {
  func.func @_scatter_kernel(%arg0: i32, %arg1: i32, %arg2: memref<1x128xi32, #tpu.memory_space<vmem>>, %arg3: memref<128x128xbf16, #tpu.memory_space<vmem>>, %arg4: memref<32x128xbf16, #tpu.memory_space<vmem>>, %arg5: memref<32x128xf32, #tpu.memory_space<vmem>>) attributes {dimension_semantics = [#tpu.dimension_semantics<parallel>, #tpu.dimension_semantics<arbitrary>], iteration_bounds = array<i64: 2, 2>, scalar_prefetch = 0 : i64, scratch_operands = 1 : i64, tpu.core_type = #tpu.core_type<tc>, window_params = [{transform_indices = @transform_0, window_bounds = array<i64: 1, 128>}, {transform_indices = @transform_1, window_bounds = array<i64: 128, 128>}, {transform_indices = @transform_2, window_bounds = array<i64: 32, 128>}]} {
    %c0_i32 = arith.constant 0 : i32
    %0 = arith.cmpi eq, %arg1, %c0_i32 : i32
    %1 = arith.extui %0 : i1 to i32
    %c0_i32_0 = arith.constant 0 : i32
    %2 = arith.cmpi ne, %1, %c0_i32_0 : i32
    scf.if %2 {
      %cst_9 = arith.constant 0.000000e+00 : f32
      %22 = vector.broadcast %cst_9 : f32 to vector<32x128xf32>
      %c0_10 = arith.constant 0 : index
      %c0_11 = arith.constant 0 : index
      %23 = vector.load %arg5[%c0_10, %c0_11] : memref<32x128xf32, #tpu.memory_space<vmem>>, vector<32x128xf32>
      tpu.vector_store %arg5[%c0_10, %c0_11], %22 {strides = array<i32>} : memref<32x128xf32, #tpu.memory_space<vmem>>, vector<32x128xf32>,
    } else {
    }
    %3 = tpu.iota {dimensions = array<i32: 0>} : vector<32x128xi32>
    %c32_i32 = arith.constant 32 : i32
    %4 = arith.muli %arg0, %c32_i32 : i32
    %5 = vector.broadcast %4 : i32 to vector<32x128xi32>
    %6 = arith.addi %3, %5 : vector<32x128xi32>
    %c0 = arith.constant 0 : index
    %c0_1 = arith.constant 0 : index
    %7 = vector.load %arg2[%c0, %c0_1] : memref<1x128xi32, #tpu.memory_space<vmem>>, vector<1x128xi32>
    %8 = vector.shape_cast %7 : vector<1x128xi32> to vector<1x128xi32>
    %9 = vector.broadcast %8 : vector<1x128xi32> to vector<32x128xi32>
    %10 = arith.cmpi eq, %9, %6 : vector<32x128xi32>
    %c0_2 = arith.constant 0 : index
    %c0_3 = arith.constant 0 : index
    %11 = vector.load %arg5[%c0_2, %c0_3] : memref<32x128xf32, #tpu.memory_space<vmem>>, vector<32x128xf32>
    %12 = arith.extui %10 : vector<32x128xi1> to vector<32x128xi32>
    %13 = arith.sitofp %12 : vector<32x128xi32> to vector<32x128xf32>
    %14 = arith.truncf %13 : vector<32x128xf32> to vector<32x128xbf16>
    %c0_4 = arith.constant 0 : index
    %c0_5 = arith.constant 0 : index
    %15 = vector.load %arg3[%c0_4, %c0_5] : memref<128x128xbf16, #tpu.memory_space<vmem>>, vector<128x128xbf16>
    %cst = arith.constant dense<0.000000e+00> : vector<32x128xf32>
    %16 = tpu.matmul %14, %15, %cst {dimension_numbers = #tpu.dot_dimension_numbers<[1], [0], [0], [1], [0, 0, 1, 1], [], []>} : vector<32x128xbf16>, vector<128x128xbf16>, vector<32x128xf32> -> vector<32x128xf32>
    %17 = arith.addf %11, %16 : vector<32x128xf32>
    %c0_6 = arith.constant 0 : index
    %c0_7 = arith.constant 0 : index
    %18 = vector.load %arg5[%c0_6, %c0_7] : memref<32x128xf32, #tpu.memory_space<vmem>>, vector<32x128xf32>
    tpu.vector_store %arg5[%c0_6, %c0_7], %17 {strides = array<i32>} : memref<32x128xf32, #tpu.memory_space<vmem>>, vector<32x128xf32>,
    %c1_i32 = arith.constant 1 : i32
    %19 = arith.cmpi eq, %arg1, %c1_i32 : i32
    %20 = arith.extui %19 : i1 to i32
    %c0_i32_8 = arith.constant 0 : i32
    %21 = arith.cmpi ne, %20, %c0_i32_8 : i32
    scf.if %21 {
      %c0_9 = arith.constant 0 : index
      %c0_10 = arith.constant 0 : index
      %22 = vector.load %arg5[%c0_9, %c0_10] : memref<32x128xf32, #tpu.memory_space<vmem>>, vector<32x128xf32>
      %23 = arith.truncf %22 : vector<32x128xf32> to vector<32x128xbf16>
      %c0_11 = arith.constant 0 : index
      %c0_12 = arith.constant 0 : index
      %24 = vector.load %arg4[%c0_11, %c0_12] : memref<32x128xbf16, #tpu.memory_space<vmem>>, vector<32x128xbf16>
      tpu.vector_store %arg4[%c0_11, %c0_12], %23 {strides = array<i32>} : memref<32x128xbf16, #tpu.memory_space<vmem>>, vector<32x128xbf16>,
    } else {
    }
    return
  }
  func.func @transform_0(%arg0: i32, %arg1: i32) -> (i32, i32) {
    %c0_i32 = arith.constant 0 : i32
    %c0_i32_0 = arith.constant 0 : i32
    return %c0_i32, %arg1 : i32, i32
  }
  func.func @transform_1(%arg0: i32, %arg1: i32) -> (i32, i32) {
    %c0_i32 = arith.constant 0 : i32
    %c0_i32_0 = arith.constant 0 : i32
    return %arg1, %c0_i32 : i32, i32
  }
  func.func @transform_2(%arg0: i32, %arg1: i32) -> (i32, i32) {
    %c0_i32 = arith.constant 0 : i32
    %c0_i32_0 = arith.constant 0 : i32
    return %arg0, %c0_i32 : i32, i32
  }
}

module attributes {stable_mosaic.version = 11 : i64} {
  func.func @_message_kernel(%arg0: i32, %arg1: memref<128x128xbf16, #tpu.memory_space<vmem>>, %arg2: memref<128x128xbf16, #tpu.memory_space<vmem>>, %arg3: memref<128x2xbf16, #tpu.memory_space<vmem>>, %arg4: memref<128x8xbf16, #tpu.memory_space<vmem>>, %arg5: memref<128x1024xbf16, #tpu.memory_space<vmem>>, %arg6: memref<128x1024xbf16, #tpu.memory_space<vmem>>, %arg7: memref<2x1024xbf16, #tpu.memory_space<vmem>>, %arg8: memref<1x128xbf16, #tpu.memory_space<vmem>>, %arg9: memref<128x1024xbf16, #tpu.memory_space<vmem>>, %arg10: memref<1x128xbf16, #tpu.memory_space<vmem>>, %arg11: memref<128x128xbf16, #tpu.memory_space<vmem>>) attributes {dimension_semantics = [#tpu.dimension_semantics<parallel>], iteration_bounds = array<i64: 2>, scalar_prefetch = 0 : i64, scratch_operands = 0 : i64, tpu.core_type = #tpu.core_type<tc>, window_params = [{transform_indices = @transform_0, window_bounds = array<i64: 128, 128>}, {transform_indices = @transform_1, window_bounds = array<i64: 128, 128>}, {transform_indices = @transform_2, window_bounds = array<i64: 128, 2>}, {transform_indices = @transform_3, window_bounds = array<i64: 128, 8>}, {pipeline_mode = #tpu.pipeline_mode<synchronous>, transform_indices = @transform_4, window_bounds = array<i64: 128, 1024>}, {pipeline_mode = #tpu.pipeline_mode<synchronous>, transform_indices = @transform_5, window_bounds = array<i64: 128, 1024>}, {pipeline_mode = #tpu.pipeline_mode<synchronous>, transform_indices = @transform_6, window_bounds = array<i64: 2, 1024>}, {pipeline_mode = #tpu.pipeline_mode<synchronous>, transform_indices = @transform_7, window_bounds = array<i64: 1, 128>}, {pipeline_mode = #tpu.pipeline_mode<synchronous>, transform_indices = @transform_8, window_bounds = array<i64: 128, 1024>}, {pipeline_mode = #tpu.pipeline_mode<synchronous>, transform_indices = @transform_9, window_bounds = array<i64: 1, 128>}, {transform_indices = @transform_10, window_bounds = array<i64: 128, 128>}]} {
    %c0 = arith.constant 0 : index
    %c0_0 = arith.constant 0 : index
    %0 = vector.load %arg4[%c0, %c0_0] : memref<128x8xbf16, #tpu.memory_space<vmem>>, vector<128x8xbf16>
    %1 = arith.extf %0 : vector<128x8xbf16> to vector<128x8xf32>
    %c0_1 = arith.constant 0 : index
    %c0_2 = arith.constant 0 : index
    %2 = vector.load %arg1[%c0_1, %c0_2] : memref<128x128xbf16, #tpu.memory_space<vmem>>, vector<128x128xbf16>
    %c0_3 = arith.constant 0 : index
    %c0_4 = arith.constant 0 : index
    %3 = vector.load %arg5[%c0_3, %c0_4] : memref<128x1024xbf16, #tpu.memory_space<vmem>>, vector<128x1024xbf16>
    %cst = arith.constant dense<0.000000e+00> : vector<128x1024xf32>
    %4 = tpu.matmul %2, %3, %cst {dimension_numbers = #tpu.dot_dimension_numbers<[1], [0], [0], [1], [0, 0, 1, 1], [], []>} : vector<128x128xbf16>, vector<128x1024xbf16>, vector<128x1024xf32> -> vector<128x1024xf32>
    %c0_5 = arith.constant 0 : index
    %c0_6 = arith.constant 0 : index
    %5 = vector.load %arg2[%c0_5, %c0_6] : memref<128x128xbf16, #tpu.memory_space<vmem>>, vector<128x128xbf16>
    %c0_7 = arith.constant 0 : index
    %c0_8 = arith.constant 0 : index
    %6 = vector.load %arg6[%c0_7, %c0_8] : memref<128x1024xbf16, #tpu.memory_space<vmem>>, vector<128x1024xbf16>
    %cst_9 = arith.constant dense<0.000000e+00> : vector<128x1024xf32>
    %7 = tpu.matmul %5, %6, %cst_9 {dimension_numbers = #tpu.dot_dimension_numbers<[1], [0], [0], [1], [0, 0, 1, 1], [], []>} : vector<128x128xbf16>, vector<128x1024xbf16>, vector<128x1024xf32> -> vector<128x1024xf32>
    %8 = arith.addf %4, %7 : vector<128x1024xf32>
    %c0_10 = arith.constant 0 : index
    %c0_11 = arith.constant 0 : index
    %9 = vector.load %arg3[%c0_10, %c0_11] : memref<128x2xbf16, #tpu.memory_space<vmem>>, vector<128x2xbf16>
    %c0_12 = arith.constant 0 : index
    %c0_13 = arith.constant 0 : index
    %10 = vector.load %arg7[%c0_12, %c0_13] : memref<2x1024xbf16, #tpu.memory_space<vmem>>, vector<2x1024xbf16>
    %cst_14 = arith.constant dense<0.000000e+00> : vector<128x1024xf32>
    %11 = tpu.matmul %9, %10, %cst_14 {dimension_numbers = #tpu.dot_dimension_numbers<[1], [0], [0], [1], [0, 0, 1, 1], [], []>} : vector<128x2xbf16>, vector<2x1024xbf16>, vector<128x1024xf32> -> vector<128x1024xf32>
    %12 = arith.addf %8, %11 : vector<128x1024xf32>
    %c0_15 = arith.constant 0 : index
    %c0_16 = arith.constant 0 : index
    %13 = vector.load %arg8[%c0_15, %c0_16] : memref<1x128xbf16, #tpu.memory_space<vmem>>, vector<1x128xbf16>
    %14 = arith.extf %13 : vector<1x128xbf16> to vector<1x128xf32>
    %15 = vector.shape_cast %14 : vector<1x128xf32> to vector<1x128xf32>
    %16 = vector.broadcast %15 : vector<1x128xf32> to vector<128x128xf32>
    %17 = vector.extract_strided_slice %1 {offsets = [0, 0], sizes = [128, 1], strides = [1, 1]} : vector<128x8xf32> to vector<128x1xf32>
    %18 = vector.extract_strided_slice %12 {offsets = [0, 0], sizes = [128, 128], strides = [1, 1]} : vector<128x1024xf32> to vector<128x128xf32>
    %19 = vector.broadcast %17 : vector<128x1xf32> to vector<128x128xf32>
    %20 = arith.mulf %19, %18 : vector<128x128xf32>
    %21 = arith.addf %16, %20 : vector<128x128xf32>
    %22 = vector.extract_strided_slice %1 {offsets = [0, 1], sizes = [128, 1], strides = [1, 1]} : vector<128x8xf32> to vector<128x1xf32>
    %23 = vector.extract_strided_slice %12 {offsets = [0, 128], sizes = [128, 128], strides = [1, 1]} : vector<128x1024xf32> to vector<128x128xf32>
    %24 = vector.broadcast %22 : vector<128x1xf32> to vector<128x128xf32>
    %25 = arith.mulf %24, %23 : vector<128x128xf32>
    %26 = arith.addf %21, %25 : vector<128x128xf32>
    %27 = vector.extract_strided_slice %1 {offsets = [0, 2], sizes = [128, 1], strides = [1, 1]} : vector<128x8xf32> to vector<128x1xf32>
    %28 = vector.extract_strided_slice %12 {offsets = [0, 256], sizes = [128, 128], strides = [1, 1]} : vector<128x1024xf32> to vector<128x128xf32>
    %29 = vector.broadcast %27 : vector<128x1xf32> to vector<128x128xf32>
    %30 = arith.mulf %29, %28 : vector<128x128xf32>
    %31 = arith.addf %26, %30 : vector<128x128xf32>
    %32 = vector.extract_strided_slice %1 {offsets = [0, 3], sizes = [128, 1], strides = [1, 1]} : vector<128x8xf32> to vector<128x1xf32>
    %33 = vector.extract_strided_slice %12 {offsets = [0, 384], sizes = [128, 128], strides = [1, 1]} : vector<128x1024xf32> to vector<128x128xf32>
    %34 = vector.broadcast %32 : vector<128x1xf32> to vector<128x128xf32>
    %35 = arith.mulf %34, %33 : vector<128x128xf32>
    %36 = arith.addf %31, %35 : vector<128x128xf32>
    %37 = vector.extract_strided_slice %1 {offsets = [0, 4], sizes = [128, 1], strides = [1, 1]} : vector<128x8xf32> to vector<128x1xf32>
    %38 = vector.extract_strided_slice %12 {offsets = [0, 512], sizes = [128, 128], strides = [1, 1]} : vector<128x1024xf32> to vector<128x128xf32>
    %39 = vector.broadcast %37 : vector<128x1xf32> to vector<128x128xf32>
    %40 = arith.mulf %39, %38 : vector<128x128xf32>
    %41 = arith.addf %36, %40 : vector<128x128xf32>
    %42 = vector.extract_strided_slice %1 {offsets = [0, 5], sizes = [128, 1], strides = [1, 1]} : vector<128x8xf32> to vector<128x1xf32>
    %43 = vector.extract_strided_slice %12 {offsets = [0, 640], sizes = [128, 128], strides = [1, 1]} : vector<128x1024xf32> to vector<128x128xf32>
    %44 = vector.broadcast %42 : vector<128x1xf32> to vector<128x128xf32>
    %45 = arith.mulf %44, %43 : vector<128x128xf32>
    %46 = arith.addf %41, %45 : vector<128x128xf32>
    %47 = vector.extract_strided_slice %1 {offsets = [0, 6], sizes = [128, 1], strides = [1, 1]} : vector<128x8xf32> to vector<128x1xf32>
    %48 = vector.extract_strided_slice %12 {offsets = [0, 768], sizes = [128, 128], strides = [1, 1]} : vector<128x1024xf32> to vector<128x128xf32>
    %49 = vector.broadcast %47 : vector<128x1xf32> to vector<128x128xf32>
    %50 = arith.mulf %49, %48 : vector<128x128xf32>
    %51 = arith.addf %46, %50 : vector<128x128xf32>
    %52 = vector.extract_strided_slice %1 {offsets = [0, 7], sizes = [128, 1], strides = [1, 1]} : vector<128x8xf32> to vector<128x1xf32>
    %53 = vector.extract_strided_slice %12 {offsets = [0, 896], sizes = [128, 128], strides = [1, 1]} : vector<128x1024xf32> to vector<128x128xf32>
    %54 = vector.broadcast %52 : vector<128x1xf32> to vector<128x128xf32>
    %55 = arith.mulf %54, %53 : vector<128x128xf32>
    %56 = arith.addf %51, %55 : vector<128x128xf32>
    %57 = arith.negf %56 : vector<128x128xf32>
    %58 = math.exp %57 : vector<128x128xf32>
    %cst_17 = arith.constant 1.000000e+00 : f32
    %59 = vector.broadcast %cst_17 : f32 to vector<128x128xf32>
    %60 = arith.addf %59, %58 : vector<128x128xf32>
    %61 = arith.divf %59, %60 : vector<128x128xf32>
    %62 = arith.mulf %56, %61 : vector<128x128xf32>
    %63 = arith.truncf %62 : vector<128x128xf32> to vector<128x128xbf16>
    %c0_18 = arith.constant 0 : index
    %c0_19 = arith.constant 0 : index
    %64 = vector.load %arg9[%c0_18, %c0_19] : memref<128x1024xbf16, #tpu.memory_space<vmem>>, vector<128x1024xbf16>
    %cst_20 = arith.constant dense<0.000000e+00> : vector<128x1024xf32>
    %65 = tpu.matmul %63, %64, %cst_20 {dimension_numbers = #tpu.dot_dimension_numbers<[1], [0], [0], [1], [0, 0, 1, 1], [], []>} : vector<128x128xbf16>, vector<128x1024xbf16>, vector<128x1024xf32> -> vector<128x1024xf32>
    %c0_21 = arith.constant 0 : index
    %c0_22 = arith.constant 0 : index
    %66 = vector.load %arg10[%c0_21, %c0_22] : memref<1x128xbf16, #tpu.memory_space<vmem>>, vector<1x128xbf16>
    %67 = arith.extf %66 : vector<1x128xbf16> to vector<1x128xf32>
    %68 = vector.shape_cast %67 : vector<1x128xf32> to vector<1x128xf32>
    %69 = vector.broadcast %68 : vector<1x128xf32> to vector<128x128xf32>
    %70 = vector.extract_strided_slice %1 {offsets = [0, 0], sizes = [128, 1], strides = [1, 1]} : vector<128x8xf32> to vector<128x1xf32>
    %71 = vector.extract_strided_slice %65 {offsets = [0, 0], sizes = [128, 128], strides = [1, 1]} : vector<128x1024xf32> to vector<128x128xf32>
    %72 = vector.broadcast %70 : vector<128x1xf32> to vector<128x128xf32>
    %73 = arith.mulf %72, %71 : vector<128x128xf32>
    %74 = arith.addf %69, %73 : vector<128x128xf32>
    %75 = vector.extract_strided_slice %1 {offsets = [0, 1], sizes = [128, 1], strides = [1, 1]} : vector<128x8xf32> to vector<128x1xf32>
    %76 = vector.extract_strided_slice %65 {offsets = [0, 128], sizes = [128, 128], strides = [1, 1]} : vector<128x1024xf32> to vector<128x128xf32>
    %77 = vector.broadcast %75 : vector<128x1xf32> to vector<128x128xf32>
    %78 = arith.mulf %77, %76 : vector<128x128xf32>
    %79 = arith.addf %74, %78 : vector<128x128xf32>
    %80 = vector.extract_strided_slice %1 {offsets = [0, 2], sizes = [128, 1], strides = [1, 1]} : vector<128x8xf32> to vector<128x1xf32>
    %81 = vector.extract_strided_slice %65 {offsets = [0, 256], sizes = [128, 128], strides = [1, 1]} : vector<128x1024xf32> to vector<128x128xf32>
    %82 = vector.broadcast %80 : vector<128x1xf32> to vector<128x128xf32>
    %83 = arith.mulf %82, %81 : vector<128x128xf32>
    %84 = arith.addf %79, %83 : vector<128x128xf32>
    %85 = vector.extract_strided_slice %1 {offsets = [0, 3], sizes = [128, 1], strides = [1, 1]} : vector<128x8xf32> to vector<128x1xf32>
    %86 = vector.extract_strided_slice %65 {offsets = [0, 384], sizes = [128, 128], strides = [1, 1]} : vector<128x1024xf32> to vector<128x128xf32>
    %87 = vector.broadcast %85 : vector<128x1xf32> to vector<128x128xf32>
    %88 = arith.mulf %87, %86 : vector<128x128xf32>
    %89 = arith.addf %84, %88 : vector<128x128xf32>
    %90 = vector.extract_strided_slice %1 {offsets = [0, 4], sizes = [128, 1], strides = [1, 1]} : vector<128x8xf32> to vector<128x1xf32>
    %91 = vector.extract_strided_slice %65 {offsets = [0, 512], sizes = [128, 128], strides = [1, 1]} : vector<128x1024xf32> to vector<128x128xf32>
    %92 = vector.broadcast %90 : vector<128x1xf32> to vector<128x128xf32>
    %93 = arith.mulf %92, %91 : vector<128x128xf32>
    %94 = arith.addf %89, %93 : vector<128x128xf32>
    %95 = vector.extract_strided_slice %1 {offsets = [0, 5], sizes = [128, 1], strides = [1, 1]} : vector<128x8xf32> to vector<128x1xf32>
    %96 = vector.extract_strided_slice %65 {offsets = [0, 640], sizes = [128, 128], strides = [1, 1]} : vector<128x1024xf32> to vector<128x128xf32>
    %97 = vector.broadcast %95 : vector<128x1xf32> to vector<128x128xf32>
    %98 = arith.mulf %97, %96 : vector<128x128xf32>
    %99 = arith.addf %94, %98 : vector<128x128xf32>
    %100 = vector.extract_strided_slice %1 {offsets = [0, 6], sizes = [128, 1], strides = [1, 1]} : vector<128x8xf32> to vector<128x1xf32>
    %101 = vector.extract_strided_slice %65 {offsets = [0, 768], sizes = [128, 128], strides = [1, 1]} : vector<128x1024xf32> to vector<128x128xf32>
    %102 = vector.broadcast %100 : vector<128x1xf32> to vector<128x128xf32>
    %103 = arith.mulf %102, %101 : vector<128x128xf32>
    %104 = arith.addf %99, %103 : vector<128x128xf32>
    %105 = vector.extract_strided_slice %1 {offsets = [0, 7], sizes = [128, 1], strides = [1, 1]} : vector<128x8xf32> to vector<128x1xf32>
    %106 = vector.extract_strided_slice %65 {offsets = [0, 896], sizes = [128, 128], strides = [1, 1]} : vector<128x1024xf32> to vector<128x128xf32>
    %107 = vector.broadcast %105 : vector<128x1xf32> to vector<128x128xf32>
    %108 = arith.mulf %107, %106 : vector<128x128xf32>
    %109 = arith.addf %104, %108 : vector<128x128xf32>
    %110 = arith.negf %109 : vector<128x128xf32>
    %111 = math.exp %110 : vector<128x128xf32>
    %cst_23 = arith.constant 1.000000e+00 : f32
    %112 = vector.broadcast %cst_23 : f32 to vector<128x128xf32>
    %113 = arith.addf %112, %111 : vector<128x128xf32>
    %114 = arith.divf %112, %113 : vector<128x128xf32>
    %115 = arith.mulf %109, %114 : vector<128x128xf32>
    %116 = arith.truncf %115 : vector<128x128xf32> to vector<128x128xbf16>
    %c0_24 = arith.constant 0 : index
    %c0_25 = arith.constant 0 : index
    %117 = vector.load %arg11[%c0_24, %c0_25] : memref<128x128xbf16, #tpu.memory_space<vmem>>, vector<128x128xbf16>
    tpu.vector_store %arg11[%c0_24, %c0_25], %116 {strides = array<i32>} : memref<128x128xbf16, #tpu.memory_space<vmem>>, vector<128x128xbf16>,
    return
  }
  func.func @transform_0(%arg0: i32) -> (i32, i32) {
    %c0_i32 = arith.constant 0 : i32
    %c0_i32_0 = arith.constant 0 : i32
    return %arg0, %c0_i32 : i32, i32
  }
  func.func @transform_1(%arg0: i32) -> (i32, i32) {
    %c0_i32 = arith.constant 0 : i32
    %c0_i32_0 = arith.constant 0 : i32
    return %arg0, %c0_i32 : i32, i32
  }
  func.func @transform_2(%arg0: i32) -> (i32, i32) {
    %c0_i32 = arith.constant 0 : i32
    %c0_i32_0 = arith.constant 0 : i32
    return %arg0, %c0_i32 : i32, i32
  }
  func.func @transform_3(%arg0: i32) -> (i32, i32) {
    %c0_i32 = arith.constant 0 : i32
    %c0_i32_0 = arith.constant 0 : i32
    return %arg0, %c0_i32 : i32, i32
  }
  func.func @transform_4(%arg0: i32) -> (i32, i32) {
    %c0_i32 = arith.constant 0 : i32
    %c0_i32_0 = arith.constant 0 : i32
    %c0_i32_1 = arith.constant 0 : i32
    return %c0_i32, %c0_i32_0 : i32, i32
  }
  func.func @transform_5(%arg0: i32) -> (i32, i32) {
    %c0_i32 = arith.constant 0 : i32
    %c0_i32_0 = arith.constant 0 : i32
    %c0_i32_1 = arith.constant 0 : i32
    return %c0_i32, %c0_i32_0 : i32, i32
  }
  func.func @transform_6(%arg0: i32) -> (i32, i32) {
    %c0_i32 = arith.constant 0 : i32
    %c0_i32_0 = arith.constant 0 : i32
    %c0_i32_1 = arith.constant 0 : i32
    return %c0_i32, %c0_i32_0 : i32, i32
  }
  func.func @transform_7(%arg0: i32) -> (i32, i32) {
    %c0_i32 = arith.constant 0 : i32
    %c0_i32_0 = arith.constant 0 : i32
    %c0_i32_1 = arith.constant 0 : i32
    return %c0_i32, %c0_i32_0 : i32, i32
  }
  func.func @transform_8(%arg0: i32) -> (i32, i32) {
    %c0_i32 = arith.constant 0 : i32
    %c0_i32_0 = arith.constant 0 : i32
    %c0_i32_1 = arith.constant 0 : i32
    return %c0_i32, %c0_i32_0 : i32, i32
  }
  func.func @transform_9(%arg0: i32) -> (i32, i32) {
    %c0_i32 = arith.constant 0 : i32
    %c0_i32_0 = arith.constant 0 : i32
    %c0_i32_1 = arith.constant 0 : i32
    return %c0_i32, %c0_i32_0 : i32, i32
  }
  func.func @transform_10(%arg0: i32) -> (i32, i32) {
    %c0_i32 = arith.constant 0 : i32
    %c0_i32_0 = arith.constant 0 : i32
    return %arg0, %c0_i32 : i32, i32
  }
}

module attributes {stable_mosaic.version = 11 : i64} {
  func.func @_update_kernel(%arg0: i32, %arg1: memref<32x128xbf16, #tpu.memory_space<vmem>>, %arg2: memref<32x128xbf16, #tpu.memory_space<vmem>>, %arg3: memref<32x8xbf16, #tpu.memory_space<vmem>>, %arg4: memref<128x1024xbf16, #tpu.memory_space<vmem>>, %arg5: memref<128x1024xbf16, #tpu.memory_space<vmem>>, %arg6: memref<1x128xbf16, #tpu.memory_space<vmem>>, %arg7: memref<128x1024xbf16, #tpu.memory_space<vmem>>, %arg8: memref<1x128xbf16, #tpu.memory_space<vmem>>, %arg9: memref<32x128xbf16, #tpu.memory_space<vmem>>) attributes {dimension_semantics = [#tpu.dimension_semantics<parallel>], iteration_bounds = array<i64: 2>, scalar_prefetch = 0 : i64, scratch_operands = 0 : i64, tpu.core_type = #tpu.core_type<tc>, window_params = [{transform_indices = @transform_0, window_bounds = array<i64: 32, 128>}, {transform_indices = @transform_1, window_bounds = array<i64: 32, 128>}, {transform_indices = @transform_2, window_bounds = array<i64: 32, 8>}, {pipeline_mode = #tpu.pipeline_mode<synchronous>, transform_indices = @transform_3, window_bounds = array<i64: 128, 1024>}, {pipeline_mode = #tpu.pipeline_mode<synchronous>, transform_indices = @transform_4, window_bounds = array<i64: 128, 1024>}, {pipeline_mode = #tpu.pipeline_mode<synchronous>, transform_indices = @transform_5, window_bounds = array<i64: 1, 128>}, {pipeline_mode = #tpu.pipeline_mode<synchronous>, transform_indices = @transform_6, window_bounds = array<i64: 128, 1024>}, {pipeline_mode = #tpu.pipeline_mode<synchronous>, transform_indices = @transform_7, window_bounds = array<i64: 1, 128>}, {transform_indices = @transform_8, window_bounds = array<i64: 32, 128>}]} {
    %c0 = arith.constant 0 : index
    %c0_0 = arith.constant 0 : index
    %0 = vector.load %arg3[%c0, %c0_0] : memref<32x8xbf16, #tpu.memory_space<vmem>>, vector<32x8xbf16>
    %1 = arith.extf %0 : vector<32x8xbf16> to vector<32x8xf32>
    %c0_1 = arith.constant 0 : index
    %c0_2 = arith.constant 0 : index
    %2 = vector.load %arg1[%c0_1, %c0_2] : memref<32x128xbf16, #tpu.memory_space<vmem>>, vector<32x128xbf16>
    %c0_3 = arith.constant 0 : index
    %c0_4 = arith.constant 0 : index
    %3 = vector.load %arg4[%c0_3, %c0_4] : memref<128x1024xbf16, #tpu.memory_space<vmem>>, vector<128x1024xbf16>
    %cst = arith.constant dense<0.000000e+00> : vector<32x1024xf32>
    %4 = tpu.matmul %2, %3, %cst {dimension_numbers = #tpu.dot_dimension_numbers<[1], [0], [0], [1], [0, 0, 1, 1], [], []>} : vector<32x128xbf16>, vector<128x1024xbf16>, vector<32x1024xf32> -> vector<32x1024xf32>
    %c0_5 = arith.constant 0 : index
    %c0_6 = arith.constant 0 : index
    %5 = vector.load %arg2[%c0_5, %c0_6] : memref<32x128xbf16, #tpu.memory_space<vmem>>, vector<32x128xbf16>
    %c0_7 = arith.constant 0 : index
    %c0_8 = arith.constant 0 : index
    %6 = vector.load %arg5[%c0_7, %c0_8] : memref<128x1024xbf16, #tpu.memory_space<vmem>>, vector<128x1024xbf16>
    %cst_9 = arith.constant dense<0.000000e+00> : vector<32x1024xf32>
    %7 = tpu.matmul %5, %6, %cst_9 {dimension_numbers = #tpu.dot_dimension_numbers<[1], [0], [0], [1], [0, 0, 1, 1], [], []>} : vector<32x128xbf16>, vector<128x1024xbf16>, vector<32x1024xf32> -> vector<32x1024xf32>
    %8 = arith.addf %4, %7 : vector<32x1024xf32>
    %c0_10 = arith.constant 0 : index
    %c0_11 = arith.constant 0 : index
    %9 = vector.load %arg6[%c0_10, %c0_11] : memref<1x128xbf16, #tpu.memory_space<vmem>>, vector<1x128xbf16>
    %10 = arith.extf %9 : vector<1x128xbf16> to vector<1x128xf32>
    %11 = vector.shape_cast %10 : vector<1x128xf32> to vector<1x128xf32>
    %12 = vector.broadcast %11 : vector<1x128xf32> to vector<32x128xf32>
    %13 = vector.extract_strided_slice %1 {offsets = [0, 0], sizes = [32, 1], strides = [1, 1]} : vector<32x8xf32> to vector<32x1xf32>
    %14 = vector.extract_strided_slice %8 {offsets = [0, 0], sizes = [32, 128], strides = [1, 1]} : vector<32x1024xf32> to vector<32x128xf32>
    %15 = vector.broadcast %13 : vector<32x1xf32> to vector<32x128xf32>
    %16 = arith.mulf %15, %14 : vector<32x128xf32>
    %17 = arith.addf %12, %16 : vector<32x128xf32>
    %18 = vector.extract_strided_slice %1 {offsets = [0, 1], sizes = [32, 1], strides = [1, 1]} : vector<32x8xf32> to vector<32x1xf32>
    %19 = vector.extract_strided_slice %8 {offsets = [0, 128], sizes = [32, 128], strides = [1, 1]} : vector<32x1024xf32> to vector<32x128xf32>
    %20 = vector.broadcast %18 : vector<32x1xf32> to vector<32x128xf32>
    %21 = arith.mulf %20, %19 : vector<32x128xf32>
    %22 = arith.addf %17, %21 : vector<32x128xf32>
    %23 = vector.extract_strided_slice %1 {offsets = [0, 2], sizes = [32, 1], strides = [1, 1]} : vector<32x8xf32> to vector<32x1xf32>
    %24 = vector.extract_strided_slice %8 {offsets = [0, 256], sizes = [32, 128], strides = [1, 1]} : vector<32x1024xf32> to vector<32x128xf32>
    %25 = vector.broadcast %23 : vector<32x1xf32> to vector<32x128xf32>
    %26 = arith.mulf %25, %24 : vector<32x128xf32>
    %27 = arith.addf %22, %26 : vector<32x128xf32>
    %28 = vector.extract_strided_slice %1 {offsets = [0, 3], sizes = [32, 1], strides = [1, 1]} : vector<32x8xf32> to vector<32x1xf32>
    %29 = vector.extract_strided_slice %8 {offsets = [0, 384], sizes = [32, 128], strides = [1, 1]} : vector<32x1024xf32> to vector<32x128xf32>
    %30 = vector.broadcast %28 : vector<32x1xf32> to vector<32x128xf32>
    %31 = arith.mulf %30, %29 : vector<32x128xf32>
    %32 = arith.addf %27, %31 : vector<32x128xf32>
    %33 = vector.extract_strided_slice %1 {offsets = [0, 4], sizes = [32, 1], strides = [1, 1]} : vector<32x8xf32> to vector<32x1xf32>
    %34 = vector.extract_strided_slice %8 {offsets = [0, 512], sizes = [32, 128], strides = [1, 1]} : vector<32x1024xf32> to vector<32x128xf32>
    %35 = vector.broadcast %33 : vector<32x1xf32> to vector<32x128xf32>
    %36 = arith.mulf %35, %34 : vector<32x128xf32>
    %37 = arith.addf %32, %36 : vector<32x128xf32>
    %38 = vector.extract_strided_slice %1 {offsets = [0, 5], sizes = [32, 1], strides = [1, 1]} : vector<32x8xf32> to vector<32x1xf32>
    %39 = vector.extract_strided_slice %8 {offsets = [0, 640], sizes = [32, 128], strides = [1, 1]} : vector<32x1024xf32> to vector<32x128xf32>
    %40 = vector.broadcast %38 : vector<32x1xf32> to vector<32x128xf32>
    %41 = arith.mulf %40, %39 : vector<32x128xf32>
    %42 = arith.addf %37, %41 : vector<32x128xf32>
    %43 = vector.extract_strided_slice %1 {offsets = [0, 6], sizes = [32, 1], strides = [1, 1]} : vector<32x8xf32> to vector<32x1xf32>
    %44 = vector.extract_strided_slice %8 {offsets = [0, 768], sizes = [32, 128], strides = [1, 1]} : vector<32x1024xf32> to vector<32x128xf32>
    %45 = vector.broadcast %43 : vector<32x1xf32> to vector<32x128xf32>
    %46 = arith.mulf %45, %44 : vector<32x128xf32>
    %47 = arith.addf %42, %46 : vector<32x128xf32>
    %48 = vector.extract_strided_slice %1 {offsets = [0, 7], sizes = [32, 1], strides = [1, 1]} : vector<32x8xf32> to vector<32x1xf32>
    %49 = vector.extract_strided_slice %8 {offsets = [0, 896], sizes = [32, 128], strides = [1, 1]} : vector<32x1024xf32> to vector<32x128xf32>
    %50 = vector.broadcast %48 : vector<32x1xf32> to vector<32x128xf32>
    %51 = arith.mulf %50, %49 : vector<32x128xf32>
    %52 = arith.addf %47, %51 : vector<32x128xf32>
    %53 = arith.negf %52 : vector<32x128xf32>
    %54 = math.exp %53 : vector<32x128xf32>
    %cst_12 = arith.constant 1.000000e+00 : f32
    %55 = vector.broadcast %cst_12 : f32 to vector<32x128xf32>
    %56 = arith.addf %55, %54 : vector<32x128xf32>
    %57 = arith.divf %55, %56 : vector<32x128xf32>
    %58 = arith.mulf %52, %57 : vector<32x128xf32>
    %59 = arith.truncf %58 : vector<32x128xf32> to vector<32x128xbf16>
    %c0_13 = arith.constant 0 : index
    %c0_14 = arith.constant 0 : index
    %60 = vector.load %arg7[%c0_13, %c0_14] : memref<128x1024xbf16, #tpu.memory_space<vmem>>, vector<128x1024xbf16>
    %cst_15 = arith.constant dense<0.000000e+00> : vector<32x1024xf32>
    %61 = tpu.matmul %59, %60, %cst_15 {dimension_numbers = #tpu.dot_dimension_numbers<[1], [0], [0], [1], [0, 0, 1, 1], [], []>} : vector<32x128xbf16>, vector<128x1024xbf16>, vector<32x1024xf32> -> vector<32x1024xf32>
    %c0_16 = arith.constant 0 : index
    %c0_17 = arith.constant 0 : index
    %62 = vector.load %arg8[%c0_16, %c0_17] : memref<1x128xbf16, #tpu.memory_space<vmem>>, vector<1x128xbf16>
    %63 = arith.extf %62 : vector<1x128xbf16> to vector<1x128xf32>
    %64 = vector.shape_cast %63 : vector<1x128xf32> to vector<1x128xf32>
    %65 = vector.broadcast %64 : vector<1x128xf32> to vector<32x128xf32>
    %66 = vector.extract_strided_slice %1 {offsets = [0, 0], sizes = [32, 1], strides = [1, 1]} : vector<32x8xf32> to vector<32x1xf32>
    %67 = vector.extract_strided_slice %61 {offsets = [0, 0], sizes = [32, 128], strides = [1, 1]} : vector<32x1024xf32> to vector<32x128xf32>
    %68 = vector.broadcast %66 : vector<32x1xf32> to vector<32x128xf32>
    %69 = arith.mulf %68, %67 : vector<32x128xf32>
    %70 = arith.addf %65, %69 : vector<32x128xf32>
    %71 = vector.extract_strided_slice %1 {offsets = [0, 1], sizes = [32, 1], strides = [1, 1]} : vector<32x8xf32> to vector<32x1xf32>
    %72 = vector.extract_strided_slice %61 {offsets = [0, 128], sizes = [32, 128], strides = [1, 1]} : vector<32x1024xf32> to vector<32x128xf32>
    %73 = vector.broadcast %71 : vector<32x1xf32> to vector<32x128xf32>
    %74 = arith.mulf %73, %72 : vector<32x128xf32>
    %75 = arith.addf %70, %74 : vector<32x128xf32>
    %76 = vector.extract_strided_slice %1 {offsets = [0, 2], sizes = [32, 1], strides = [1, 1]} : vector<32x8xf32> to vector<32x1xf32>
    %77 = vector.extract_strided_slice %61 {offsets = [0, 256], sizes = [32, 128], strides = [1, 1]} : vector<32x1024xf32> to vector<32x128xf32>
    %78 = vector.broadcast %76 : vector<32x1xf32> to vector<32x128xf32>
    %79 = arith.mulf %78, %77 : vector<32x128xf32>
    %80 = arith.addf %75, %79 : vector<32x128xf32>
    %81 = vector.extract_strided_slice %1 {offsets = [0, 3], sizes = [32, 1], strides = [1, 1]} : vector<32x8xf32> to vector<32x1xf32>
    %82 = vector.extract_strided_slice %61 {offsets = [0, 384], sizes = [32, 128], strides = [1, 1]} : vector<32x1024xf32> to vector<32x128xf32>
    %83 = vector.broadcast %81 : vector<32x1xf32> to vector<32x128xf32>
    %84 = arith.mulf %83, %82 : vector<32x128xf32>
    %85 = arith.addf %80, %84 : vector<32x128xf32>
    %86 = vector.extract_strided_slice %1 {offsets = [0, 4], sizes = [32, 1], strides = [1, 1]} : vector<32x8xf32> to vector<32x1xf32>
    %87 = vector.extract_strided_slice %61 {offsets = [0, 512], sizes = [32, 128], strides = [1, 1]} : vector<32x1024xf32> to vector<32x128xf32>
    %88 = vector.broadcast %86 : vector<32x1xf32> to vector<32x128xf32>
    %89 = arith.mulf %88, %87 : vector<32x128xf32>
    %90 = arith.addf %85, %89 : vector<32x128xf32>
    %91 = vector.extract_strided_slice %1 {offsets = [0, 5], sizes = [32, 1], strides = [1, 1]} : vector<32x8xf32> to vector<32x1xf32>
    %92 = vector.extract_strided_slice %61 {offsets = [0, 640], sizes = [32, 128], strides = [1, 1]} : vector<32x1024xf32> to vector<32x128xf32>
    %93 = vector.broadcast %91 : vector<32x1xf32> to vector<32x128xf32>
    %94 = arith.mulf %93, %92 : vector<32x128xf32>
    %95 = arith.addf %90, %94 : vector<32x128xf32>
    %96 = vector.extract_strided_slice %1 {offsets = [0, 6], sizes = [32, 1], strides = [1, 1]} : vector<32x8xf32> to vector<32x1xf32>
    %97 = vector.extract_strided_slice %61 {offsets = [0, 768], sizes = [32, 128], strides = [1, 1]} : vector<32x1024xf32> to vector<32x128xf32>
    %98 = vector.broadcast %96 : vector<32x1xf32> to vector<32x128xf32>
    %99 = arith.mulf %98, %97 : vector<32x128xf32>
    %100 = arith.addf %95, %99 : vector<32x128xf32>
    %101 = vector.extract_strided_slice %1 {offsets = [0, 7], sizes = [32, 1], strides = [1, 1]} : vector<32x8xf32> to vector<32x1xf32>
    %102 = vector.extract_strided_slice %61 {offsets = [0, 896], sizes = [32, 128], strides = [1, 1]} : vector<32x1024xf32> to vector<32x128xf32>
    %103 = vector.broadcast %101 : vector<32x1xf32> to vector<32x128xf32>
    %104 = arith.mulf %103, %102 : vector<32x128xf32>
    %105 = arith.addf %100, %104 : vector<32x128xf32>
    %c0_18 = arith.constant 0 : index
    %c0_19 = arith.constant 0 : index
    %106 = vector.load %arg1[%c0_18, %c0_19] : memref<32x128xbf16, #tpu.memory_space<vmem>>, vector<32x128xbf16>
    %107 = arith.extf %106 : vector<32x128xbf16> to vector<32x128xf32>
    %108 = arith.addf %107, %105 : vector<32x128xf32>
    %109 = arith.truncf %108 : vector<32x128xf32> to vector<32x128xbf16>
    %c0_20 = arith.constant 0 : index
    %c0_21 = arith.constant 0 : index
    %110 = vector.load %arg9[%c0_20, %c0_21] : memref<32x128xbf16, #tpu.memory_space<vmem>>, vector<32x128xbf16>
    tpu.vector_store %arg9[%c0_20, %c0_21], %109 {strides = array<i32>} : memref<32x128xbf16, #tpu.memory_space<vmem>>, vector<32x128xbf16>,
    return
  }
  func.func @transform_0(%arg0: i32) -> (i32, i32) {
    %c0_i32 = arith.constant 0 : i32
    %c0_i32_0 = arith.constant 0 : i32
    return %arg0, %c0_i32 : i32, i32
  }
  func.func @transform_1(%arg0: i32) -> (i32, i32) {
    %c0_i32 = arith.constant 0 : i32
    %c0_i32_0 = arith.constant 0 : i32
    return %arg0, %c0_i32 : i32, i32
  }
  func.func @transform_2(%arg0: i32) -> (i32, i32) {
    %c0_i32 = arith.constant 0 : i32
    %c0_i32_0 = arith.constant 0 : i32
    return %arg0, %c0_i32 : i32, i32
  }
  func.func @transform_3(%arg0: i32) -> (i32, i32) {
    %c0_i32 = arith.constant 0 : i32
    %c0_i32_0 = arith.constant 0 : i32
    %c0_i32_1 = arith.constant 0 : i32
    return %c0_i32, %c0_i32_0 : i32, i32
  }
  func.func @transform_4(%arg0: i32) -> (i32, i32) {
    %c0_i32 = arith.constant 0 : i32
    %c0_i32_0 = arith.constant 0 : i32
    %c0_i32_1 = arith.constant 0 : i32
    return %c0_i32, %c0_i32_0 : i32, i32
  }
  func.func @transform_5(%arg0: i32) -> (i32, i32) {
    %c0_i32 = arith.constant 0 : i32
    %c0_i32_0 = arith.constant 0 : i32
    %c0_i32_1 = arith.constant 0 : i32
    return %c0_i32, %c0_i32_0 : i32, i32
  }
  func.func @transform_6(%arg0: i32) -> (i32, i32) {
    %c0_i32 = arith.constant 0 : i32
    %c0_i32_0 = arith.constant 0 : i32
    %c0_i32_1 = arith.constant 0 : i32
    return %c0_i32, %c0_i32_0 : i32, i32
  }
  func.func @transform_7(%arg0: i32) -> (i32, i32) {
    %c0_i32 = arith.constant 0 : i32
    %c0_i32_0 = arith.constant 0 : i32
    %c0_i32_1 = arith.constant 0 : i32
    return %c0_i32, %c0_i32_0 : i32, i32
  }
  func.func @transform_8(%arg0: i32) -> (i32, i32) {
    %c0_i32 = arith.constant 0 : i32
    %c0_i32_0 = arith.constant 0 : i32
    return %arg0, %c0_i32 : i32, i32
  }
}

</mosaic_0001>

<llo_original>
// kernel: segnn_graph_layers_forward.7
$region0: #{segnn_graph_layers_forward.7}
  #allocation0 [shape = 'u32[]', space=smem, size = 0x4, offset = 0x4, fixed_abs, tag = 'smem constant byte address 0x4 - core index']
  #allocation1 [shape = 'u32[72,128]{1,0:T(1,128)}', space=vmem, size = 0x9000, scoped, tag = 'internal scratch']
  %s0 = inlined_call_operand.vmem [shape: bf16[64,8], index: 0, kind: input, shape index: {}]
  %s1 = inlined_call_operand.vmem [shape: bf16[64,8], index: 1, kind: input, shape index: {}]
  %s2 = inlined_call_operand.vmem [shape: bf16[8,1024], index: 2, kind: input, shape index: {}]
  %s3 = inlined_call_operand.vmem [shape: bf16[1,128], index: 3, kind: input, shape index: {}]
  %s4 = inlined_call_operand.vmem [shape: bf16[64,128], index: 4, kind: output, shape index: {}]
  %s5 = sld [smem:[#allocation0]]
  $region49: #{segnn_graph_layers_forward.7} parent=0
    _
  %s7 = ssub.s32 1, %s5
  %s8 = scalar_select 0, %s7, %s5
  loop: start=0, step=1, limit=4
  $region2: #{segnn_graph_layers_forward.7} parent=0 // loop_pre_header
    _
  $region3: #{segnn_graph_layers_forward.7} parent=0 // loop_header
    %s10 = sphi 0, %s14
    %p11 = scmp.ge.s32.totalorder %s10, 4
    %s20 = sphi 0, %s22
    %s23 = sphi 0, %s20
    %s24 = sphi 0, %s23
    %s40 = sphi 0, %s24
    %s46 = sphi 0, %s48
    %s49 = sphi 0, %s46
    %s50 = sphi 0, %s49
    %s66 = sphi 0, %s50
    %s70 = sphi 0, %s70
    %s72 = sphi 0, %s70
    %s73 = sphi 0, %s72
    %s87 = sphi 0, %s73
    %s91 = sphi 0, %s91
    %s93 = sphi 0, %s91
    %s94 = sphi 0, %s93
    %s108 = sphi 0, %s94
    %s114 = sphi 0, %s116
    %s117 = sphi 0, %s114
    %s118 = sphi 0, %s117
    %s134 = sphi 0, %s118
  $region4: #{segnn_graph_layers_forward.7} parent=0 // loop_header_branch
    %13 = sbr.rel (%p11) target = $region8
  $region5: #{segnn_graph_layers_forward.7} parent=0 // loop_body
    %s15 = ssub.s32 %s10, 1
    %s16 = ssub.s32 %s10, 2
    %s17 = sadd.s32 %s10, 1
    %s18 = ssub.s32 %s10, %s17
    %p19 = scmp.eq.s32.totalorder %s18, 0
    %s21 = sadd.s32 %s20, 1
    %s22 = scalar_select %p19, %s20, %s21
    %p25 = pneg %p19
    %p26 = scmp.eq.s32.totalorder %s10, 1
    %p27 = por %p25, %p26
    %p28 = scmp.ne.s32.totalorder %s20, %s23
    %p29 = scmp.eq.s32.totalorder %s10, 0
    %p30 = por %p28, %p29
    %p31 = scmp.ne.s32.totalorder %s20, %s23
    %p32 = scmp.eq.s32.totalorder %s15, 1
    %p33 = por %p31, %p32
    %p34 = scmp.ne.s32.totalorder %s23, %s24
    %p35 = scmp.eq.s32.totalorder %s15, 0
    %p36 = por %p34, %p35
    %p37 = scmp.ne.s32.totalorder %s23, %s24
    %p38 = scmp.eq.s32.totalorder %s16, 1
    %p39 = por %p37, %p38
    %p41 = scmp.ne.s32.totalorder %s24, %s40
    %p42 = scmp.eq.s32.totalorder %s16, 0
    %p43 = por %p41, %p42
    %s44 = ssub.s32 %s10, %s17
    %p45 = scmp.eq.s32.totalorder %s44, 0
    %s47 = sadd.s32 %s46, 1
    %s48 = scalar_select %p45, %s46, %s47
    %p51 = pneg %p45
    %p52 = scmp.eq.s32.totalorder %s10, 1
    %p53 = por %p51, %p52
    %p54 = scmp.ne.s32.totalorder %s46, %s49
    %p55 = scmp.eq.s32.totalorder %s10, 0
    %p56 = por %p54, %p55
    %p57 = scmp.ne.s32.totalorder %s46, %s49
    %p58 = scmp.eq.s32.totalorder %s15, 1
    %p59 = por %p57, %p58
    %p60 = scmp.ne.s32.totalorder %s49, %s50
    %p61 = scmp.eq.s32.totalorder %s15, 0
    %p62 = por %p60, %p61
    %p63 = scmp.ne.s32.totalorder %s49, %s50
    %p64 = scmp.eq.s32.totalorder %s16, 1
    %p65 = por %p63, %p64
    %p67 = scmp.ne.s32.totalorder %s50, %s66
    %p68 = scmp.eq.s32.totalorder %s16, 0
    %p69 = por %p67, %p68
    %s71 = sadd.s32 %s70, 1
    %p74 = scmp.eq.s32.totalorder %s10, 1
    %p75 = scmp.ne.s32.totalorder %s70, %s72
    %p76 = scmp.eq.s32.totalorder %s10, 0
    %p77 = por %p75, %p76
    %p78 = scmp.ne.s32.totalorder %s70, %s72
    %p79 = scmp.eq.s32.totalorder %s15, 1
    %p80 = por %p78, %p79
    %p81 = scmp.ne.s32.totalorder %s72, %s73
    %p82 = scmp.eq.s32.totalorder %s15, 0
    %p83 = por %p81, %p82
    %p84 = scmp.ne.s32.totalorder %s72, %s73
    %p85 = scmp.eq.s32.totalorder %s16, 1
    %p86 = por %p84, %p85
    %p88 = scmp.ne.s32.totalorder %s73, %s87
    %p89 = scmp.eq.s32.totalorder %s16, 0
    %p90 = por %p88, %p89
    %s92 = sadd.s32 %s91, 1
    %p95 = scmp.eq.s32.totalorder %s10, 1
    %p96 = scmp.ne.s32.totalorder %s91, %s93
    %p97 = scmp.eq.s32.totalorder %s10, 0
    %p98 = por %p96, %p97
    %p99 = scmp.ne.s32.totalorder %s91, %s93
    %p100 = scmp.eq.s32.totalorder %s15, 1
    %p101 = por %p99, %p100
    %p102 = scmp.ne.s32.totalorder %s93, %s94
    %p103 = scmp.eq.s32.totalorder %s15, 0
    %p104 = por %p102, %p103
    %p105 = scmp.ne.s32.totalorder %s93, %s94
    %p106 = scmp.eq.s32.totalorder %s16, 1
    %p107 = por %p105, %p106
    %p109 = scmp.ne.s32.totalorder %s94, %s108
    %p110 = scmp.eq.s32.totalorder %s16, 0
    %p111 = por %p109, %p110
    %s112 = ssub.s32 %s10, %s17
    %p113 = scmp.eq.s32.totalorder %s112, 0
    %s115 = sadd.s32 %s114, 1
    %s116 = scalar_select %p113, %s114, %s115
    %p119 = pneg %p113
    %p120 = scmp.eq.s32.totalorder %s10, 1
    %p121 = por %p119, %p120
    %p122 = scmp.ne.s32.totalorder %s114, %s117
    %p123 = scmp.eq.s32.totalorder %s10, 0
    %p124 = por %p122, %p123
    %p125 = scmp.ne.s32.totalorder %s114, %s117
    %p126 = scmp.eq.s32.totalorder %s15, 1
    %p127 = por %p125, %p126
    %p128 = scmp.ne.s32.totalorder %s117, %s118
    %p129 = scmp.eq.s32.totalorder %s15, 0
    %p130 = por %p128, %p129
    %p131 = scmp.ne.s32.totalorder %s117, %s118
    %p132 = scmp.eq.s32.totalorder %s16, 1
    %p133 = por %p131, %p132
    %p135 = scmp.ne.s32.totalorder %s118, %s134
    %p136 = scmp.eq.s32.totalorder %s16, 0
    %p137 = por %p135, %p136
    %p138 = scmp.le.s32.totalorder 1, %s10
    %p139 = scmp.lt.s32.totalorder %s10, 3
    %p140 = pnand %p138, %p139
    %p141 = pneg %p140
    // Predicated region
    $region9: #{segnn_graph_layers_forward.7} parent=5 // pred_check
      _
    $region10: #{segnn_graph_layers_forward.7} parent=5 // pred_check_branch
      %143 = sbr.rel (%p140) target = $region12
    $region11: #{segnn_graph_layers_forward.7} parent=5 // pred_region
      %s144 = ssub.s32 %s10, 1
      // Predicated region
      $region13: #{segnn_graph_layers_forward.7} parent=11 // pred_check
        %p145 = pneg %p83
      $region14: #{segnn_graph_layers_forward.7} parent=11 // pred_check_branch
        %147 = sbr.rel (%p145) target = $region16
      $region15: #{segnn_graph_layers_forward.7} parent=11 // pred_region
        _
      $region16: #{segnn_graph_layers_forward.7} parent=11 // pred_fallthru
        _
      // Predicated region
      $region17: #{segnn_graph_layers_forward.7} parent=11 // pred_check
        %p148 = pneg %p104
      $region18: #{segnn_graph_layers_forward.7} parent=11 // pred_check_branch
        %150 = sbr.rel (%p148) target = $region20
      $region19: #{segnn_graph_layers_forward.7} parent=11 // pred_region
        _
      $region20: #{segnn_graph_layers_forward.7} parent=11 // pred_fallthru
        _
    $region12: #{segnn_graph_layers_forward.7} parent=5 // pred_fallthru
      _
    %p151 = scmp.lt.s32.totalorder %s10, 2
    // Predicated region
    $region21: #{segnn_graph_layers_forward.7} parent=5 // pred_check
      %p152 = pneg %p151
    $region22: #{segnn_graph_layers_forward.7} parent=5 // pred_check_branch
      %154 = sbr.rel (%p152) target = $region24
    $region23: #{segnn_graph_layers_forward.7} parent=5 // pred_region
      // Predicated region
      $region25: #{segnn_graph_layers_forward.7} parent=23 // pred_check
        %p155 = pneg %p30
      $region26: #{segnn_graph_layers_forward.7} parent=23 // pred_check_branch
        %157 = sbr.rel (%p155) target = $region28
      $region27: #{segnn_graph_layers_forward.7} parent=23 // pred_region
        %s158 = smul.u32 4, %s10
        %p159 = scmp.lt.s32.totalorder %s158, 7
        %s160 = scalar_select %p159, %s158, 7
        %s161 = smul.addr %s160, 4
        %s162 = scalar_lea.vmem %s0, %s161
        %s163 = smul.u32 4, %s10
      $region28: #{segnn_graph_layers_forward.7} parent=23 // pred_fallthru
        _
      // Predicated region
      $region29: #{segnn_graph_layers_forward.7} parent=23 // pred_check
        %p164 = pneg %p56
      $region30: #{segnn_graph_layers_forward.7} parent=23 // pred_check_branch
        %166 = sbr.rel (%p164) target = $region32
      $region31: #{segnn_graph_layers_forward.7} parent=23 // pred_region
        %s167 = smul.u32 4, %s10
        %p168 = scmp.lt.s32.totalorder %s167, 7
        %s169 = scalar_select %p168, %s167, 7
        %s170 = smul.addr %s169, 4
        %s171 = scalar_lea.vmem %s1, %s170
        %s172 = smul.u32 4, %s10
      $region32: #{segnn_graph_layers_forward.7} parent=23 // pred_fallthru
        _
    $region24: #{segnn_graph_layers_forward.7} parent=5 // pred_fallthru
      _
    %p173 = scmp.le.s32.totalorder 1, %s10
    %p174 = scmp.lt.s32.totalorder %s10, 3
    %p175 = pnand %p173, %p174
    %p176 = pneg %p175
    // Predicated region
    $region33: #{segnn_graph_layers_forward.7} parent=5 // pred_check
      _
    $region34: #{segnn_graph_layers_forward.7} parent=5 // pred_check_branch
      %178 = sbr.rel (%p175) target = $region36
    $region35: #{segnn_graph_layers_forward.7} parent=5 // pred_region
      %s179 = ssub.s32 %s10, 1
      %s180 = smul.u32 4, %s15
      %p181 = scmp.lt.s32.totalorder %s180, 7
      %s182 = scalar_select %p181, %s180, 7
      %s183 = smul.addr %s182, 4
      %s184 = scalar_lea.vmem %s0, %s183
      %p185 = pneg %p36
      %p186 = pneg %p33
      %s187 = smul.u32 4, %s15
      %p188 = scmp.lt.s32.totalorder %s187, 7
      %s189 = scalar_select %p188, %s187, 7
      %s190 = smul.addr %s189, 4
      %s191 = scalar_lea.vmem %s1, %s190
      %p192 = pneg %p62
      %p193 = pneg %p59
      %p194 = pneg %p83
      %p195 = pneg %p80
      %p196 = pneg %p104
      %p197 = pneg %p101
      %p198 = pneg %p130
      %p199 = pneg %p127
      %s200 = smul.u32 4, %s15
      %p201 = scmp.lt.s32.totalorder %s200, 7
      %s202 = scalar_select %p201, %s200, 7
      %s203 = smul.addr %s202, 4
      %s204 = scalar_lea.vmem %s4, %s203
      %s205 = smul.u32 4, %s15
      %p206 = scmp.lt.s32.totalorder %s205, 7
      %s207 = scalar_select %p206, %s205, 7
      %s208 = smul.addr %s207, 4
      %s209 = scalar_lea.vmem %s0, %s208
      %s210 = smul.u32 4, %s15
      %s211 = smul.u32 4, %s15
      %p212 = scmp.lt.s32.totalorder %s211, 7
      %s213 = scalar_select %p212, %s211, 7
      %s214 = smul.addr %s213, 4
      %s215 = scalar_lea.vmem %s1, %s214
      %s216 = smul.u32 4, %s15
      %s217 = smul.u32 4, %s15
      %p218 = scmp.lt.s32.totalorder %s217, 7
      %s219 = scalar_select %p218, %s217, 7
      %s220 = smul.addr %s219, 4
      %s221 = scalar_lea.vmem %s4, %s220
      %s222 = smul.u32 4, %s15
      %v224 = vld [vmem:[%s209] sm:$0xf]
      %v225 = vld [vmem:[%s209 + $0x4] sm:$0xf]
      %v226 = vld [vmem:[%s209 + $0x8] sm:$0xf]
      %v227 = vld [vmem:[%s209 + $0xc] sm:$0xf]
      %v228 = vld [vmem:[%s2] sm:$0xff]
      %v229 = vld [vmem:[%s2 + $0x8] sm:$0xff]
      %v230 = vld [vmem:[%s2 + $0x10] sm:$0xff]
      %v231 = vld [vmem:[%s2 + $0x18] sm:$0xff]
      %v236 = vunpack.c.l.b16 %v224
      %v237 = vunpack.c.l.b16 %v225
      %v238 = vunpack.c.l.b16 %v226
      %v239 = vunpack.c.l.b16 %v227
      %v240 = vpack.c.b16 %v237, %v236
      %v241 = vpack.c.b16 %v239, %v238
      %v246 = vunpack.c.l.b16 %v228
      %v247 = vunpack.c.h.b16 %v228
      %v248 = vunpack.c.l.b16 %v229
      %v249 = vunpack.c.h.b16 %v229
      %v250 = vunpack.c.l.b16 %v230
      %v251 = vunpack.c.h.b16 %v230
      %v252 = vunpack.c.l.b16 %v231
      %v253 = vunpack.c.h.b16 %v231
      %v254 = vpack.c.b16 %v246, %v246
      %v255 = vpack.c.b16 %v247, %v247
      %v256 = vpack.c.b16 %v248, %v248
      %v257 = vpack.c.b16 %v249, %v249
      %v258 = vpack.c.b16 %v250, %v250
      %v259 = vpack.c.b16 %v251, %v251
      %v260 = vpack.c.b16 %v252, %v252
      %v261 = vpack.c.b16 %v253, %v253
      %vm262 = vcmask 64512
      %v264 = vsel %vm262, %v240, 0
      %v267 = vsel %vm262, %v241, 0
      %vm269 = vcmask 1043456
      %v271 = vsel %vm269, %v254, 0
      %v274 = vsel %vm269, %v255, 0
      %v277 = vsel %vm269, %v256, 0
      %v280 = vsel %vm269, %v257, 0
      %v283 = vsel %vm269, %v258, 0
      %v286 = vsel %vm269, %v259, 0
      %v289 = vsel %vm269, %v260, 0
      %v292 = vsel %vm269, %v261, 0
      %294 = vmatpush.bf16.msra.mxu0 0
      %295 = vmatpush.bf16.msra.mxu0 0
      %296 = vmatpush.bf16.msra.mxu0 0
      %297 = vmatpush.bf16.msra.mxu0 0
      %298 = vmatpush.bf16.msra.mxu0 0
      %299 = vmatpush.bf16.msra.mxu0 0
      %300 = vmatpush.bf16.msra.mxu0 0
      %301 = vmatpush.bf16.msra.mxu0 %v271
      %302 = vmatmul.bf16.gmra.mxu0 %v264
      %v303 = vpop.f32.mrf.mxu0
      %v304 = vadd.f32 0.0, %v303
      %v305 = vpop.f32.mrf.mxu0
      %v306 = vadd.f32 0.0, %v305
      %307 = vmatmul.bf16.gmra.mxu0 %v267
      %v308 = vpop.f32.mrf.mxu0
      %v309 = vadd.f32 0.0, %v308
      %v310 = vpop.f32.mrf.mxu0
      %v311 = vadd.f32 0.0, %v310
      %312 = vdwg.mxu0
      %313 = vmatpush.bf16.msra.mxu0 0
      %314 = vmatpush.bf16.msra.mxu0 0
      %315 = vmatpush.bf16.msra.mxu0 0
      %316 = vmatpush.bf16.msra.mxu0 0
      %317 = vmatpush.bf16.msra.mxu0 0
      %318 = vmatpush.bf16.msra.mxu0 0
      %319 = vmatpush.bf16.msra.mxu0 0
      %320 = vmatpush.bf16.msra.mxu0 %v274
      %321 = vmatmul.bf16.gmra.mxu0 %v264
      %v322 = vpop.f32.mrf.mxu0
      %v323 = vadd.f32 0.0, %v322
      %v324 = vpop.f32.mrf.mxu0
      %v325 = vadd.f32 0.0, %v324
      %326 = vmatmul.bf16.gmra.mxu0 %v267
      %v327 = vpop.f32.mrf.mxu0
      %v328 = vadd.f32 0.0, %v327
      %v329 = vpop.f32.mrf.mxu0
      %v330 = vadd.f32 0.0, %v329
      %331 = vdwg.mxu0
      %332 = vmatpush.bf16.msra.mxu0 0
      %333 = vmatpush.bf16.msra.mxu0 0
      %334 = vmatpush.bf16.msra.mxu0 0
      %335 = vmatpush.bf16.msra.mxu0 0
      %336 = vmatpush.bf16.msra.mxu0 0
      %337 = vmatpush.bf16.msra.mxu0 0
      %338 = vmatpush.bf16.msra.mxu0 0
      %339 = vmatpush.bf16.msra.mxu0 %v277
      %340 = vmatmul.bf16.gmra.mxu0 %v264
      %v341 = vpop.f32.mrf.mxu0
      %v342 = vadd.f32 0.0, %v341
      %v343 = vpop.f32.mrf.mxu0
      %v344 = vadd.f32 0.0, %v343
      %345 = vmatmul.bf16.gmra.mxu0 %v267
      %v346 = vpop.f32.mrf.mxu0
      %v347 = vadd.f32 0.0, %v346
      %v348 = vpop.f32.mrf.mxu0
      %v349 = vadd.f32 0.0, %v348
      %350 = vdwg.mxu0
      %351 = vmatpush.bf16.msra.mxu0 0
      %352 = vmatpush.bf16.msra.mxu0 0
      %353 = vmatpush.bf16.msra.mxu0 0
      %354 = vmatpush.bf16.msra.mxu0 0
      %355 = vmatpush.bf16.msra.mxu0 0
      %356 = vmatpush.bf16.msra.mxu0 0
      %357 = vmatpush.bf16.msra.mxu0 0
      %358 = vmatpush.bf16.msra.mxu0 %v280
      %359 = vmatmul.bf16.gmra.mxu0 %v264
      %v360 = vpop.f32.mrf.mxu0
      %v361 = vadd.f32 0.0, %v360
      %v362 = vpop.f32.mrf.mxu0
      %v363 = vadd.f32 0.0, %v362
      %364 = vmatmul.bf16.gmra.mxu0 %v267
      %v365 = vpop.f32.mrf.mxu0
      %v366 = vadd.f32 0.0, %v365
      %v367 = vpop.f32.mrf.mxu0
      %v368 = vadd.f32 0.0, %v367
      %369 = vdwg.mxu0
      %370 = vmatpush.bf16.msra.mxu0 0
      %371 = vmatpush.bf16.msra.mxu0 0
      %372 = vmatpush.bf16.msra.mxu0 0
      %373 = vmatpush.bf16.msra.mxu0 0
      %374 = vmatpush.bf16.msra.mxu0 0
      %375 = vmatpush.bf16.msra.mxu0 0
      %376 = vmatpush.bf16.msra.mxu0 0
      %377 = vmatpush.bf16.msra.mxu0 %v283
      %378 = vmatmul.bf16.gmra.mxu0 %v264
      %v379 = vpop.f32.mrf.mxu0
      %v380 = vadd.f32 0.0, %v379
      %v381 = vpop.f32.mrf.mxu0
      %v382 = vadd.f32 0.0, %v381
      %383 = vmatmul.bf16.gmra.mxu0 %v267
      %v384 = vpop.f32.mrf.mxu0
      %v385 = vadd.f32 0.0, %v384
      %v386 = vpop.f32.mrf.mxu0
      %v387 = vadd.f32 0.0, %v386
      %388 = vdwg.mxu0
      %389 = vmatpush.bf16.msra.mxu0 0
      %390 = vmatpush.bf16.msra.mxu0 0
      %391 = vmatpush.bf16.msra.mxu0 0
      %392 = vmatpush.bf16.msra.mxu0 0
      %393 = vmatpush.bf16.msra.mxu0 0
      %394 = vmatpush.bf16.msra.mxu0 0
      %395 = vmatpush.bf16.msra.mxu0 0
      %396 = vmatpush.bf16.msra.mxu0 %v286
      %397 = vmatmul.bf16.gmra.mxu0 %v264
      %v398 = vpop.f32.mrf.mxu0
      %v399 = vadd.f32 0.0, %v398
      %v400 = vpop.f32.mrf.mxu0
      %v401 = vadd.f32 0.0, %v400
      %402 = vmatmul.bf16.gmra.mxu0 %v267
      %v403 = vpop.f32.mrf.mxu0
      %v404 = vadd.f32 0.0, %v403
      %v405 = vpop.f32.mrf.mxu0
      %v406 = vadd.f32 0.0, %v405
      %407 = vdwg.mxu0
      %408 = vmatpush.bf16.msra.mxu0 0
      %409 = vmatpush.bf16.msra.mxu0 0
      %410 = vmatpush.bf16.msra.mxu0 0
      %411 = vmatpush.bf16.msra.mxu0 0
      %412 = vmatpush.bf16.msra.mxu0 0
      %413 = vmatpush.bf16.msra.mxu0 0
      %414 = vmatpush.bf16.msra.mxu0 0
      %415 = vmatpush.bf16.msra.mxu0 %v289
      %416 = vmatmul.bf16.gmra.mxu0 %v264
      %v417 = vpop.f32.mrf.mxu0
      %v418 = vadd.f32 0.0, %v417
      %v419 = vpop.f32.mrf.mxu0
      %v420 = vadd.f32 0.0, %v419
      %421 = vmatmul.bf16.gmra.mxu0 %v267
      %v422 = vpop.f32.mrf.mxu0
      %v423 = vadd.f32 0.0, %v422
      %v424 = vpop.f32.mrf.mxu0
      %v425 = vadd.f32 0.0, %v424
      %426 = vdwg.mxu0
      %427 = vmatpush.bf16.msra.mxu0 0
      %428 = vmatpush.bf16.msra.mxu0 0
      %429 = vmatpush.bf16.msra.mxu0 0
      %430 = vmatpush.bf16.msra.mxu0 0
      %431 = vmatpush.bf16.msra.mxu0 0
      %432 = vmatpush.bf16.msra.mxu0 0
      %433 = vmatpush.bf16.msra.mxu0 0
      %434 = vmatpush.bf16.msra.mxu0 %v292
      %435 = vmatmul.bf16.gmra.mxu0 %v264
      %v436 = vpop.f32.mrf.mxu0
      %v437 = vadd.f32 0.0, %v436
      %v438 = vpop.f32.mrf.mxu0
      %v439 = vadd.f32 0.0, %v438
      %440 = vmatmul.bf16.gmra.mxu0 %v267
      %v441 = vpop.f32.mrf.mxu0
      %v442 = vadd.f32 0.0, %v441
      %v443 = vpop.f32.mrf.mxu0
      %v444 = vadd.f32 0.0, %v443
      %445 = vdwg.mxu0
      %v446 = vld [vmem:[%s215] sm:$0xf]
      %v447 = vld [vmem:[%s215 + $0x4] sm:$0xf]
      %v448 = vld [vmem:[%s215 + $0x8] sm:$0xf]
      %v449 = vld [vmem:[%s215 + $0xc] sm:$0xf]
      %v450 = vunpack.c.l.bf16 %v446
      %v451 = vunpack.c.l.bf16 %v447
      %v452 = vunpack.c.l.bf16 %v448
      %v453 = vunpack.c.l.bf16 %v449
      %v454 = vld [vmem:[%s3] sm:$0x1]
      %v455 = vunpack.c.l.bf16 %v454
      %v456 = vperm.slane %v455, 0
      %458 = vset.pattern.permute.xlu0 0
      %459 = vperm.xlu0 %458, %v450
      %v460 = vpop.permute.xlu0 %459
      %463 = vset.pattern.permute.xlu0 0
      %464 = vperm.xlu0 %463, %v451
      %v465 = vpop.permute.xlu0 %464
      %468 = vset.pattern.permute.xlu0 0
      %469 = vperm.xlu0 %468, %v452
      %v470 = vpop.permute.xlu0 %469
      %473 = vset.pattern.permute.xlu0 0
      %474 = vperm.xlu0 %473, %v453
      %v475 = vpop.permute.xlu0 %474
      %v477 = vmul.f32 %v460, %v304
      %v478 = vmul.f32 %v465, %v306
      %v479 = vmul.f32 %v470, %v309
      %v480 = vmul.f32 %v475, %v311
      %v481 = vadd.f32 %v456, %v477
      %v482 = vadd.f32 %v456, %v478
      %v483 = vadd.f32 %v456, %v479
      %v484 = vadd.f32 %v456, %v480
      %485 = vset.pattern.permute.xlu0 1
      %486 = vperm.xlu0 %485, %v450
      %v487 = vpop.permute.xlu0 %486
      %489 = vset.pattern.permute.xlu0 1
      %490 = vperm.xlu0 %489, %v451
      %v491 = vpop.permute.xlu0 %490
      %493 = vset.pattern.permute.xlu0 1
      %494 = vperm.xlu0 %493, %v452
      %v495 = vpop.permute.xlu0 %494
      %497 = vset.pattern.permute.xlu0 1
      %498 = vperm.xlu0 %497, %v453
      %v499 = vpop.permute.xlu0 %498
      %v501 = vmul.f32 %v487, %v323
      %v502 = vmul.f32 %v491, %v325
      %v503 = vmul.f32 %v495, %v328
      %v504 = vmul.f32 %v499, %v330
      %v505 = vadd.f32 %v481, %v501
      %v506 = vadd.f32 %v482, %v502
      %v507 = vadd.f32 %v483, %v503
      %v508 = vadd.f32 %v484, %v504
      %509 = vset.pattern.permute.xlu0 2
      %510 = vperm.xlu0 %509, %v450
      %v511 = vpop.permute.xlu0 %510
      %513 = vset.pattern.permute.xlu0 2
      %514 = vperm.xlu0 %513, %v451
      %v515 = vpop.permute.xlu0 %514
      %517 = vset.pattern.permute.xlu0 2
      %518 = vperm.xlu0 %517, %v452
      %v519 = vpop.permute.xlu0 %518
      %521 = vset.pattern.permute.xlu0 2
      %522 = vperm.xlu0 %521, %v453
      %v523 = vpop.permute.xlu0 %522
      %v525 = vmul.f32 %v511, %v342
      %v526 = vmul.f32 %v515, %v344
      %v527 = vmul.f32 %v519, %v347
      %v528 = vmul.f32 %v523, %v349
      %v529 = vadd.f32 %v505, %v525
      %v530 = vadd.f32 %v506, %v526
      %v531 = vadd.f32 %v507, %v527
      %v532 = vadd.f32 %v508, %v528
      %533 = vset.pattern.permute.xlu0 3
      %534 = vperm.xlu0 %533, %v450
      %v535 = vpop.permute.xlu0 %534
      %537 = vset.pattern.permute.xlu0 3
      %538 = vperm.xlu0 %537, %v451
      %v539 = vpop.permute.xlu0 %538
      %541 = vset.pattern.permute.xlu0 3
      %542 = vperm.xlu0 %541, %v452
      %v543 = vpop.permute.xlu0 %542
      %545 = vset.pattern.permute.xlu0 3
      %546 = vperm.xlu0 %545, %v453
      %v547 = vpop.permute.xlu0 %546
      %v549 = vmul.f32 %v535, %v361
      %v550 = vmul.f32 %v539, %v363
      %v551 = vmul.f32 %v543, %v366
      %v552 = vmul.f32 %v547, %v368
      %v553 = vadd.f32 %v529, %v549
      %v554 = vadd.f32 %v530, %v550
      %v555 = vadd.f32 %v531, %v551
      %v556 = vadd.f32 %v532, %v552
      %557 = vset.pattern.permute.xlu0 4
      %558 = vperm.xlu0 %557, %v450
      %v559 = vpop.permute.xlu0 %558
      %561 = vset.pattern.permute.xlu0 4
      %562 = vperm.xlu0 %561, %v451
      %v563 = vpop.permute.xlu0 %562
      %565 = vset.pattern.permute.xlu0 4
      %566 = vperm.xlu0 %565, %v452
      %v567 = vpop.permute.xlu0 %566
      %569 = vset.pattern.permute.xlu0 4
      %570 = vperm.xlu0 %569, %v453
      %v571 = vpop.permute.xlu0 %570
      %v573 = vmul.f32 %v559, %v380
      %v574 = vmul.f32 %v563, %v382
      %v575 = vmul.f32 %v567, %v385
      %v576 = vmul.f32 %v571, %v387
      %v577 = vadd.f32 %v553, %v573
      %v578 = vadd.f32 %v554, %v574
      %v579 = vadd.f32 %v555, %v575
      %v580 = vadd.f32 %v556, %v576
      %581 = vset.pattern.permute.xlu0 5
      %582 = vperm.xlu0 %581, %v450
      %v583 = vpop.permute.xlu0 %582
      %585 = vset.pattern.permute.xlu0 5
      %586 = vperm.xlu0 %585, %v451
      %v587 = vpop.permute.xlu0 %586
      %589 = vset.pattern.permute.xlu0 5
      %590 = vperm.xlu0 %589, %v452
      %v591 = vpop.permute.xlu0 %590
      %593 = vset.pattern.permute.xlu0 5
      %594 = vperm.xlu0 %593, %v453
      %v595 = vpop.permute.xlu0 %594
      %v597 = vmul.f32 %v583, %v399
      %v598 = vmul.f32 %v587, %v401
      %v599 = vmul.f32 %v591, %v404
      %v600 = vmul.f32 %v595, %v406
      %v601 = vadd.f32 %v577, %v597
      %v602 = vadd.f32 %v578, %v598
      %v603 = vadd.f32 %v579, %v599
      %v604 = vadd.f32 %v580, %v600
      %605 = vset.pattern.permute.xlu0 6
      %606 = vperm.xlu0 %605, %v450
      %v607 = vpop.permute.xlu0 %606
      %609 = vset.pattern.permute.xlu0 6
      %610 = vperm.xlu0 %609, %v451
      %v611 = vpop.permute.xlu0 %610
      %613 = vset.pattern.permute.xlu0 6
      %614 = vperm.xlu0 %613, %v452
      %v615 = vpop.permute.xlu0 %614
      %617 = vset.pattern.permute.xlu0 6
      %618 = vperm.xlu0 %617, %v453
      %v619 = vpop.permute.xlu0 %618
      %v621 = vmul.f32 %v607, %v418
      %v622 = vmul.f32 %v611, %v420
      %v623 = vmul.f32 %v615, %v423
      %v624 = vmul.f32 %v619, %v425
      %v625 = vadd.f32 %v601, %v621
      %v626 = vadd.f32 %v602, %v622
      %v627 = vadd.f32 %v603, %v623
      %v628 = vadd.f32 %v604, %v624
      %629 = vset.pattern.permute.xlu0 7
      %630 = vperm.xlu0 %629, %v450
      %v631 = vpop.permute.xlu0 %630
      %633 = vset.pattern.permute.xlu0 7
      %634 = vperm.xlu0 %633, %v451
      %v635 = vpop.permute.xlu0 %634
      %637 = vset.pattern.permute.xlu0 7
      %638 = vperm.xlu0 %637, %v452
      %v639 = vpop.permute.xlu0 %638
      %641 = vset.pattern.permute.xlu0 7
      %642 = vperm.xlu0 %641, %v453
      %v643 = vpop.permute.xlu0 %642
      %v645 = vmul.f32 %v631, %v437
      %v646 = vmul.f32 %v635, %v439
      %v647 = vmul.f32 %v639, %v442
      %v648 = vmul.f32 %v643, %v444
      %v649 = vadd.f32 %v625, %v645
      %v650 = vadd.f32 %v626, %v646
      %v651 = vadd.f32 %v627, %v647
      %v652 = vadd.f32 %v628, %v648
      %v653 = vpack.c.bf16 %v649, %v649
      %v654 = vpack.c.bf16 %v650, %v650
      %v655 = vpack.c.bf16 %v651, %v651
      %v656 = vpack.c.bf16 %v652, %v652
      %657 = vst [vmem:[%s221] sm:$0xf] %v653
      %658 = vst [vmem:[%s221 + $0x4] sm:$0xf] %v654
      %659 = vst [vmem:[%s221 + $0x8] sm:$0xf] %v655
      %660 = vst [vmem:[%s221 + $0xc] sm:$0xf] %v656
      %s661 = smul.u32 4, %s15
      %p662 = scmp.lt.s32.totalorder %s661, 7
      %s663 = scalar_select %p662, %s661, 7
      %s664 = smul.addr %s663, 4
      %s665 = scalar_lea.vmem %s4, %s664
      // Predicated region
      $region37: #{segnn_graph_layers_forward.7} parent=35 // pred_check
        %p666 = pneg %p127
      $region38: #{segnn_graph_layers_forward.7} parent=35 // pred_check_branch
        %668 = sbr.rel (%p666) target = $region40
      $region39: #{segnn_graph_layers_forward.7} parent=35 // pred_region
        %s669 = smul.u32 4, %s15
      $region40: #{segnn_graph_layers_forward.7} parent=35 // pred_fallthru
        _
    $region36: #{segnn_graph_layers_forward.7} parent=5 // pred_fallthru
      _
    %p670 = scmp.le.s32.totalorder 2, %s10
    // Predicated region
    $region41: #{segnn_graph_layers_forward.7} parent=5 // pred_check
      %p671 = pneg %p670
    $region42: #{segnn_graph_layers_forward.7} parent=5 // pred_check_branch
      %673 = sbr.rel (%p671) target = $region44
    $region43: #{segnn_graph_layers_forward.7} parent=5 // pred_region
      %s674 = ssub.s32 %s10, 2
      // Predicated region
      $region45: #{segnn_graph_layers_forward.7} parent=43 // pred_check
        %p675 = pneg %p133
      $region46: #{segnn_graph_layers_forward.7} parent=43 // pred_check_branch
        %677 = sbr.rel (%p675) target = $region48
      $region47: #{segnn_graph_layers_forward.7} parent=43 // pred_region
        %s678 = smul.u32 4, %s16
        %p679 = scmp.lt.s32.totalorder %s678, 7
        %s680 = scalar_select %p679, %s678, 7
        %s681 = smul.addr %s680, 4
        %s682 = scalar_lea.vmem %s4, %s681
      $region48: #{segnn_graph_layers_forward.7} parent=43 // pred_fallthru
        _
    $region44: #{segnn_graph_layers_forward.7} parent=5 // pred_fallthru
      _
  $region6: #{segnn_graph_layers_forward.7} parent=0 // loop_footer
    %s14 = sadd.s32 1, %s10
  $region7: #{segnn_graph_layers_forward.7} parent=0 // loop_footer_branch
    %9 = sbr.rel target = $region3
  $region8: #{segnn_graph_layers_forward.7} parent=0 // loop_exit
    _

// kernel: segnn_graph_layers_forward.9
$region0: #{segnn_graph_layers_forward.9}
  #allocation0 [shape = 'u32[]', space=smem, size = 0x4, offset = 0x4, fixed_abs, tag = 'smem constant byte address 0x4 - core index']
  #allocation1 [shape = 'u32[72,128]{1,0:T(1,128)}', space=vmem, size = 0x9000, scoped, tag = 'internal scratch']
  #allocation2 [shape = 'f32[32,128]{1,0:T(8,128)}', space=vmem, size = 0x4000, scoped, tag = 'scratch operand']
  %s0 = inlined_call_operand.vmem [shape: s32[1,256], index: 0, kind: input, shape index: {}]
  %s1 = inlined_call_operand.vmem [shape: bf16[256,128], index: 1, kind: input, shape index: {}]
  %s2 = inlined_call_operand.vmem [shape: bf16[64,128], index: 2, kind: output, shape index: {}]
  %s3 = sld [smem:[#allocation0]]
  $region49: #{segnn_graph_layers_forward.9} parent=0
    _
  %s5 = ssub.s32 1, %s3
  %s6 = scalar_select 0, %s5, %s3
  loop: start=0, step=1, limit=6
  $region2: #{segnn_graph_layers_forward.9} parent=0 // loop_pre_header
    _
  $region3: #{segnn_graph_layers_forward.9} parent=0 // loop_header
    %s8 = sphi 0, %s12
    %p9 = scmp.ge.s32.totalorder %s8, 6
    %s15 = sphi 0, %s27
    %s16 = sphi 0, %s23
    %s17 = sphi 0, %s15
    %s18 = sphi 0, %s16
    %s19 = sphi 0, %s17
    %s20 = sphi 0, %s18
    %s30 = sphi 0, %s32
    %s33 = sphi 0, %s30
    %s34 = sphi 0, %s33
    %s50 = sphi 0, %s34
    %s56 = sphi 0, %s58
    %s59 = sphi 0, %s56
    %s60 = sphi 0, %s59
    %s76 = sphi 0, %s60
    %s82 = sphi 0, %s84
    %s85 = sphi 0, %s82
    %s86 = sphi 0, %s85
    %s102 = sphi 0, %s86
  $region4: #{segnn_graph_layers_forward.9} parent=0 // loop_header_branch
    %11 = sbr.rel (%p9) target = $region8
  $region5: #{segnn_graph_layers_forward.9} parent=0 // loop_body
    %s13 = ssub.s32 %s8, 1
    %s14 = ssub.s32 %s8, 2
    %s21 = sadd.s32 1, %s16
    %p22 = scmp.ge.s32.totalorder %s21, 2
    %s23 = scalar_select %p22, 0, %s21
    %s24 = sadd.s32 1, %s15
    %s25 = scalar_select %p22, %s24, %s15
    %p26 = scmp.ge.s32.totalorder %s25, 2
    %s27 = scalar_select %p26, 0, %s25
    %s28 = ssub.s32 %s16, %s23
    %p29 = scmp.eq.s32.totalorder %s28, 0
    %s31 = sadd.s32 %s30, 1
    %s32 = scalar_select %p29, %s30, %s31
    %p35 = pneg %p29
    %p36 = scmp.eq.s32.totalorder %s8, 3
    %p37 = por %p35, %p36
    %p38 = scmp.ne.s32.totalorder %s30, %s33
    %p39 = scmp.eq.s32.totalorder %s8, 0
    %p40 = por %p38, %p39
    %p41 = scmp.ne.s32.totalorder %s30, %s33
    %p42 = scmp.eq.s32.totalorder %s13, 3
    %p43 = por %p41, %p42
    %p44 = scmp.ne.s32.totalorder %s33, %s34
    %p45 = scmp.eq.s32.totalorder %s13, 0
    %p46 = por %p44, %p45
    %p47 = scmp.ne.s32.totalorder %s33, %s34
    %p48 = scmp.eq.s32.totalorder %s14, 3
    %p49 = por %p47, %p48
    %p51 = scmp.ne.s32.totalorder %s34, %s50
    %p52 = scmp.eq.s32.totalorder %s14, 0
    %p53 = por %p51, %p52
    %s54 = ssub.s32 %s16, %s23
    %p55 = scmp.eq.s32.totalorder %s54, 0
    %s57 = sadd.s32 %s56, 1
    %s58 = scalar_select %p55, %s56, %s57
    %p61 = pneg %p55
    %p62 = scmp.eq.s32.totalorder %s8, 3
    %p63 = por %p61, %p62
    %p64 = scmp.ne.s32.totalorder %s56, %s59
    %p65 = scmp.eq.s32.totalorder %s8, 0
    %p66 = por %p64, %p65
    %p67 = scmp.ne.s32.totalorder %s56, %s59
    %p68 = scmp.eq.s32.totalorder %s13, 3
    %p69 = por %p67, %p68
    %p70 = scmp.ne.s32.totalorder %s59, %s60
    %p71 = scmp.eq.s32.totalorder %s13, 0
    %p72 = por %p70, %p71
    %p73 = scmp.ne.s32.totalorder %s59, %s60
    %p74 = scmp.eq.s32.totalorder %s14, 3
    %p75 = por %p73, %p74
    %p77 = scmp.ne.s32.totalorder %s60, %s76
    %p78 = scmp.eq.s32.totalorder %s14, 0
    %p79 = por %p77, %p78
    %s80 = ssub.s32 %s15, %s27
    %p81 = scmp.eq.s32.totalorder %s80, 0
    %s83 = sadd.s32 %s82, 1
    %s84 = scalar_select %p81, %s82, %s83
    %p87 = pneg %p81
    %p88 = scmp.eq.s32.totalorder %s8, 3
    %p89 = por %p87, %p88
    %p90 = scmp.ne.s32.totalorder %s82, %s85
    %p91 = scmp.eq.s32.totalorder %s8, 0
    %p92 = por %p90, %p91
    %p93 = scmp.ne.s32.totalorder %s82, %s85
    %p94 = scmp.eq.s32.totalorder %s13, 3
    %p95 = por %p93, %p94
    %p96 = scmp.ne.s32.totalorder %s85, %s86
    %p97 = scmp.eq.s32.totalorder %s13, 0
    %p98 = por %p96, %p97
    %p99 = scmp.ne.s32.totalorder %s85, %s86
    %p100 = scmp.eq.s32.totalorder %s14, 3
    %p101 = por %p99, %p100
    %p103 = scmp.ne.s32.totalorder %s86, %s102
    %p104 = scmp.eq.s32.totalorder %s14, 0
    %p105 = por %p103, %p104
    %p106 = scmp.le.s32.totalorder 1, %s8
    %p107 = scmp.lt.s32.totalorder %s8, 5
    %p108 = pnand %p106, %p107
    %p109 = pneg %p108
    // Predicated region
    $region9: #{segnn_graph_layers_forward.9} parent=5 // pred_check
      _
    $region10: #{segnn_graph_layers_forward.9} parent=5 // pred_check_branch
      %111 = sbr.rel (%p108) target = $region12
    $region11: #{segnn_graph_layers_forward.9} parent=5 // pred_region
      %s112 = ssub.s32 %s8, 1
    $region12: #{segnn_graph_layers_forward.9} parent=5 // pred_fallthru
      _
    %p113 = scmp.lt.s32.totalorder %s8, 4
    // Predicated region
    $region13: #{segnn_graph_layers_forward.9} parent=5 // pred_check
      %p114 = pneg %p113
    $region14: #{segnn_graph_layers_forward.9} parent=5 // pred_check_branch
      %116 = sbr.rel (%p114) target = $region16
    $region15: #{segnn_graph_layers_forward.9} parent=5 // pred_region
      // Predicated region
      $region17: #{segnn_graph_layers_forward.9} parent=15 // pred_check
        %p117 = pneg %p40
      $region18: #{segnn_graph_layers_forward.9} parent=15 // pred_check_branch
        %119 = sbr.rel (%p117) target = $region20
      $region19: #{segnn_graph_layers_forward.9} parent=15 // pred_region
        %p120 = scmp.lt.s32.totalorder %s16, 1
        %s121 = scalar_select %p120, %s16, 1
        %s122 = scalar_lea.vmem %s0, %s121
      $region20: #{segnn_graph_layers_forward.9} parent=15 // pred_fallthru
        _
      // Predicated region
      $region21: #{segnn_graph_layers_forward.9} parent=15 // pred_check
        %p123 = pneg %p66
      $region22: #{segnn_graph_layers_forward.9} parent=15 // pred_check_branch
        %125 = sbr.rel (%p123) target = $region24
      $region23: #{segnn_graph_layers_forward.9} parent=15 // pred_region
        %s126 = smul.u32 16, %s16
        %p127 = scmp.lt.s32.totalorder %s126, 31
        %s128 = scalar_select %p127, %s126, 31
        %s129 = smul.addr %s128, 4
        %s130 = scalar_lea.vmem %s1, %s129
        %s131 = smul.u32 16, %s16
      $region24: #{segnn_graph_layers_forward.9} parent=15 // pred_fallthru
        _
    $region16: #{segnn_graph_layers_forward.9} parent=5 // pred_fallthru
      _
    %p132 = scmp.le.s32.totalorder 1, %s8
    %p133 = scmp.lt.s32.totalorder %s8, 5
    %p134 = pnand %p132, %p133
    %p135 = pneg %p134
    // Predicated region
    $region25: #{segnn_graph_layers_forward.9} parent=5 // pred_check
      _
    $region26: #{segnn_graph_layers_forward.9} parent=5 // pred_check_branch
      %137 = sbr.rel (%p134) target = $region28
    $region27: #{segnn_graph_layers_forward.9} parent=5 // pred_region
      %s138 = ssub.s32 %s8, 1
      %p139 = scmp.lt.s32.totalorder %s18, 1
      %s140 = scalar_select %p139, %s18, 1
      %s141 = scalar_lea.vmem %s0, %s140
      %p142 = pneg %p46
      %p143 = pneg %p43
      %s144 = smul.u32 16, %s18
      %p145 = scmp.lt.s32.totalorder %s144, 31
      %s146 = scalar_select %p145, %s144, 31
      %s147 = smul.addr %s146, 4
      %s148 = scalar_lea.vmem %s1, %s147
      %p149 = pneg %p72
      %p150 = pneg %p69
      %p151 = pneg %p98
      %p152 = pneg %p95
      %s153 = smul.u32 4, %s17
      %p154 = scmp.lt.s32.totalorder %s153, 7
      %s155 = scalar_select %p154, %s153, 7
      %s156 = smul.addr %s155, 4
      %s157 = scalar_lea.vmem %s2, %s156
      %p158 = scmp.lt.s32.totalorder %s18, 1
      %s159 = scalar_select %p158, %s18, 1
      %s160 = scalar_lea.vmem %s0, %s159
      %s161 = smul.u32 16, %s18
      %p162 = scmp.lt.s32.totalorder %s161, 31
      %s163 = scalar_select %p162, %s161, 31
      %s164 = smul.addr %s163, 4
      %s165 = scalar_lea.vmem %s1, %s164
      %s166 = smul.u32 16, %s18
      %s167 = smul.u32 4, %s17
      %p168 = scmp.lt.s32.totalorder %s167, 7
      %s169 = scalar_select %p168, %s167, 7
      %s170 = smul.addr %s169, 4
      %s171 = scalar_lea.vmem %s2, %s170
      %s172 = smul.u32 4, %s17
      %p173 = scmp.eq.s32.totalorder %s18, 0
      // Predicated region
      $region29: #{segnn_graph_layers_forward.9} parent=27 // pred_check
        %p174 = pneg %p173
      $region30: #{segnn_graph_layers_forward.9} parent=27 // pred_check_branch
        %176 = sbr.rel (%p174) target = $region32
      $region31: #{segnn_graph_layers_forward.9} parent=27 // pred_region
        %177 = vst [vmem:[#allocation2] sm:$0xff] 0.0
        %178 = vst [vmem:[#allocation2 + $0x8] sm:$0xff] 0.0
        %179 = vst [vmem:[#allocation2 + $0x10] sm:$0xff] 0.0
        %180 = vst [vmem:[#allocation2 + $0x18] sm:$0xff] 0.0
      $region32: #{segnn_graph_layers_forward.9} parent=27 // pred_fallthru
        _
      %v181 = vlaneseq
      %v182 = vshrl.u32 %v181, 7
      %v183 = vadd.s32 %v182, 8
      %v184 = vadd.s32 %v182, 16
      %v185 = vadd.s32 %v182, 24
      %s186 = smul.u32 %s17, 32
      %v187 = vstv %s186
      %v188 = vadd.s32 %v182, %v187
      %v189 = vadd.s32 %v183, %v187
      %v190 = vadd.s32 %v184, %v187
      %v191 = vadd.s32 %v185, %v187
      %v192 = vld [vmem:[%s160] sm:$0x1]
      %v193 = vperm.slane %v192, 0
      %vm194 = vcmp.eq.s32.totalorder %v193, %v188
      %vm195 = vcmp.eq.s32.totalorder %v193, %v189
      %vm196 = vcmp.eq.s32.totalorder %v193, %v190
      %vm197 = vcmp.eq.s32.totalorder %v193, %v191
      %v198 = vld [vmem:[#allocation2] sm:$0xff]
      %v199 = vld [vmem:[#allocation2 + $0x8] sm:$0xff]
      %v200 = vld [vmem:[#allocation2 + $0x10] sm:$0xff]
      %v201 = vld [vmem:[#allocation2 + $0x18] sm:$0xff]
      %v202 = vsel %vm194, 1, 0
      %v203 = vsel %vm195, 1, 0
      %v204 = vsel %vm196, 1, 0
      %v205 = vsel %vm197, 1, 0
      %v206 = vcvt.s32.f32 %v202
      %v207 = vcvt.s32.f32 %v203
      %v208 = vcvt.s32.f32 %v204
      %v209 = vcvt.s32.f32 %v205
      %v210 = vpack.c.bf16 %v207, %v206
      %v211 = vpack.c.bf16 %v209, %v208
      %v212 = vld [vmem:[%s165] sm:$0xf]
      %v213 = vld [vmem:[%s165 + $0x4] sm:$0xf]
      %v214 = vld [vmem:[%s165 + $0x8] sm:$0xf]
      %v215 = vld [vmem:[%s165 + $0xc] sm:$0xf]
      %v216 = vld [vmem:[%s165 + $0x10] sm:$0xf]
      %v217 = vld [vmem:[%s165 + $0x14] sm:$0xf]
      %v218 = vld [vmem:[%s165 + $0x18] sm:$0xf]
      %v219 = vld [vmem:[%s165 + $0x1c] sm:$0xf]
      %v220 = vld [vmem:[%s165 + $0x20] sm:$0xf]
      %v221 = vld [vmem:[%s165 + $0x24] sm:$0xf]
      %v222 = vld [vmem:[%s165 + $0x28] sm:$0xf]
      %v223 = vld [vmem:[%s165 + $0x2c] sm:$0xf]
      %v224 = vld [vmem:[%s165 + $0x30] sm:$0xf]
      %v225 = vld [vmem:[%s165 + $0x34] sm:$0xf]
      %v226 = vld [vmem:[%s165 + $0x38] sm:$0xf]
      %v227 = vld [vmem:[%s165 + $0x3c] sm:$0xf]
      %v244 = vunpack.c.l.b16 %v212
      %v245 = vunpack.c.l.b16 %v213
      %v246 = vunpack.c.l.b16 %v214
      %v247 = vunpack.c.l.b16 %v215
      %v248 = vunpack.c.l.b16 %v216
      %v249 = vunpack.c.l.b16 %v217
      %v250 = vunpack.c.l.b16 %v218
      %v251 = vunpack.c.l.b16 %v219
      %v252 = vunpack.c.l.b16 %v220
      %v253 = vunpack.c.l.b16 %v221
      %v254 = vunpack.c.l.b16 %v222
      %v255 = vunpack.c.l.b16 %v223
      %v256 = vunpack.c.l.b16 %v224
      %v257 = vunpack.c.l.b16 %v225
      %v258 = vunpack.c.l.b16 %v226
      %v259 = vunpack.c.l.b16 %v227
      %v260 = vpack.c.b16 %v245, %v244
      %v261 = vpack.c.b16 %v247, %v246
      %v262 = vpack.c.b16 %v249, %v248
      %v263 = vpack.c.b16 %v251, %v250
      %v264 = vpack.c.b16 %v253, %v252
      %v265 = vpack.c.b16 %v255, %v254
      %v266 = vpack.c.b16 %v257, %v256
      %v267 = vpack.c.b16 %v259, %v258
      %276 = vmatpush.bf16.msra.mxu0 %v267
      %277 = vmatpush.bf16.msra.mxu0 %v266
      %278 = vmatpush.bf16.msra.mxu0 %v265
      %279 = vmatpush.bf16.msra.mxu0 %v264
      %280 = vmatpush.bf16.msra.mxu0 %v263
      %281 = vmatpush.bf16.msra.mxu0 %v262
      %282 = vmatpush.bf16.msra.mxu0 %v261
      %283 = vmatpush.bf16.msra.mxu0 %v260
      %284 = vmatmul.bf16.gmra.mxu0 %v210
      %v285 = vpop.f32.mrf.mxu0
      %v286 = vadd.f32 0.0, %v285
      %v287 = vpop.f32.mrf.mxu0
      %v288 = vadd.f32 0.0, %v287
      %289 = vmatmul.bf16.gmra.mxu0 %v211
      %v290 = vpop.f32.mrf.mxu0
      %v291 = vadd.f32 0.0, %v290
      %v292 = vpop.f32.mrf.mxu0
      %v293 = vadd.f32 0.0, %v292
      %294 = vdwg.mxu0
      %v295 = vadd.f32 %v198, %v286
      %v296 = vadd.f32 %v199, %v288
      %v297 = vadd.f32 %v200, %v291
      %v298 = vadd.f32 %v201, %v293
      %299 = vst [vmem:[#allocation2] sm:$0xff] %v295
      %300 = vst [vmem:[#allocation2 + $0x8] sm:$0xff] %v296
      %301 = vst [vmem:[#allocation2 + $0x10] sm:$0xff] %v297
      %302 = vst [vmem:[#allocation2 + $0x18] sm:$0xff] %v298
      %p303 = scmp.eq.s32.totalorder %s18, 1
      // Predicated region
      $region33: #{segnn_graph_layers_forward.9} parent=27 // pred_check
        %p304 = pneg %p303
      $region34: #{segnn_graph_layers_forward.9} parent=27 // pred_check_branch
        %306 = sbr.rel (%p304) target = $region36
      $region35: #{segnn_graph_layers_forward.9} parent=27 // pred_region
        %v307 = vld [vmem:[#allocation2] sm:$0xff]
        %v308 = vld [vmem:[#allocation2 + $0x8] sm:$0xff]
        %v309 = vld [vmem:[#allocation2 + $0x10] sm:$0xff]
        %v310 = vld [vmem:[#allocation2 + $0x18] sm:$0xff]
        %v311 = vpack.c.bf16 %v307, %v307
        %v312 = vpack.c.bf16 %v308, %v308
        %v313 = vpack.c.bf16 %v309, %v309
        %v314 = vpack.c.bf16 %v310, %v310
        %315 = vst [vmem:[%s171] sm:$0xf] %v311
        %316 = vst [vmem:[%s171 + $0x4] sm:$0xf] %v312
        %317 = vst [vmem:[%s171 + $0x8] sm:$0xf] %v313
        %318 = vst [vmem:[%s171 + $0xc] sm:$0xf] %v314
      $region36: #{segnn_graph_layers_forward.9} parent=27 // pred_fallthru
        _
      %s319 = smul.u32 4, %s17
      %p320 = scmp.lt.s32.totalorder %s319, 7
      %s321 = scalar_select %p320, %s319, 7
      %s322 = smul.addr %s321, 4
      %s323 = scalar_lea.vmem %s2, %s322
      // Predicated region
      $region37: #{segnn_graph_layers_forward.9} parent=27 // pred_check
        %p324 = pneg %p95
      $region38: #{segnn_graph_layers_forward.9} parent=27 // pred_check_branch
        %326 = sbr.rel (%p324) target = $region40
      $region39: #{segnn_graph_layers_forward.9} parent=27 // pred_region
        %s327 = smul.u32 4, %s17
      $region40: #{segnn_graph_layers_forward.9} parent=27 // pred_fallthru
        _
    $region28: #{segnn_graph_layers_forward.9} parent=5 // pred_fallthru
      _
    %p328 = scmp.le.s32.totalorder 2, %s8
    // Predicated region
    $region41: #{segnn_graph_layers_forward.9} parent=5 // pred_check
      %p329 = pneg %p328
    $region42: #{segnn_graph_layers_forward.9} parent=5 // pred_check_branch
      %331 = sbr.rel (%p329) target = $region44
    $region43: #{segnn_graph_layers_forward.9} parent=5 // pred_region
      %s332 = ssub.s32 %s8, 2
      // Predicated region
      $region45: #{segnn_graph_layers_forward.9} parent=43 // pred_check
        %p333 = pneg %p101
      $region46: #{segnn_graph_layers_forward.9} parent=43 // pred_check_branch
        %335 = sbr.rel (%p333) target = $region48
      $region47: #{segnn_graph_layers_forward.9} parent=43 // pred_region
        %s336 = smul.u32 4, %s19
        %p337 = scmp.lt.s32.totalorder %s336, 7
        %s338 = scalar_select %p337, %s336, 7
        %s339 = smul.addr %s338, 4
        %s340 = scalar_lea.vmem %s2, %s339
      $region48: #{segnn_graph_layers_forward.9} parent=43 // pred_fallthru
        _
    $region44: #{segnn_graph_layers_forward.9} parent=5 // pred_fallthru
      _
  $region6: #{segnn_graph_layers_forward.9} parent=0 // loop_footer
    %s12 = sadd.s32 1, %s8
  $region7: #{segnn_graph_layers_forward.9} parent=0 // loop_footer_branch
    %7 = sbr.rel target = $region3
  $region8: #{segnn_graph_layers_forward.9} parent=0 // loop_exit
    _

// kernel: segnn_graph_layers_forward.10
$region0: #{segnn_graph_layers_forward.10}
  #allocation0 [shape = 'u32[]', space=smem, size = 0x4, offset = 0x4, fixed_abs, tag = 'smem constant byte address 0x4 - core index']
  #allocation1 [shape = 'u32[72,128]{1,0:T(1,128)}', space=vmem, size = 0x9000, scoped, tag = 'internal scratch']
  %s0 = inlined_call_operand.vmem [shape: bf16[64,128], index: 0, kind: input, shape index: {}]
  %s1 = inlined_call_operand.vmem [shape: bf16[64,128], index: 1, kind: input, shape index: {}]
  %s2 = inlined_call_operand.vmem [shape: bf16[64,8], index: 2, kind: input, shape index: {}]
  %s3 = inlined_call_operand.vmem [shape: bf16[128,1024], index: 3, kind: input, shape index: {}]
  %s4 = inlined_call_operand.vmem [shape: bf16[128,1024], index: 4, kind: input, shape index: {}]
  %s5 = inlined_call_operand.vmem [shape: bf16[1,128], index: 5, kind: input, shape index: {}]
  %s6 = inlined_call_operand.vmem [shape: bf16[128,1024], index: 6, kind: input, shape index: {}]
  %s7 = inlined_call_operand.vmem [shape: bf16[1,128], index: 7, kind: input, shape index: {}]
  %s8 = inlined_call_operand.vmem [shape: bf16[64,128], index: 8, kind: output, shape index: {}]
  %s9 = sld [smem:[#allocation0]]
  $region65: #{segnn_graph_layers_forward.10} parent=0
    _
  %s11 = ssub.s32 1, %s9
  %s12 = scalar_select 0, %s11, %s9
  loop: start=0, step=1, limit=4
  $region2: #{segnn_graph_layers_forward.10} parent=0 // loop_pre_header
    _
  $region3: #{segnn_graph_layers_forward.10} parent=0 // loop_header
    %s14 = sphi 0, %s18
    %p15 = scmp.ge.s32.totalorder %s14, 4
    %s24 = sphi 0, %s26
    %s27 = sphi 0, %s24
    %s28 = sphi 0, %s27
    %s44 = sphi 0, %s28
    %s50 = sphi 0, %s52
    %s53 = sphi 0, %s50
    %s54 = sphi 0, %s53
    %s70 = sphi 0, %s54
    %s76 = sphi 0, %s78
    %s79 = sphi 0, %s76
    %s80 = sphi 0, %s79
    %s96 = sphi 0, %s80
    %s100 = sphi 0, %s100
    %s102 = sphi 0, %s100
    %s103 = sphi 0, %s102
    %s117 = sphi 0, %s103
    %s121 = sphi 0, %s121
    %s123 = sphi 0, %s121
    %s124 = sphi 0, %s123
    %s138 = sphi 0, %s124
    %s142 = sphi 0, %s142
    %s144 = sphi 0, %s142
    %s145 = sphi 0, %s144
    %s159 = sphi 0, %s145
    %s163 = sphi 0, %s163
    %s165 = sphi 0, %s163
    %s166 = sphi 0, %s165
    %s180 = sphi 0, %s166
    %s184 = sphi 0, %s184
    %s186 = sphi 0, %s184
    %s187 = sphi 0, %s186
    %s201 = sphi 0, %s187
    %s207 = sphi 0, %s209
    %s210 = sphi 0, %s207
    %s211 = sphi 0, %s210
    %s227 = sphi 0, %s211
  $region4: #{segnn_graph_layers_forward.10} parent=0 // loop_header_branch
    %17 = sbr.rel (%p15) target = $region8
  $region5: #{segnn_graph_layers_forward.10} parent=0 // loop_body
    %s19 = ssub.s32 %s14, 1
    %s20 = ssub.s32 %s14, 2
    %s21 = sadd.s32 %s14, 1
    %s22 = ssub.s32 %s14, %s21
    %p23 = scmp.eq.s32.totalorder %s22, 0
    %s25 = sadd.s32 %s24, 1
    %s26 = scalar_select %p23, %s24, %s25
    %p29 = pneg %p23
    %p30 = scmp.eq.s32.totalorder %s14, 1
    %p31 = por %p29, %p30
    %p32 = scmp.ne.s32.totalorder %s24, %s27
    %p33 = scmp.eq.s32.totalorder %s14, 0
    %p34 = por %p32, %p33
    %p35 = scmp.ne.s32.totalorder %s24, %s27
    %p36 = scmp.eq.s32.totalorder %s19, 1
    %p37 = por %p35, %p36
    %p38 = scmp.ne.s32.totalorder %s27, %s28
    %p39 = scmp.eq.s32.totalorder %s19, 0
    %p40 = por %p38, %p39
    %p41 = scmp.ne.s32.totalorder %s27, %s28
    %p42 = scmp.eq.s32.totalorder %s20, 1
    %p43 = por %p41, %p42
    %p45 = scmp.ne.s32.totalorder %s28, %s44
    %p46 = scmp.eq.s32.totalorder %s20, 0
    %p47 = por %p45, %p46
    %s48 = ssub.s32 %s14, %s21
    %p49 = scmp.eq.s32.totalorder %s48, 0
    %s51 = sadd.s32 %s50, 1
    %s52 = scalar_select %p49, %s50, %s51
    %p55 = pneg %p49
    %p56 = scmp.eq.s32.totalorder %s14, 1
    %p57 = por %p55, %p56
    %p58 = scmp.ne.s32.totalorder %s50, %s53
    %p59 = scmp.eq.s32.totalorder %s14, 0
    %p60 = por %p58, %p59
    %p61 = scmp.ne.s32.totalorder %s50, %s53
    %p62 = scmp.eq.s32.totalorder %s19, 1
    %p63 = por %p61, %p62
    %p64 = scmp.ne.s32.totalorder %s53, %s54
    %p65 = scmp.eq.s32.totalorder %s19, 0
    %p66 = por %p64, %p65
    %p67 = scmp.ne.s32.totalorder %s53, %s54
    %p68 = scmp.eq.s32.totalorder %s20, 1
    %p69 = por %p67, %p68
    %p71 = scmp.ne.s32.totalorder %s54, %s70
    %p72 = scmp.eq.s32.totalorder %s20, 0
    %p73 = por %p71, %p72
    %s74 = ssub.s32 %s14, %s21
    %p75 = scmp.eq.s32.totalorder %s74, 0
    %s77 = sadd.s32 %s76, 1
    %s78 = scalar_select %p75, %s76, %s77
    %p81 = pneg %p75
    %p82 = scmp.eq.s32.totalorder %s14, 1
    %p83 = por %p81, %p82
    %p84 = scmp.ne.s32.totalorder %s76, %s79
    %p85 = scmp.eq.s32.totalorder %s14, 0
    %p86 = por %p84, %p85
    %p87 = scmp.ne.s32.totalorder %s76, %s79
    %p88 = scmp.eq.s32.totalorder %s19, 1
    %p89 = por %p87, %p88
    %p90 = scmp.ne.s32.totalorder %s79, %s80
    %p91 = scmp.eq.s32.totalorder %s19, 0
    %p92 = por %p90, %p91
    %p93 = scmp.ne.s32.totalorder %s79, %s80
    %p94 = scmp.eq.s32.totalorder %s20, 1
    %p95 = por %p93, %p94
    %p97 = scmp.ne.s32.totalorder %s80, %s96
    %p98 = scmp.eq.s32.totalorder %s20, 0
    %p99 = por %p97, %p98
    %s101 = sadd.s32 %s100, 1
    %p104 = scmp.eq.s32.totalorder %s14, 1
    %p105 = scmp.ne.s32.totalorder %s100, %s102
    %p106 = scmp.eq.s32.totalorder %s14, 0
    %p107 = por %p105, %p106
    %p108 = scmp.ne.s32.totalorder %s100, %s102
    %p109 = scmp.eq.s32.totalorder %s19, 1
    %p110 = por %p108, %p109
    %p111 = scmp.ne.s32.totalorder %s102, %s103
    %p112 = scmp.eq.s32.totalorder %s19, 0
    %p113 = por %p111, %p112
    %p114 = scmp.ne.s32.totalorder %s102, %s103
    %p115 = scmp.eq.s32.totalorder %s20, 1
    %p116 = por %p114, %p115
    %p118 = scmp.ne.s32.totalorder %s103, %s117
    %p119 = scmp.eq.s32.totalorder %s20, 0
    %p120 = por %p118, %p119
    %s122 = sadd.s32 %s121, 1
    %p125 = scmp.eq.s32.totalorder %s14, 1
    %p126 = scmp.ne.s32.totalorder %s121, %s123
    %p127 = scmp.eq.s32.totalorder %s14, 0
    %p128 = por %p126, %p127
    %p129 = scmp.ne.s32.totalorder %s121, %s123
    %p130 = scmp.eq.s32.totalorder %s19, 1
    %p131 = por %p129, %p130
    %p132 = scmp.ne.s32.totalorder %s123, %s124
    %p133 = scmp.eq.s32.totalorder %s19, 0
    %p134 = por %p132, %p133
    %p135 = scmp.ne.s32.totalorder %s123, %s124
    %p136 = scmp.eq.s32.totalorder %s20, 1
    %p137 = por %p135, %p136
    %p139 = scmp.ne.s32.totalorder %s124, %s138
    %p140 = scmp.eq.s32.totalorder %s20, 0
    %p141 = por %p139, %p140
    %s143 = sadd.s32 %s142, 1
    %p146 = scmp.eq.s32.totalorder %s14, 1
    %p147 = scmp.ne.s32.totalorder %s142, %s144
    %p148 = scmp.eq.s32.totalorder %s14, 0
    %p149 = por %p147, %p148
    %p150 = scmp.ne.s32.totalorder %s142, %s144
    %p151 = scmp.eq.s32.totalorder %s19, 1
    %p152 = por %p150, %p151
    %p153 = scmp.ne.s32.totalorder %s144, %s145
    %p154 = scmp.eq.s32.totalorder %s19, 0
    %p155 = por %p153, %p154
    %p156 = scmp.ne.s32.totalorder %s144, %s145
    %p157 = scmp.eq.s32.totalorder %s20, 1
    %p158 = por %p156, %p157
    %p160 = scmp.ne.s32.totalorder %s145, %s159
    %p161 = scmp.eq.s32.totalorder %s20, 0
    %p162 = por %p160, %p161
    %s164 = sadd.s32 %s163, 1
    %p167 = scmp.eq.s32.totalorder %s14, 1
    %p168 = scmp.ne.s32.totalorder %s163, %s165
    %p169 = scmp.eq.s32.totalorder %s14, 0
    %p170 = por %p168, %p169
    %p171 = scmp.ne.s32.totalorder %s163, %s165
    %p172 = scmp.eq.s32.totalorder %s19, 1
    %p173 = por %p171, %p172
    %p174 = scmp.ne.s32.totalorder %s165, %s166
    %p175 = scmp.eq.s32.totalorder %s19, 0
    %p176 = por %p174, %p175
    %p177 = scmp.ne.s32.totalorder %s165, %s166
    %p178 = scmp.eq.s32.totalorder %s20, 1
    %p179 = por %p177, %p178
    %p181 = scmp.ne.s32.totalorder %s166, %s180
    %p182 = scmp.eq.s32.totalorder %s20, 0
    %p183 = por %p181, %p182
    %s185 = sadd.s32 %s184, 1
    %p188 = scmp.eq.s32.totalorder %s14, 1
    %p189 = scmp.ne.s32.totalorder %s184, %s186
    %p190 = scmp.eq.s32.totalorder %s14, 0
    %p191 = por %p189, %p190
    %p192 = scmp.ne.s32.totalorder %s184, %s186
    %p193 = scmp.eq.s32.totalorder %s19, 1
    %p194 = por %p192, %p193
    %p195 = scmp.ne.s32.totalorder %s186, %s187
    %p196 = scmp.eq.s32.totalorder %s19, 0
    %p197 = por %p195, %p196
    %p198 = scmp.ne.s32.totalorder %s186, %s187
    %p199 = scmp.eq.s32.totalorder %s20, 1
    %p200 = por %p198, %p199
    %p202 = scmp.ne.s32.totalorder %s187, %s201
    %p203 = scmp.eq.s32.totalorder %s20, 0
    %p204 = por %p202, %p203
    %s205 = ssub.s32 %s14, %s21
    %p206 = scmp.eq.s32.totalorder %s205, 0
    %s208 = sadd.s32 %s207, 1
    %s209 = scalar_select %p206, %s207, %s208
    %p212 = pneg %p206
    %p213 = scmp.eq.s32.totalorder %s14, 1
    %p214 = por %p212, %p213
    %p215 = scmp.ne.s32.totalorder %s207, %s210
    %p216 = scmp.eq.s32.totalorder %s14, 0
    %p217 = por %p215, %p216
    %p218 = scmp.ne.s32.totalorder %s207, %s210
    %p219 = scmp.eq.s32.totalorder %s19, 1
    %p220 = por %p218, %p219
    %p221 = scmp.ne.s32.totalorder %s210, %s211
    %p222 = scmp.eq.s32.totalorder %s19, 0
    %p223 = por %p221, %p222
    %p224 = scmp.ne.s32.totalorder %s210, %s211
    %p225 = scmp.eq.s32.totalorder %s20, 1
    %p226 = por %p224, %p225
    %p228 = scmp.ne.s32.totalorder %s211, %s227
    %p229 = scmp.eq.s32.totalorder %s20, 0
    %p230 = por %p228, %p229
    %p231 = scmp.le.s32.totalorder 1, %s14
    %p232 = scmp.lt.s32.totalorder %s14, 3
    %p233 = pnand %p231, %p232
    %p234 = pneg %p233
    // Predicated region
    $region9: #{segnn_graph_layers_forward.10} parent=5 // pred_check
      _
    $region10: #{segnn_graph_layers_forward.10} parent=5 // pred_check_branch
      %236 = sbr.rel (%p233) target = $region12
    $region11: #{segnn_graph_layers_forward.10} parent=5 // pred_region
      %s237 = ssub.s32 %s14, 1
      // Predicated region
      $region13: #{segnn_graph_layers_forward.10} parent=11 // pred_check
        %p238 = pneg %p113
      $region14: #{segnn_graph_layers_forward.10} parent=11 // pred_check_branch
        %240 = sbr.rel (%p238) target = $region16
      $region15: #{segnn_graph_layers_forward.10} parent=11 // pred_region
        _
      $region16: #{segnn_graph_layers_forward.10} parent=11 // pred_fallthru
        _
      // Predicated region
      $region17: #{segnn_graph_layers_forward.10} parent=11 // pred_check
        %p241 = pneg %p134
      $region18: #{segnn_graph_layers_forward.10} parent=11 // pred_check_branch
        %243 = sbr.rel (%p241) target = $region20
      $region19: #{segnn_graph_layers_forward.10} parent=11 // pred_region
        _
      $region20: #{segnn_graph_layers_forward.10} parent=11 // pred_fallthru
        _
      // Predicated region
      $region21: #{segnn_graph_layers_forward.10} parent=11 // pred_check
        %p244 = pneg %p155
      $region22: #{segnn_graph_layers_forward.10} parent=11 // pred_check_branch
        %246 = sbr.rel (%p244) target = $region24
      $region23: #{segnn_graph_layers_forward.10} parent=11 // pred_region
        _
      $region24: #{segnn_graph_layers_forward.10} parent=11 // pred_fallthru
        _
      // Predicated region
      $region25: #{segnn_graph_layers_forward.10} parent=11 // pred_check
        %p247 = pneg %p176
      $region26: #{segnn_graph_layers_forward.10} parent=11 // pred_check_branch
        %249 = sbr.rel (%p247) target = $region28
      $region27: #{segnn_graph_layers_forward.10} parent=11 // pred_region
        _
      $region28: #{segnn_graph_layers_forward.10} parent=11 // pred_fallthru
        _
      // Predicated region
      $region29: #{segnn_graph_layers_forward.10} parent=11 // pred_check
        %p250 = pneg %p197
      $region30: #{segnn_graph_layers_forward.10} parent=11 // pred_check_branch
        %252 = sbr.rel (%p250) target = $region32
      $region31: #{segnn_graph_layers_forward.10} parent=11 // pred_region
        _
      $region32: #{segnn_graph_layers_forward.10} parent=11 // pred_fallthru
        _
    $region12: #{segnn_graph_layers_forward.10} parent=5 // pred_fallthru
      _
    %p253 = scmp.lt.s32.totalorder %s14, 2
    // Predicated region
    $region33: #{segnn_graph_layers_forward.10} parent=5 // pred_check
      %p254 = pneg %p253
    $region34: #{segnn_graph_layers_forward.10} parent=5 // pred_check_branch
      %256 = sbr.rel (%p254) target = $region36
    $region35: #{segnn_graph_layers_forward.10} parent=5 // pred_region
      // Predicated region
      $region37: #{segnn_graph_layers_forward.10} parent=35 // pred_check
        %p257 = pneg %p34
      $region38: #{segnn_graph_layers_forward.10} parent=35 // pred_check_branch
        %259 = sbr.rel (%p257) target = $region40
      $region39: #{segnn_graph_layers_forward.10} parent=35 // pred_region
        %s260 = smul.u32 4, %s14
        %p261 = scmp.lt.s32.totalorder %s260, 7
        %s262 = scalar_select %p261, %s260, 7
        %s263 = smul.addr %s262, 4
        %s264 = scalar_lea.vmem %s0, %s263
        %s265 = smul.u32 4, %s14
      $region40: #{segnn_graph_layers_forward.10} parent=35 // pred_fallthru
        _
      // Predicated region
      $region41: #{segnn_graph_layers_forward.10} parent=35 // pred_check
        %p266 = pneg %p60
      $region42: #{segnn_graph_layers_forward.10} parent=35 // pred_check_branch
        %268 = sbr.rel (%p266) target = $region44
      $region43: #{segnn_graph_layers_forward.10} parent=35 // pred_region
        %s269 = smul.u32 4, %s14
        %p270 = scmp.lt.s32.totalorder %s269, 7
        %s271 = scalar_select %p270, %s269, 7
        %s272 = smul.addr %s271, 4
        %s273 = scalar_lea.vmem %s1, %s272
        %s274 = smul.u32 4, %s14
      $region44: #{segnn_graph_layers_forward.10} parent=35 // pred_fallthru
        _
      // Predicated region
      $region45: #{segnn_graph_layers_forward.10} parent=35 // pred_check
        %p275 = pneg %p86
      $region46: #{segnn_graph_layers_forward.10} parent=35 // pred_check_branch
        %277 = sbr.rel (%p275) target = $region48
      $region47: #{segnn_graph_layers_forward.10} parent=35 // pred_region
        %s278 = smul.u32 4, %s14
        %p279 = scmp.lt.s32.totalorder %s278, 7
        %s280 = scalar_select %p279, %s278, 7
        %s281 = smul.addr %s280, 4
        %s282 = scalar_lea.vmem %s2, %s281
        %s283 = smul.u32 4, %s14
      $region48: #{segnn_graph_layers_forward.10} parent=35 // pred_fallthru
        _
    $region36: #{segnn_graph_layers_forward.10} parent=5 // pred_fallthru
      _
    %p284 = scmp.le.s32.totalorder 1, %s14
    %p285 = scmp.lt.s32.totalorder %s14, 3
    %p286 = pnand %p284, %p285
    %p287 = pneg %p286
    // Predicated region
    $region49: #{segnn_graph_layers_forward.10} parent=5 // pred_check
      _
    $region50: #{segnn_graph_layers_forward.10} parent=5 // pred_check_branch
      %289 = sbr.rel (%p286) target = $region52
    $region51: #{segnn_graph_layers_forward.10} parent=5 // pred_region
      %s290 = ssub.s32 %s14, 1
      %s291 = smul.u32 4, %s19
      %p292 = scmp.lt.s32.totalorder %s291, 7
      %s293 = scalar_select %p292, %s291, 7
      %s294 = smul.addr %s293, 4
      %s295 = scalar_lea.vmem %s0, %s294
      %p296 = pneg %p40
      %p297 = pneg %p37
      %s298 = smul.u32 4, %s19
      %p299 = scmp.lt.s32.totalorder %s298, 7
      %s300 = scalar_select %p299, %s298, 7
      %s301 = smul.addr %s300, 4
      %s302 = scalar_lea.vmem %s1, %s301
      %p303 = pneg %p66
      %p304 = pneg %p63
      %s305 = smul.u32 4, %s19
      %p306 = scmp.lt.s32.totalorder %s305, 7
      %s307 = scalar_select %p306, %s305, 7
      %s308 = smul.addr %s307, 4
      %s309 = scalar_lea.vmem %s2, %s308
      %p310 = pneg %p92
      %p311 = pneg %p89
      %p312 = pneg %p113
      %p313 = pneg %p110
      %p314 = pneg %p134
      %p315 = pneg %p131
      %p316 = pneg %p155
      %p317 = pneg %p152
      %p318 = pneg %p176
      %p319 = pneg %p173
      %p320 = pneg %p197
      %p321 = pneg %p194
      %p322 = pneg %p223
      %p323 = pneg %p220
      %s324 = smul.u32 4, %s19
      %p325 = scmp.lt.s32.totalorder %s324, 7
      %s326 = scalar_select %p325, %s324, 7
      %s327 = smul.addr %s326, 4
      %s328 = scalar_lea.vmem %s8, %s327
      %s329 = smul.u32 4, %s19
      %p330 = scmp.lt.s32.totalorder %s329, 7
      %s331 = scalar_select %p330, %s329, 7
      %s332 = smul.addr %s331, 4
      %s333 = scalar_lea.vmem %s0, %s332
      %s334 = smul.u32 4, %s19
      %s335 = smul.u32 4, %s19
      %p336 = scmp.lt.s32.totalorder %s335, 7
      %s337 = scalar_select %p336, %s335, 7
      %s338 = smul.addr %s337, 4
      %s339 = scalar_lea.vmem %s1, %s338
      %s340 = smul.u32 4, %s19
      %s341 = smul.u32 4, %s19
      %p342 = scmp.lt.s32.totalorder %s341, 7
      %s343 = scalar_select %p342, %s341, 7
      %s344 = smul.addr %s343, 4
      %s345 = scalar_lea.vmem %s2, %s344
      %s346 = smul.u32 4, %s19
      %s347 = smul.u32 4, %s19
      %p348 = scmp.lt.s32.totalorder %s347, 7
      %s349 = scalar_select %p348, %s347, 7
      %s350 = smul.addr %s349, 4
      %s351 = scalar_lea.vmem %s8, %s350
      %s352 = smul.u32 4, %s19
      %v353 = vld [vmem:[%s345] sm:$0xf]
      %v354 = vld [vmem:[%s345 + $0x4] sm:$0xf]
      %v355 = vld [vmem:[%s345 + $0x8] sm:$0xf]
      %v356 = vld [vmem:[%s345 + $0xc] sm:$0xf]
      %v357 = vunpack.c.l.bf16 %v353
      %v358 = vunpack.c.l.bf16 %v354
      %v359 = vunpack.c.l.bf16 %v355
      %v360 = vunpack.c.l.bf16 %v356
      %v361 = vld [vmem:[%s333] sm:$0xf]
      %v362 = vld [vmem:[%s333 + $0x4] sm:$0xf]
      %v363 = vld [vmem:[%s333 + $0x8] sm:$0xf]
      %v364 = vld [vmem:[%s333 + $0xc] sm:$0xf]
      %v365 = vld [vmem:[%s3] sm:$0xff]
      %v366 = vld [vmem:[%s3 + $0x8] sm:$0xff]
      %v367 = vld [vmem:[%s3 + $0x10] sm:$0xff]
      %v368 = vld [vmem:[%s3 + $0x18] sm:$0xff]
      %v369 = vld [vmem:[%s3 + $0x20] sm:$0xff]
      %v370 = vld [vmem:[%s3 + $0x28] sm:$0xff]
      %v371 = vld [vmem:[%s3 + $0x30] sm:$0xff]
      %v372 = vld [vmem:[%s3 + $0x38] sm:$0xff]
      %v373 = vld [vmem:[%s3 + $0x40] sm:$0xff]
      %v374 = vld [vmem:[%s3 + $0x48] sm:$0xff]
      %v375 = vld [vmem:[%s3 + $0x50] sm:$0xff]
      %v376 = vld [vmem:[%s3 + $0x58] sm:$0xff]
      %v377 = vld [vmem:[%s3 + $0x60] sm:$0xff]
      %v378 = vld [vmem:[%s3 + $0x68] sm:$0xff]
      %v379 = vld [vmem:[%s3 + $0x70] sm:$0xff]
      %v380 = vld [vmem:[%s3 + $0x78] sm:$0xff]
      %v381 = vld [vmem:[%s3 + $0x80] sm:$0xff]
      %v382 = vld [vmem:[%s3 + $0x88] sm:$0xff]
      %v383 = vld [vmem:[%s3 + $0x90] sm:$0xff]
      %v384 = vld [vmem:[%s3 + $0x98] sm:$0xff]
      %v385 = vld [vmem:[%s3 + $0xa0] sm:$0xff]
      %v386 = vld [vmem:[%s3 + $0xa8] sm:$0xff]
      %v387 = vld [vmem:[%s3 + $0xb0] sm:$0xff]
      %v388 = vld [vmem:[%s3 + $0xb8] sm:$0xff]
      %v389 = vld [vmem:[%s3 + $0xc0] sm:$0xff]
      %v390 = vld [vmem:[%s3 + $0xc8] sm:$0xff]
      %v391 = vld [vmem:[%s3 + $0xd0] sm:$0xff]
      %v392 = vld [vmem:[%s3 + $0xd8] sm:$0xff]
      %v393 = vld [vmem:[%s3 + $0xe0] sm:$0xff]
      %v394 = vld [vmem:[%s3 + $0xe8] sm:$0xff]
      %v395 = vld [vmem:[%s3 + $0xf0] sm:$0xff]
      %v396 = vld [vmem:[%s3 + $0xf8] sm:$0xff]
      %v397 = vld [vmem:[%s3 + $0x100] sm:$0xff]
      %v398 = vld [vmem:[%s3 + $0x108] sm:$0xff]
      %v399 = vld [vmem:[%s3 + $0x110] sm:$0xff]
      %v400 = vld [vmem:[%s3 + $0x118] sm:$0xff]
      %v401 = vld [vmem:[%s3 + $0x120] sm:$0xff]
      %v402 = vld [vmem:[%s3 + $0x128] sm:$0xff]
      %v403 = vld [vmem:[%s3 + $0x130] sm:$0xff]
      %v404 = vld [vmem:[%s3 + $0x138] sm:$0xff]
      %v405 = vld [vmem:[%s3 + $0x140] sm:$0xff]
      %v406 = vld [vmem:[%s3 + $0x148] sm:$0xff]
      %v407 = vld [vmem:[%s3 + $0x150] sm:$0xff]
      %v408 = vld [vmem:[%s3 + $0x158] sm:$0xff]
      %v409 = vld [vmem:[%s3 + $0x160] sm:$0xff]
      %v410 = vld [vmem:[%s3 + $0x168] sm:$0xff]
      %v411 = vld [vmem:[%s3 + $0x170] sm:$0xff]
      %v412 = vld [vmem:[%s3 + $0x178] sm:$0xff]
      %v413 = vld [vmem:[%s3 + $0x180] sm:$0xff]
      %v414 = vld [vmem:[%s3 + $0x188] sm:$0xff]
      %v415 = vld [vmem:[%s3 + $0x190] sm:$0xff]
      %v416 = vld [vmem:[%s3 + $0x198] sm:$0xff]
      %v417 = vld [vmem:[%s3 + $0x1a0] sm:$0xff]
      %v418 = vld [vmem:[%s3 + $0x1a8] sm:$0xff]
      %v419 = vld [vmem:[%s3 + $0x1b0] sm:$0xff]
      %v420 = vld [vmem:[%s3 + $0x1b8] sm:$0xff]
      %v421 = vld [vmem:[%s3 + $0x1c0] sm:$0xff]
      %v422 = vld [vmem:[%s3 + $0x1c8] sm:$0xff]
      %v423 = vld [vmem:[%s3 + $0x1d0] sm:$0xff]
      %v424 = vld [vmem:[%s3 + $0x1d8] sm:$0xff]
      %v425 = vld [vmem:[%s3 + $0x1e0] sm:$0xff]
      %v426 = vld [vmem:[%s3 + $0x1e8] sm:$0xff]
      %v427 = vld [vmem:[%s3 + $0x1f0] sm:$0xff]
      %v428 = vld [vmem:[%s3 + $0x1f8] sm:$0xff]
      %v429 = vld [vmem:[%s339] sm:$0xf]
      %v430 = vld [vmem:[%s339 + $0x4] sm:$0xf]
      %v431 = vld [vmem:[%s339 + $0x8] sm:$0xf]
      %v432 = vld [vmem:[%s339 + $0xc] sm:$0xf]
      %v433 = vld [vmem:[%s4] sm:$0xff]
      %v434 = vld [vmem:[%s4 + $0x8] sm:$0xff]
      %v435 = vld [vmem:[%s4 + $0x10] sm:$0xff]
      %v436 = vld [vmem:[%s4 + $0x18] sm:$0xff]
      %v437 = vld [vmem:[%s4 + $0x20] sm:$0xff]
      %v438 = vld [vmem:[%s4 + $0x28] sm:$0xff]
      %v439 = vld [vmem:[%s4 + $0x30] sm:$0xff]
      %v440 = vld [vmem:[%s4 + $0x38] sm:$0xff]
      %v441 = vld [vmem:[%s4 + $0x40] sm:$0xff]
      %v442 = vld [vmem:[%s4 + $0x48] sm:$0xff]
      %v443 = vld [vmem:[%s4 + $0x50] sm:$0xff]
      %v444 = vld [vmem:[%s4 + $0x58] sm:$0xff]
      %v445 = vld [vmem:[%s4 + $0x60] sm:$0xff]
      %v446 = vld [vmem:[%s4 + $0x68] sm:$0xff]
      %v447 = vld [vmem:[%s4 + $0x70] sm:$0xff]
      %v448 = vld [vmem:[%s4 + $0x78] sm:$0xff]
      %v449 = vld [vmem:[%s4 + $0x80] sm:$0xff]
      %v450 = vld [vmem:[%s4 + $0x88] sm:$0xff]
      %v451 = vld [vmem:[%s4 + $0x90] sm:$0xff]
      %v452 = vld [vmem:[%s4 + $0x98] sm:$0xff]
      %v453 = vld [vmem:[%s4 + $0xa0] sm:$0xff]
      %v454 = vld [vmem:[%s4 + $0xa8] sm:$0xff]
      %v455 = vld [vmem:[%s4 + $0xb0] sm:$0xff]
      %v456 = vld [vmem:[%s4 + $0xb8] sm:$0xff]
      %v457 = vld [vmem:[%s4 + $0xc0] sm:$0xff]
      %v458 = vld [vmem:[%s4 + $0xc8] sm:$0xff]
      %v459 = vld [vmem:[%s4 + $0xd0] sm:$0xff]
      %v460 = vld [vmem:[%s4 + $0xd8] sm:$0xff]
      %v461 = vld [vmem:[%s4 + $0xe0] sm:$0xff]
      %v462 = vld [vmem:[%s4 + $0xe8] sm:$0xff]
      %v463 = vld [vmem:[%s4 + $0xf0] sm:$0xff]
      %v464 = vld [vmem:[%s4 + $0xf8] sm:$0xff]
      %v465 = vld [vmem:[%s4 + $0x100] sm:$0xff]
      %v466 = vld [vmem:[%s4 + $0x108] sm:$0xff]
      %v467 = vld [vmem:[%s4 + $0x110] sm:$0xff]
      %v468 = vld [vmem:[%s4 + $0x118] sm:$0xff]
      %v469 = vld [vmem:[%s4 + $0x120] sm:$0xff]
      %v470 = vld [vmem:[%s4 + $0x128] sm:$0xff]
      %v471 = vld [vmem:[%s4 + $0x130] sm:$0xff]
      %v472 = vld [vmem:[%s4 + $0x138] sm:$0xff]
      %v473 = vld [vmem:[%s4 + $0x140] sm:$0xff]
      %v474 = vld [vmem:[%s4 + $0x148] sm:$0xff]
      %v475 = vld [vmem:[%s4 + $0x150] sm:$0xff]
      %v476 = vld [vmem:[%s4 + $0x158] sm:$0xff]
      %v477 = vld [vmem:[%s4 + $0x160] sm:$0xff]
      %v478 = vld [vmem:[%s4 + $0x168] sm:$0xff]
      %v479 = vld [vmem:[%s4 + $0x170] sm:$0xff]
      %v480 = vld [vmem:[%s4 + $0x178] sm:$0xff]
      %v481 = vld [vmem:[%s4 + $0x180] sm:$0xff]
      %v482 = vld [vmem:[%s4 + $0x188] sm:$0xff]
      %v483 = vld [vmem:[%s4 + $0x190] sm:$0xff]
      %v484 = vld [vmem:[%s4 + $0x198] sm:$0xff]
      %v485 = vld [vmem:[%s4 + $0x1a0] sm:$0xff]
      %v486 = vld [vmem:[%s4 + $0x1a8] sm:$0xff]
      %v487 = vld [vmem:[%s4 + $0x1b0] sm:$0xff]
      %v488 = vld [vmem:[%s4 + $0x1b8] sm:$0xff]
      %v489 = vld [vmem:[%s4 + $0x1c0] sm:$0xff]
      %v490 = vld [vmem:[%s4 + $0x1c8] sm:$0xff]
      %v491 = vld [vmem:[%s4 + $0x1d0] sm:$0xff]
      %v492 = vld [vmem:[%s4 + $0x1d8] sm:$0xff]
      %v493 = vld [vmem:[%s4 + $0x1e0] sm:$0xff]
      %v494 = vld [vmem:[%s4 + $0x1e8] sm:$0xff]
      %v495 = vld [vmem:[%s4 + $0x1f0] sm:$0xff]
      %v496 = vld [vmem:[%s4 + $0x1f8] sm:$0xff]
      %v501 = vunpack.c.l.b16 %v429
      %v502 = vunpack.c.l.b16 %v430
      %v503 = vunpack.c.l.b16 %v431
      %v504 = vunpack.c.l.b16 %v432
      %v505 = vpack.c.b16 %v502, %v501
      %v506 = vpack.c.b16 %v504, %v503
      %v573 = vunpack.c.l.b16 %v433
      %v574 = vunpack.c.h.b16 %v433
      %v575 = vunpack.c.l.b16 %v434
      %v576 = vunpack.c.h.b16 %v434
      %v577 = vunpack.c.l.b16 %v435
      %v578 = vunpack.c.h.b16 %v435
      %v579 = vunpack.c.l.b16 %v436
      %v580 = vunpack.c.h.b16 %v436
      %v581 = vunpack.c.l.b16 %v437
      %v582 = vunpack.c.h.b16 %v437
      %v583 = vunpack.c.l.b16 %v438
      %v584 = vunpack.c.h.b16 %v438
      %v585 = vunpack.c.l.b16 %v439
      %v586 = vunpack.c.h.b16 %v439
      %v587 = vunpack.c.l.b16 %v440
      %v588 = vunpack.c.h.b16 %v440
      %v589 = vunpack.c.l.b16 %v441
      %v590 = vunpack.c.h.b16 %v441
      %v591 = vunpack.c.l.b16 %v442
      %v592 = vunpack.c.h.b16 %v442
      %v593 = vunpack.c.l.b16 %v443
      %v594 = vunpack.c.h.b16 %v443
      %v595 = vunpack.c.l.b16 %v444
      %v596 = vunpack.c.h.b16 %v444
      %v597 = vunpack.c.l.b16 %v445
      %v598 = vunpack.c.h.b16 %v445
      %v599 = vunpack.c.l.b16 %v446
      %v600 = vunpack.c.h.b16 %v446
      %v601 = vunpack.c.l.b16 %v447
      %v602 = vunpack.c.h.b16 %v447
      %v603 = vunpack.c.l.b16 %v448
      %v604 = vunpack.c.h.b16 %v448
      %v605 = vunpack.c.l.b16 %v449
      %v606 = vunpack.c.h.b16 %v449
      %v607 = vunpack.c.l.b16 %v450
      %v608 = vunpack.c.h.b16 %v450
      %v609 = vunpack.c.l.b16 %v451
      %v610 = vunpack.c.h.b16 %v451
      %v611 = vunpack.c.l.b16 %v452
      %v612 = vunpack.c.h.b16 %v452
      %v613 = vunpack.c.l.b16 %v453
      %v614 = vunpack.c.h.b16 %v453
      %v615 = vunpack.c.l.b16 %v454
      %v616 = vunpack.c.h.b16 %v454
      %v617 = vunpack.c.l.b16 %v455
      %v618 = vunpack.c.h.b16 %v455
      %v619 = vunpack.c.l.b16 %v456
      %v620 = vunpack.c.h.b16 %v456
      %v621 = vunpack.c.l.b16 %v457
      %v622 = vunpack.c.h.b16 %v457
      %v623 = vunpack.c.l.b16 %v458
      %v624 = vunpack.c.h.b16 %v458
      %v625 = vunpack.c.l.b16 %v459
      %v626 = vunpack.c.h.b16 %v459
      %v627 = vunpack.c.l.b16 %v460
      %v628 = vunpack.c.h.b16 %v460
      %v629 = vunpack.c.l.b16 %v461
      %v630 = vunpack.c.h.b16 %v461
      %v631 = vunpack.c.l.b16 %v462
      %v632 = vunpack.c.h.b16 %v462
      %v633 = vunpack.c.l.b16 %v463
      %v634 = vunpack.c.h.b16 %v463
      %v635 = vunpack.c.l.b16 %v464
      %v636 = vunpack.c.h.b16 %v464
      %v637 = vunpack.c.l.b16 %v465
      %v638 = vunpack.c.h.b16 %v465
      %v639 = vunpack.c.l.b16 %v466
      %v640 = vunpack.c.h.b16 %v466
      %v641 = vunpack.c.l.b16 %v467
      %v642 = vunpack.c.h.b16 %v467
      %v643 = vunpack.c.l.b16 %v468
      %v644 = vunpack.c.h.b16 %v468
      %v645 = vunpack.c.l.b16 %v469
      %v646 = vunpack.c.h.b16 %v469
      %v647 = vunpack.c.l.b16 %v470
      %v648 = vunpack.c.h.b16 %v470
      %v649 = vunpack.c.l.b16 %v471
      %v650 = vunpack.c.h.b16 %v471
      %v651 = vunpack.c.l.b16 %v472
      %v652 = vunpack.c.h.b16 %v472
      %v653 = vunpack.c.l.b16 %v473
      %v654 = vunpack.c.h.b16 %v473
      %v655 = vunpack.c.l.b16 %v474
      %v656 = vunpack.c.h.b16 %v474
      %v657 = vunpack.c.l.b16 %v475
      %v658 = vunpack.c.h.b16 %v475
      %v659 = vunpack.c.l.b16 %v476
      %v660 = vunpack.c.h.b16 %v476
      %v661 = vunpack.c.l.b16 %v477
      %v662 = vunpack.c.h.b16 %v477
      %v663 = vunpack.c.l.b16 %v478
      %v664 = vunpack.c.h.b16 %v478
      %v665 = vunpack.c.l.b16 %v479
      %v666 = vunpack.c.h.b16 %v479
      %v667 = vunpack.c.l.b16 %v480
      %v668 = vunpack.c.h.b16 %v480
      %v669 = vunpack.c.l.b16 %v481
      %v670 = vunpack.c.h.b16 %v481
      %v671 = vunpack.c.l.b16 %v482
      %v672 = vunpack.c.h.b16 %v482
      %v673 = vunpack.c.l.b16 %v483
      %v674 = vunpack.c.h.b16 %v483
      %v675 = vunpack.c.l.b16 %v484
      %v676 = vunpack.c.h.b16 %v484
      %v677 = vunpack.c.l.b16 %v485
      %v678 = vunpack.c.h.b16 %v485
      %v679 = vunpack.c.l.b16 %v486
      %v680 = vunpack.c.h.b16 %v486
      %v681 = vunpack.c.l.b16 %v487
      %v682 = vunpack.c.h.b16 %v487
      %v683 = vunpack.c.l.b16 %v488
      %v684 = vunpack.c.h.b16 %v488
      %v685 = vunpack.c.l.b16 %v489
      %v686 = vunpack.c.h.b16 %v489
      %v687 = vunpack.c.l.b16 %v490
      %v688 = vunpack.c.h.b16 %v490
      %v689 = vunpack.c.l.b16 %v491
      %v690 = vunpack.c.h.b16 %v491
      %v691 = vunpack.c.l.b16 %v492
      %v692 = vunpack.c.h.b16 %v492
      %v693 = vunpack.c.l.b16 %v493
      %v694 = vunpack.c.h.b16 %v493
      %v695 = vunpack.c.l.b16 %v494
      %v696 = vunpack.c.h.b16 %v494
      %v697 = vunpack.c.l.b16 %v495
      %v698 = vunpack.c.h.b16 %v495
      %v699 = vunpack.c.l.b16 %v496
      %v700 = vunpack.c.h.b16 %v496
      %v701 = vpack.c.b16 %v581, %v573
      %v702 = vpack.c.b16 %v582, %v574
      %v703 = vpack.c.b16 %v583, %v575
      %v704 = vpack.c.b16 %v584, %v576
      %v705 = vpack.c.b16 %v585, %v577
      %v706 = vpack.c.b16 %v586, %v578
      %v707 = vpack.c.b16 %v587, %v579
      %v708 = vpack.c.b16 %v588, %v580
      %v709 = vpack.c.b16 %v597, %v589
      %v710 = vpack.c.b16 %v598, %v590
      %v711 = vpack.c.b16 %v599, %v591
      %v712 = vpack.c.b16 %v600, %v592
      %v713 = vpack.c.b16 %v601, %v593
      %v714 = vpack.c.b16 %v602, %v594
      %v715 = vpack.c.b16 %v603, %v595
      %v716 = vpack.c.b16 %v604, %v596
      %v717 = vpack.c.b16 %v613, %v605
      %v718 = vpack.c.b16 %v614, %v606
      %v719 = vpack.c.b16 %v615, %v607
      %v720 = vpack.c.b16 %v616, %v608
      %v721 = vpack.c.b16 %v617, %v609
      %v722 = vpack.c.b16 %v618, %v610
      %v723 = vpack.c.b16 %v619, %v611
      %v724 = vpack.c.b16 %v620, %v612
      %v725 = vpack.c.b16 %v629, %v621
      %v726 = vpack.c.b16 %v630, %v622
      %v727 = vpack.c.b16 %v631, %v623
      %v728 = vpack.c.b16 %v632, %v624
      %v729 = vpack.c.b16 %v633, %v625
      %v730 = vpack.c.b16 %v634, %v626
      %v731 = vpack.c.b16 %v635, %v627
      %v732 = vpack.c.b16 %v636, %v628
      %v733 = vpack.c.b16 %v645, %v637
      %v734 = vpack.c.b16 %v646, %v638
      %v735 = vpack.c.b16 %v647, %v639
      %v736 = vpack.c.b16 %v648, %v640
      %v737 = vpack.c.b16 %v649, %v641
      %v738 = vpack.c.b16 %v650, %v642
      %v739 = vpack.c.b16 %v651, %v643
      %v740 = vpack.c.b16 %v652, %v644
      %v741 = vpack.c.b16 %v661, %v653
      %v742 = vpack.c.b16 %v662, %v654
      %v743 = vpack.c.b16 %v663, %v655
      %v744 = vpack.c.b16 %v664, %v656
      %v745 = vpack.c.b16 %v665, %v657
      %v746 = vpack.c.b16 %v666, %v658
      %v747 = vpack.c.b16 %v667, %v659
      %v748 = vpack.c.b16 %v668, %v660
      %v749 = vpack.c.b16 %v677, %v669
      %v750 = vpack.c.b16 %v678, %v670
      %v751 = vpack.c.b16 %v679, %v671
      %v752 = vpack.c.b16 %v680, %v672
      %v753 = vpack.c.b16 %v681, %v673
      %v754 = vpack.c.b16 %v682, %v674
      %v755 = vpack.c.b16 %v683, %v675
      %v756 = vpack.c.b16 %v684, %v676
      %v757 = vpack.c.b16 %v693, %v685
      %v758 = vpack.c.b16 %v694, %v686
      %v759 = vpack.c.b16 %v695, %v687
      %v760 = vpack.c.b16 %v696, %v688
      %v761 = vpack.c.b16 %v697, %v689
      %v762 = vpack.c.b16 %v698, %v690
      %v763 = vpack.c.b16 %v699, %v691
      %v764 = vpack.c.b16 %v700, %v692
      %829 = vmatpush.bf16.msra.mxu0 %v757
      %830 = vmatpush.bf16.msra.mxu0 %v749
      %831 = vmatpush.bf16.msra.mxu0 %v741
      %832 = vmatpush.bf16.msra.mxu0 %v733
      %833 = vmatpush.bf16.msra.mxu0 %v725
      %834 = vmatpush.bf16.msra.mxu0 %v717
      %835 = vmatpush.bf16.msra.mxu0 %v709
      %836 = vmatpush.bf16.msra.mxu0 %v701
      %837 = vmatmul.bf16.gmra.mxu0 %v505
      %v838 = vpop.f32.mrf.mxu0
      %v839 = vadd.f32 0.0, %v838
      %v840 = vpop.f32.mrf.mxu0
      %v841 = vadd.f32 0.0, %v840
      %842 = vmatmul.bf16.gmra.mxu0 %v506
      %v843 = vpop.f32.mrf.mxu0
      %v844 = vadd.f32 0.0, %v843
      %v845 = vpop.f32.mrf.mxu0
      %v846 = vadd.f32 0.0, %v845
      %847 = vdwg.mxu0
      %848 = vmatpush.bf16.msra.mxu0 %v758
      %849 = vmatpush.bf16.msra.mxu0 %v750
      %850 = vmatpush.bf16.msra.mxu0 %v742
      %851 = vmatpush.bf16.msra.mxu0 %v734
      %852 = vmatpush.bf16.msra.mxu0 %v726
      %853 = vmatpush.bf16.msra.mxu0 %v718
      %854 = vmatpush.bf16.msra.mxu0 %v710
      %855 = vmatpush.bf16.msra.mxu0 %v702
      %856 = vmatmul.bf16.gmra.mxu0 %v505
      %v857 = vpop.f32.mrf.mxu0
      %v858 = vadd.f32 0.0, %v857
      %v859 = vpop.f32.mrf.mxu0
      %v860 = vadd.f32 0.0, %v859
      %861 = vmatmul.bf16.gmra.mxu0 %v506
      %v862 = vpop.f32.mrf.mxu0
      %v863 = vadd.f32 0.0, %v862
      %v864 = vpop.f32.mrf.mxu0
      %v865 = vadd.f32 0.0, %v864
      %866 = vdwg.mxu0
      %867 = vmatpush.bf16.msra.mxu0 %v759
      %868 = vmatpush.bf16.msra.mxu0 %v751
      %869 = vmatpush.bf16.msra.mxu0 %v743
      %870 = vmatpush.bf16.msra.mxu0 %v735
      %871 = vmatpush.bf16.msra.mxu0 %v727
      %872 = vmatpush.bf16.msra.mxu0 %v719
      %873 = vmatpush.bf16.msra.mxu0 %v711
      %874 = vmatpush.bf16.msra.mxu0 %v703
      %875 = vmatmul.bf16.gmra.mxu0 %v505
      %v876 = vpop.f32.mrf.mxu0
      %v877 = vadd.f32 0.0, %v876
      %v878 = vpop.f32.mrf.mxu0
      %v879 = vadd.f32 0.0, %v878
      %880 = vmatmul.bf16.gmra.mxu0 %v506
      %v881 = vpop.f32.mrf.mxu0
      %v882 = vadd.f32 0.0, %v881
      %v883 = vpop.f32.mrf.mxu0
      %v884 = vadd.f32 0.0, %v883
      %885 = vdwg.mxu0
      %886 = vmatpush.bf16.msra.mxu0 %v760
      %887 = vmatpush.bf16.msra.mxu0 %v752
      %888 = vmatpush.bf16.msra.mxu0 %v744
      %889 = vmatpush.bf16.msra.mxu0 %v736
      %890 = vmatpush.bf16.msra.mxu0 %v728
      %891 = vmatpush.bf16.msra.mxu0 %v720
      %892 = vmatpush.bf16.msra.mxu0 %v712
      %893 = vmatpush.bf16.msra.mxu0 %v704
      %894 = vmatmul.bf16.gmra.mxu0 %v505
      %v895 = vpop.f32.mrf.mxu0
      %v896 = vadd.f32 0.0, %v895
      %v897 = vpop.f32.mrf.mxu0
      %v898 = vadd.f32 0.0, %v897
      %899 = vmatmul.bf16.gmra.mxu0 %v506
      %v900 = vpop.f32.mrf.mxu0
      %v901 = vadd.f32 0.0, %v900
      %v902 = vpop.f32.mrf.mxu0
      %v903 = vadd.f32 0.0, %v902
      %904 = vdwg.mxu0
      %905 = vmatpush.bf16.msra.mxu0 %v761
      %906 = vmatpush.bf16.msra.mxu0 %v753
      %907 = vmatpush.bf16.msra.mxu0 %v745
      %908 = vmatpush.bf16.msra.mxu0 %v737
      %909 = vmatpush.bf16.msra.mxu0 %v729
      %910 = vmatpush.bf16.msra.mxu0 %v721
      %911 = vmatpush.bf16.msra.mxu0 %v713
      %912 = vmatpush.bf16.msra.mxu0 %v705
      %913 = vmatmul.bf16.gmra.mxu0 %v505
      %v914 = vpop.f32.mrf.mxu0
      %v915 = vadd.f32 0.0, %v914
      %v916 = vpop.f32.mrf.mxu0
      %v917 = vadd.f32 0.0, %v916
      %918 = vmatmul.bf16.gmra.mxu0 %v506
      %v919 = vpop.f32.mrf.mxu0
      %v920 = vadd.f32 0.0, %v919
      %v921 = vpop.f32.mrf.mxu0
      %v922 = vadd.f32 0.0, %v921
      %923 = vdwg.mxu0
      %924 = vmatpush.bf16.msra.mxu0 %v762
      %925 = vmatpush.bf16.msra.mxu0 %v754
      %926 = vmatpush.bf16.msra.mxu0 %v746
      %927 = vmatpush.bf16.msra.mxu0 %v738
      %928 = vmatpush.bf16.msra.mxu0 %v730
      %929 = vmatpush.bf16.msra.mxu0 %v722
      %930 = vmatpush.bf16.msra.mxu0 %v714
      %931 = vmatpush.bf16.msra.mxu0 %v706
      %932 = vmatmul.bf16.gmra.mxu0 %v505
      %v933 = vpop.f32.mrf.mxu0
      %v934 = vadd.f32 0.0, %v933
      %v935 = vpop.f32.mrf.mxu0
      %v936 = vadd.f32 0.0, %v935
      %937 = vmatmul.bf16.gmra.mxu0 %v506
      %v938 = vpop.f32.mrf.mxu0
      %v939 = vadd.f32 0.0, %v938
      %v940 = vpop.f32.mrf.mxu0
      %v941 = vadd.f32 0.0, %v940
      %942 = vdwg.mxu0
      %943 = vmatpush.bf16.msra.mxu0 %v763
      %944 = vmatpush.bf16.msra.mxu0 %v755
      %945 = vmatpush.bf16.msra.mxu0 %v747
      %946 = vmatpush.bf16.msra.mxu0 %v739
      %947 = vmatpush.bf16.msra.mxu0 %v731
      %948 = vmatpush.bf16.msra.mxu0 %v723
      %949 = vmatpush.bf16.msra.mxu0 %v715
      %950 = vmatpush.bf16.msra.mxu0 %v707
      %951 = vmatmul.bf16.gmra.mxu0 %v505
      %v952 = vpop.f32.mrf.mxu0
      %v953 = vadd.f32 0.0, %v952
      %v954 = vpop.f32.mrf.mxu0
      %v955 = vadd.f32 0.0, %v954
      %956 = vmatmul.bf16.gmra.mxu0 %v506
      %v957 = vpop.f32.mrf.mxu0
      %v958 = vadd.f32 0.0, %v957
      %v959 = vpop.f32.mrf.mxu0
      %v960 = vadd.f32 0.0, %v959
      %961 = vdwg.mxu0
      %962 = vmatpush.bf16.msra.mxu0 %v764
      %963 = vmatpush.bf16.msra.mxu0 %v756
      %964 = vmatpush.bf16.msra.mxu0 %v748
      %965 = vmatpush.bf16.msra.mxu0 %v740
      %966 = vmatpush.bf16.msra.mxu0 %v732
      %967 = vmatpush.bf16.msra.mxu0 %v724
      %968 = vmatpush.bf16.msra.mxu0 %v716
      %969 = vmatpush.bf16.msra.mxu0 %v708
      %970 = vmatmul.bf16.gmra.mxu0 %v505
      %v971 = vpop.f32.mrf.mxu0
      %v972 = vadd.f32 0.0, %v971
      %v973 = vpop.f32.mrf.mxu0
      %v974 = vadd.f32 0.0, %v973
      %975 = vmatmul.bf16.gmra.mxu0 %v506
      %v976 = vpop.f32.mrf.mxu0
      %v977 = vadd.f32 0.0, %v976
      %v978 = vpop.f32.mrf.mxu0
      %v979 = vadd.f32 0.0, %v978
      %980 = vdwg.mxu0
      %v985 = vunpack.c.l.b16 %v361
      %v986 = vunpack.c.l.b16 %v362
      %v987 = vunpack.c.l.b16 %v363
      %v988 = vunpack.c.l.b16 %v364
      %v989 = vpack.c.b16 %v986, %v985
      %v990 = vpack.c.b16 %v988, %v987
      %v1057 = vunpack.c.l.b16 %v365
      %v1058 = vunpack.c.h.b16 %v365
      %v1059 = vunpack.c.l.b16 %v366
      %v1060 = vunpack.c.h.b16 %v366
      %v1061 = vunpack.c.l.b16 %v367
      %v1062 = vunpack.c.h.b16 %v367
      %v1063 = vunpack.c.l.b16 %v368
      %v1064 = vunpack.c.h.b16 %v368
      %v1065 = vunpack.c.l.b16 %v369
      %v1066 = vunpack.c.h.b16 %v369
      %v1067 = vunpack.c.l.b16 %v370
      %v1068 = vunpack.c.h.b16 %v370
      %v1069 = vunpack.c.l.b16 %v371
      %v1070 = vunpack.c.h.b16 %v371
      %v1071 = vunpack.c.l.b16 %v372
      %v1072 = vunpack.c.h.b16 %v372
      %v1073 = vunpack.c.l.b16 %v373
      %v1074 = vunpack.c.h.b16 %v373
      %v1075 = vunpack.c.l.b16 %v374
      %v1076 = vunpack.c.h.b16 %v374
      %v1077 = vunpack.c.l.b16 %v375
      %v1078 = vunpack.c.h.b16 %v375
      %v1079 = vunpack.c.l.b16 %v376
      %v1080 = vunpack.c.h.b16 %v376
      %v1081 = vunpack.c.l.b16 %v377
      %v1082 = vunpack.c.h.b16 %v377
      %v1083 = vunpack.c.l.b16 %v378
      %v1084 = vunpack.c.h.b16 %v378
      %v1085 = vunpack.c.l.b16 %v379
      %v1086 = vunpack.c.h.b16 %v379
      %v1087 = vunpack.c.l.b16 %v380
      %v1088 = vunpack.c.h.b16 %v380
      %v1089 = vunpack.c.l.b16 %v381
      %v1090 = vunpack.c.h.b16 %v381
      %v1091 = vunpack.c.l.b16 %v382
      %v1092 = vunpack.c.h.b16 %v382
      %v1093 = vunpack.c.l.b16 %v383
      %v1094 = vunpack.c.h.b16 %v383
      %v1095 = vunpack.c.l.b16 %v384
      %v1096 = vunpack.c.h.b16 %v384
      %v1097 = vunpack.c.l.b16 %v385
      %v1098 = vunpack.c.h.b16 %v385
      %v1099 = vunpack.c.l.b16 %v386
      %v1100 = vunpack.c.h.b16 %v386
      %v1101 = vunpack.c.l.b16 %v387
      %v1102 = vunpack.c.h.b16 %v387
      %v1103 = vunpack.c.l.b16 %v388
      %v1104 = vunpack.c.h.b16 %v388
      %v1105 = vunpack.c.l.b16 %v389
      %v1106 = vunpack.c.h.b16 %v389
      %v1107 = vunpack.c.l.b16 %v390
      %v1108 = vunpack.c.h.b16 %v390
      %v1109 = vunpack.c.l.b16 %v391
      %v1110 = vunpack.c.h.b16 %v391
      %v1111 = vunpack.c.l.b16 %v392
      %v1112 = vunpack.c.h.b16 %v392
      %v1113 = vunpack.c.l.b16 %v393
      %v1114 = vunpack.c.h.b16 %v393
      %v1115 = vunpack.c.l.b16 %v394
      %v1116 = vunpack.c.h.b16 %v394
      %v1117 = vunpack.c.l.b16 %v395
      %v1118 = vunpack.c.h.b16 %v395
      %v1119 = vunpack.c.l.b16 %v396
      %v1120 = vunpack.c.h.b16 %v396
      %v1121 = vunpack.c.l.b16 %v397
      %v1122 = vunpack.c.h.b16 %v397
      %v1123 = vunpack.c.l.b16 %v398
      %v1124 = vunpack.c.h.b16 %v398
      %v1125 = vunpack.c.l.b16 %v399
      %v1126 = vunpack.c.h.b16 %v399
      %v1127 = vunpack.c.l.b16 %v400
      %v1128 = vunpack.c.h.b16 %v400
      %v1129 = vunpack.c.l.b16 %v401
      %v1130 = vunpack.c.h.b16 %v401
      %v1131 = vunpack.c.l.b16 %v402
      %v1132 = vunpack.c.h.b16 %v402
      %v1133 = vunpack.c.l.b16 %v403
      %v1134 = vunpack.c.h.b16 %v403
      %v1135 = vunpack.c.l.b16 %v404
      %v1136 = vunpack.c.h.b16 %v404
      %v1137 = vunpack.c.l.b16 %v405
      %v1138 = vunpack.c.h.b16 %v405
      %v1139 = vunpack.c.l.b16 %v406
      %v1140 = vunpack.c.h.b16 %v406
      %v1141 = vunpack.c.l.b16 %v407
      %v1142 = vunpack.c.h.b16 %v407
      %v1143 = vunpack.c.l.b16 %v408
      %v1144 = vunpack.c.h.b16 %v408
      %v1145 = vunpack.c.l.b16 %v409
      %v1146 = vunpack.c.h.b16 %v409
      %v1147 = vunpack.c.l.b16 %v410
      %v1148 = vunpack.c.h.b16 %v410
      %v1149 = vunpack.c.l.b16 %v411
      %v1150 = vunpack.c.h.b16 %v411
      %v1151 = vunpack.c.l.b16 %v412
      %v1152 = vunpack.c.h.b16 %v412
      %v1153 = vunpack.c.l.b16 %v413
      %v1154 = vunpack.c.h.b16 %v413
      %v1155 = vunpack.c.l.b16 %v414
      %v1156 = vunpack.c.h.b16 %v414
      %v1157 = vunpack.c.l.b16 %v415
      %v1158 = vunpack.c.h.b16 %v415
      %v1159 = vunpack.c.l.b16 %v416
      %v1160 = vunpack.c.h.b16 %v416
      %v1161 = vunpack.c.l.b16 %v417
      %v1162 = vunpack.c.h.b16 %v417
      %v1163 = vunpack.c.l.b16 %v418
      %v1164 = vunpack.c.h.b16 %v418
      %v1165 = vunpack.c.l.b16 %v419
      %v1166 = vunpack.c.h.b16 %v419
      %v1167 = vunpack.c.l.b16 %v420
      %v1168 = vunpack.c.h.b16 %v420
      %v1169 = vunpack.c.l.b16 %v421
      %v1170 = vunpack.c.h.b16 %v421
      %v1171 = vunpack.c.l.b16 %v422
      %v1172 = vunpack.c.h.b16 %v422
      %v1173 = vunpack.c.l.b16 %v423
      %v1174 = vunpack.c.h.b16 %v423
      %v1175 = vunpack.c.l.b16 %v424
      %v1176 = vunpack.c.h.b16 %v424
      %v1177 = vunpack.c.l.b16 %v425
      %v1178 = vunpack.c.h.b16 %v425
      %v1179 = vunpack.c.l.b16 %v426
      %v1180 = vunpack.c.h.b16 %v426
      %v1181 = vunpack.c.l.b16 %v427
      %v1182 = vunpack.c.h.b16 %v427
      %v1183 = vunpack.c.l.b16 %v428
      %v1184 = vunpack.c.h.b16 %v428
      %v1185 = vpack.c.b16 %v1065, %v1057
      %v1186 = vpack.c.b16 %v1066, %v1058
      %v1187 = vpack.c.b16 %v1067, %v1059
      %v1188 = vpack.c.b16 %v1068, %v1060
      %v1189 = vpack.c.b16 %v1069, %v1061
      %v1190 = vpack.c.b16 %v1070, %v1062
      %v1191 = vpack.c.b16 %v1071, %v1063
      %v1192 = vpack.c.b16 %v1072, %v1064
      %v1193 = vpack.c.b16 %v1081, %v1073
      %v1194 = vpack.c.b16 %v1082, %v1074
      %v1195 = vpack.c.b16 %v1083, %v1075
      %v1196 = vpack.c.b16 %v1084, %v1076
      %v1197 = vpack.c.b16 %v1085, %v1077
      %v1198 = vpack.c.b16 %v1086, %v1078
      %v1199 = vpack.c.b16 %v1087, %v1079
      %v1200 = vpack.c.b16 %v1088, %v1080
      %v1201 = vpack.c.b16 %v1097, %v1089
      %v1202 = vpack.c.b16 %v1098, %v1090
      %v1203 = vpack.c.b16 %v1099, %v1091
      %v1204 = vpack.c.b16 %v1100, %v1092
      %v1205 = vpack.c.b16 %v1101, %v1093
      %v1206 = vpack.c.b16 %v1102, %v1094
      %v1207 = vpack.c.b16 %v1103, %v1095
      %v1208 = vpack.c.b16 %v1104, %v1096
      %v1209 = vpack.c.b16 %v1113, %v1105
      %v1210 = vpack.c.b16 %v1114, %v1106
      %v1211 = vpack.c.b16 %v1115, %v1107
      %v1212 = vpack.c.b16 %v1116, %v1108
      %v1213 = vpack.c.b16 %v1117, %v1109
      %v1214 = vpack.c.b16 %v1118, %v1110
      %v1215 = vpack.c.b16 %v1119, %v1111
      %v1216 = vpack.c.b16 %v1120, %v1112
      %v1217 = vpack.c.b16 %v1129, %v1121
      %v1218 = vpack.c.b16 %v1130, %v1122
      %v1219 = vpack.c.b16 %v1131, %v1123
      %v1220 = vpack.c.b16 %v1132, %v1124
      %v1221 = vpack.c.b16 %v1133, %v1125
      %v1222 = vpack.c.b16 %v1134, %v1126
      %v1223 = vpack.c.b16 %v1135, %v1127
      %v1224 = vpack.c.b16 %v1136, %v1128
      %v1225 = vpack.c.b16 %v1145, %v1137
      %v1226 = vpack.c.b16 %v1146, %v1138
      %v1227 = vpack.c.b16 %v1147, %v1139
      %v1228 = vpack.c.b16 %v1148, %v1140
      %v1229 = vpack.c.b16 %v1149, %v1141
      %v1230 = vpack.c.b16 %v1150, %v1142
      %v1231 = vpack.c.b16 %v1151, %v1143
      %v1232 = vpack.c.b16 %v1152, %v1144
      %v1233 = vpack.c.b16 %v1161, %v1153
      %v1234 = vpack.c.b16 %v1162, %v1154
      %v1235 = vpack.c.b16 %v1163, %v1155
      %v1236 = vpack.c.b16 %v1164, %v1156
      %v1237 = vpack.c.b16 %v1165, %v1157
      %v1238 = vpack.c.b16 %v1166, %v1158
      %v1239 = vpack.c.b16 %v1167, %v1159
      %v1240 = vpack.c.b16 %v1168, %v1160
      %v1241 = vpack.c.b16 %v1177, %v1169
      %v1242 = vpack.c.b16 %v1178, %v1170
      %v1243 = vpack.c.b16 %v1179, %v1171
      %v1244 = vpack.c.b16 %v1180, %v1172
      %v1245 = vpack.c.b16 %v1181, %v1173
      %v1246 = vpack.c.b16 %v1182, %v1174
      %v1247 = vpack.c.b16 %v1183, %v1175
      %v1248 = vpack.c.b16 %v1184, %v1176
      %1313 = vmatpush.bf16.msra.mxu0 %v1241
      %1314 = vmatpush.bf16.msra.mxu0 %v1233
      %1315 = vmatpush.bf16.msra.mxu0 %v1225
      %1316 = vmatpush.bf16.msra.mxu0 %v1217
      %1317 = vmatpush.bf16.msra.mxu0 %v1209
      %1318 = vmatpush.bf16.msra.mxu0 %v1201
      %1319 = vmatpush.bf16.msra.mxu0 %v1193
      %1320 = vmatpush.bf16.msra.mxu0 %v1185
      %1321 = vmatmul.bf16.gmra.mxu0 %v989
      %v1322 = vpop.f32.mrf.mxu0
      %v1323 = vadd.f32 %v839, %v1322
      %v1324 = vpop.f32.mrf.mxu0
      %v1325 = vadd.f32 %v841, %v1324
      %1326 = vmatmul.bf16.gmra.mxu0 %v990
      %v1327 = vpop.f32.mrf.mxu0
      %v1328 = vadd.f32 %v844, %v1327
      %v1329 = vpop.f32.mrf.mxu0
      %v1330 = vadd.f32 %v846, %v1329
      %1331 = vdwg.mxu0
      %1332 = vmatpush.bf16.msra.mxu0 %v1242
      %1333 = vmatpush.bf16.msra.mxu0 %v1234
      %1334 = vmatpush.bf16.msra.mxu0 %v1226
      %1335 = vmatpush.bf16.msra.mxu0 %v1218
      %1336 = vmatpush.bf16.msra.mxu0 %v1210
      %1337 = vmatpush.bf16.msra.mxu0 %v1202
      %1338 = vmatpush.bf16.msra.mxu0 %v1194
      %1339 = vmatpush.bf16.msra.mxu0 %v1186
      %1340 = vmatmul.bf16.gmra.mxu0 %v989
      %v1341 = vpop.f32.mrf.mxu0
      %v1342 = vadd.f32 %v858, %v1341
      %v1343 = vpop.f32.mrf.mxu0
      %v1344 = vadd.f32 %v860, %v1343
      %1345 = vmatmul.bf16.gmra.mxu0 %v990
      %v1346 = vpop.f32.mrf.mxu0
      %v1347 = vadd.f32 %v863, %v1346
      %v1348 = vpop.f32.mrf.mxu0
      %v1349 = vadd.f32 %v865, %v1348
      %1350 = vdwg.mxu0
      %1351 = vmatpush.bf16.msra.mxu0 %v1243
      %1352 = vmatpush.bf16.msra.mxu0 %v1235
      %1353 = vmatpush.bf16.msra.mxu0 %v1227
      %1354 = vmatpush.bf16.msra.mxu0 %v1219
      %1355 = vmatpush.bf16.msra.mxu0 %v1211
      %1356 = vmatpush.bf16.msra.mxu0 %v1203
      %1357 = vmatpush.bf16.msra.mxu0 %v1195
      %1358 = vmatpush.bf16.msra.mxu0 %v1187
      %1359 = vmatmul.bf16.gmra.mxu0 %v989
      %v1360 = vpop.f32.mrf.mxu0
      %v1361 = vadd.f32 %v877, %v1360
      %v1362 = vpop.f32.mrf.mxu0
      %v1363 = vadd.f32 %v879, %v1362
      %1364 = vmatmul.bf16.gmra.mxu0 %v990
      %v1365 = vpop.f32.mrf.mxu0
      %v1366 = vadd.f32 %v882, %v1365
      %v1367 = vpop.f32.mrf.mxu0
      %v1368 = vadd.f32 %v884, %v1367
      %1369 = vdwg.mxu0
      %1370 = vmatpush.bf16.msra.mxu0 %v1244
      %1371 = vmatpush.bf16.msra.mxu0 %v1236
      %1372 = vmatpush.bf16.msra.mxu0 %v1228
      %1373 = vmatpush.bf16.msra.mxu0 %v1220
      %1374 = vmatpush.bf16.msra.mxu0 %v1212
      %1375 = vmatpush.bf16.msra.mxu0 %v1204
      %1376 = vmatpush.bf16.msra.mxu0 %v1196
      %1377 = vmatpush.bf16.msra.mxu0 %v1188
      %1378 = vmatmul.bf16.gmra.mxu0 %v989
      %v1379 = vpop.f32.mrf.mxu0
      %v1380 = vadd.f32 %v896, %v1379
      %v1381 = vpop.f32.mrf.mxu0
      %v1382 = vadd.f32 %v898, %v1381
      %1383 = vmatmul.bf16.gmra.mxu0 %v990
      %v1384 = vpop.f32.mrf.mxu0
      %v1385 = vadd.f32 %v901, %v1384
      %v1386 = vpop.f32.mrf.mxu0
      %v1387 = vadd.f32 %v903, %v1386
      %1388 = vdwg.mxu0
      %1389 = vmatpush.bf16.msra.mxu0 %v1245
      %1390 = vmatpush.bf16.msra.mxu0 %v1237
      %1391 = vmatpush.bf16.msra.mxu0 %v1229
      %1392 = vmatpush.bf16.msra.mxu0 %v1221
      %1393 = vmatpush.bf16.msra.mxu0 %v1213
      %1394 = vmatpush.bf16.msra.mxu0 %v1205
      %1395 = vmatpush.bf16.msra.mxu0 %v1197
      %1396 = vmatpush.bf16.msra.mxu0 %v1189
      %1397 = vmatmul.bf16.gmra.mxu0 %v989
      %v1398 = vpop.f32.mrf.mxu0
      %v1399 = vadd.f32 %v915, %v1398
      %v1400 = vpop.f32.mrf.mxu0
      %v1401 = vadd.f32 %v917, %v1400
      %1402 = vmatmul.bf16.gmra.mxu0 %v990
      %v1403 = vpop.f32.mrf.mxu0
      %v1404 = vadd.f32 %v920, %v1403
      %v1405 = vpop.f32.mrf.mxu0
      %v1406 = vadd.f32 %v922, %v1405
      %1407 = vdwg.mxu0
      %1408 = vmatpush.bf16.msra.mxu0 %v1246
      %1409 = vmatpush.bf16.msra.mxu0 %v1238
      %1410 = vmatpush.bf16.msra.mxu0 %v1230
      %1411 = vmatpush.bf16.msra.mxu0 %v1222
      %1412 = vmatpush.bf16.msra.mxu0 %v1214
      %1413 = vmatpush.bf16.msra.mxu0 %v1206
      %1414 = vmatpush.bf16.msra.mxu0 %v1198
      %1415 = vmatpush.bf16.msra.mxu0 %v1190
      %1416 = vmatmul.bf16.gmra.mxu0 %v989
      %v1417 = vpop.f32.mrf.mxu0
      %v1418 = vadd.f32 %v934, %v1417
      %v1419 = vpop.f32.mrf.mxu0
      %v1420 = vadd.f32 %v936, %v1419
      %1421 = vmatmul.bf16.gmra.mxu0 %v990
      %v1422 = vpop.f32.mrf.mxu0
      %v1423 = vadd.f32 %v939, %v1422
      %v1424 = vpop.f32.mrf.mxu0
      %v1425 = vadd.f32 %v941, %v1424
      %1426 = vdwg.mxu0
      %1427 = vmatpush.bf16.msra.mxu0 %v1247
      %1428 = vmatpush.bf16.msra.mxu0 %v1239
      %1429 = vmatpush.bf16.msra.mxu0 %v1231
      %1430 = vmatpush.bf16.msra.mxu0 %v1223
      %1431 = vmatpush.bf16.msra.mxu0 %v1215
      %1432 = vmatpush.bf16.msra.mxu0 %v1207
      %1433 = vmatpush.bf16.msra.mxu0 %v1199
      %1434 = vmatpush.bf16.msra.mxu0 %v1191
      %1435 = vmatmul.bf16.gmra.mxu0 %v989
      %v1436 = vpop.f32.mrf.mxu0
      %v1437 = vadd.f32 %v953, %v1436
      %v1438 = vpop.f32.mrf.mxu0
      %v1439 = vadd.f32 %v955, %v1438
      %1440 = vmatmul.bf16.gmra.mxu0 %v990
      %v1441 = vpop.f32.mrf.mxu0
      %v1442 = vadd.f32 %v958, %v1441
      %v1443 = vpop.f32.mrf.mxu0
      %v1444 = vadd.f32 %v960, %v1443
      %1445 = vdwg.mxu0
      %1446 = vmatpush.bf16.msra.mxu0 %v1248
      %1447 = vmatpush.bf16.msra.mxu0 %v1240
      %1448 = vmatpush.bf16.msra.mxu0 %v1232
      %1449 = vmatpush.bf16.msra.mxu0 %v1224
      %1450 = vmatpush.bf16.msra.mxu0 %v1216
      %1451 = vmatpush.bf16.msra.mxu0 %v1208
      %1452 = vmatpush.bf16.msra.mxu0 %v1200
      %1453 = vmatpush.bf16.msra.mxu0 %v1192
      %1454 = vmatmul.bf16.gmra.mxu0 %v989
      %v1455 = vpop.f32.mrf.mxu0
      %v1456 = vadd.f32 %v972, %v1455
      %v1457 = vpop.f32.mrf.mxu0
      %v1458 = vadd.f32 %v974, %v1457
      %1459 = vmatmul.bf16.gmra.mxu0 %v990
      %v1460 = vpop.f32.mrf.mxu0
      %v1461 = vadd.f32 %v977, %v1460
      %v1462 = vpop.f32.mrf.mxu0
      %v1463 = vadd.f32 %v979, %v1462
      %1464 = vdwg.mxu0
      %v1465 = vld [vmem:[%s5] sm:$0x1]
      %v1466 = vunpack.c.l.bf16 %v1465
      %v1467 = vperm.slane %v1466, 0
      %1469 = vset.pattern.permute.xlu0 0
      %1470 = vperm.xlu0 %1469, %v357
      %v1471 = vpop.permute.xlu0 %1470
      %1474 = vset.pattern.permute.xlu0 0
      %1475 = vperm.xlu0 %1474, %v358
      %v1476 = vpop.permute.xlu0 %1475
      %1479 = vset.pattern.permute.xlu0 0
      %1480 = vperm.xlu0 %1479, %v359
      %v1481 = vpop.permute.xlu0 %1480
      %1484 = vset.pattern.permute.xlu0 0
      %1485 = vperm.xlu0 %1484, %v360
      %v1486 = vpop.permute.xlu0 %1485
      %v1488 = vmul.f32 %v1471, %v1323
      %v1489 = vmul.f32 %v1476, %v1325
      %v1490 = vmul.f32 %v1481, %v1328
      %v1491 = vmul.f32 %v1486, %v1330
      %v1492 = vadd.f32 %v1467, %v1488
      %v1493 = vadd.f32 %v1467, %v1489
      %v1494 = vadd.f32 %v1467, %v1490
      %v1495 = vadd.f32 %v1467, %v1491
      %1496 = vset.pattern.permute.xlu0 1
      %1497 = vperm.xlu0 %1496, %v357
      %v1498 = vpop.permute.xlu0 %1497
      %1500 = vset.pattern.permute.xlu0 1
      %1501 = vperm.xlu0 %1500, %v358
      %v1502 = vpop.permute.xlu0 %1501
      %1504 = vset.pattern.permute.xlu0 1
      %1505 = vperm.xlu0 %1504, %v359
      %v1506 = vpop.permute.xlu0 %1505
      %1508 = vset.pattern.permute.xlu0 1
      %1509 = vperm.xlu0 %1508, %v360
      %v1510 = vpop.permute.xlu0 %1509
      %v1512 = vmul.f32 %v1498, %v1342
      %v1513 = vmul.f32 %v1502, %v1344
      %v1514 = vmul.f32 %v1506, %v1347
      %v1515 = vmul.f32 %v1510, %v1349
      %v1516 = vadd.f32 %v1492, %v1512
      %v1517 = vadd.f32 %v1493, %v1513
      %v1518 = vadd.f32 %v1494, %v1514
      %v1519 = vadd.f32 %v1495, %v1515
      %1520 = vset.pattern.permute.xlu0 2
      %1521 = vperm.xlu0 %1520, %v357
      %v1522 = vpop.permute.xlu0 %1521
      %1524 = vset.pattern.permute.xlu0 2
      %1525 = vperm.xlu0 %1524, %v358
      %v1526 = vpop.permute.xlu0 %1525
      %1528 = vset.pattern.permute.xlu0 2
      %1529 = vperm.xlu0 %1528, %v359
      %v1530 = vpop.permute.xlu0 %1529
      %1532 = vset.pattern.permute.xlu0 2
      %1533 = vperm.xlu0 %1532, %v360
      %v1534 = vpop.permute.xlu0 %1533
      %v1536 = vmul.f32 %v1522, %v1361
      %v1537 = vmul.f32 %v1526, %v1363
      %v1538 = vmul.f32 %v1530, %v1366
      %v1539 = vmul.f32 %v1534, %v1368
      %v1540 = vadd.f32 %v1516, %v1536
      %v1541 = vadd.f32 %v1517, %v1537
      %v1542 = vadd.f32 %v1518, %v1538
      %v1543 = vadd.f32 %v1519, %v1539
      %1544 = vset.pattern.permute.xlu0 3
      %1545 = vperm.xlu0 %1544, %v357
      %v1546 = vpop.permute.xlu0 %1545
      %1548 = vset.pattern.permute.xlu0 3
      %1549 = vperm.xlu0 %1548, %v358
      %v1550 = vpop.permute.xlu0 %1549
      %1552 = vset.pattern.permute.xlu0 3
      %1553 = vperm.xlu0 %1552, %v359
      %v1554 = vpop.permute.xlu0 %1553
      %1556 = vset.pattern.permute.xlu0 3
      %1557 = vperm.xlu0 %1556, %v360
      %v1558 = vpop.permute.xlu0 %1557
      %v1560 = vmul.f32 %v1546, %v1380
      %v1561 = vmul.f32 %v1550, %v1382
      %v1562 = vmul.f32 %v1554, %v1385
      %v1563 = vmul.f32 %v1558, %v1387
      %v1564 = vadd.f32 %v1540, %v1560
      %v1565 = vadd.f32 %v1541, %v1561
      %v1566 = vadd.f32 %v1542, %v1562
      %v1567 = vadd.f32 %v1543, %v1563
      %1568 = vset.pattern.permute.xlu0 4
      %1569 = vperm.xlu0 %1568, %v357
      %v1570 = vpop.permute.xlu0 %1569
      %1572 = vset.pattern.permute.xlu0 4
      %1573 = vperm.xlu0 %1572, %v358
      %v1574 = vpop.permute.xlu0 %1573
      %1576 = vset.pattern.permute.xlu0 4
      %1577 = vperm.xlu0 %1576, %v359
      %v1578 = vpop.permute.xlu0 %1577
      %1580 = vset.pattern.permute.xlu0 4
      %1581 = vperm.xlu0 %1580, %v360
      %v1582 = vpop.permute.xlu0 %1581
      %v1584 = vmul.f32 %v1570, %v1399
      %v1585 = vmul.f32 %v1574, %v1401
      %v1586 = vmul.f32 %v1578, %v1404
      %v1587 = vmul.f32 %v1582, %v1406
      %v1588 = vadd.f32 %v1564, %v1584
      %v1589 = vadd.f32 %v1565, %v1585
      %v1590 = vadd.f32 %v1566, %v1586
      %v1591 = vadd.f32 %v1567, %v1587
      %1592 = vset.pattern.permute.xlu0 5
      %1593 = vperm.xlu0 %1592, %v357
      %v1594 = vpop.permute.xlu0 %1593
      %1596 = vset.pattern.permute.xlu0 5
      %1597 = vperm.xlu0 %1596, %v358
      %v1598 = vpop.permute.xlu0 %1597
      %1600 = vset.pattern.permute.xlu0 5
      %1601 = vperm.xlu0 %1600, %v359
      %v1602 = vpop.permute.xlu0 %1601
      %1604 = vset.pattern.permute.xlu0 5
      %1605 = vperm.xlu0 %1604, %v360
      %v1606 = vpop.permute.xlu0 %1605
      %v1608 = vmul.f32 %v1594, %v1418
      %v1609 = vmul.f32 %v1598, %v1420
      %v1610 = vmul.f32 %v1602, %v1423
      %v1611 = vmul.f32 %v1606, %v1425
      %v1612 = vadd.f32 %v1588, %v1608
      %v1613 = vadd.f32 %v1589, %v1609
      %v1614 = vadd.f32 %v1590, %v1610
      %v1615 = vadd.f32 %v1591, %v1611
      %1616 = vset.pattern.permute.xlu0 6
      %1617 = vperm.xlu0 %1616, %v357
      %v1618 = vpop.permute.xlu0 %1617
      %1620 = vset.pattern.permute.xlu0 6
      %1621 = vperm.xlu0 %1620, %v358
      %v1622 = vpop.permute.xlu0 %1621
      %1624 = vset.pattern.permute.xlu0 6
      %1625 = vperm.xlu0 %1624, %v359
      %v1626 = vpop.permute.xlu0 %1625
      %1628 = vset.pattern.permute.xlu0 6
      %1629 = vperm.xlu0 %1628, %v360
      %v1630 = vpop.permute.xlu0 %1629
      %v1632 = vmul.f32 %v1618, %v1437
      %v1633 = vmul.f32 %v1622, %v1439
      %v1634 = vmul.f32 %v1626, %v1442
      %v1635 = vmul.f32 %v1630, %v1444
      %v1636 = vadd.f32 %v1612, %v1632
      %v1637 = vadd.f32 %v1613, %v1633
      %v1638 = vadd.f32 %v1614, %v1634
      %v1639 = vadd.f32 %v1615, %v1635
      %1640 = vset.pattern.permute.xlu0 7
      %1641 = vperm.xlu0 %1640, %v357
      %v1642 = vpop.permute.xlu0 %1641
      %1644 = vset.pattern.permute.xlu0 7
      %1645 = vperm.xlu0 %1644, %v358
      %v1646 = vpop.permute.xlu0 %1645
      %1648 = vset.pattern.permute.xlu0 7
      %1649 = vperm.xlu0 %1648, %v359
      %v1650 = vpop.permute.xlu0 %1649
      %1652 = vset.pattern.permute.xlu0 7
      %1653 = vperm.xlu0 %1652, %v360
      %v1654 = vpop.permute.xlu0 %1653
      %v1656 = vmul.f32 %v1642, %v1456
      %v1657 = vmul.f32 %v1646, %v1458
      %v1658 = vmul.f32 %v1650, %v1461
      %v1659 = vmul.f32 %v1654, %v1463
      %v1660 = vadd.f32 %v1636, %v1656
      %v1661 = vadd.f32 %v1637, %v1657
      %v1662 = vadd.f32 %v1638, %v1658
      %v1663 = vadd.f32 %v1639, %v1659
      %v1664 = vxor.u32 %v1660, 2147483648
      %v1665 = vxor.u32 %v1661, 2147483648
      %v1666 = vxor.u32 %v1662, 2147483648
      %v1667 = vxor.u32 %v1663, 2147483648
      %v1668 = vmul.f32 %v1664, 1.442695
      %v1669 = vpow.pop %v1668
      %v1670 = vmul.f32 %v1665, 1.442695
      %v1671 = vpow.pop %v1670
      %v1672 = vmul.f32 %v1666, 1.442695
      %v1673 = vpow.pop %v1672
      %v1674 = vmul.f32 %v1667, 1.442695
      %v1675 = vpow.pop %v1674
      %v1676 = vadd.f32 %v1669, 1.0
      %v1677 = vadd.f32 %v1671, 1.0
      %v1678 = vadd.f32 %v1673, 1.0
      %v1679 = vadd.f32 %v1675, 1.0
      %v1680 = vrcp.pop %v1676
      %v1681 = vmul.f32 %v1676, %v1680
      %v1682 = vsub.f32 1.0, %v1681
      %v1683 = vmul.f32 %v1680, %v1682
      %v1684 = vadd.f32 %v1680, %v1683
      %vm1685 = vweird.f32 %v1676
      %vm1686 = vweird.f32 %v1680
      %vm1687 = vmor %vm1685, %vm1686
      %v1688 = vsel %vm1687, %v1680, %v1684
      %v1689 = vand.u32 2147483647, %v1676
      %vm1690 = vcmp.eq.f32.partialorder %v1689, 8.507059e+37
      %v1691 = vand.u32 %v1676, 2147483648
      %v1692 = vor.u32 1.1754944e-38, %v1691
      %v1693 = vsel %vm1690, %v1692, %v1688
      %v1694 = vmul.f32 1.0, %v1693
      %v1695 = vrcp.pop %v1677
      %v1696 = vmul.f32 %v1677, %v1695
      %v1697 = vsub.f32 1.0, %v1696
      %v1698 = vmul.f32 %v1695, %v1697
      %v1699 = vadd.f32 %v1695, %v1698
      %vm1700 = vweird.f32 %v1677
      %vm1701 = vweird.f32 %v1695
      %vm1702 = vmor %vm1700, %vm1701
      %v1703 = vsel %vm1702, %v1695, %v1699
      %v1704 = vand.u32 2147483647, %v1677
      %vm1705 = vcmp.eq.f32.partialorder %v1704, 8.507059e+37
      %v1706 = vand.u32 %v1677, 2147483648
      %v1707 = vor.u32 1.1754944e-38, %v1706
      %v1708 = vsel %vm1705, %v1707, %v1703
      %v1709 = vmul.f32 1.0, %v1708
      %v1710 = vrcp.pop %v1678
      %v1711 = vmul.f32 %v1678, %v1710
      %v1712 = vsub.f32 1.0, %v1711
      %v1713 = vmul.f32 %v1710, %v1712
      %v1714 = vadd.f32 %v1710, %v1713
      %vm1715 = vweird.f32 %v1678
      %vm1716 = vweird.f32 %v1710
      %vm1717 = vmor %vm1715, %vm1716
      %v1718 = vsel %vm1717, %v1710, %v1714
      %v1719 = vand.u32 2147483647, %v1678
      %vm1720 = vcmp.eq.f32.partialorder %v1719, 8.507059e+37
      %v1721 = vand.u32 %v1678, 2147483648
      %v1722 = vor.u32 1.1754944e-38, %v1721
      %v1723 = vsel %vm1720, %v1722, %v1718
      %v1724 = vmul.f32 1.0, %v1723
      %v1725 = vrcp.pop %v1679
      %v1726 = vmul.f32 %v1679, %v1725
      %v1727 = vsub.f32 1.0, %v1726
      %v1728 = vmul.f32 %v1725, %v1727
      %v1729 = vadd.f32 %v1725, %v1728
      %vm1730 = vweird.f32 %v1679
      %vm1731 = vweird.f32 %v1725
      %vm1732 = vmor %vm1730, %vm1731
      %v1733 = vsel %vm1732, %v1725, %v1729
      %v1734 = vand.u32 2147483647, %v1679
      %vm1735 = vcmp.eq.f32.partialorder %v1734, 8.507059e+37
      %v1736 = vand.u32 %v1679, 2147483648
      %v1737 = vor.u32 1.1754944e-38, %v1736
      %v1738 = vsel %vm1735, %v1737, %v1733
      %v1739 = vmul.f32 1.0, %v1738
      %v1740 = vmul.f32 %v1660, %v1694
      %v1741 = vmul.f32 %v1661, %v1709
      %v1742 = vmul.f32 %v1662, %v1724
      %v1743 = vmul.f32 %v1663, %v1739
      %v1744 = vpack.c.bf16 %v1741, %v1740
      %v1745 = vpack.c.bf16 %v1743, %v1742
      %v1746 = vld [vmem:[%s6] sm:$0xff]
      %v1747 = vld [vmem:[%s6 + $0x8] sm:$0xff]
      %v1748 = vld [vmem:[%s6 + $0x10] sm:$0xff]
      %v1749 = vld [vmem:[%s6 + $0x18] sm:$0xff]
      %v1750 = vld [vmem:[%s6 + $0x20] sm:$0xff]
      %v1751 = vld [vmem:[%s6 + $0x28] sm:$0xff]
      %v1752 = vld [vmem:[%s6 + $0x30] sm:$0xff]
      %v1753 = vld [vmem:[%s6 + $0x38] sm:$0xff]
      %v1754 = vld [vmem:[%s6 + $0x40] sm:$0xff]
      %v1755 = vld [vmem:[%s6 + $0x48] sm:$0xff]
      %v1756 = vld [vmem:[%s6 + $0x50] sm:$0xff]
      %v1757 = vld [vmem:[%s6 + $0x58] sm:$0xff]
      %v1758 = vld [vmem:[%s6 + $0x60] sm:$0xff]
      %v1759 = vld [vmem:[%s6 + $0x68] sm:$0xff]
      %v1760 = vld [vmem:[%s6 + $0x70] sm:$0xff]
      %v1761 = vld [vmem:[%s6 + $0x78] sm:$0xff]
      %v1762 = vld [vmem:[%s6 + $0x80] sm:$0xff]
      %v1763 = vld [vmem:[%s6 + $0x88] sm:$0xff]
      %v1764 = vld [vmem:[%s6 + $0x90] sm:$0xff]
      %v1765 = vld [vmem:[%s6 + $0x98] sm:$0xff]
      %v1766 = vld [vmem:[%s6 + $0xa0] sm:$0xff]
      %v1767 = vld [vmem:[%s6 + $0xa8] sm:$0xff]
      %v1768 = vld [vmem:[%s6 + $0xb0] sm:$0xff]
      %v1769 = vld [vmem:[%s6 + $0xb8] sm:$0xff]
      %v1770 = vld [vmem:[%s6 + $0xc0] sm:$0xff]
      %v1771 = vld [vmem:[%s6 + $0xc8] sm:$0xff]
      %v1772 = vld [vmem:[%s6 + $0xd0] sm:$0xff]
      %v1773 = vld [vmem:[%s6 + $0xd8] sm:$0xff]
      %v1774 = vld [vmem:[%s6 + $0xe0] sm:$0xff]
      %v1775 = vld [vmem:[%s6 + $0xe8] sm:$0xff]
      %v1776 = vld [vmem:[%s6 + $0xf0] sm:$0xff]
      %v1777 = vld [vmem:[%s6 + $0xf8] sm:$0xff]
      %v1778 = vld [vmem:[%s6 + $0x100] sm:$0xff]
      %v1779 = vld [vmem:[%s6 + $0x108] sm:$0xff]
      %v1780 = vld [vmem:[%s6 + $0x110] sm:$0xff]
      %v1781 = vld [vmem:[%s6 + $0x118] sm:$0xff]
      %v1782 = vld [vmem:[%s6 + $0x120] sm:$0xff]
      %v1783 = vld [vmem:[%s6 + $0x128] sm:$0xff]
      %v1784 = vld [vmem:[%s6 + $0x130] sm:$0xff]
      %v1785 = vld [vmem:[%s6 + $0x138] sm:$0xff]
      %v1786 = vld [vmem:[%s6 + $0x140] sm:$0xff]
      %v1787 = vld [vmem:[%s6 + $0x148] sm:$0xff]
      %v1788 = vld [vmem:[%s6 + $0x150] sm:$0xff]
      %v1789 = vld [vmem:[%s6 + $0x158] sm:$0xff]
      %v1790 = vld [vmem:[%s6 + $0x160] sm:$0xff]
      %v1791 = vld [vmem:[%s6 + $0x168] sm:$0xff]
      %v1792 = vld [vmem:[%s6 + $0x170] sm:$0xff]
      %v1793 = vld [vmem:[%s6 + $0x178] sm:$0xff]
      %v1794 = vld [vmem:[%s6 + $0x180] sm:$0xff]
      %v1795 = vld [vmem:[%s6 + $0x188] sm:$0xff]
      %v1796 = vld [vmem:[%s6 + $0x190] sm:$0xff]
      %v1797 = vld [vmem:[%s6 + $0x198] sm:$0xff]
      %v1798 = vld [vmem:[%s6 + $0x1a0] sm:$0xff]
      %v1799 = vld [vmem:[%s6 + $0x1a8] sm:$0xff]
      %v1800 = vld [vmem:[%s6 + $0x1b0] sm:$0xff]
      %v1801 = vld [vmem:[%s6 + $0x1b8] sm:$0xff]
      %v1802 = vld [vmem:[%s6 + $0x1c0] sm:$0xff]
      %v1803 = vld [vmem:[%s6 + $0x1c8] sm:$0xff]
      %v1804 = vld [vmem:[%s6 + $0x1d0] sm:$0xff]
      %v1805 = vld [vmem:[%s6 + $0x1d8] sm:$0xff]
      %v1806 = vld [vmem:[%s6 + $0x1e0] sm:$0xff]
      %v1807 = vld [vmem:[%s6 + $0x1e8] sm:$0xff]
      %v1808 = vld [vmem:[%s6 + $0x1f0] sm:$0xff]
      %v1809 = vld [vmem:[%s6 + $0x1f8] sm:$0xff]
      %v1874 = vunpack.c.l.b16 %v1746
      %v1875 = vunpack.c.h.b16 %v1746
      %v1876 = vunpack.c.l.b16 %v1747
      %v1877 = vunpack.c.h.b16 %v1747
      %v1878 = vunpack.c.l.b16 %v1748
      %v1879 = vunpack.c.h.b16 %v1748
      %v1880 = vunpack.c.l.b16 %v1749
      %v1881 = vunpack.c.h.b16 %v1749
      %v1882 = vunpack.c.l.b16 %v1750
      %v1883 = vunpack.c.h.b16 %v1750
      %v1884 = vunpack.c.l.b16 %v1751
      %v1885 = vunpack.c.h.b16 %v1751
      %v1886 = vunpack.c.l.b16 %v1752
      %v1887 = vunpack.c.h.b16 %v1752
      %v1888 = vunpack.c.l.b16 %v1753
      %v1889 = vunpack.c.h.b16 %v1753
      %v1890 = vunpack.c.l.b16 %v1754
      %v1891 = vunpack.c.h.b16 %v1754
      %v1892 = vunpack.c.l.b16 %v1755
      %v1893 = vunpack.c.h.b16 %v1755
      %v1894 = vunpack.c.l.b16 %v1756
      %v1895 = vunpack.c.h.b16 %v1756
      %v1896 = vunpack.c.l.b16 %v1757
      %v1897 = vunpack.c.h.b16 %v1757
      %v1898 = vunpack.c.l.b16 %v1758
      %v1899 = vunpack.c.h.b16 %v1758
      %v1900 = vunpack.c.l.b16 %v1759
      %v1901 = vunpack.c.h.b16 %v1759
      %v1902 = vunpack.c.l.b16 %v1760
      %v1903 = vunpack.c.h.b16 %v1760
      %v1904 = vunpack.c.l.b16 %v1761
      %v1905 = vunpack.c.h.b16 %v1761
      %v1906 = vunpack.c.l.b16 %v1762
      %v1907 = vunpack.c.h.b16 %v1762
      %v1908 = vunpack.c.l.b16 %v1763
      %v1909 = vunpack.c.h.b16 %v1763
      %v1910 = vunpack.c.l.b16 %v1764
      %v1911 = vunpack.c.h.b16 %v1764
      %v1912 = vunpack.c.l.b16 %v1765
      %v1913 = vunpack.c.h.b16 %v1765
      %v1914 = vunpack.c.l.b16 %v1766
      %v1915 = vunpack.c.h.b16 %v1766
      %v1916 = vunpack.c.l.b16 %v1767
      %v1917 = vunpack.c.h.b16 %v1767
      %v1918 = vunpack.c.l.b16 %v1768
      %v1919 = vunpack.c.h.b16 %v1768
      %v1920 = vunpack.c.l.b16 %v1769
      %v1921 = vunpack.c.h.b16 %v1769
      %v1922 = vunpack.c.l.b16 %v1770
      %v1923 = vunpack.c.h.b16 %v1770
      %v1924 = vunpack.c.l.b16 %v1771
      %v1925 = vunpack.c.h.b16 %v1771
      %v1926 = vunpack.c.l.b16 %v1772
      %v1927 = vunpack.c.h.b16 %v1772
      %v1928 = vunpack.c.l.b16 %v1773
      %v1929 = vunpack.c.h.b16 %v1773
      %v1930 = vunpack.c.l.b16 %v1774
      %v1931 = vunpack.c.h.b16 %v1774
      %v1932 = vunpack.c.l.b16 %v1775
      %v1933 = vunpack.c.h.b16 %v1775
      %v1934 = vunpack.c.l.b16 %v1776
      %v1935 = vunpack.c.h.b16 %v1776
      %v1936 = vunpack.c.l.b16 %v1777
      %v1937 = vunpack.c.h.b16 %v1777
      %v1938 = vunpack.c.l.b16 %v1778
      %v1939 = vunpack.c.h.b16 %v1778
      %v1940 = vunpack.c.l.b16 %v1779
      %v1941 = vunpack.c.h.b16 %v1779
      %v1942 = vunpack.c.l.b16 %v1780
      %v1943 = vunpack.c.h.b16 %v1780
      %v1944 = vunpack.c.l.b16 %v1781
      %v1945 = vunpack.c.h.b16 %v1781
      %v1946 = vunpack.c.l.b16 %v1782
      %v1947 = vunpack.c.h.b16 %v1782
      %v1948 = vunpack.c.l.b16 %v1783
      %v1949 = vunpack.c.h.b16 %v1783
      %v1950 = vunpack.c.l.b16 %v1784
      %v1951 = vunpack.c.h.b16 %v1784
      %v1952 = vunpack.c.l.b16 %v1785
      %v1953 = vunpack.c.h.b16 %v1785
      %v1954 = vunpack.c.l.b16 %v1786
      %v1955 = vunpack.c.h.b16 %v1786
      %v1956 = vunpack.c.l.b16 %v1787
      %v1957 = vunpack.c.h.b16 %v1787
      %v1958 = vunpack.c.l.b16 %v1788
      %v1959 = vunpack.c.h.b16 %v1788
      %v1960 = vunpack.c.l.b16 %v1789
      %v1961 = vunpack.c.h.b16 %v1789
      %v1962 = vunpack.c.l.b16 %v1790
      %v1963 = vunpack.c.h.b16 %v1790
      %v1964 = vunpack.c.l.b16 %v1791
      %v1965 = vunpack.c.h.b16 %v1791
      %v1966 = vunpack.c.l.b16 %v1792
      %v1967 = vunpack.c.h.b16 %v1792
      %v1968 = vunpack.c.l.b16 %v1793
      %v1969 = vunpack.c.h.b16 %v1793
      %v1970 = vunpack.c.l.b16 %v1794
      %v1971 = vunpack.c.h.b16 %v1794
      %v1972 = vunpack.c.l.b16 %v1795
      %v1973 = vunpack.c.h.b16 %v1795
      %v1974 = vunpack.c.l.b16 %v1796
      %v1975 = vunpack.c.h.b16 %v1796
      %v1976 = vunpack.c.l.b16 %v1797
      %v1977 = vunpack.c.h.b16 %v1797
      %v1978 = vunpack.c.l.b16 %v1798
      %v1979 = vunpack.c.h.b16 %v1798
      %v1980 = vunpack.c.l.b16 %v1799
      %v1981 = vunpack.c.h.b16 %v1799
      %v1982 = vunpack.c.l.b16 %v1800
      %v1983 = vunpack.c.h.b16 %v1800
      %v1984 = vunpack.c.l.b16 %v1801
      %v1985 = vunpack.c.h.b16 %v1801
      %v1986 = vunpack.c.l.b16 %v1802
      %v1987 = vunpack.c.h.b16 %v1802
      %v1988 = vunpack.c.l.b16 %v1803
      %v1989 = vunpack.c.h.b16 %v1803
      %v1990 = vunpack.c.l.b16 %v1804
      %v1991 = vunpack.c.h.b16 %v1804
      %v1992 = vunpack.c.l.b16 %v1805
      %v1993 = vunpack.c.h.b16 %v1805
      %v1994 = vunpack.c.l.b16 %v1806
      %v1995 = vunpack.c.h.b16 %v1806
      %v1996 = vunpack.c.l.b16 %v1807
      %v1997 = vunpack.c.h.b16 %v1807
      %v1998 = vunpack.c.l.b16 %v1808
      %v1999 = vunpack.c.h.b16 %v1808
      %v2000 = vunpack.c.l.b16 %v1809
      %v2001 = vunpack.c.h.b16 %v1809
      %v2002 = vpack.c.b16 %v1882, %v1874
      %v2003 = vpack.c.b16 %v1883, %v1875
      %v2004 = vpack.c.b16 %v1884, %v1876
      %v2005 = vpack.c.b16 %v1885, %v1877
      %v2006 = vpack.c.b16 %v1886, %v1878
      %v2007 = vpack.c.b16 %v1887, %v1879
      %v2008 = vpack.c.b16 %v1888, %v1880
      %v2009 = vpack.c.b16 %v1889, %v1881
      %v2010 = vpack.c.b16 %v1898, %v1890
      %v2011 = vpack.c.b16 %v1899, %v1891
      %v2012 = vpack.c.b16 %v1900, %v1892
      %v2013 = vpack.c.b16 %v1901, %v1893
      %v2014 = vpack.c.b16 %v1902, %v1894
      %v2015 = vpack.c.b16 %v1903, %v1895
      %v2016 = vpack.c.b16 %v1904, %v1896
      %v2017 = vpack.c.b16 %v1905, %v1897
      %v2018 = vpack.c.b16 %v1914, %v1906
      %v2019 = vpack.c.b16 %v1915, %v1907
      %v2020 = vpack.c.b16 %v1916, %v1908
      %v2021 = vpack.c.b16 %v1917, %v1909
      %v2022 = vpack.c.b16 %v1918, %v1910
      %v2023 = vpack.c.b16 %v1919, %v1911
      %v2024 = vpack.c.b16 %v1920, %v1912
      %v2025 = vpack.c.b16 %v1921, %v1913
      %v2026 = vpack.c.b16 %v1930, %v1922
      %v2027 = vpack.c.b16 %v1931, %v1923
      %v2028 = vpack.c.b16 %v1932, %v1924
      %v2029 = vpack.c.b16 %v1933, %v1925
      %v2030 = vpack.c.b16 %v1934, %v1926
      %v2031 = vpack.c.b16 %v1935, %v1927
      %v2032 = vpack.c.b16 %v1936, %v1928
      %v2033 = vpack.c.b16 %v1937, %v1929
      %v2034 = vpack.c.b16 %v1946, %v1938
      %v2035 = vpack.c.b16 %v1947, %v1939
      %v2036 = vpack.c.b16 %v1948, %v1940
      %v2037 = vpack.c.b16 %v1949, %v1941
      %v2038 = vpack.c.b16 %v1950, %v1942
      %v2039 = vpack.c.b16 %v1951, %v1943
      %v2040 = vpack.c.b16 %v1952, %v1944
      %v2041 = vpack.c.b16 %v1953, %v1945
      %v2042 = vpack.c.b16 %v1962, %v1954
      %v2043 = vpack.c.b16 %v1963, %v1955
      %v2044 = vpack.c.b16 %v1964, %v1956
      %v2045 = vpack.c.b16 %v1965, %v1957
      %v2046 = vpack.c.b16 %v1966, %v1958
      %v2047 = vpack.c.b16 %v1967, %v1959
      %v2048 = vpack.c.b16 %v1968, %v1960
      %v2049 = vpack.c.b16 %v1969, %v1961
      %v2050 = vpack.c.b16 %v1978, %v1970
      %v2051 = vpack.c.b16 %v1979, %v1971
      %v2052 = vpack.c.b16 %v1980, %v1972
      %v2053 = vpack.c.b16 %v1981, %v1973
      %v2054 = vpack.c.b16 %v1982, %v1974
      %v2055 = vpack.c.b16 %v1983, %v1975
      %v2056 = vpack.c.b16 %v1984, %v1976
      %v2057 = vpack.c.b16 %v1985, %v1977
      %v2058 = vpack.c.b16 %v1994, %v1986
      %v2059 = vpack.c.b16 %v1995, %v1987
      %v2060 = vpack.c.b16 %v1996, %v1988
      %v2061 = vpack.c.b16 %v1997, %v1989
      %v2062 = vpack.c.b16 %v1998, %v1990
      %v2063 = vpack.c.b16 %v1999, %v1991
      %v2064 = vpack.c.b16 %v2000, %v1992
      %v2065 = vpack.c.b16 %v2001, %v1993
      %2130 = vmatpush.bf16.msra.mxu0 %v2058
      %2131 = vmatpush.bf16.msra.mxu0 %v2050
      %2132 = vmatpush.bf16.msra.mxu0 %v2042
      %2133 = vmatpush.bf16.msra.mxu0 %v2034
      %2134 = vmatpush.bf16.msra.mxu0 %v2026
      %2135 = vmatpush.bf16.msra.mxu0 %v2018
      %2136 = vmatpush.bf16.msra.mxu0 %v2010
      %2137 = vmatpush.bf16.msra.mxu0 %v2002
      %2138 = vmatmul.bf16.gmra.mxu0 %v1744
      %v2139 = vpop.f32.mrf.mxu0
      %v2140 = vadd.f32 0.0, %v2139
      %v2141 = vpop.f32.mrf.mxu0
      %v2142 = vadd.f32 0.0, %v2141
      %2143 = vmatmul.bf16.gmra.mxu0 %v1745
      %v2144 = vpop.f32.mrf.mxu0
      %v2145 = vadd.f32 0.0, %v2144
      %v2146 = vpop.f32.mrf.mxu0
      %v2147 = vadd.f32 0.0, %v2146
      %2148 = vdwg.mxu0
      %2149 = vmatpush.bf16.msra.mxu0 %v2059
      %2150 = vmatpush.bf16.msra.mxu0 %v2051
      %2151 = vmatpush.bf16.msra.mxu0 %v2043
      %2152 = vmatpush.bf16.msra.mxu0 %v2035
      %2153 = vmatpush.bf16.msra.mxu0 %v2027
      %2154 = vmatpush.bf16.msra.mxu0 %v2019
      %2155 = vmatpush.bf16.msra.mxu0 %v2011
      %2156 = vmatpush.bf16.msra.mxu0 %v2003
      %2157 = vmatmul.bf16.gmra.mxu0 %v1744
      %v2158 = vpop.f32.mrf.mxu0
      %v2159 = vadd.f32 0.0, %v2158
      %v2160 = vpop.f32.mrf.mxu0
      %v2161 = vadd.f32 0.0, %v2160
      %2162 = vmatmul.bf16.gmra.mxu0 %v1745
      %v2163 = vpop.f32.mrf.mxu0
      %v2164 = vadd.f32 0.0, %v2163
      %v2165 = vpop.f32.mrf.mxu0
      %v2166 = vadd.f32 0.0, %v2165
      %2167 = vdwg.mxu0
      %2168 = vmatpush.bf16.msra.mxu0 %v2060
      %2169 = vmatpush.bf16.msra.mxu0 %v2052
      %2170 = vmatpush.bf16.msra.mxu0 %v2044
      %2171 = vmatpush.bf16.msra.mxu0 %v2036
      %2172 = vmatpush.bf16.msra.mxu0 %v2028
      %2173 = vmatpush.bf16.msra.mxu0 %v2020
      %2174 = vmatpush.bf16.msra.mxu0 %v2012
      %2175 = vmatpush.bf16.msra.mxu0 %v2004
      %2176 = vmatmul.bf16.gmra.mxu0 %v1744
      %v2177 = vpop.f32.mrf.mxu0
      %v2178 = vadd.f32 0.0, %v2177
      %v2179 = vpop.f32.mrf.mxu0
      %v2180 = vadd.f32 0.0, %v2179
      %2181 = vmatmul.bf16.gmra.mxu0 %v1745
      %v2182 = vpop.f32.mrf.mxu0
      %v2183 = vadd.f32 0.0, %v2182
      %v2184 = vpop.f32.mrf.mxu0
      %v2185 = vadd.f32 0.0, %v2184
      %2186 = vdwg.mxu0
      %2187 = vmatpush.bf16.msra.mxu0 %v2061
      %2188 = vmatpush.bf16.msra.mxu0 %v2053
      %2189 = vmatpush.bf16.msra.mxu0 %v2045
      %2190 = vmatpush.bf16.msra.mxu0 %v2037
      %2191 = vmatpush.bf16.msra.mxu0 %v2029
      %2192 = vmatpush.bf16.msra.mxu0 %v2021
      %2193 = vmatpush.bf16.msra.mxu0 %v2013
      %2194 = vmatpush.bf16.msra.mxu0 %v2005
      %2195 = vmatmul.bf16.gmra.mxu0 %v1744
      %v2196 = vpop.f32.mrf.mxu0
      %v2197 = vadd.f32 0.0, %v2196
      %v2198 = vpop.f32.mrf.mxu0
      %v2199 = vadd.f32 0.0, %v2198
      %2200 = vmatmul.bf16.gmra.mxu0 %v1745
      %v2201 = vpop.f32.mrf.mxu0
      %v2202 = vadd.f32 0.0, %v2201
      %v2203 = vpop.f32.mrf.mxu0
      %v2204 = vadd.f32 0.0, %v2203
      %2205 = vdwg.mxu0
      %2206 = vmatpush.bf16.msra.mxu0 %v2062
      %2207 = vmatpush.bf16.msra.mxu0 %v2054
      %2208 = vmatpush.bf16.msra.mxu0 %v2046
      %2209 = vmatpush.bf16.msra.mxu0 %v2038
      %2210 = vmatpush.bf16.msra.mxu0 %v2030
      %2211 = vmatpush.bf16.msra.mxu0 %v2022
      %2212 = vmatpush.bf16.msra.mxu0 %v2014
      %2213 = vmatpush.bf16.msra.mxu0 %v2006
      %2214 = vmatmul.bf16.gmra.mxu0 %v1744
      %v2215 = vpop.f32.mrf.mxu0
      %v2216 = vadd.f32 0.0, %v2215
      %v2217 = vpop.f32.mrf.mxu0
      %v2218 = vadd.f32 0.0, %v2217
      %2219 = vmatmul.bf16.gmra.mxu0 %v1745
      %v2220 = vpop.f32.mrf.mxu0
      %v2221 = vadd.f32 0.0, %v2220
      %v2222 = vpop.f32.mrf.mxu0
      %v2223 = vadd.f32 0.0, %v2222
      %2224 = vdwg.mxu0
      %2225 = vmatpush.bf16.msra.mxu0 %v2063
      %2226 = vmatpush.bf16.msra.mxu0 %v2055
      %2227 = vmatpush.bf16.msra.mxu0 %v2047
      %2228 = vmatpush.bf16.msra.mxu0 %v2039
      %2229 = vmatpush.bf16.msra.mxu0 %v2031
      %2230 = vmatpush.bf16.msra.mxu0 %v2023
      %2231 = vmatpush.bf16.msra.mxu0 %v2015
      %2232 = vmatpush.bf16.msra.mxu0 %v2007
      %2233 = vmatmul.bf16.gmra.mxu0 %v1744
      %v2234 = vpop.f32.mrf.mxu0
      %v2235 = vadd.f32 0.0, %v2234
      %v2236 = vpop.f32.mrf.mxu0
      %v2237 = vadd.f32 0.0, %v2236
      %2238 = vmatmul.bf16.gmra.mxu0 %v1745
      %v2239 = vpop.f32.mrf.mxu0
      %v2240 = vadd.f32 0.0, %v2239
      %v2241 = vpop.f32.mrf.mxu0
      %v2242 = vadd.f32 0.0, %v2241
      %2243 = vdwg.mxu0
      %2244 = vmatpush.bf16.msra.mxu0 %v2064
      %2245 = vmatpush.bf16.msra.mxu0 %v2056
      %2246 = vmatpush.bf16.msra.mxu0 %v2048
      %2247 = vmatpush.bf16.msra.mxu0 %v2040
      %2248 = vmatpush.bf16.msra.mxu0 %v2032
      %2249 = vmatpush.bf16.msra.mxu0 %v2024
      %2250 = vmatpush.bf16.msra.mxu0 %v2016
      %2251 = vmatpush.bf16.msra.mxu0 %v2008
      %2252 = vmatmul.bf16.gmra.mxu0 %v1744
      %v2253 = vpop.f32.mrf.mxu0
      %v2254 = vadd.f32 0.0, %v2253
      %v2255 = vpop.f32.mrf.mxu0
      %v2256 = vadd.f32 0.0, %v2255
      %2257 = vmatmul.bf16.gmra.mxu0 %v1745
      %v2258 = vpop.f32.mrf.mxu0
      %v2259 = vadd.f32 0.0, %v2258
      %v2260 = vpop.f32.mrf.mxu0
      %v2261 = vadd.f32 0.0, %v2260
      %2262 = vdwg.mxu0
      %2263 = vmatpush.bf16.msra.mxu0 %v2065
      %2264 = vmatpush.bf16.msra.mxu0 %v2057
      %2265 = vmatpush.bf16.msra.mxu0 %v2049
      %2266 = vmatpush.bf16.msra.mxu0 %v2041
      %2267 = vmatpush.bf16.msra.mxu0 %v2033
      %2268 = vmatpush.bf16.msra.mxu0 %v2025
      %2269 = vmatpush.bf16.msra.mxu0 %v2017
      %2270 = vmatpush.bf16.msra.mxu0 %v2009
      %2271 = vmatmul.bf16.gmra.mxu0 %v1744
      %v2272 = vpop.f32.mrf.mxu0
      %v2273 = vadd.f32 0.0, %v2272
      %v2274 = vpop.f32.mrf.mxu0
      %v2275 = vadd.f32 0.0, %v2274
      %2276 = vmatmul.bf16.gmra.mxu0 %v1745
      %v2277 = vpop.f32.mrf.mxu0
      %v2278 = vadd.f32 0.0, %v2277
      %v2279 = vpop.f32.mrf.mxu0
      %v2280 = vadd.f32 0.0, %v2279
      %2281 = vdwg.mxu0
      %v2282 = vld [vmem:[%s7] sm:$0x1]
      %v2283 = vunpack.c.l.bf16 %v2282
      %v2284 = vperm.slane %v2283, 0
      %v2285 = vmul.f32 %v1471, %v2140
      %v2286 = vmul.f32 %v1476, %v2142
      %v2287 = vmul.f32 %v1481, %v2145
      %v2288 = vmul.f32 %v1486, %v2147
      %v2289 = vadd.f32 %v2284, %v2285
      %v2290 = vadd.f32 %v2284, %v2286
      %v2291 = vadd.f32 %v2284, %v2287
      %v2292 = vadd.f32 %v2284, %v2288
      %v2293 = vmul.f32 %v1498, %v2159
      %v2294 = vmul.f32 %v1502, %v2161
      %v2295 = vmul.f32 %v1506, %v2164
      %v2296 = vmul.f32 %v1510, %v2166
      %v2297 = vadd.f32 %v2289, %v2293
      %v2298 = vadd.f32 %v2290, %v2294
      %v2299 = vadd.f32 %v2291, %v2295
      %v2300 = vadd.f32 %v2292, %v2296
      %v2301 = vmul.f32 %v1522, %v2178
      %v2302 = vmul.f32 %v1526, %v2180
      %v2303 = vmul.f32 %v1530, %v2183
      %v2304 = vmul.f32 %v1534, %v2185
      %v2305 = vadd.f32 %v2297, %v2301
      %v2306 = vadd.f32 %v2298, %v2302
      %v2307 = vadd.f32 %v2299, %v2303
      %v2308 = vadd.f32 %v2300, %v2304
      %v2309 = vmul.f32 %v1546, %v2197
      %v2310 = vmul.f32 %v1550, %v2199
      %v2311 = vmul.f32 %v1554, %v2202
      %v2312 = vmul.f32 %v1558, %v2204
      %v2313 = vadd.f32 %v2305, %v2309
      %v2314 = vadd.f32 %v2306, %v2310
      %v2315 = vadd.f32 %v2307, %v2311
      %v2316 = vadd.f32 %v2308, %v2312
      %v2317 = vmul.f32 %v1570, %v2216
      %v2318 = vmul.f32 %v1574, %v2218
      %v2319 = vmul.f32 %v1578, %v2221
      %v2320 = vmul.f32 %v1582, %v2223
      %v2321 = vadd.f32 %v2313, %v2317
      %v2322 = vadd.f32 %v2314, %v2318
      %v2323 = vadd.f32 %v2315, %v2319
      %v2324 = vadd.f32 %v2316, %v2320
      %v2325 = vmul.f32 %v1594, %v2235
      %v2326 = vmul.f32 %v1598, %v2237
      %v2327 = vmul.f32 %v1602, %v2240
      %v2328 = vmul.f32 %v1606, %v2242
      %v2329 = vadd.f32 %v2321, %v2325
      %v2330 = vadd.f32 %v2322, %v2326
      %v2331 = vadd.f32 %v2323, %v2327
      %v2332 = vadd.f32 %v2324, %v2328
      %v2333 = vmul.f32 %v1618, %v2254
      %v2334 = vmul.f32 %v1622, %v2256
      %v2335 = vmul.f32 %v1626, %v2259
      %v2336 = vmul.f32 %v1630, %v2261
      %v2337 = vadd.f32 %v2329, %v2333
      %v2338 = vadd.f32 %v2330, %v2334
      %v2339 = vadd.f32 %v2331, %v2335
      %v2340 = vadd.f32 %v2332, %v2336
      %v2341 = vmul.f32 %v1642, %v2273
      %v2342 = vmul.f32 %v1646, %v2275
      %v2343 = vmul.f32 %v1650, %v2278
      %v2344 = vmul.f32 %v1654, %v2280
      %v2345 = vadd.f32 %v2337, %v2341
      %v2346 = vadd.f32 %v2338, %v2342
      %v2347 = vadd.f32 %v2339, %v2343
      %v2348 = vadd.f32 %v2340, %v2344
      %v2349 = vunpack.c.l.bf16 %v361
      %v2350 = vunpack.c.l.bf16 %v362
      %v2351 = vunpack.c.l.bf16 %v363
      %v2352 = vunpack.c.l.bf16 %v364
      %v2353 = vadd.f32 %v2349, %v2345
      %v2354 = vadd.f32 %v2350, %v2346
      %v2355 = vadd.f32 %v2351, %v2347
      %v2356 = vadd.f32 %v2352, %v2348
      %v2357 = vpack.c.bf16 %v2353, %v2353
      %v2358 = vpack.c.bf16 %v2354, %v2354
      %v2359 = vpack.c.bf16 %v2355, %v2355
      %v2360 = vpack.c.bf16 %v2356, %v2356
      %2361 = vst [vmem:[%s351] sm:$0xf] %v2357
      %2362 = vst [vmem:[%s351 + $0x4] sm:$0xf] %v2358
      %2363 = vst [vmem:[%s351 + $0x8] sm:$0xf] %v2359
      %2364 = vst [vmem:[%s351 + $0xc] sm:$0xf] %v2360
      %s2365 = smul.u32 4, %s19
      %p2366 = scmp.lt.s32.totalorder %s2365, 7
      %s2367 = scalar_select %p2366, %s2365, 7
      %s2368 = smul.addr %s2367, 4
      %s2369 = scalar_lea.vmem %s8, %s2368
      // Predicated region
      $region53: #{segnn_graph_layers_forward.10} parent=51 // pred_check
        %p2370 = pneg %p220
      $region54: #{segnn_graph_layers_forward.10} parent=51 // pred_check_branch
        %2372 = sbr.rel (%p2370) target = $region56
      $region55: #{segnn_graph_layers_forward.10} parent=51 // pred_region
        %s2373 = smul.u32 4, %s19
      $region56: #{segnn_graph_layers_forward.10} parent=51 // pred_fallthru
        _
    $region52: #{segnn_graph_layers_forward.10} parent=5 // pred_fallthru
      _
    %p2374 = scmp.le.s32.totalorder 2, %s14
    // Predicated region
    $region57: #{segnn_graph_layers_forward.10} parent=5 // pred_check
      %p2375 = pneg %p2374
    $region58: #{segnn_graph_layers_forward.10} parent=5 // pred_check_branch
      %2377 = sbr.rel (%p2375) target = $region60
    $region59: #{segnn_graph_layers_forward.10} parent=5 // pred_region
      %s2378 = ssub.s32 %s14, 2
      // Predicated region
      $region61: #{segnn_graph_layers_forward.10} parent=59 // pred_check
        %p2379 = pneg %p226
      $region62: #{segnn_graph_layers_forward.10} parent=59 // pred_check_branch
        %2381 = sbr.rel (%p2379) target = $region64
      $region63: #{segnn_graph_layers_forward.10} parent=59 // pred_region
        %s2382 = smul.u32 4, %s20
        %p2383 = scmp.lt.s32.totalorder %s2382, 7
        %s2384 = scalar_select %p2383, %s2382, 7
        %s2385 = smul.addr %s2384, 4
        %s2386 = scalar_lea.vmem %s8, %s2385
      $region64: #{segnn_graph_layers_forward.10} parent=59 // pred_fallthru
        _
    $region60: #{segnn_graph_layers_forward.10} parent=5 // pred_fallthru
      _
  $region6: #{segnn_graph_layers_forward.10} parent=0 // loop_footer
    %s18 = sadd.s32 1, %s14
  $region7: #{segnn_graph_layers_forward.10} parent=0 // loop_footer_branch
    %13 = sbr.rel target = $region3
  $region8: #{segnn_graph_layers_forward.10} parent=0 // loop_exit
    _

// kernel: segnn_graph_layers_forward.8
$region0: #{segnn_graph_layers_forward.8}
  #allocation0 [shape = 'u32[]', space=smem, size = 0x4, offset = 0x4, fixed_abs, tag = 'smem constant byte address 0x4 - core index']
  #allocation1 [shape = 'u32[72,128]{1,0:T(1,128)}', space=vmem, size = 0x9000, scoped, tag = 'internal scratch']
  %s0 = inlined_call_operand.vmem [shape: bf16[256,128], index: 0, kind: input, shape index: {}]
  %s1 = inlined_call_operand.vmem [shape: bf16[256,128], index: 1, kind: input, shape index: {}]
  %s2 = inlined_call_operand.vmem [shape: bf16[256,2], index: 2, kind: input, shape index: {}]
  %s3 = inlined_call_operand.vmem [shape: bf16[256,8], index: 3, kind: input, shape index: {}]
  %s4 = inlined_call_operand.vmem [shape: bf16[128,1024], index: 4, kind: input, shape index: {}]
  %s5 = inlined_call_operand.vmem [shape: bf16[128,1024], index: 5, kind: input, shape index: {}]
  %s6 = inlined_call_operand.vmem [shape: bf16[2,1024], index: 6, kind: input, shape index: {}]
  %s7 = inlined_call_operand.vmem [shape: bf16[1,128], index: 7, kind: input, shape index: {}]
  %s8 = inlined_call_operand.vmem [shape: bf16[128,1024], index: 8, kind: input, shape index: {}]
  %s9 = inlined_call_operand.vmem [shape: bf16[1,128], index: 9, kind: input, shape index: {}]
  %s10 = inlined_call_operand.vmem [shape: bf16[256,128], index: 10, kind: output, shape index: {}]
  %s11 = sld [smem:[#allocation0]]
  $region73: #{segnn_graph_layers_forward.8} parent=0
    _
  %s13 = ssub.s32 1, %s11
  %s14 = scalar_select 0, %s13, %s11
  loop: start=0, step=1, limit=4
  $region2: #{segnn_graph_layers_forward.8} parent=0 // loop_pre_header
    _
  $region3: #{segnn_graph_layers_forward.8} parent=0 // loop_header
    %s16 = sphi 0, %s20
    %p17 = scmp.ge.s32.totalorder %s16, 4
    %s26 = sphi 0, %s28
    %s29 = sphi 0, %s26
    %s30 = sphi 0, %s29
    %s46 = sphi 0, %s30
    %s52 = sphi 0, %s54
    %s55 = sphi 0, %s52
    %s56 = sphi 0, %s55
    %s72 = sphi 0, %s56
    %s78 = sphi 0, %s80
    %s81 = sphi 0, %s78
    %s82 = sphi 0, %s81
    %s98 = sphi 0, %s82
    %s104 = sphi 0, %s106
    %s107 = sphi 0, %s104
    %s108 = sphi 0, %s107
    %s124 = sphi 0, %s108
    %s128 = sphi 0, %s128
    %s130 = sphi 0, %s128
    %s131 = sphi 0, %s130
    %s145 = sphi 0, %s131
    %s149 = sphi 0, %s149
    %s151 = sphi 0, %s149
    %s152 = sphi 0, %s151
    %s166 = sphi 0, %s152
    %s170 = sphi 0, %s170
    %s172 = sphi 0, %s170
    %s173 = sphi 0, %s172
    %s187 = sphi 0, %s173
    %s191 = sphi 0, %s191
    %s193 = sphi 0, %s191
    %s194 = sphi 0, %s193
    %s208 = sphi 0, %s194
    %s212 = sphi 0, %s212
    %s214 = sphi 0, %s212
    %s215 = sphi 0, %s214
    %s229 = sphi 0, %s215
    %s233 = sphi 0, %s233
    %s235 = sphi 0, %s233
    %s236 = sphi 0, %s235
    %s250 = sphi 0, %s236
    %s256 = sphi 0, %s258
    %s259 = sphi 0, %s256
    %s260 = sphi 0, %s259
    %s276 = sphi 0, %s260
  $region4: #{segnn_graph_layers_forward.8} parent=0 // loop_header_branch
    %19 = sbr.rel (%p17) target = $region8
  $region5: #{segnn_graph_layers_forward.8} parent=0 // loop_body
    %s21 = ssub.s32 %s16, 1
    %s22 = ssub.s32 %s16, 2
    %s23 = sadd.s32 %s16, 1
    %s24 = ssub.s32 %s16, %s23
    %p25 = scmp.eq.s32.totalorder %s24, 0
    %s27 = sadd.s32 %s26, 1
    %s28 = scalar_select %p25, %s26, %s27
    %p31 = pneg %p25
    %p32 = scmp.eq.s32.totalorder %s16, 1
    %p33 = por %p31, %p32
    %p34 = scmp.ne.s32.totalorder %s26, %s29
    %p35 = scmp.eq.s32.totalorder %s16, 0
    %p36 = por %p34, %p35
    %p37 = scmp.ne.s32.totalorder %s26, %s29
    %p38 = scmp.eq.s32.totalorder %s21, 1
    %p39 = por %p37, %p38
    %p40 = scmp.ne.s32.totalorder %s29, %s30
    %p41 = scmp.eq.s32.totalorder %s21, 0
    %p42 = por %p40, %p41
    %p43 = scmp.ne.s32.totalorder %s29, %s30
    %p44 = scmp.eq.s32.totalorder %s22, 1
    %p45 = por %p43, %p44
    %p47 = scmp.ne.s32.totalorder %s30, %s46
    %p48 = scmp.eq.s32.totalorder %s22, 0
    %p49 = por %p47, %p48
    %s50 = ssub.s32 %s16, %s23
    %p51 = scmp.eq.s32.totalorder %s50, 0
    %s53 = sadd.s32 %s52, 1
    %s54 = scalar_select %p51, %s52, %s53
    %p57 = pneg %p51
    %p58 = scmp.eq.s32.totalorder %s16, 1
    %p59 = por %p57, %p58
    %p60 = scmp.ne.s32.totalorder %s52, %s55
    %p61 = scmp.eq.s32.totalorder %s16, 0
    %p62 = por %p60, %p61
    %p63 = scmp.ne.s32.totalorder %s52, %s55
    %p64 = scmp.eq.s32.totalorder %s21, 1
    %p65 = por %p63, %p64
    %p66 = scmp.ne.s32.totalorder %s55, %s56
    %p67 = scmp.eq.s32.totalorder %s21, 0
    %p68 = por %p66, %p67
    %p69 = scmp.ne.s32.totalorder %s55, %s56
    %p70 = scmp.eq.s32.totalorder %s22, 1
    %p71 = por %p69, %p70
    %p73 = scmp.ne.s32.totalorder %s56, %s72
    %p74 = scmp.eq.s32.totalorder %s22, 0
    %p75 = por %p73, %p74
    %s76 = ssub.s32 %s16, %s23
    %p77 = scmp.eq.s32.totalorder %s76, 0
    %s79 = sadd.s32 %s78, 1
    %s80 = scalar_select %p77, %s78, %s79
    %p83 = pneg %p77
    %p84 = scmp.eq.s32.totalorder %s16, 1
    %p85 = por %p83, %p84
    %p86 = scmp.ne.s32.totalorder %s78, %s81
    %p87 = scmp.eq.s32.totalorder %s16, 0
    %p88 = por %p86, %p87
    %p89 = scmp.ne.s32.totalorder %s78, %s81
    %p90 = scmp.eq.s32.totalorder %s21, 1
    %p91 = por %p89, %p90
    %p92 = scmp.ne.s32.totalorder %s81, %s82
    %p93 = scmp.eq.s32.totalorder %s21, 0
    %p94 = por %p92, %p93
    %p95 = scmp.ne.s32.totalorder %s81, %s82
    %p96 = scmp.eq.s32.totalorder %s22, 1
    %p97 = por %p95, %p96
    %p99 = scmp.ne.s32.totalorder %s82, %s98
    %p100 = scmp.eq.s32.totalorder %s22, 0
    %p101 = por %p99, %p100
    %s102 = ssub.s32 %s16, %s23
    %p103 = scmp.eq.s32.totalorder %s102, 0
    %s105 = sadd.s32 %s104, 1
    %s106 = scalar_select %p103, %s104, %s105
    %p109 = pneg %p103
    %p110 = scmp.eq.s32.totalorder %s16, 1
    %p111 = por %p109, %p110
    %p112 = scmp.ne.s32.totalorder %s104, %s107
    %p113 = scmp.eq.s32.totalorder %s16, 0
    %p114 = por %p112, %p113
    %p115 = scmp.ne.s32.totalorder %s104, %s107
    %p116 = scmp.eq.s32.totalorder %s21, 1
    %p117 = por %p115, %p116
    %p118 = scmp.ne.s32.totalorder %s107, %s108
    %p119 = scmp.eq.s32.totalorder %s21, 0
    %p120 = por %p118, %p119
    %p121 = scmp.ne.s32.totalorder %s107, %s108
    %p122 = scmp.eq.s32.totalorder %s22, 1
    %p123 = por %p121, %p122
    %p125 = scmp.ne.s32.totalorder %s108, %s124
    %p126 = scmp.eq.s32.totalorder %s22, 0
    %p127 = por %p125, %p126
    %s129 = sadd.s32 %s128, 1
    %p132 = scmp.eq.s32.totalorder %s16, 1
    %p133 = scmp.ne.s32.totalorder %s128, %s130
    %p134 = scmp.eq.s32.totalorder %s16, 0
    %p135 = por %p133, %p134
    %p136 = scmp.ne.s32.totalorder %s128, %s130
    %p137 = scmp.eq.s32.totalorder %s21, 1
    %p138 = por %p136, %p137
    %p139 = scmp.ne.s32.totalorder %s130, %s131
    %p140 = scmp.eq.s32.totalorder %s21, 0
    %p141 = por %p139, %p140
    %p142 = scmp.ne.s32.totalorder %s130, %s131
    %p143 = scmp.eq.s32.totalorder %s22, 1
    %p144 = por %p142, %p143
    %p146 = scmp.ne.s32.totalorder %s131, %s145
    %p147 = scmp.eq.s32.totalorder %s22, 0
    %p148 = por %p146, %p147
    %s150 = sadd.s32 %s149, 1
    %p153 = scmp.eq.s32.totalorder %s16, 1
    %p154 = scmp.ne.s32.totalorder %s149, %s151
    %p155 = scmp.eq.s32.totalorder %s16, 0
    %p156 = por %p154, %p155
    %p157 = scmp.ne.s32.totalorder %s149, %s151
    %p158 = scmp.eq.s32.totalorder %s21, 1
    %p159 = por %p157, %p158
    %p160 = scmp.ne.s32.totalorder %s151, %s152
    %p161 = scmp.eq.s32.totalorder %s21, 0
    %p162 = por %p160, %p161
    %p163 = scmp.ne.s32.totalorder %s151, %s152
    %p164 = scmp.eq.s32.totalorder %s22, 1
    %p165 = por %p163, %p164
    %p167 = scmp.ne.s32.totalorder %s152, %s166
    %p168 = scmp.eq.s32.totalorder %s22, 0
    %p169 = por %p167, %p168
    %s171 = sadd.s32 %s170, 1
    %p174 = scmp.eq.s32.totalorder %s16, 1
    %p175 = scmp.ne.s32.totalorder %s170, %s172
    %p176 = scmp.eq.s32.totalorder %s16, 0
    %p177 = por %p175, %p176
    %p178 = scmp.ne.s32.totalorder %s170, %s172
    %p179 = scmp.eq.s32.totalorder %s21, 1
    %p180 = por %p178, %p179
    %p181 = scmp.ne.s32.totalorder %s172, %s173
    %p182 = scmp.eq.s32.totalorder %s21, 0
    %p183 = por %p181, %p182
    %p184 = scmp.ne.s32.totalorder %s172, %s173
    %p185 = scmp.eq.s32.totalorder %s22, 1
    %p186 = por %p184, %p185
    %p188 = scmp.ne.s32.totalorder %s173, %s187
    %p189 = scmp.eq.s32.totalorder %s22, 0
    %p190 = por %p188, %p189
    %s192 = sadd.s32 %s191, 1
    %p195 = scmp.eq.s32.totalorder %s16, 1
    %p196 = scmp.ne.s32.totalorder %s191, %s193
    %p197 = scmp.eq.s32.totalorder %s16, 0
    %p198 = por %p196, %p197
    %p199 = scmp.ne.s32.totalorder %s191, %s193
    %p200 = scmp.eq.s32.totalorder %s21, 1
    %p201 = por %p199, %p200
    %p202 = scmp.ne.s32.totalorder %s193, %s194
    %p203 = scmp.eq.s32.totalorder %s21, 0
    %p204 = por %p202, %p203
    %p205 = scmp.ne.s32.totalorder %s193, %s194
    %p206 = scmp.eq.s32.totalorder %s22, 1
    %p207 = por %p205, %p206
    %p209 = scmp.ne.s32.totalorder %s194, %s208
    %p210 = scmp.eq.s32.totalorder %s22, 0
    %p211 = por %p209, %p210
    %s213 = sadd.s32 %s212, 1
    %p216 = scmp.eq.s32.totalorder %s16, 1
    %p217 = scmp.ne.s32.totalorder %s212, %s214
    %p218 = scmp.eq.s32.totalorder %s16, 0
    %p219 = por %p217, %p218
    %p220 = scmp.ne.s32.totalorder %s212, %s214
    %p221 = scmp.eq.s32.totalorder %s21, 1
    %p222 = por %p220, %p221
    %p223 = scmp.ne.s32.totalorder %s214, %s215
    %p224 = scmp.eq.s32.totalorder %s21, 0
    %p225 = por %p223, %p224
    %p226 = scmp.ne.s32.totalorder %s214, %s215
    %p227 = scmp.eq.s32.totalorder %s22, 1
    %p228 = por %p226, %p227
    %p230 = scmp.ne.s32.totalorder %s215, %s229
    %p231 = scmp.eq.s32.totalorder %s22, 0
    %p232 = por %p230, %p231
    %s234 = sadd.s32 %s233, 1
    %p237 = scmp.eq.s32.totalorder %s16, 1
    %p238 = scmp.ne.s32.totalorder %s233, %s235
    %p239 = scmp.eq.s32.totalorder %s16, 0
    %p240 = por %p238, %p239
    %p241 = scmp.ne.s32.totalorder %s233, %s235
    %p242 = scmp.eq.s32.totalorder %s21, 1
    %p243 = por %p241, %p242
    %p244 = scmp.ne.s32.totalorder %s235, %s236
    %p245 = scmp.eq.s32.totalorder %s21, 0
    %p246 = por %p244, %p245
    %p247 = scmp.ne.s32.totalorder %s235, %s236
    %p248 = scmp.eq.s32.totalorder %s22, 1
    %p249 = por %p247, %p248
    %p251 = scmp.ne.s32.totalorder %s236, %s250
    %p252 = scmp.eq.s32.totalorder %s22, 0
    %p253 = por %p251, %p252
    %s254 = ssub.s32 %s16, %s23
    %p255 = scmp.eq.s32.totalorder %s254, 0
    %s257 = sadd.s32 %s256, 1
    %s258 = scalar_select %p255, %s256, %s257
    %p261 = pneg %p255
    %p262 = scmp.eq.s32.totalorder %s16, 1
    %p263 = por %p261, %p262
    %p264 = scmp.ne.s32.totalorder %s256, %s259
    %p265 = scmp.eq.s32.totalorder %s16, 0
    %p266 = por %p264, %p265
    %p267 = scmp.ne.s32.totalorder %s256, %s259
    %p268 = scmp.eq.s32.totalorder %s21, 1
    %p269 = por %p267, %p268
    %p270 = scmp.ne.s32.totalorder %s259, %s260
    %p271 = scmp.eq.s32.totalorder %s21, 0
    %p272 = por %p270, %p271
    %p273 = scmp.ne.s32.totalorder %s259, %s260
    %p274 = scmp.eq.s32.totalorder %s22, 1
    %p275 = por %p273, %p274
    %p277 = scmp.ne.s32.totalorder %s260, %s276
    %p278 = scmp.eq.s32.totalorder %s22, 0
    %p279 = por %p277, %p278
    %p280 = scmp.le.s32.totalorder 1, %s16
    %p281 = scmp.lt.s32.totalorder %s16, 3
    %p282 = pnand %p280, %p281
    %p283 = pneg %p282
    // Predicated region
    $region9: #{segnn_graph_layers_forward.8} parent=5 // pred_check
      _
    $region10: #{segnn_graph_layers_forward.8} parent=5 // pred_check_branch
      %285 = sbr.rel (%p282) target = $region12
    $region11: #{segnn_graph_layers_forward.8} parent=5 // pred_region
      %s286 = ssub.s32 %s16, 1
      // Predicated region
      $region13: #{segnn_graph_layers_forward.8} parent=11 // pred_check
        %p287 = pneg %p141
      $region14: #{segnn_graph_layers_forward.8} parent=11 // pred_check_branch
        %289 = sbr.rel (%p287) target = $region16
      $region15: #{segnn_graph_layers_forward.8} parent=11 // pred_region
        _
      $region16: #{segnn_graph_layers_forward.8} parent=11 // pred_fallthru
        _
      // Predicated region
      $region17: #{segnn_graph_layers_forward.8} parent=11 // pred_check
        %p290 = pneg %p162
      $region18: #{segnn_graph_layers_forward.8} parent=11 // pred_check_branch
        %292 = sbr.rel (%p290) target = $region20
      $region19: #{segnn_graph_layers_forward.8} parent=11 // pred_region
        _
      $region20: #{segnn_graph_layers_forward.8} parent=11 // pred_fallthru
        _
      // Predicated region
      $region21: #{segnn_graph_layers_forward.8} parent=11 // pred_check
        %p293 = pneg %p183
      $region22: #{segnn_graph_layers_forward.8} parent=11 // pred_check_branch
        %295 = sbr.rel (%p293) target = $region24
      $region23: #{segnn_graph_layers_forward.8} parent=11 // pred_region
        _
      $region24: #{segnn_graph_layers_forward.8} parent=11 // pred_fallthru
        _
      // Predicated region
      $region25: #{segnn_graph_layers_forward.8} parent=11 // pred_check
        %p296 = pneg %p204
      $region26: #{segnn_graph_layers_forward.8} parent=11 // pred_check_branch
        %298 = sbr.rel (%p296) target = $region28
      $region27: #{segnn_graph_layers_forward.8} parent=11 // pred_region
        _
      $region28: #{segnn_graph_layers_forward.8} parent=11 // pred_fallthru
        _
      // Predicated region
      $region29: #{segnn_graph_layers_forward.8} parent=11 // pred_check
        %p299 = pneg %p225
      $region30: #{segnn_graph_layers_forward.8} parent=11 // pred_check_branch
        %301 = sbr.rel (%p299) target = $region32
      $region31: #{segnn_graph_layers_forward.8} parent=11 // pred_region
        _
      $region32: #{segnn_graph_layers_forward.8} parent=11 // pred_fallthru
        _
      // Predicated region
      $region33: #{segnn_graph_layers_forward.8} parent=11 // pred_check
        %p302 = pneg %p246
      $region34: #{segnn_graph_layers_forward.8} parent=11 // pred_check_branch
        %304 = sbr.rel (%p302) target = $region36
      $region35: #{segnn_graph_layers_forward.8} parent=11 // pred_region
        _
      $region36: #{segnn_graph_layers_forward.8} parent=11 // pred_fallthru
        _
    $region12: #{segnn_graph_layers_forward.8} parent=5 // pred_fallthru
      _
    %p305 = scmp.lt.s32.totalorder %s16, 2
    // Predicated region
    $region37: #{segnn_graph_layers_forward.8} parent=5 // pred_check
      %p306 = pneg %p305
    $region38: #{segnn_graph_layers_forward.8} parent=5 // pred_check_branch
      %308 = sbr.rel (%p306) target = $region40
    $region39: #{segnn_graph_layers_forward.8} parent=5 // pred_region
      // Predicated region
      $region41: #{segnn_graph_layers_forward.8} parent=39 // pred_check
        %p309 = pneg %p36
      $region42: #{segnn_graph_layers_forward.8} parent=39 // pred_check_branch
        %311 = sbr.rel (%p309) target = $region44
      $region43: #{segnn_graph_layers_forward.8} parent=39 // pred_region
        %s312 = smul.u32 16, %s16
        %p313 = scmp.lt.s32.totalorder %s312, 31
        %s314 = scalar_select %p313, %s312, 31
        %s315 = smul.addr %s314, 4
        %s316 = scalar_lea.vmem %s0, %s315
        %s317 = smul.u32 16, %s16
      $region44: #{segnn_graph_layers_forward.8} parent=39 // pred_fallthru
        _
      // Predicated region
      $region45: #{segnn_graph_layers_forward.8} parent=39 // pred_check
        %p318 = pneg %p62
      $region46: #{segnn_graph_layers_forward.8} parent=39 // pred_check_branch
        %320 = sbr.rel (%p318) target = $region48
      $region47: #{segnn_graph_layers_forward.8} parent=39 // pred_region
        %s321 = smul.u32 16, %s16
        %p322 = scmp.lt.s32.totalorder %s321, 31
        %s323 = scalar_select %p322, %s321, 31
        %s324 = smul.addr %s323, 4
        %s325 = scalar_lea.vmem %s1, %s324
        %s326 = smul.u32 16, %s16
      $region48: #{segnn_graph_layers_forward.8} parent=39 // pred_fallthru
        _
      // Predicated region
      $region49: #{segnn_graph_layers_forward.8} parent=39 // pred_check
        %p327 = pneg %p88
      $region50: #{segnn_graph_layers_forward.8} parent=39 // pred_check_branch
        %329 = sbr.rel (%p327) target = $region52
      $region51: #{segnn_graph_layers_forward.8} parent=39 // pred_region
        %s330 = smul.u32 16, %s16
        %p331 = scmp.lt.s32.totalorder %s330, 31
        %s332 = scalar_select %p331, %s330, 31
        %s333 = smul.addr %s332, 4
        %s334 = scalar_lea.vmem %s2, %s333
        %s335 = smul.u32 16, %s16
      $region52: #{segnn_graph_layers_forward.8} parent=39 // pred_fallthru
        _
      // Predicated region
      $region53: #{segnn_graph_layers_forward.8} parent=39 // pred_check
        %p336 = pneg %p114
      $region54: #{segnn_graph_layers_forward.8} parent=39 // pred_check_branch
        %338 = sbr.rel (%p336) target = $region56
      $region55: #{segnn_graph_layers_forward.8} parent=39 // pred_region
        %s339 = smul.u32 16, %s16
        %p340 = scmp.lt.s32.totalorder %s339, 31
        %s341 = scalar_select %p340, %s339, 31
        %s342 = smul.addr %s341, 4
        %s343 = scalar_lea.vmem %s3, %s342
        %s344 = smul.u32 16, %s16
      $region56: #{segnn_graph_layers_forward.8} parent=39 // pred_fallthru
        _
    $region40: #{segnn_graph_layers_forward.8} parent=5 // pred_fallthru
      _
    %p345 = scmp.le.s32.totalorder 1, %s16
    %p346 = scmp.lt.s32.totalorder %s16, 3
    %p347 = pnand %p345, %p346
    %p348 = pneg %p347
    // Predicated region
    $region57: #{segnn_graph_layers_forward.8} parent=5 // pred_check
      _
    $region58: #{segnn_graph_layers_forward.8} parent=5 // pred_check_branch
      %350 = sbr.rel (%p347) target = $region60
    $region59: #{segnn_graph_layers_forward.8} parent=5 // pred_region
      %s351 = ssub.s32 %s16, 1
      %s352 = smul.u32 16, %s21
      %p353 = scmp.lt.s32.totalorder %s352, 31
      %s354 = scalar_select %p353, %s352, 31
      %s355 = smul.addr %s354, 4
      %s356 = scalar_lea.vmem %s0, %s355
      %p357 = pneg %p42
      %p358 = pneg %p39
      %s359 = smul.u32 16, %s21
      %p360 = scmp.lt.s32.totalorder %s359, 31
      %s361 = scalar_select %p360, %s359, 31
      %s362 = smul.addr %s361, 4
      %s363 = scalar_lea.vmem %s1, %s362
      %p364 = pneg %p68
      %p365 = pneg %p65
      %s366 = smul.u32 16, %s21
      %p367 = scmp.lt.s32.totalorder %s366, 31
      %s368 = scalar_select %p367, %s366, 31
      %s369 = smul.addr %s368, 4
      %s370 = scalar_lea.vmem %s2, %s369
      %p371 = pneg %p94
      %p372 = pneg %p91
      %s373 = smul.u32 16, %s21
      %p374 = scmp.lt.s32.totalorder %s373, 31
      %s375 = scalar_select %p374, %s373, 31
      %s376 = smul.addr %s375, 4
      %s377 = scalar_lea.vmem %s3, %s376
      %p378 = pneg %p120
      %p379 = pneg %p117
      %p380 = pneg %p141
      %p381 = pneg %p138
      %p382 = pneg %p162
      %p383 = pneg %p159
      %p384 = pneg %p183
      %p385 = pneg %p180
      %p386 = pneg %p204
      %p387 = pneg %p201
      %p388 = pneg %p225
      %p389 = pneg %p222
      %p390 = pneg %p246
      %p391 = pneg %p243
      %p392 = pneg %p272
      %p393 = pneg %p269
      %s394 = smul.u32 16, %s21
      %p395 = scmp.lt.s32.totalorder %s394, 31
      %s396 = scalar_select %p395, %s394, 31
      %s397 = smul.addr %s396, 4
      %s398 = scalar_lea.vmem %s10, %s397
      %s399 = smul.u32 16, %s21
      %p400 = scmp.lt.s32.totalorder %s399, 31
      %s401 = scalar_select %p400, %s399, 31
      %s402 = smul.addr %s401, 4
      %s403 = scalar_lea.vmem %s0, %s402
      %s404 = smul.u32 16, %s21
      %s405 = smul.u32 16, %s21
      %p406 = scmp.lt.s32.totalorder %s405, 31
      %s407 = scalar_select %p406, %s405, 31
      %s408 = smul.addr %s407, 4
      %s409 = scalar_lea.vmem %s1, %s408
      %s410 = smul.u32 16, %s21
      %s411 = smul.u32 16, %s21
      %p412 = scmp.lt.s32.totalorder %s411, 31
      %s413 = scalar_select %p412, %s411, 31
      %s414 = smul.addr %s413, 4
      %s415 = scalar_lea.vmem %s2, %s414
      %s416 = smul.u32 16, %s21
      %s417 = smul.u32 16, %s21
      %p418 = scmp.lt.s32.totalorder %s417, 31
      %s419 = scalar_select %p418, %s417, 31
      %s420 = smul.addr %s419, 4
      %s421 = scalar_lea.vmem %s3, %s420
      %s422 = smul.u32 16, %s21
      %s423 = smul.u32 16, %s21
      %p424 = scmp.lt.s32.totalorder %s423, 31
      %s425 = scalar_select %p424, %s423, 31
      %s426 = smul.addr %s425, 4
      %s427 = scalar_lea.vmem %s10, %s426
      %s428 = smul.u32 16, %s21
      %v430 = vld [vmem:[%s421] sm:$0xf]
      %v431 = vld [vmem:[%s421 + $0x4] sm:$0xf]
      %v432 = vld [vmem:[%s421 + $0x8] sm:$0xf]
      %v433 = vld [vmem:[%s421 + $0xc] sm:$0xf]
      %v434 = vld [vmem:[%s421 + $0x10] sm:$0xf]
      %v435 = vld [vmem:[%s421 + $0x14] sm:$0xf]
      %v436 = vld [vmem:[%s421 + $0x18] sm:$0xf]
      %v437 = vld [vmem:[%s421 + $0x1c] sm:$0xf]
      %v438 = vld [vmem:[%s421 + $0x20] sm:$0xf]
      %v439 = vld [vmem:[%s421 + $0x24] sm:$0xf]
      %v440 = vld [vmem:[%s421 + $0x28] sm:$0xf]
      %v441 = vld [vmem:[%s421 + $0x2c] sm:$0xf]
      %v442 = vld [vmem:[%s421 + $0x30] sm:$0xf]
      %v443 = vld [vmem:[%s421 + $0x34] sm:$0xf]
      %v444 = vld [vmem:[%s421 + $0x38] sm:$0xf]
      %v445 = vld [vmem:[%s421 + $0x3c] sm:$0xf]
      %v446 = vunpack.c.l.bf16 %v430
      %v447 = vunpack.c.l.bf16 %v431
      %v448 = vunpack.c.l.bf16 %v432
      %v449 = vunpack.c.l.bf16 %v433
      %v450 = vunpack.c.l.bf16 %v434
      %v451 = vunpack.c.l.bf16 %v435
      %v452 = vunpack.c.l.bf16 %v436
      %v453 = vunpack.c.l.bf16 %v437
      %v454 = vunpack.c.l.bf16 %v438
      %v455 = vunpack.c.l.bf16 %v439
      %v456 = vunpack.c.l.bf16 %v440
      %v457 = vunpack.c.l.bf16 %v441
      %v458 = vunpack.c.l.bf16 %v442
      %v459 = vunpack.c.l.bf16 %v443
      %v460 = vunpack.c.l.bf16 %v444
      %v461 = vunpack.c.l.bf16 %v445
      %v462 = vld [vmem:[%s403] sm:$0xf]
      %v463 = vld [vmem:[%s403 + $0x4] sm:$0xf]
      %v464 = vld [vmem:[%s403 + $0x8] sm:$0xf]
      %v465 = vld [vmem:[%s403 + $0xc] sm:$0xf]
      %v466 = vld [vmem:[%s403 + $0x10] sm:$0xf]
      %v467 = vld [vmem:[%s403 + $0x14] sm:$0xf]
      %v468 = vld [vmem:[%s403 + $0x18] sm:$0xf]
      %v469 = vld [vmem:[%s403 + $0x1c] sm:$0xf]
      %v470 = vld [vmem:[%s403 + $0x20] sm:$0xf]
      %v471 = vld [vmem:[%s403 + $0x24] sm:$0xf]
      %v472 = vld [vmem:[%s403 + $0x28] sm:$0xf]
      %v473 = vld [vmem:[%s403 + $0x2c] sm:$0xf]
      %v474 = vld [vmem:[%s403 + $0x30] sm:$0xf]
      %v475 = vld [vmem:[%s403 + $0x34] sm:$0xf]
      %v476 = vld [vmem:[%s403 + $0x38] sm:$0xf]
      %v477 = vld [vmem:[%s403 + $0x3c] sm:$0xf]
      %v478 = vld [vmem:[%s4] sm:$0xff]
      %v479 = vld [vmem:[%s4 + $0x8] sm:$0xff]
      %v480 = vld [vmem:[%s4 + $0x10] sm:$0xff]
      %v481 = vld [vmem:[%s4 + $0x18] sm:$0xff]
      %v482 = vld [vmem:[%s4 + $0x20] sm:$0xff]
      %v483 = vld [vmem:[%s4 + $0x28] sm:$0xff]
      %v484 = vld [vmem:[%s4 + $0x30] sm:$0xff]
      %v485 = vld [vmem:[%s4 + $0x38] sm:$0xff]
      %v486 = vld [vmem:[%s4 + $0x40] sm:$0xff]
      %v487 = vld [vmem:[%s4 + $0x48] sm:$0xff]
      %v488 = vld [vmem:[%s4 + $0x50] sm:$0xff]
      %v489 = vld [vmem:[%s4 + $0x58] sm:$0xff]
      %v490 = vld [vmem:[%s4 + $0x60] sm:$0xff]
      %v491 = vld [vmem:[%s4 + $0x68] sm:$0xff]
      %v492 = vld [vmem:[%s4 + $0x70] sm:$0xff]
      %v493 = vld [vmem:[%s4 + $0x78] sm:$0xff]
      %v494 = vld [vmem:[%s4 + $0x80] sm:$0xff]
      %v495 = vld [vmem:[%s4 + $0x88] sm:$0xff]
      %v496 = vld [vmem:[%s4 + $0x90] sm:$0xff]
      %v497 = vld [vmem:[%s4 + $0x98] sm:$0xff]
      %v498 = vld [vmem:[%s4 + $0xa0] sm:$0xff]
      %v499 = vld [vmem:[%s4 + $0xa8] sm:$0xff]
      %v500 = vld [vmem:[%s4 + $0xb0] sm:$0xff]
      %v501 = vld [vmem:[%s4 + $0xb8] sm:$0xff]
      %v502 = vld [vmem:[%s4 + $0xc0] sm:$0xff]
      %v503 = vld [vmem:[%s4 + $0xc8] sm:$0xff]
      %v504 = vld [vmem:[%s4 + $0xd0] sm:$0xff]
      %v505 = vld [vmem:[%s4 + $0xd8] sm:$0xff]
      %v506 = vld [vmem:[%s4 + $0xe0] sm:$0xff]
      %v507 = vld [vmem:[%s4 + $0xe8] sm:$0xff]
      %v508 = vld [vmem:[%s4 + $0xf0] sm:$0xff]
      %v509 = vld [vmem:[%s4 + $0xf8] sm:$0xff]
      %v510 = vld [vmem:[%s4 + $0x100] sm:$0xff]
      %v511 = vld [vmem:[%s4 + $0x108] sm:$0xff]
      %v512 = vld [vmem:[%s4 + $0x110] sm:$0xff]
      %v513 = vld [vmem:[%s4 + $0x118] sm:$0xff]
      %v514 = vld [vmem:[%s4 + $0x120] sm:$0xff]
      %v515 = vld [vmem:[%s4 + $0x128] sm:$0xff]
      %v516 = vld [vmem:[%s4 + $0x130] sm:$0xff]
      %v517 = vld [vmem:[%s4 + $0x138] sm:$0xff]
      %v518 = vld [vmem:[%s4 + $0x140] sm:$0xff]
      %v519 = vld [vmem:[%s4 + $0x148] sm:$0xff]
      %v520 = vld [vmem:[%s4 + $0x150] sm:$0xff]
      %v521 = vld [vmem:[%s4 + $0x158] sm:$0xff]
      %v522 = vld [vmem:[%s4 + $0x160] sm:$0xff]
      %v523 = vld [vmem:[%s4 + $0x168] sm:$0xff]
      %v524 = vld [vmem:[%s4 + $0x170] sm:$0xff]
      %v525 = vld [vmem:[%s4 + $0x178] sm:$0xff]
      %v526 = vld [vmem:[%s4 + $0x180] sm:$0xff]
      %v527 = vld [vmem:[%s4 + $0x188] sm:$0xff]
      %v528 = vld [vmem:[%s4 + $0x190] sm:$0xff]
      %v529 = vld [vmem:[%s4 + $0x198] sm:$0xff]
      %v530 = vld [vmem:[%s4 + $0x1a0] sm:$0xff]
      %v531 = vld [vmem:[%s4 + $0x1a8] sm:$0xff]
      %v532 = vld [vmem:[%s4 + $0x1b0] sm:$0xff]
      %v533 = vld [vmem:[%s4 + $0x1b8] sm:$0xff]
      %v534 = vld [vmem:[%s4 + $0x1c0] sm:$0xff]
      %v535 = vld [vmem:[%s4 + $0x1c8] sm:$0xff]
      %v536 = vld [vmem:[%s4 + $0x1d0] sm:$0xff]
      %v537 = vld [vmem:[%s4 + $0x1d8] sm:$0xff]
      %v538 = vld [vmem:[%s4 + $0x1e0] sm:$0xff]
      %v539 = vld [vmem:[%s4 + $0x1e8] sm:$0xff]
      %v540 = vld [vmem:[%s4 + $0x1f0] sm:$0xff]
      %v541 = vld [vmem:[%s4 + $0x1f8] sm:$0xff]
      %v542 = vld [vmem:[%s409] sm:$0xf]
      %v543 = vld [vmem:[%s409 + $0x4] sm:$0xf]
      %v544 = vld [vmem:[%s409 + $0x8] sm:$0xf]
      %v545 = vld [vmem:[%s409 + $0xc] sm:$0xf]
      %v546 = vld [vmem:[%s409 + $0x10] sm:$0xf]
      %v547 = vld [vmem:[%s409 + $0x14] sm:$0xf]
      %v548 = vld [vmem:[%s409 + $0x18] sm:$0xf]
      %v549 = vld [vmem:[%s409 + $0x1c] sm:$0xf]
      %v550 = vld [vmem:[%s409 + $0x20] sm:$0xf]
      %v551 = vld [vmem:[%s409 + $0x24] sm:$0xf]
      %v552 = vld [vmem:[%s409 + $0x28] sm:$0xf]
      %v553 = vld [vmem:[%s409 + $0x2c] sm:$0xf]
      %v554 = vld [vmem:[%s409 + $0x30] sm:$0xf]
      %v555 = vld [vmem:[%s409 + $0x34] sm:$0xf]
      %v556 = vld [vmem:[%s409 + $0x38] sm:$0xf]
      %v557 = vld [vmem:[%s409 + $0x3c] sm:$0xf]
      %v558 = vld [vmem:[%s5] sm:$0xff]
      %v559 = vld [vmem:[%s5 + $0x8] sm:$0xff]
      %v560 = vld [vmem:[%s5 + $0x10] sm:$0xff]
      %v561 = vld [vmem:[%s5 + $0x18] sm:$0xff]
      %v562 = vld [vmem:[%s5 + $0x20] sm:$0xff]
      %v563 = vld [vmem:[%s5 + $0x28] sm:$0xff]
      %v564 = vld [vmem:[%s5 + $0x30] sm:$0xff]
      %v565 = vld [vmem:[%s5 + $0x38] sm:$0xff]
      %v566 = vld [vmem:[%s5 + $0x40] sm:$0xff]
      %v567 = vld [vmem:[%s5 + $0x48] sm:$0xff]
      %v568 = vld [vmem:[%s5 + $0x50] sm:$0xff]
      %v569 = vld [vmem:[%s5 + $0x58] sm:$0xff]
      %v570 = vld [vmem:[%s5 + $0x60] sm:$0xff]
      %v571 = vld [vmem:[%s5 + $0x68] sm:$0xff]
      %v572 = vld [vmem:[%s5 + $0x70] sm:$0xff]
      %v573 = vld [vmem:[%s5 + $0x78] sm:$0xff]
      %v574 = vld [vmem:[%s5 + $0x80] sm:$0xff]
      %v575 = vld [vmem:[%s5 + $0x88] sm:$0xff]
      %v576 = vld [vmem:[%s5 + $0x90] sm:$0xff]
      %v577 = vld [vmem:[%s5 + $0x98] sm:$0xff]
      %v578 = vld [vmem:[%s5 + $0xa0] sm:$0xff]
      %v579 = vld [vmem:[%s5 + $0xa8] sm:$0xff]
      %v580 = vld [vmem:[%s5 + $0xb0] sm:$0xff]
      %v581 = vld [vmem:[%s5 + $0xb8] sm:$0xff]
      %v582 = vld [vmem:[%s5 + $0xc0] sm:$0xff]
      %v583 = vld [vmem:[%s5 + $0xc8] sm:$0xff]
      %v584 = vld [vmem:[%s5 + $0xd0] sm:$0xff]
      %v585 = vld [vmem:[%s5 + $0xd8] sm:$0xff]
      %v586 = vld [vmem:[%s5 + $0xe0] sm:$0xff]
      %v587 = vld [vmem:[%s5 + $0xe8] sm:$0xff]
      %v588 = vld [vmem:[%s5 + $0xf0] sm:$0xff]
      %v589 = vld [vmem:[%s5 + $0xf8] sm:$0xff]
      %v590 = vld [vmem:[%s5 + $0x100] sm:$0xff]
      %v591 = vld [vmem:[%s5 + $0x108] sm:$0xff]
      %v592 = vld [vmem:[%s5 + $0x110] sm:$0xff]
      %v593 = vld [vmem:[%s5 + $0x118] sm:$0xff]
      %v594 = vld [vmem:[%s5 + $0x120] sm:$0xff]
      %v595 = vld [vmem:[%s5 + $0x128] sm:$0xff]
      %v596 = vld [vmem:[%s5 + $0x130] sm:$0xff]
      %v597 = vld [vmem:[%s5 + $0x138] sm:$0xff]
      %v598 = vld [vmem:[%s5 + $0x140] sm:$0xff]
      %v599 = vld [vmem:[%s5 + $0x148] sm:$0xff]
      %v600 = vld [vmem:[%s5 + $0x150] sm:$0xff]
      %v601 = vld [vmem:[%s5 + $0x158] sm:$0xff]
      %v602 = vld [vmem:[%s5 + $0x160] sm:$0xff]
      %v603 = vld [vmem:[%s5 + $0x168] sm:$0xff]
      %v604 = vld [vmem:[%s5 + $0x170] sm:$0xff]
      %v605 = vld [vmem:[%s5 + $0x178] sm:$0xff]
      %v606 = vld [vmem:[%s5 + $0x180] sm:$0xff]
      %v607 = vld [vmem:[%s5 + $0x188] sm:$0xff]
      %v608 = vld [vmem:[%s5 + $0x190] sm:$0xff]
      %v609 = vld [vmem:[%s5 + $0x198] sm:$0xff]
      %v610 = vld [vmem:[%s5 + $0x1a0] sm:$0xff]
      %v611 = vld [vmem:[%s5 + $0x1a8] sm:$0xff]
      %v612 = vld [vmem:[%s5 + $0x1b0] sm:$0xff]
      %v613 = vld [vmem:[%s5 + $0x1b8] sm:$0xff]
      %v614 = vld [vmem:[%s5 + $0x1c0] sm:$0xff]
      %v615 = vld [vmem:[%s5 + $0x1c8] sm:$0xff]
      %v616 = vld [vmem:[%s5 + $0x1d0] sm:$0xff]
      %v617 = vld [vmem:[%s5 + $0x1d8] sm:$0xff]
      %v618 = vld [vmem:[%s5 + $0x1e0] sm:$0xff]
      %v619 = vld [vmem:[%s5 + $0x1e8] sm:$0xff]
      %v620 = vld [vmem:[%s5 + $0x1f0] sm:$0xff]
      %v621 = vld [vmem:[%s5 + $0x1f8] sm:$0xff]
      %v638 = vunpack.c.l.b16 %v542
      %v639 = vunpack.c.l.b16 %v543
      %v640 = vunpack.c.l.b16 %v544
      %v641 = vunpack.c.l.b16 %v545
      %v642 = vunpack.c.l.b16 %v546
      %v643 = vunpack.c.l.b16 %v547
      %v644 = vunpack.c.l.b16 %v548
      %v645 = vunpack.c.l.b16 %v549
      %v646 = vunpack.c.l.b16 %v550
      %v647 = vunpack.c.l.b16 %v551
      %v648 = vunpack.c.l.b16 %v552
      %v649 = vunpack.c.l.b16 %v553
      %v650 = vunpack.c.l.b16 %v554
      %v651 = vunpack.c.l.b16 %v555
      %v652 = vunpack.c.l.b16 %v556
      %v653 = vunpack.c.l.b16 %v557
      %v654 = vpack.c.b16 %v639, %v638
      %v655 = vpack.c.b16 %v641, %v640
      %v656 = vpack.c.b16 %v643, %v642
      %v657 = vpack.c.b16 %v645, %v644
      %v658 = vpack.c.b16 %v647, %v646
      %v659 = vpack.c.b16 %v649, %v648
      %v660 = vpack.c.b16 %v651, %v650
      %v661 = vpack.c.b16 %v653, %v652
      %v734 = vunpack.c.l.b16 %v558
      %v735 = vunpack.c.h.b16 %v558
      %v736 = vunpack.c.l.b16 %v559
      %v737 = vunpack.c.h.b16 %v559
      %v738 = vunpack.c.l.b16 %v560
      %v739 = vunpack.c.h.b16 %v560
      %v740 = vunpack.c.l.b16 %v561
      %v741 = vunpack.c.h.b16 %v561
      %v742 = vunpack.c.l.b16 %v562
      %v743 = vunpack.c.h.b16 %v562
      %v744 = vunpack.c.l.b16 %v563
      %v745 = vunpack.c.h.b16 %v563
      %v746 = vunpack.c.l.b16 %v564
      %v747 = vunpack.c.h.b16 %v564
      %v748 = vunpack.c.l.b16 %v565
      %v749 = vunpack.c.h.b16 %v565
      %v750 = vunpack.c.l.b16 %v566
      %v751 = vunpack.c.h.b16 %v566
      %v752 = vunpack.c.l.b16 %v567
      %v753 = vunpack.c.h.b16 %v567
      %v754 = vunpack.c.l.b16 %v568
      %v755 = vunpack.c.h.b16 %v568
      %v756 = vunpack.c.l.b16 %v569
      %v757 = vunpack.c.h.b16 %v569
      %v758 = vunpack.c.l.b16 %v570
      %v759 = vunpack.c.h.b16 %v570
      %v760 = vunpack.c.l.b16 %v571
      %v761 = vunpack.c.h.b16 %v571
      %v762 = vunpack.c.l.b16 %v572
      %v763 = vunpack.c.h.b16 %v572
      %v764 = vunpack.c.l.b16 %v573
      %v765 = vunpack.c.h.b16 %v573
      %v766 = vunpack.c.l.b16 %v574
      %v767 = vunpack.c.h.b16 %v574
      %v768 = vunpack.c.l.b16 %v575
      %v769 = vunpack.c.h.b16 %v575
      %v770 = vunpack.c.l.b16 %v576
      %v771 = vunpack.c.h.b16 %v576
      %v772 = vunpack.c.l.b16 %v577
      %v773 = vunpack.c.h.b16 %v577
      %v774 = vunpack.c.l.b16 %v578
      %v775 = vunpack.c.h.b16 %v578
      %v776 = vunpack.c.l.b16 %v579
      %v777 = vunpack.c.h.b16 %v579
      %v778 = vunpack.c.l.b16 %v580
      %v779 = vunpack.c.h.b16 %v580
      %v780 = vunpack.c.l.b16 %v581
      %v781 = vunpack.c.h.b16 %v581
      %v782 = vunpack.c.l.b16 %v582
      %v783 = vunpack.c.h.b16 %v582
      %v784 = vunpack.c.l.b16 %v583
      %v785 = vunpack.c.h.b16 %v583
      %v786 = vunpack.c.l.b16 %v584
      %v787 = vunpack.c.h.b16 %v584
      %v788 = vunpack.c.l.b16 %v585
      %v789 = vunpack.c.h.b16 %v585
      %v790 = vunpack.c.l.b16 %v586
      %v791 = vunpack.c.h.b16 %v586
      %v792 = vunpack.c.l.b16 %v587
      %v793 = vunpack.c.h.b16 %v587
      %v794 = vunpack.c.l.b16 %v588
      %v795 = vunpack.c.h.b16 %v588
      %v796 = vunpack.c.l.b16 %v589
      %v797 = vunpack.c.h.b16 %v589
      %v798 = vunpack.c.l.b16 %v590
      %v799 = vunpack.c.h.b16 %v590
      %v800 = vunpack.c.l.b16 %v591
      %v801 = vunpack.c.h.b16 %v591
      %v802 = vunpack.c.l.b16 %v592
      %v803 = vunpack.c.h.b16 %v592
      %v804 = vunpack.c.l.b16 %v593
      %v805 = vunpack.c.h.b16 %v593
      %v806 = vunpack.c.l.b16 %v594
      %v807 = vunpack.c.h.b16 %v594
      %v808 = vunpack.c.l.b16 %v595
      %v809 = vunpack.c.h.b16 %v595
      %v810 = vunpack.c.l.b16 %v596
      %v811 = vunpack.c.h.b16 %v596
      %v812 = vunpack.c.l.b16 %v597
      %v813 = vunpack.c.h.b16 %v597
      %v814 = vunpack.c.l.b16 %v598
      %v815 = vunpack.c.h.b16 %v598
      %v816 = vunpack.c.l.b16 %v599
      %v817 = vunpack.c.h.b16 %v599
      %v818 = vunpack.c.l.b16 %v600
      %v819 = vunpack.c.h.b16 %v600
      %v820 = vunpack.c.l.b16 %v601
      %v821 = vunpack.c.h.b16 %v601
      %v822 = vunpack.c.l.b16 %v602
      %v823 = vunpack.c.h.b16 %v602
      %v824 = vunpack.c.l.b16 %v603
      %v825 = vunpack.c.h.b16 %v603
      %v826 = vunpack.c.l.b16 %v604
      %v827 = vunpack.c.h.b16 %v604
      %v828 = vunpack.c.l.b16 %v605
      %v829 = vunpack.c.h.b16 %v605
      %v830 = vunpack.c.l.b16 %v606
      %v831 = vunpack.c.h.b16 %v606
      %v832 = vunpack.c.l.b16 %v607
      %v833 = vunpack.c.h.b16 %v607
      %v834 = vunpack.c.l.b16 %v608
      %v835 = vunpack.c.h.b16 %v608
      %v836 = vunpack.c.l.b16 %v609
      %v837 = vunpack.c.h.b16 %v609
      %v838 = vunpack.c.l.b16 %v610
      %v839 = vunpack.c.h.b16 %v610
      %v840 = vunpack.c.l.b16 %v611
      %v841 = vunpack.c.h.b16 %v611
      %v842 = vunpack.c.l.b16 %v612
      %v843 = vunpack.c.h.b16 %v612
      %v844 = vunpack.c.l.b16 %v613
      %v845 = vunpack.c.h.b16 %v613
      %v846 = vunpack.c.l.b16 %v614
      %v847 = vunpack.c.h.b16 %v614
      %v848 = vunpack.c.l.b16 %v615
      %v849 = vunpack.c.h.b16 %v615
      %v850 = vunpack.c.l.b16 %v616
      %v851 = vunpack.c.h.b16 %v616
      %v852 = vunpack.c.l.b16 %v617
      %v853 = vunpack.c.h.b16 %v617
      %v854 = vunpack.c.l.b16 %v618
      %v855 = vunpack.c.h.b16 %v618
      %v856 = vunpack.c.l.b16 %v619
      %v857 = vunpack.c.h.b16 %v619
      %v858 = vunpack.c.l.b16 %v620
      %v859 = vunpack.c.h.b16 %v620
      %v860 = vunpack.c.l.b16 %v621
      %v861 = vunpack.c.h.b16 %v621
      %v862 = vpack.c.b16 %v742, %v734
      %v863 = vpack.c.b16 %v743, %v735
      %v864 = vpack.c.b16 %v744, %v736
      %v865 = vpack.c.b16 %v745, %v737
      %v866 = vpack.c.b16 %v746, %v738
      %v867 = vpack.c.b16 %v747, %v739
      %v868 = vpack.c.b16 %v748, %v740
      %v869 = vpack.c.b16 %v749, %v741
      %v870 = vpack.c.b16 %v758, %v750
      %v871 = vpack.c.b16 %v759, %v751
      %v872 = vpack.c.b16 %v760, %v752
      %v873 = vpack.c.b16 %v761, %v753
      %v874 = vpack.c.b16 %v762, %v754
      %v875 = vpack.c.b16 %v763, %v755
      %v876 = vpack.c.b16 %v764, %v756
      %v877 = vpack.c.b16 %v765, %v757
      %v878 = vpack.c.b16 %v774, %v766
      %v879 = vpack.c.b16 %v775, %v767
      %v880 = vpack.c.b16 %v776, %v768
      %v881 = vpack.c.b16 %v777, %v769
      %v882 = vpack.c.b16 %v778, %v770
      %v883 = vpack.c.b16 %v779, %v771
      %v884 = vpack.c.b16 %v780, %v772
      %v885 = vpack.c.b16 %v781, %v773
      %v886 = vpack.c.b16 %v790, %v782
      %v887 = vpack.c.b16 %v791, %v783
      %v888 = vpack.c.b16 %v792, %v784
      %v889 = vpack.c.b16 %v793, %v785
      %v890 = vpack.c.b16 %v794, %v786
      %v891 = vpack.c.b16 %v795, %v787
      %v892 = vpack.c.b16 %v796, %v788
      %v893 = vpack.c.b16 %v797, %v789
      %v894 = vpack.c.b16 %v806, %v798
      %v895 = vpack.c.b16 %v807, %v799
      %v896 = vpack.c.b16 %v808, %v800
      %v897 = vpack.c.b16 %v809, %v801
      %v898 = vpack.c.b16 %v810, %v802
      %v899 = vpack.c.b16 %v811, %v803
      %v900 = vpack.c.b16 %v812, %v804
      %v901 = vpack.c.b16 %v813, %v805
      %v902 = vpack.c.b16 %v822, %v814
      %v903 = vpack.c.b16 %v823, %v815
      %v904 = vpack.c.b16 %v824, %v816
      %v905 = vpack.c.b16 %v825, %v817
      %v906 = vpack.c.b16 %v826, %v818
      %v907 = vpack.c.b16 %v827, %v819
      %v908 = vpack.c.b16 %v828, %v820
      %v909 = vpack.c.b16 %v829, %v821
      %v910 = vpack.c.b16 %v838, %v830
      %v911 = vpack.c.b16 %v839, %v831
      %v912 = vpack.c.b16 %v840, %v832
      %v913 = vpack.c.b16 %v841, %v833
      %v914 = vpack.c.b16 %v842, %v834
      %v915 = vpack.c.b16 %v843, %v835
      %v916 = vpack.c.b16 %v844, %v836
      %v917 = vpack.c.b16 %v845, %v837
      %v918 = vpack.c.b16 %v854, %v846
      %v919 = vpack.c.b16 %v855, %v847
      %v920 = vpack.c.b16 %v856, %v848
      %v921 = vpack.c.b16 %v857, %v849
      %v922 = vpack.c.b16 %v858, %v850
      %v923 = vpack.c.b16 %v859, %v851
      %v924 = vpack.c.b16 %v860, %v852
      %v925 = vpack.c.b16 %v861, %v853
      %990 = vmatpush.bf16.msra.mxu0 %v918
      %991 = vmatpush.bf16.msra.mxu0 %v910
      %992 = vmatpush.bf16.msra.mxu0 %v902
      %993 = vmatpush.bf16.msra.mxu0 %v894
      %994 = vmatpush.bf16.msra.mxu0 %v886
      %995 = vmatpush.bf16.msra.mxu0 %v878
      %996 = vmatpush.bf16.msra.mxu0 %v870
      %997 = vmatpush.bf16.msra.mxu0 %v862
      %998 = vmatmul.bf16.gmra.mxu0 %v654
      %v999 = vpop.f32.mrf.mxu0
      %v1000 = vadd.f32 0.0, %v999
      %v1001 = vpop.f32.mrf.mxu0
      %v1002 = vadd.f32 0.0, %v1001
      %1003 = vmatmul.bf16.gmra.mxu0 %v655
      %v1004 = vpop.f32.mrf.mxu0
      %v1005 = vadd.f32 0.0, %v1004
      %v1006 = vpop.f32.mrf.mxu0
      %v1007 = vadd.f32 0.0, %v1006
      %1008 = vmatmul.bf16.gmra.mxu0 %v656
      %v1009 = vpop.f32.mrf.mxu0
      %v1010 = vadd.f32 0.0, %v1009
      %v1011 = vpop.f32.mrf.mxu0
      %v1012 = vadd.f32 0.0, %v1011
      %1013 = vmatmul.bf16.gmra.mxu0 %v657
      %v1014 = vpop.f32.mrf.mxu0
      %v1015 = vadd.f32 0.0, %v1014
      %v1016 = vpop.f32.mrf.mxu0
      %v1017 = vadd.f32 0.0, %v1016
      %1018 = vmatmul.bf16.gmra.mxu0 %v658
      %v1019 = vpop.f32.mrf.mxu0
      %v1020 = vadd.f32 0.0, %v1019
      %v1021 = vpop.f32.mrf.mxu0
      %v1022 = vadd.f32 0.0, %v1021
      %1023 = vmatmul.bf16.gmra.mxu0 %v659
      %v1024 = vpop.f32.mrf.mxu0
      %v1025 = vadd.f32 0.0, %v1024
      %v1026 = vpop.f32.mrf.mxu0
      %v1027 = vadd.f32 0.0, %v1026
      %1028 = vmatmul.bf16.gmra.mxu0 %v660
      %v1029 = vpop.f32.mrf.mxu0
      %v1030 = vadd.f32 0.0, %v1029
      %v1031 = vpop.f32.mrf.mxu0
      %v1032 = vadd.f32 0.0, %v1031
      %1033 = vmatmul.bf16.gmra.mxu0 %v661
      %v1034 = vpop.f32.mrf.mxu0
      %v1035 = vadd.f32 0.0, %v1034
      %v1036 = vpop.f32.mrf.mxu0
      %v1037 = vadd.f32 0.0, %v1036
      %1038 = vdwg.mxu0
      %1039 = vmatpush.bf16.msra.mxu0 %v919
      %1040 = vmatpush.bf16.msra.mxu0 %v911
      %1041 = vmatpush.bf16.msra.mxu0 %v903
      %1042 = vmatpush.bf16.msra.mxu0 %v895
      %1043 = vmatpush.bf16.msra.mxu0 %v887
      %1044 = vmatpush.bf16.msra.mxu0 %v879
      %1045 = vmatpush.bf16.msra.mxu0 %v871
      %1046 = vmatpush.bf16.msra.mxu0 %v863
      %1047 = vmatmul.bf16.gmra.mxu0 %v654
      %v1048 = vpop.f32.mrf.mxu0
      %v1049 = vadd.f32 0.0, %v1048
      %v1050 = vpop.f32.mrf.mxu0
      %v1051 = vadd.f32 0.0, %v1050
      %1052 = vmatmul.bf16.gmra.mxu0 %v655
      %v1053 = vpop.f32.mrf.mxu0
      %v1054 = vadd.f32 0.0, %v1053
      %v1055 = vpop.f32.mrf.mxu0
      %v1056 = vadd.f32 0.0, %v1055
      %1057 = vmatmul.bf16.gmra.mxu0 %v656
      %v1058 = vpop.f32.mrf.mxu0
      %v1059 = vadd.f32 0.0, %v1058
      %v1060 = vpop.f32.mrf.mxu0
      %v1061 = vadd.f32 0.0, %v1060
      %1062 = vmatmul.bf16.gmra.mxu0 %v657
      %v1063 = vpop.f32.mrf.mxu0
      %v1064 = vadd.f32 0.0, %v1063
      %v1065 = vpop.f32.mrf.mxu0
      %v1066 = vadd.f32 0.0, %v1065
      %1067 = vmatmul.bf16.gmra.mxu0 %v658
      %v1068 = vpop.f32.mrf.mxu0
      %v1069 = vadd.f32 0.0, %v1068
      %v1070 = vpop.f32.mrf.mxu0
      %v1071 = vadd.f32 0.0, %v1070
      %1072 = vmatmul.bf16.gmra.mxu0 %v659
      %v1073 = vpop.f32.mrf.mxu0
      %v1074 = vadd.f32 0.0, %v1073
      %v1075 = vpop.f32.mrf.mxu0
      %v1076 = vadd.f32 0.0, %v1075
      %1077 = vmatmul.bf16.gmra.mxu0 %v660
      %v1078 = vpop.f32.mrf.mxu0
      %v1079 = vadd.f32 0.0, %v1078
      %v1080 = vpop.f32.mrf.mxu0
      %v1081 = vadd.f32 0.0, %v1080
      %1082 = vmatmul.bf16.gmra.mxu0 %v661
      %v1083 = vpop.f32.mrf.mxu0
      %v1084 = vadd.f32 0.0, %v1083
      %v1085 = vpop.f32.mrf.mxu0
      %v1086 = vadd.f32 0.0, %v1085
      %1087 = vdwg.mxu0
      %1088 = vmatpush.bf16.msra.mxu0 %v920
      %1089 = vmatpush.bf16.msra.mxu0 %v912
      %1090 = vmatpush.bf16.msra.mxu0 %v904
      %1091 = vmatpush.bf16.msra.mxu0 %v896
      %1092 = vmatpush.bf16.msra.mxu0 %v888
      %1093 = vmatpush.bf16.msra.mxu0 %v880
      %1094 = vmatpush.bf16.msra.mxu0 %v872
      %1095 = vmatpush.bf16.msra.mxu0 %v864
      %1096 = vmatmul.bf16.gmra.mxu0 %v654
      %v1097 = vpop.f32.mrf.mxu0
      %v1098 = vadd.f32 0.0, %v1097
      %v1099 = vpop.f32.mrf.mxu0
      %v1100 = vadd.f32 0.0, %v1099
      %1101 = vmatmul.bf16.gmra.mxu0 %v655
      %v1102 = vpop.f32.mrf.mxu0
      %v1103 = vadd.f32 0.0, %v1102
      %v1104 = vpop.f32.mrf.mxu0
      %v1105 = vadd.f32 0.0, %v1104
      %1106 = vmatmul.bf16.gmra.mxu0 %v656
      %v1107 = vpop.f32.mrf.mxu0
      %v1108 = vadd.f32 0.0, %v1107
      %v1109 = vpop.f32.mrf.mxu0
      %v1110 = vadd.f32 0.0, %v1109
      %1111 = vmatmul.bf16.gmra.mxu0 %v657
      %v1112 = vpop.f32.mrf.mxu0
      %v1113 = vadd.f32 0.0, %v1112
      %v1114 = vpop.f32.mrf.mxu0
      %v1115 = vadd.f32 0.0, %v1114
      %1116 = vmatmul.bf16.gmra.mxu0 %v658
      %v1117 = vpop.f32.mrf.mxu0
      %v1118 = vadd.f32 0.0, %v1117
      %v1119 = vpop.f32.mrf.mxu0
      %v1120 = vadd.f32 0.0, %v1119
      %1121 = vmatmul.bf16.gmra.mxu0 %v659
      %v1122 = vpop.f32.mrf.mxu0
      %v1123 = vadd.f32 0.0, %v1122
      %v1124 = vpop.f32.mrf.mxu0
      %v1125 = vadd.f32 0.0, %v1124
      %1126 = vmatmul.bf16.gmra.mxu0 %v660
      %v1127 = vpop.f32.mrf.mxu0
      %v1128 = vadd.f32 0.0, %v1127
      %v1129 = vpop.f32.mrf.mxu0
      %v1130 = vadd.f32 0.0, %v1129
      %1131 = vmatmul.bf16.gmra.mxu0 %v661
      %v1132 = vpop.f32.mrf.mxu0
      %v1133 = vadd.f32 0.0, %v1132
      %v1134 = vpop.f32.mrf.mxu0
      %v1135 = vadd.f32 0.0, %v1134
      %1136 = vdwg.mxu0
      %1137 = vmatpush.bf16.msra.mxu0 %v921
      %1138 = vmatpush.bf16.msra.mxu0 %v913
      %1139 = vmatpush.bf16.msra.mxu0 %v905
      %1140 = vmatpush.bf16.msra.mxu0 %v897
      %1141 = vmatpush.bf16.msra.mxu0 %v889
      %1142 = vmatpush.bf16.msra.mxu0 %v881
      %1143 = vmatpush.bf16.msra.mxu0 %v873
      %1144 = vmatpush.bf16.msra.mxu0 %v865
      %1145 = vmatmul.bf16.gmra.mxu0 %v654
      %v1146 = vpop.f32.mrf.mxu0
      %v1147 = vadd.f32 0.0, %v1146
      %v1148 = vpop.f32.mrf.mxu0
      %v1149 = vadd.f32 0.0, %v1148
      %1150 = vmatmul.bf16.gmra.mxu0 %v655
      %v1151 = vpop.f32.mrf.mxu0
      %v1152 = vadd.f32 0.0, %v1151
      %v1153 = vpop.f32.mrf.mxu0
      %v1154 = vadd.f32 0.0, %v1153
      %1155 = vmatmul.bf16.gmra.mxu0 %v656
      %v1156 = vpop.f32.mrf.mxu0
      %v1157 = vadd.f32 0.0, %v1156
      %v1158 = vpop.f32.mrf.mxu0
      %v1159 = vadd.f32 0.0, %v1158
      %1160 = vmatmul.bf16.gmra.mxu0 %v657
      %v1161 = vpop.f32.mrf.mxu0
      %v1162 = vadd.f32 0.0, %v1161
      %v1163 = vpop.f32.mrf.mxu0
      %v1164 = vadd.f32 0.0, %v1163
      %1165 = vmatmul.bf16.gmra.mxu0 %v658
      %v1166 = vpop.f32.mrf.mxu0
      %v1167 = vadd.f32 0.0, %v1166
      %v1168 = vpop.f32.mrf.mxu0
      %v1169 = vadd.f32 0.0, %v1168
      %1170 = vmatmul.bf16.gmra.mxu0 %v659
      %v1171 = vpop.f32.mrf.mxu0
      %v1172 = vadd.f32 0.0, %v1171
      %v1173 = vpop.f32.mrf.mxu0
      %v1174 = vadd.f32 0.0, %v1173
      %1175 = vmatmul.bf16.gmra.mxu0 %v660
      %v1176 = vpop.f32.mrf.mxu0
      %v1177 = vadd.f32 0.0, %v1176
      %v1178 = vpop.f32.mrf.mxu0
      %v1179 = vadd.f32 0.0, %v1178
      %1180 = vmatmul.bf16.gmra.mxu0 %v661
      %v1181 = vpop.f32.mrf.mxu0
      %v1182 = vadd.f32 0.0, %v1181
      %v1183 = vpop.f32.mrf.mxu0
      %v1184 = vadd.f32 0.0, %v1183
      %1185 = vdwg.mxu0
      %1186 = vmatpush.bf16.msra.mxu0 %v922
      %1187 = vmatpush.bf16.msra.mxu0 %v914
      %1188 = vmatpush.bf16.msra.mxu0 %v906
      %1189 = vmatpush.bf16.msra.mxu0 %v898
      %1190 = vmatpush.bf16.msra.mxu0 %v890
      %1191 = vmatpush.bf16.msra.mxu0 %v882
      %1192 = vmatpush.bf16.msra.mxu0 %v874
      %1193 = vmatpush.bf16.msra.mxu0 %v866
      %1194 = vmatmul.bf16.gmra.mxu0 %v654
      %v1195 = vpop.f32.mrf.mxu0
      %v1196 = vadd.f32 0.0, %v1195
      %v1197 = vpop.f32.mrf.mxu0
      %v1198 = vadd.f32 0.0, %v1197
      %1199 = vmatmul.bf16.gmra.mxu0 %v655
      %v1200 = vpop.f32.mrf.mxu0
      %v1201 = vadd.f32 0.0, %v1200
      %v1202 = vpop.f32.mrf.mxu0
      %v1203 = vadd.f32 0.0, %v1202
      %1204 = vmatmul.bf16.gmra.mxu0 %v656
      %v1205 = vpop.f32.mrf.mxu0
      %v1206 = vadd.f32 0.0, %v1205
      %v1207 = vpop.f32.mrf.mxu0
      %v1208 = vadd.f32 0.0, %v1207
      %1209 = vmatmul.bf16.gmra.mxu0 %v657
      %v1210 = vpop.f32.mrf.mxu0
      %v1211 = vadd.f32 0.0, %v1210
      %v1212 = vpop.f32.mrf.mxu0
      %v1213 = vadd.f32 0.0, %v1212
      %1214 = vmatmul.bf16.gmra.mxu0 %v658
      %v1215 = vpop.f32.mrf.mxu0
      %v1216 = vadd.f32 0.0, %v1215
      %v1217 = vpop.f32.mrf.mxu0
      %v1218 = vadd.f32 0.0, %v1217
      %1219 = vmatmul.bf16.gmra.mxu0 %v659
      %v1220 = vpop.f32.mrf.mxu0
      %v1221 = vadd.f32 0.0, %v1220
      %v1222 = vpop.f32.mrf.mxu0
      %v1223 = vadd.f32 0.0, %v1222
      %1224 = vmatmul.bf16.gmra.mxu0 %v660
      %v1225 = vpop.f32.mrf.mxu0
      %v1226 = vadd.f32 0.0, %v1225
      %v1227 = vpop.f32.mrf.mxu0
      %v1228 = vadd.f32 0.0, %v1227
      %1229 = vmatmul.bf16.gmra.mxu0 %v661
      %v1230 = vpop.f32.mrf.mxu0
      %v1231 = vadd.f32 0.0, %v1230
      %v1232 = vpop.f32.mrf.mxu0
      %v1233 = vadd.f32 0.0, %v1232
      %1234 = vdwg.mxu0
      %1235 = vmatpush.bf16.msra.mxu0 %v923
      %1236 = vmatpush.bf16.msra.mxu0 %v915
      %1237 = vmatpush.bf16.msra.mxu0 %v907
      %1238 = vmatpush.bf16.msra.mxu0 %v899
      %1239 = vmatpush.bf16.msra.mxu0 %v891
      %1240 = vmatpush.bf16.msra.mxu0 %v883
      %1241 = vmatpush.bf16.msra.mxu0 %v875
      %1242 = vmatpush.bf16.msra.mxu0 %v867
      %1243 = vmatmul.bf16.gmra.mxu0 %v654
      %v1244 = vpop.f32.mrf.mxu0
      %v1245 = vadd.f32 0.0, %v1244
      %v1246 = vpop.f32.mrf.mxu0
      %v1247 = vadd.f32 0.0, %v1246
      %1248 = vmatmul.bf16.gmra.mxu0 %v655
      %v1249 = vpop.f32.mrf.mxu0
      %v1250 = vadd.f32 0.0, %v1249
      %v1251 = vpop.f32.mrf.mxu0
      %v1252 = vadd.f32 0.0, %v1251
      %1253 = vmatmul.bf16.gmra.mxu0 %v656
      %v1254 = vpop.f32.mrf.mxu0
      %v1255 = vadd.f32 0.0, %v1254
      %v1256 = vpop.f32.mrf.mxu0
      %v1257 = vadd.f32 0.0, %v1256
      %1258 = vmatmul.bf16.gmra.mxu0 %v657
      %v1259 = vpop.f32.mrf.mxu0
      %v1260 = vadd.f32 0.0, %v1259
      %v1261 = vpop.f32.mrf.mxu0
      %v1262 = vadd.f32 0.0, %v1261
      %1263 = vmatmul.bf16.gmra.mxu0 %v658
      %v1264 = vpop.f32.mrf.mxu0
      %v1265 = vadd.f32 0.0, %v1264
      %v1266 = vpop.f32.mrf.mxu0
      %v1267 = vadd.f32 0.0, %v1266
      %1268 = vmatmul.bf16.gmra.mxu0 %v659
      %v1269 = vpop.f32.mrf.mxu0
      %v1270 = vadd.f32 0.0, %v1269
      %v1271 = vpop.f32.mrf.mxu0
      %v1272 = vadd.f32 0.0, %v1271
      %1273 = vmatmul.bf16.gmra.mxu0 %v660
      %v1274 = vpop.f32.mrf.mxu0
      %v1275 = vadd.f32 0.0, %v1274
      %v1276 = vpop.f32.mrf.mxu0
      %v1277 = vadd.f32 0.0, %v1276
      %1278 = vmatmul.bf16.gmra.mxu0 %v661
      %v1279 = vpop.f32.mrf.mxu0
      %v1280 = vadd.f32 0.0, %v1279
      %v1281 = vpop.f32.mrf.mxu0
      %v1282 = vadd.f32 0.0, %v1281
      %1283 = vdwg.mxu0
      %1284 = vmatpush.bf16.msra.mxu0 %v924
      %1285 = vmatpush.bf16.msra.mxu0 %v916
      %1286 = vmatpush.bf16.msra.mxu0 %v908
      %1287 = vmatpush.bf16.msra.mxu0 %v900
      %1288 = vmatpush.bf16.msra.mxu0 %v892
      %1289 = vmatpush.bf16.msra.mxu0 %v884
      %1290 = vmatpush.bf16.msra.mxu0 %v876
      %1291 = vmatpush.bf16.msra.mxu0 %v868
      %1292 = vmatmul.bf16.gmra.mxu0 %v654
      %v1293 = vpop.f32.mrf.mxu0
      %v1294 = vadd.f32 0.0, %v1293
      %v1295 = vpop.f32.mrf.mxu0
      %v1296 = vadd.f32 0.0, %v1295
      %1297 = vmatmul.bf16.gmra.mxu0 %v655
      %v1298 = vpop.f32.mrf.mxu0
      %v1299 = vadd.f32 0.0, %v1298
      %v1300 = vpop.f32.mrf.mxu0
      %v1301 = vadd.f32 0.0, %v1300
      %1302 = vmatmul.bf16.gmra.mxu0 %v656
      %v1303 = vpop.f32.mrf.mxu0
      %v1304 = vadd.f32 0.0, %v1303
      %v1305 = vpop.f32.mrf.mxu0
      %v1306 = vadd.f32 0.0, %v1305
      %1307 = vmatmul.bf16.gmra.mxu0 %v657
      %v1308 = vpop.f32.mrf.mxu0
      %v1309 = vadd.f32 0.0, %v1308
      %v1310 = vpop.f32.mrf.mxu0
      %v1311 = vadd.f32 0.0, %v1310
      %1312 = vmatmul.bf16.gmra.mxu0 %v658
      %v1313 = vpop.f32.mrf.mxu0
      %v1314 = vadd.f32 0.0, %v1313
      %v1315 = vpop.f32.mrf.mxu0
      %v1316 = vadd.f32 0.0, %v1315
      %1317 = vmatmul.bf16.gmra.mxu0 %v659
      %v1318 = vpop.f32.mrf.mxu0
      %v1319 = vadd.f32 0.0, %v1318
      %v1320 = vpop.f32.mrf.mxu0
      %v1321 = vadd.f32 0.0, %v1320
      %1322 = vmatmul.bf16.gmra.mxu0 %v660
      %v1323 = vpop.f32.mrf.mxu0
      %v1324 = vadd.f32 0.0, %v1323
      %v1325 = vpop.f32.mrf.mxu0
      %v1326 = vadd.f32 0.0, %v1325
      %1327 = vmatmul.bf16.gmra.mxu0 %v661
      %v1328 = vpop.f32.mrf.mxu0
      %v1329 = vadd.f32 0.0, %v1328
      %v1330 = vpop.f32.mrf.mxu0
      %v1331 = vadd.f32 0.0, %v1330
      %1332 = vdwg.mxu0
      %1333 = vmatpush.bf16.msra.mxu0 %v925
      %1334 = vmatpush.bf16.msra.mxu0 %v917
      %1335 = vmatpush.bf16.msra.mxu0 %v909
      %1336 = vmatpush.bf16.msra.mxu0 %v901
      %1337 = vmatpush.bf16.msra.mxu0 %v893
      %1338 = vmatpush.bf16.msra.mxu0 %v885
      %1339 = vmatpush.bf16.msra.mxu0 %v877
      %1340 = vmatpush.bf16.msra.mxu0 %v869
      %1341 = vmatmul.bf16.gmra.mxu0 %v654
      %v1342 = vpop.f32.mrf.mxu0
      %v1343 = vadd.f32 0.0, %v1342
      %v1344 = vpop.f32.mrf.mxu0
      %v1345 = vadd.f32 0.0, %v1344
      %1346 = vmatmul.bf16.gmra.mxu0 %v655
      %v1347 = vpop.f32.mrf.mxu0
      %v1348 = vadd.f32 0.0, %v1347
      %v1349 = vpop.f32.mrf.mxu0
      %v1350 = vadd.f32 0.0, %v1349
      %1351 = vmatmul.bf16.gmra.mxu0 %v656
      %v1352 = vpop.f32.mrf.mxu0
      %v1353 = vadd.f32 0.0, %v1352
      %v1354 = vpop.f32.mrf.mxu0
      %v1355 = vadd.f32 0.0, %v1354
      %1356 = vmatmul.bf16.gmra.mxu0 %v657
      %v1357 = vpop.f32.mrf.mxu0
      %v1358 = vadd.f32 0.0, %v1357
      %v1359 = vpop.f32.mrf.mxu0
      %v1360 = vadd.f32 0.0, %v1359
      %1361 = vmatmul.bf16.gmra.mxu0 %v658
      %v1362 = vpop.f32.mrf.mxu0
      %v1363 = vadd.f32 0.0, %v1362
      %v1364 = vpop.f32.mrf.mxu0
      %v1365 = vadd.f32 0.0, %v1364
      %1366 = vmatmul.bf16.gmra.mxu0 %v659
      %v1367 = vpop.f32.mrf.mxu0
      %v1368 = vadd.f32 0.0, %v1367
      %v1369 = vpop.f32.mrf.mxu0
      %v1370 = vadd.f32 0.0, %v1369
      %1371 = vmatmul.bf16.gmra.mxu0 %v660
      %v1372 = vpop.f32.mrf.mxu0
      %v1373 = vadd.f32 0.0, %v1372
      %v1374 = vpop.f32.mrf.mxu0
      %v1375 = vadd.f32 0.0, %v1374
      %1376 = vmatmul.bf16.gmra.mxu0 %v661
      %v1377 = vpop.f32.mrf.mxu0
      %v1378 = vadd.f32 0.0, %v1377
      %v1379 = vpop.f32.mrf.mxu0
      %v1380 = vadd.f32 0.0, %v1379
      %1381 = vdwg.mxu0
      %v1398 = vunpack.c.l.b16 %v462
      %v1399 = vunpack.c.l.b16 %v463
      %v1400 = vunpack.c.l.b16 %v464
      %v1401 = vunpack.c.l.b16 %v465
      %v1402 = vunpack.c.l.b16 %v466
      %v1403 = vunpack.c.l.b16 %v467
      %v1404 = vunpack.c.l.b16 %v468
      %v1405 = vunpack.c.l.b16 %v469
      %v1406 = vunpack.c.l.b16 %v470
      %v1407 = vunpack.c.l.b16 %v471
      %v1408 = vunpack.c.l.b16 %v472
      %v1409 = vunpack.c.l.b16 %v473
      %v1410 = vunpack.c.l.b16 %v474
      %v1411 = vunpack.c.l.b16 %v475
      %v1412 = vunpack.c.l.b16 %v476
      %v1413 = vunpack.c.l.b16 %v477
      %v1414 = vpack.c.b16 %v1399, %v1398
      %v1415 = vpack.c.b16 %v1401, %v1400
      %v1416 = vpack.c.b16 %v1403, %v1402
      %v1417 = vpack.c.b16 %v1405, %v1404
      %v1418 = vpack.c.b16 %v1407, %v1406
      %v1419 = vpack.c.b16 %v1409, %v1408
      %v1420 = vpack.c.b16 %v1411, %v1410
      %v1421 = vpack.c.b16 %v1413, %v1412
      %v1494 = vunpack.c.l.b16 %v478
      %v1495 = vunpack.c.h.b16 %v478
      %v1496 = vunpack.c.l.b16 %v479
      %v1497 = vunpack.c.h.b16 %v479
      %v1498 = vunpack.c.l.b16 %v480
      %v1499 = vunpack.c.h.b16 %v480
      %v1500 = vunpack.c.l.b16 %v481
      %v1501 = vunpack.c.h.b16 %v481
      %v1502 = vunpack.c.l.b16 %v482
      %v1503 = vunpack.c.h.b16 %v482
      %v1504 = vunpack.c.l.b16 %v483
      %v1505 = vunpack.c.h.b16 %v483
      %v1506 = vunpack.c.l.b16 %v484
      %v1507 = vunpack.c.h.b16 %v484
      %v1508 = vunpack.c.l.b16 %v485
      %v1509 = vunpack.c.h.b16 %v485
      %v1510 = vunpack.c.l.b16 %v486
      %v1511 = vunpack.c.h.b16 %v486
      %v1512 = vunpack.c.l.b16 %v487
      %v1513 = vunpack.c.h.b16 %v487
      %v1514 = vunpack.c.l.b16 %v488
      %v1515 = vunpack.c.h.b16 %v488
      %v1516 = vunpack.c.l.b16 %v489
      %v1517 = vunpack.c.h.b16 %v489
      %v1518 = vunpack.c.l.b16 %v490
      %v1519 = vunpack.c.h.b16 %v490
      %v1520 = vunpack.c.l.b16 %v491
      %v1521 = vunpack.c.h.b16 %v491
      %v1522 = vunpack.c.l.b16 %v492
      %v1523 = vunpack.c.h.b16 %v492
      %v1524 = vunpack.c.l.b16 %v493
      %v1525 = vunpack.c.h.b16 %v493
      %v1526 = vunpack.c.l.b16 %v494
      %v1527 = vunpack.c.h.b16 %v494
      %v1528 = vunpack.c.l.b16 %v495
      %v1529 = vunpack.c.h.b16 %v495
      %v1530 = vunpack.c.l.b16 %v496
      %v1531 = vunpack.c.h.b16 %v496
      %v1532 = vunpack.c.l.b16 %v497
      %v1533 = vunpack.c.h.b16 %v497
      %v1534 = vunpack.c.l.b16 %v498
      %v1535 = vunpack.c.h.b16 %v498
      %v1536 = vunpack.c.l.b16 %v499
      %v1537 = vunpack.c.h.b16 %v499
      %v1538 = vunpack.c.l.b16 %v500
      %v1539 = vunpack.c.h.b16 %v500
      %v1540 = vunpack.c.l.b16 %v501
      %v1541 = vunpack.c.h.b16 %v501
      %v1542 = vunpack.c.l.b16 %v502
      %v1543 = vunpack.c.h.b16 %v502
      %v1544 = vunpack.c.l.b16 %v503
      %v1545 = vunpack.c.h.b16 %v503
      %v1546 = vunpack.c.l.b16 %v504
      %v1547 = vunpack.c.h.b16 %v504
      %v1548 = vunpack.c.l.b16 %v505
      %v1549 = vunpack.c.h.b16 %v505
      %v1550 = vunpack.c.l.b16 %v506
      %v1551 = vunpack.c.h.b16 %v506
      %v1552 = vunpack.c.l.b16 %v507
      %v1553 = vunpack.c.h.b16 %v507
      %v1554 = vunpack.c.l.b16 %v508
      %v1555 = vunpack.c.h.b16 %v508
      %v1556 = vunpack.c.l.b16 %v509
      %v1557 = vunpack.c.h.b16 %v509
      %v1558 = vunpack.c.l.b16 %v510
      %v1559 = vunpack.c.h.b16 %v510
      %v1560 = vunpack.c.l.b16 %v511
      %v1561 = vunpack.c.h.b16 %v511
      %v1562 = vunpack.c.l.b16 %v512
      %v1563 = vunpack.c.h.b16 %v512
      %v1564 = vunpack.c.l.b16 %v513
      %v1565 = vunpack.c.h.b16 %v513
      %v1566 = vunpack.c.l.b16 %v514
      %v1567 = vunpack.c.h.b16 %v514
      %v1568 = vunpack.c.l.b16 %v515
      %v1569 = vunpack.c.h.b16 %v515
      %v1570 = vunpack.c.l.b16 %v516
      %v1571 = vunpack.c.h.b16 %v516
      %v1572 = vunpack.c.l.b16 %v517
      %v1573 = vunpack.c.h.b16 %v517
      %v1574 = vunpack.c.l.b16 %v518
      %v1575 = vunpack.c.h.b16 %v518
      %v1576 = vunpack.c.l.b16 %v519
      %v1577 = vunpack.c.h.b16 %v519
      %v1578 = vunpack.c.l.b16 %v520
      %v1579 = vunpack.c.h.b16 %v520
      %v1580 = vunpack.c.l.b16 %v521
      %v1581 = vunpack.c.h.b16 %v521
      %v1582 = vunpack.c.l.b16 %v522
      %v1583 = vunpack.c.h.b16 %v522
      %v1584 = vunpack.c.l.b16 %v523
      %v1585 = vunpack.c.h.b16 %v523
      %v1586 = vunpack.c.l.b16 %v524
      %v1587 = vunpack.c.h.b16 %v524
      %v1588 = vunpack.c.l.b16 %v525
      %v1589 = vunpack.c.h.b16 %v525
      %v1590 = vunpack.c.l.b16 %v526
      %v1591 = vunpack.c.h.b16 %v526
      %v1592 = vunpack.c.l.b16 %v527
      %v1593 = vunpack.c.h.b16 %v527
      %v1594 = vunpack.c.l.b16 %v528
      %v1595 = vunpack.c.h.b16 %v528
      %v1596 = vunpack.c.l.b16 %v529
      %v1597 = vunpack.c.h.b16 %v529
      %v1598 = vunpack.c.l.b16 %v530
      %v1599 = vunpack.c.h.b16 %v530
      %v1600 = vunpack.c.l.b16 %v531
      %v1601 = vunpack.c.h.b16 %v531
      %v1602 = vunpack.c.l.b16 %v532
      %v1603 = vunpack.c.h.b16 %v532
      %v1604 = vunpack.c.l.b16 %v533
      %v1605 = vunpack.c.h.b16 %v533
      %v1606 = vunpack.c.l.b16 %v534
      %v1607 = vunpack.c.h.b16 %v534
      %v1608 = vunpack.c.l.b16 %v535
      %v1609 = vunpack.c.h.b16 %v535
      %v1610 = vunpack.c.l.b16 %v536
      %v1611 = vunpack.c.h.b16 %v536
      %v1612 = vunpack.c.l.b16 %v537
      %v1613 = vunpack.c.h.b16 %v537
      %v1614 = vunpack.c.l.b16 %v538
      %v1615 = vunpack.c.h.b16 %v538
      %v1616 = vunpack.c.l.b16 %v539
      %v1617 = vunpack.c.h.b16 %v539
      %v1618 = vunpack.c.l.b16 %v540
      %v1619 = vunpack.c.h.b16 %v540
      %v1620 = vunpack.c.l.b16 %v541
      %v1621 = vunpack.c.h.b16 %v541
      %v1622 = vpack.c.b16 %v1502, %v1494
      %v1623 = vpack.c.b16 %v1503, %v1495
      %v1624 = vpack.c.b16 %v1504, %v1496
      %v1625 = vpack.c.b16 %v1505, %v1497
      %v1626 = vpack.c.b16 %v1506, %v1498
      %v1627 = vpack.c.b16 %v1507, %v1499
      %v1628 = vpack.c.b16 %v1508, %v1500
      %v1629 = vpack.c.b16 %v1509, %v1501
      %v1630 = vpack.c.b16 %v1518, %v1510
      %v1631 = vpack.c.b16 %v1519, %v1511
      %v1632 = vpack.c.b16 %v1520, %v1512
      %v1633 = vpack.c.b16 %v1521, %v1513
      %v1634 = vpack.c.b16 %v1522, %v1514
      %v1635 = vpack.c.b16 %v1523, %v1515
      %v1636 = vpack.c.b16 %v1524, %v1516
      %v1637 = vpack.c.b16 %v1525, %v1517
      %v1638 = vpack.c.b16 %v1534, %v1526
      %v1639 = vpack.c.b16 %v1535, %v1527
      %v1640 = vpack.c.b16 %v1536, %v1528
      %v1641 = vpack.c.b16 %v1537, %v1529
      %v1642 = vpack.c.b16 %v1538, %v1530
      %v1643 = vpack.c.b16 %v1539, %v1531
      %v1644 = vpack.c.b16 %v1540, %v1532
      %v1645 = vpack.c.b16 %v1541, %v1533
      %v1646 = vpack.c.b16 %v1550, %v1542
      %v1647 = vpack.c.b16 %v1551, %v1543
      %v1648 = vpack.c.b16 %v1552, %v1544
      %v1649 = vpack.c.b16 %v1553, %v1545
      %v1650 = vpack.c.b16 %v1554, %v1546
      %v1651 = vpack.c.b16 %v1555, %v1547
      %v1652 = vpack.c.b16 %v1556, %v1548
      %v1653 = vpack.c.b16 %v1557, %v1549
      %v1654 = vpack.c.b16 %v1566, %v1558
      %v1655 = vpack.c.b16 %v1567, %v1559
      %v1656 = vpack.c.b16 %v1568, %v1560
      %v1657 = vpack.c.b16 %v1569, %v1561
      %v1658 = vpack.c.b16 %v1570, %v1562
      %v1659 = vpack.c.b16 %v1571, %v1563
      %v1660 = vpack.c.b16 %v1572, %v1564
      %v1661 = vpack.c.b16 %v1573, %v1565
      %v1662 = vpack.c.b16 %v1582, %v1574
      %v1663 = vpack.c.b16 %v1583, %v1575
      %v1664 = vpack.c.b16 %v1584, %v1576
      %v1665 = vpack.c.b16 %v1585, %v1577
      %v1666 = vpack.c.b16 %v1586, %v1578
      %v1667 = vpack.c.b16 %v1587, %v1579
      %v1668 = vpack.c.b16 %v1588, %v1580
      %v1669 = vpack.c.b16 %v1589, %v1581
      %v1670 = vpack.c.b16 %v1598, %v1590
      %v1671 = vpack.c.b16 %v1599, %v1591
      %v1672 = vpack.c.b16 %v1600, %v1592
      %v1673 = vpack.c.b16 %v1601, %v1593
      %v1674 = vpack.c.b16 %v1602, %v1594
      %v1675 = vpack.c.b16 %v1603, %v1595
      %v1676 = vpack.c.b16 %v1604, %v1596
      %v1677 = vpack.c.b16 %v1605, %v1597
      %v1678 = vpack.c.b16 %v1614, %v1606
      %v1679 = vpack.c.b16 %v1615, %v1607
      %v1680 = vpack.c.b16 %v1616, %v1608
      %v1681 = vpack.c.b16 %v1617, %v1609
      %v1682 = vpack.c.b16 %v1618, %v1610
      %v1683 = vpack.c.b16 %v1619, %v1611
      %v1684 = vpack.c.b16 %v1620, %v1612
      %v1685 = vpack.c.b16 %v1621, %v1613
      %1750 = vmatpush.bf16.msra.mxu0 %v1678
      %1751 = vmatpush.bf16.msra.mxu0 %v1670
      %1752 = vmatpush.bf16.msra.mxu0 %v1662
      %1753 = vmatpush.bf16.msra.mxu0 %v1654
      %1754 = vmatpush.bf16.msra.mxu0 %v1646
      %1755 = vmatpush.bf16.msra.mxu0 %v1638
      %1756 = vmatpush.bf16.msra.mxu0 %v1630
      %1757 = vmatpush.bf16.msra.mxu0 %v1622
      %1758 = vmatmul.bf16.gmra.mxu0 %v1414
      %v1759 = vpop.f32.mrf.mxu0
      %v1760 = vadd.f32 %v1000, %v1759
      %v1761 = vpop.f32.mrf.mxu0
      %v1762 = vadd.f32 %v1002, %v1761
      %1763 = vmatmul.bf16.gmra.mxu0 %v1415
      %v1764 = vpop.f32.mrf.mxu0
      %v1765 = vadd.f32 %v1005, %v1764
      %v1766 = vpop.f32.mrf.mxu0
      %v1767 = vadd.f32 %v1007, %v1766
      %1768 = vmatmul.bf16.gmra.mxu0 %v1416
      %v1769 = vpop.f32.mrf.mxu0
      %v1770 = vadd.f32 %v1010, %v1769
      %v1771 = vpop.f32.mrf.mxu0
      %v1772 = vadd.f32 %v1012, %v1771
      %1773 = vmatmul.bf16.gmra.mxu0 %v1417
      %v1774 = vpop.f32.mrf.mxu0
      %v1775 = vadd.f32 %v1015, %v1774
      %v1776 = vpop.f32.mrf.mxu0
      %v1777 = vadd.f32 %v1017, %v1776
      %1778 = vmatmul.bf16.gmra.mxu0 %v1418
      %v1779 = vpop.f32.mrf.mxu0
      %v1780 = vadd.f32 %v1020, %v1779
      %v1781 = vpop.f32.mrf.mxu0
      %v1782 = vadd.f32 %v1022, %v1781
      %1783 = vmatmul.bf16.gmra.mxu0 %v1419
      %v1784 = vpop.f32.mrf.mxu0
      %v1785 = vadd.f32 %v1025, %v1784
      %v1786 = vpop.f32.mrf.mxu0
      %v1787 = vadd.f32 %v1027, %v1786
      %1788 = vmatmul.bf16.gmra.mxu0 %v1420
      %v1789 = vpop.f32.mrf.mxu0
      %v1790 = vadd.f32 %v1030, %v1789
      %v1791 = vpop.f32.mrf.mxu0
      %v1792 = vadd.f32 %v1032, %v1791
      %1793 = vmatmul.bf16.gmra.mxu0 %v1421
      %v1794 = vpop.f32.mrf.mxu0
      %v1795 = vadd.f32 %v1035, %v1794
      %v1796 = vpop.f32.mrf.mxu0
      %v1797 = vadd.f32 %v1037, %v1796
      %1798 = vdwg.mxu0
      %1799 = vmatpush.bf16.msra.mxu0 %v1679
      %1800 = vmatpush.bf16.msra.mxu0 %v1671
      %1801 = vmatpush.bf16.msra.mxu0 %v1663
      %1802 = vmatpush.bf16.msra.mxu0 %v1655
      %1803 = vmatpush.bf16.msra.mxu0 %v1647
      %1804 = vmatpush.bf16.msra.mxu0 %v1639
      %1805 = vmatpush.bf16.msra.mxu0 %v1631
      %1806 = vmatpush.bf16.msra.mxu0 %v1623
      %1807 = vmatmul.bf16.gmra.mxu0 %v1414
      %v1808 = vpop.f32.mrf.mxu0
      %v1809 = vadd.f32 %v1049, %v1808
      %v1810 = vpop.f32.mrf.mxu0
      %v1811 = vadd.f32 %v1051, %v1810
      %1812 = vmatmul.bf16.gmra.mxu0 %v1415
      %v1813 = vpop.f32.mrf.mxu0
      %v1814 = vadd.f32 %v1054, %v1813
      %v1815 = vpop.f32.mrf.mxu0
      %v1816 = vadd.f32 %v1056, %v1815
      %1817 = vmatmul.bf16.gmra.mxu0 %v1416
      %v1818 = vpop.f32.mrf.mxu0
      %v1819 = vadd.f32 %v1059, %v1818
      %v1820 = vpop.f32.mrf.mxu0
      %v1821 = vadd.f32 %v1061, %v1820
      %1822 = vmatmul.bf16.gmra.mxu0 %v1417
      %v1823 = vpop.f32.mrf.mxu0
      %v1824 = vadd.f32 %v1064, %v1823
      %v1825 = vpop.f32.mrf.mxu0
      %v1826 = vadd.f32 %v1066, %v1825
      %1827 = vmatmul.bf16.gmra.mxu0 %v1418
      %v1828 = vpop.f32.mrf.mxu0
      %v1829 = vadd.f32 %v1069, %v1828
      %v1830 = vpop.f32.mrf.mxu0
      %v1831 = vadd.f32 %v1071, %v1830
      %1832 = vmatmul.bf16.gmra.mxu0 %v1419
      %v1833 = vpop.f32.mrf.mxu0
      %v1834 = vadd.f32 %v1074, %v1833
      %v1835 = vpop.f32.mrf.mxu0
      %v1836 = vadd.f32 %v1076, %v1835
      %1837 = vmatmul.bf16.gmra.mxu0 %v1420
      %v1838 = vpop.f32.mrf.mxu0
      %v1839 = vadd.f32 %v1079, %v1838
      %v1840 = vpop.f32.mrf.mxu0
      %v1841 = vadd.f32 %v1081, %v1840
      %1842 = vmatmul.bf16.gmra.mxu0 %v1421
      %v1843 = vpop.f32.mrf.mxu0
      %v1844 = vadd.f32 %v1084, %v1843
      %v1845 = vpop.f32.mrf.mxu0
      %v1846 = vadd.f32 %v1086, %v1845
      %1847 = vdwg.mxu0
      %1848 = vmatpush.bf16.msra.mxu0 %v1680
      %1849 = vmatpush.bf16.msra.mxu0 %v1672
      %1850 = vmatpush.bf16.msra.mxu0 %v1664
      %1851 = vmatpush.bf16.msra.mxu0 %v1656
      %1852 = vmatpush.bf16.msra.mxu0 %v1648
      %1853 = vmatpush.bf16.msra.mxu0 %v1640
      %1854 = vmatpush.bf16.msra.mxu0 %v1632
      %1855 = vmatpush.bf16.msra.mxu0 %v1624
      %1856 = vmatmul.bf16.gmra.mxu0 %v1414
      %v1857 = vpop.f32.mrf.mxu0
      %v1858 = vadd.f32 %v1098, %v1857
      %v1859 = vpop.f32.mrf.mxu0
      %v1860 = vadd.f32 %v1100, %v1859
      %1861 = vmatmul.bf16.gmra.mxu0 %v1415
      %v1862 = vpop.f32.mrf.mxu0
      %v1863 = vadd.f32 %v1103, %v1862
      %v1864 = vpop.f32.mrf.mxu0
      %v1865 = vadd.f32 %v1105, %v1864
      %1866 = vmatmul.bf16.gmra.mxu0 %v1416
      %v1867 = vpop.f32.mrf.mxu0
      %v1868 = vadd.f32 %v1108, %v1867
      %v1869 = vpop.f32.mrf.mxu0
      %v1870 = vadd.f32 %v1110, %v1869
      %1871 = vmatmul.bf16.gmra.mxu0 %v1417
      %v1872 = vpop.f32.mrf.mxu0
      %v1873 = vadd.f32 %v1113, %v1872
      %v1874 = vpop.f32.mrf.mxu0
      %v1875 = vadd.f32 %v1115, %v1874
      %1876 = vmatmul.bf16.gmra.mxu0 %v1418
      %v1877 = vpop.f32.mrf.mxu0
      %v1878 = vadd.f32 %v1118, %v1877
      %v1879 = vpop.f32.mrf.mxu0
      %v1880 = vadd.f32 %v1120, %v1879
      %1881 = vmatmul.bf16.gmra.mxu0 %v1419
      %v1882 = vpop.f32.mrf.mxu0
      %v1883 = vadd.f32 %v1123, %v1882
      %v1884 = vpop.f32.mrf.mxu0
      %v1885 = vadd.f32 %v1125, %v1884
      %1886 = vmatmul.bf16.gmra.mxu0 %v1420
      %v1887 = vpop.f32.mrf.mxu0
      %v1888 = vadd.f32 %v1128, %v1887
      %v1889 = vpop.f32.mrf.mxu0
      %v1890 = vadd.f32 %v1130, %v1889
      %1891 = vmatmul.bf16.gmra.mxu0 %v1421
      %v1892 = vpop.f32.mrf.mxu0
      %v1893 = vadd.f32 %v1133, %v1892
      %v1894 = vpop.f32.mrf.mxu0
      %v1895 = vadd.f32 %v1135, %v1894
      %1896 = vdwg.mxu0
      %1897 = vmatpush.bf16.msra.mxu0 %v1681
      %1898 = vmatpush.bf16.msra.mxu0 %v1673
      %1899 = vmatpush.bf16.msra.mxu0 %v1665
      %1900 = vmatpush.bf16.msra.mxu0 %v1657
      %1901 = vmatpush.bf16.msra.mxu0 %v1649
      %1902 = vmatpush.bf16.msra.mxu0 %v1641
      %1903 = vmatpush.bf16.msra.mxu0 %v1633
      %1904 = vmatpush.bf16.msra.mxu0 %v1625
      %1905 = vmatmul.bf16.gmra.mxu0 %v1414
      %v1906 = vpop.f32.mrf.mxu0
      %v1907 = vadd.f32 %v1147, %v1906
      %v1908 = vpop.f32.mrf.mxu0
      %v1909 = vadd.f32 %v1149, %v1908
      %1910 = vmatmul.bf16.gmra.mxu0 %v1415
      %v1911 = vpop.f32.mrf.mxu0
      %v1912 = vadd.f32 %v1152, %v1911
      %v1913 = vpop.f32.mrf.mxu0
      %v1914 = vadd.f32 %v1154, %v1913
      %1915 = vmatmul.bf16.gmra.mxu0 %v1416
      %v1916 = vpop.f32.mrf.mxu0
      %v1917 = vadd.f32 %v1157, %v1916
      %v1918 = vpop.f32.mrf.mxu0
      %v1919 = vadd.f32 %v1159, %v1918
      %1920 = vmatmul.bf16.gmra.mxu0 %v1417
      %v1921 = vpop.f32.mrf.mxu0
      %v1922 = vadd.f32 %v1162, %v1921
      %v1923 = vpop.f32.mrf.mxu0
      %v1924 = vadd.f32 %v1164, %v1923
      %1925 = vmatmul.bf16.gmra.mxu0 %v1418
      %v1926 = vpop.f32.mrf.mxu0
      %v1927 = vadd.f32 %v1167, %v1926
      %v1928 = vpop.f32.mrf.mxu0
      %v1929 = vadd.f32 %v1169, %v1928
      %1930 = vmatmul.bf16.gmra.mxu0 %v1419
      %v1931 = vpop.f32.mrf.mxu0
      %v1932 = vadd.f32 %v1172, %v1931
      %v1933 = vpop.f32.mrf.mxu0
      %v1934 = vadd.f32 %v1174, %v1933
      %1935 = vmatmul.bf16.gmra.mxu0 %v1420
      %v1936 = vpop.f32.mrf.mxu0
      %v1937 = vadd.f32 %v1177, %v1936
      %v1938 = vpop.f32.mrf.mxu0
      %v1939 = vadd.f32 %v1179, %v1938
      %1940 = vmatmul.bf16.gmra.mxu0 %v1421
      %v1941 = vpop.f32.mrf.mxu0
      %v1942 = vadd.f32 %v1182, %v1941
      %v1943 = vpop.f32.mrf.mxu0
      %v1944 = vadd.f32 %v1184, %v1943
      %1945 = vdwg.mxu0
      %1946 = vmatpush.bf16.msra.mxu0 %v1682
      %1947 = vmatpush.bf16.msra.mxu0 %v1674
      %1948 = vmatpush.bf16.msra.mxu0 %v1666
      %1949 = vmatpush.bf16.msra.mxu0 %v1658
      %1950 = vmatpush.bf16.msra.mxu0 %v1650
      %1951 = vmatpush.bf16.msra.mxu0 %v1642
      %1952 = vmatpush.bf16.msra.mxu0 %v1634
      %1953 = vmatpush.bf16.msra.mxu0 %v1626
      %1954 = vmatmul.bf16.gmra.mxu0 %v1414
      %v1955 = vpop.f32.mrf.mxu0
      %v1956 = vadd.f32 %v1196, %v1955
      %v1957 = vpop.f32.mrf.mxu0
      %v1958 = vadd.f32 %v1198, %v1957
      %1959 = vmatmul.bf16.gmra.mxu0 %v1415
      %v1960 = vpop.f32.mrf.mxu0
      %v1961 = vadd.f32 %v1201, %v1960
      %v1962 = vpop.f32.mrf.mxu0
      %v1963 = vadd.f32 %v1203, %v1962
      %1964 = vmatmul.bf16.gmra.mxu0 %v1416
      %v1965 = vpop.f32.mrf.mxu0
      %v1966 = vadd.f32 %v1206, %v1965
      %v1967 = vpop.f32.mrf.mxu0
      %v1968 = vadd.f32 %v1208, %v1967
      %1969 = vmatmul.bf16.gmra.mxu0 %v1417
      %v1970 = vpop.f32.mrf.mxu0
      %v1971 = vadd.f32 %v1211, %v1970
      %v1972 = vpop.f32.mrf.mxu0
      %v1973 = vadd.f32 %v1213, %v1972
      %1974 = vmatmul.bf16.gmra.mxu0 %v1418
      %v1975 = vpop.f32.mrf.mxu0
      %v1976 = vadd.f32 %v1216, %v1975
      %v1977 = vpop.f32.mrf.mxu0
      %v1978 = vadd.f32 %v1218, %v1977
      %1979 = vmatmul.bf16.gmra.mxu0 %v1419
      %v1980 = vpop.f32.mrf.mxu0
      %v1981 = vadd.f32 %v1221, %v1980
      %v1982 = vpop.f32.mrf.mxu0
      %v1983 = vadd.f32 %v1223, %v1982
      %1984 = vmatmul.bf16.gmra.mxu0 %v1420
      %v1985 = vpop.f32.mrf.mxu0
      %v1986 = vadd.f32 %v1226, %v1985
      %v1987 = vpop.f32.mrf.mxu0
      %v1988 = vadd.f32 %v1228, %v1987
      %1989 = vmatmul.bf16.gmra.mxu0 %v1421
      %v1990 = vpop.f32.mrf.mxu0
      %v1991 = vadd.f32 %v1231, %v1990
      %v1992 = vpop.f32.mrf.mxu0
      %v1993 = vadd.f32 %v1233, %v1992
      %1994 = vdwg.mxu0
      %1995 = vmatpush.bf16.msra.mxu0 %v1683
      %1996 = vmatpush.bf16.msra.mxu0 %v1675
      %1997 = vmatpush.bf16.msra.mxu0 %v1667
      %1998 = vmatpush.bf16.msra.mxu0 %v1659
      %1999 = vmatpush.bf16.msra.mxu0 %v1651
      %2000 = vmatpush.bf16.msra.mxu0 %v1643
      %2001 = vmatpush.bf16.msra.mxu0 %v1635
      %2002 = vmatpush.bf16.msra.mxu0 %v1627
      %2003 = vmatmul.bf16.gmra.mxu0 %v1414
      %v2004 = vpop.f32.mrf.mxu0
      %v2005 = vadd.f32 %v1245, %v2004
      %v2006 = vpop.f32.mrf.mxu0
      %v2007 = vadd.f32 %v1247, %v2006
      %2008 = vmatmul.bf16.gmra.mxu0 %v1415
      %v2009 = vpop.f32.mrf.mxu0
      %v2010 = vadd.f32 %v1250, %v2009
      %v2011 = vpop.f32.mrf.mxu0
      %v2012 = vadd.f32 %v1252, %v2011
      %2013 = vmatmul.bf16.gmra.mxu0 %v1416
      %v2014 = vpop.f32.mrf.mxu0
      %v2015 = vadd.f32 %v1255, %v2014
      %v2016 = vpop.f32.mrf.mxu0
      %v2017 = vadd.f32 %v1257, %v2016
      %2018 = vmatmul.bf16.gmra.mxu0 %v1417
      %v2019 = vpop.f32.mrf.mxu0
      %v2020 = vadd.f32 %v1260, %v2019
      %v2021 = vpop.f32.mrf.mxu0
      %v2022 = vadd.f32 %v1262, %v2021
      %2023 = vmatmul.bf16.gmra.mxu0 %v1418
      %v2024 = vpop.f32.mrf.mxu0
      %v2025 = vadd.f32 %v1265, %v2024
      %v2026 = vpop.f32.mrf.mxu0
      %v2027 = vadd.f32 %v1267, %v2026
      %2028 = vmatmul.bf16.gmra.mxu0 %v1419
      %v2029 = vpop.f32.mrf.mxu0
      %v2030 = vadd.f32 %v1270, %v2029
      %v2031 = vpop.f32.mrf.mxu0
      %v2032 = vadd.f32 %v1272, %v2031
      %2033 = vmatmul.bf16.gmra.mxu0 %v1420
      %v2034 = vpop.f32.mrf.mxu0
      %v2035 = vadd.f32 %v1275, %v2034
      %v2036 = vpop.f32.mrf.mxu0
      %v2037 = vadd.f32 %v1277, %v2036
      %2038 = vmatmul.bf16.gmra.mxu0 %v1421
      %v2039 = vpop.f32.mrf.mxu0
      %v2040 = vadd.f32 %v1280, %v2039
      %v2041 = vpop.f32.mrf.mxu0
      %v2042 = vadd.f32 %v1282, %v2041
      %2043 = vdwg.mxu0
      %2044 = vmatpush.bf16.msra.mxu0 %v1684
      %2045 = vmatpush.bf16.msra.mxu0 %v1676
      %2046 = vmatpush.bf16.msra.mxu0 %v1668
      %2047 = vmatpush.bf16.msra.mxu0 %v1660
      %2048 = vmatpush.bf16.msra.mxu0 %v1652
      %2049 = vmatpush.bf16.msra.mxu0 %v1644
      %2050 = vmatpush.bf16.msra.mxu0 %v1636
      %2051 = vmatpush.bf16.msra.mxu0 %v1628
      %2052 = vmatmul.bf16.gmra.mxu0 %v1414
      %v2053 = vpop.f32.mrf.mxu0
      %v2054 = vadd.f32 %v1294, %v2053
      %v2055 = vpop.f32.mrf.mxu0
      %v2056 = vadd.f32 %v1296, %v2055
      %2057 = vmatmul.bf16.gmra.mxu0 %v1415
      %v2058 = vpop.f32.mrf.mxu0
      %v2059 = vadd.f32 %v1299, %v2058
      %v2060 = vpop.f32.mrf.mxu0
      %v2061 = vadd.f32 %v1301, %v2060
      %2062 = vmatmul.bf16.gmra.mxu0 %v1416
      %v2063 = vpop.f32.mrf.mxu0
      %v2064 = vadd.f32 %v1304, %v2063
      %v2065 = vpop.f32.mrf.mxu0
      %v2066 = vadd.f32 %v1306, %v2065
      %2067 = vmatmul.bf16.gmra.mxu0 %v1417
      %v2068 = vpop.f32.mrf.mxu0
      %v2069 = vadd.f32 %v1309, %v2068
      %v2070 = vpop.f32.mrf.mxu0
      %v2071 = vadd.f32 %v1311, %v2070
      %2072 = vmatmul.bf16.gmra.mxu0 %v1418
      %v2073 = vpop.f32.mrf.mxu0
      %v2074 = vadd.f32 %v1314, %v2073
      %v2075 = vpop.f32.mrf.mxu0
      %v2076 = vadd.f32 %v1316, %v2075
      %2077 = vmatmul.bf16.gmra.mxu0 %v1419
      %v2078 = vpop.f32.mrf.mxu0
      %v2079 = vadd.f32 %v1319, %v2078
      %v2080 = vpop.f32.mrf.mxu0
      %v2081 = vadd.f32 %v1321, %v2080
      %2082 = vmatmul.bf16.gmra.mxu0 %v1420
      %v2083 = vpop.f32.mrf.mxu0
      %v2084 = vadd.f32 %v1324, %v2083
      %v2085 = vpop.f32.mrf.mxu0
      %v2086 = vadd.f32 %v1326, %v2085
      %2087 = vmatmul.bf16.gmra.mxu0 %v1421
      %v2088 = vpop.f32.mrf.mxu0
      %v2089 = vadd.f32 %v1329, %v2088
      %v2090 = vpop.f32.mrf.mxu0
      %v2091 = vadd.f32 %v1331, %v2090
      %2092 = vdwg.mxu0
      %2093 = vmatpush.bf16.msra.mxu0 %v1685
      %2094 = vmatpush.bf16.msra.mxu0 %v1677
      %2095 = vmatpush.bf16.msra.mxu0 %v1669
      %2096 = vmatpush.bf16.msra.mxu0 %v1661
      %2097 = vmatpush.bf16.msra.mxu0 %v1653
      %2098 = vmatpush.bf16.msra.mxu0 %v1645
      %2099 = vmatpush.bf16.msra.mxu0 %v1637
      %2100 = vmatpush.bf16.msra.mxu0 %v1629
      %2101 = vmatmul.bf16.gmra.mxu0 %v1414
      %v2102 = vpop.f32.mrf.mxu0
      %v2103 = vadd.f32 %v1343, %v2102
      %v2104 = vpop.f32.mrf.mxu0
      %v2105 = vadd.f32 %v1345, %v2104
      %2106 = vmatmul.bf16.gmra.mxu0 %v1415
      %v2107 = vpop.f32.mrf.mxu0
      %v2108 = vadd.f32 %v1348, %v2107
      %v2109 = vpop.f32.mrf.mxu0
      %v2110 = vadd.f32 %v1350, %v2109
      %2111 = vmatmul.bf16.gmra.mxu0 %v1416
      %v2112 = vpop.f32.mrf.mxu0
      %v2113 = vadd.f32 %v1353, %v2112
      %v2114 = vpop.f32.mrf.mxu0
      %v2115 = vadd.f32 %v1355, %v2114
      %2116 = vmatmul.bf16.gmra.mxu0 %v1417
      %v2117 = vpop.f32.mrf.mxu0
      %v2118 = vadd.f32 %v1358, %v2117
      %v2119 = vpop.f32.mrf.mxu0
      %v2120 = vadd.f32 %v1360, %v2119
      %2121 = vmatmul.bf16.gmra.mxu0 %v1418
      %v2122 = vpop.f32.mrf.mxu0
      %v2123 = vadd.f32 %v1363, %v2122
      %v2124 = vpop.f32.mrf.mxu0
      %v2125 = vadd.f32 %v1365, %v2124
      %2126 = vmatmul.bf16.gmra.mxu0 %v1419
      %v2127 = vpop.f32.mrf.mxu0
      %v2128 = vadd.f32 %v1368, %v2127
      %v2129 = vpop.f32.mrf.mxu0
      %v2130 = vadd.f32 %v1370, %v2129
      %2131 = vmatmul.bf16.gmra.mxu0 %v1420
      %v2132 = vpop.f32.mrf.mxu0
      %v2133 = vadd.f32 %v1373, %v2132
      %v2134 = vpop.f32.mrf.mxu0
      %v2135 = vadd.f32 %v1375, %v2134
      %2136 = vmatmul.bf16.gmra.mxu0 %v1421
      %v2137 = vpop.f32.mrf.mxu0
      %v2138 = vadd.f32 %v1378, %v2137
      %v2139 = vpop.f32.mrf.mxu0
      %v2140 = vadd.f32 %v1380, %v2139
      %2141 = vdwg.mxu0
      %v2142 = vld [vmem:[%s415] sm:$0xf]
      %v2143 = vld [vmem:[%s415 + $0x4] sm:$0xf]
      %v2144 = vld [vmem:[%s415 + $0x8] sm:$0xf]
      %v2145 = vld [vmem:[%s415 + $0xc] sm:$0xf]
      %v2146 = vld [vmem:[%s415 + $0x10] sm:$0xf]
      %v2147 = vld [vmem:[%s415 + $0x14] sm:$0xf]
      %v2148 = vld [vmem:[%s415 + $0x18] sm:$0xf]
      %v2149 = vld [vmem:[%s415 + $0x1c] sm:$0xf]
      %v2150 = vld [vmem:[%s415 + $0x20] sm:$0xf]
      %v2151 = vld [vmem:[%s415 + $0x24] sm:$0xf]
      %v2152 = vld [vmem:[%s415 + $0x28] sm:$0xf]
      %v2153 = vld [vmem:[%s415 + $0x2c] sm:$0xf]
      %v2154 = vld [vmem:[%s415 + $0x30] sm:$0xf]
      %v2155 = vld [vmem:[%s415 + $0x34] sm:$0xf]
      %v2156 = vld [vmem:[%s415 + $0x38] sm:$0xf]
      %v2157 = vld [vmem:[%s415 + $0x3c] sm:$0xf]
      %v2158 = vld [vmem:[%s6] sm:$0xff]
      %v2175 = vunpack.c.l.b16 %v2142
      %v2176 = vunpack.c.l.b16 %v2143
      %v2177 = vunpack.c.l.b16 %v2144
      %v2178 = vunpack.c.l.b16 %v2145
      %v2179 = vunpack.c.l.b16 %v2146
      %v2180 = vunpack.c.l.b16 %v2147
      %v2181 = vunpack.c.l.b16 %v2148
      %v2182 = vunpack.c.l.b16 %v2149
      %v2183 = vunpack.c.l.b16 %v2150
      %v2184 = vunpack.c.l.b16 %v2151
      %v2185 = vunpack.c.l.b16 %v2152
      %v2186 = vunpack.c.l.b16 %v2153
      %v2187 = vunpack.c.l.b16 %v2154
      %v2188 = vunpack.c.l.b16 %v2155
      %v2189 = vunpack.c.l.b16 %v2156
      %v2190 = vunpack.c.l.b16 %v2157
      %v2191 = vpack.c.b16 %v2176, %v2175
      %v2192 = vpack.c.b16 %v2178, %v2177
      %v2193 = vpack.c.b16 %v2180, %v2179
      %v2194 = vpack.c.b16 %v2182, %v2181
      %v2195 = vpack.c.b16 %v2184, %v2183
      %v2196 = vpack.c.b16 %v2186, %v2185
      %v2197 = vpack.c.b16 %v2188, %v2187
      %v2198 = vpack.c.b16 %v2190, %v2189
      %2200 = vst [vmem:[#allocation1] ss:$9 sm:$0xff] %v2158
      %v2201 = vld [vmem:[#allocation1] sm:$0xff]
      %v2202 = vld [vmem:[#allocation1 + $0x9] sm:$0xff]
      %v2203 = vld [vmem:[#allocation1 + $0x12] sm:$0xff]
      %v2204 = vld [vmem:[#allocation1 + $0x1b] sm:$0xff]
      %v2205 = vld [vmem:[#allocation1 + $0x24] sm:$0xff]
      %v2206 = vld [vmem:[#allocation1 + $0x2d] sm:$0xff]
      %v2207 = vld [vmem:[#allocation1 + $0x36] sm:$0xff]
      %v2208 = vld [vmem:[#allocation1 + $0x3f] sm:$0xff]
      %vm2209 = vcmask 15360
      %v2211 = vsel %vm2209, %v2191, 0
      %v2214 = vsel %vm2209, %v2192, 0
      %v2217 = vsel %vm2209, %v2193, 0
      %v2220 = vsel %vm2209, %v2194, 0
      %v2223 = vsel %vm2209, %v2195, 0
      %v2226 = vsel %vm2209, %v2196, 0
      %v2229 = vsel %vm2209, %v2197, 0
      %v2232 = vsel %vm2209, %v2198, 0
      %vm2234 = vcmask 1040384
      %v2235 = vsel %vm2234, %v2201, 0
      %v2237 = vsel %vm2234, %v2202, 0
      %v2239 = vsel %vm2234, %v2203, 0
      %v2241 = vsel %vm2234, %v2204, 0
      %v2243 = vsel %vm2234, %v2205, 0
      %v2245 = vsel %vm2234, %v2206, 0
      %v2247 = vsel %vm2234, %v2207, 0
      %v2249 = vsel %vm2234, %v2208, 0
      %2251 = vmatpush.bf16.msra.mxu0 0
      %2252 = vmatpush.bf16.msra.mxu0 0
      %2253 = vmatpush.bf16.msra.mxu0 0
      %2254 = vmatpush.bf16.msra.mxu0 0
      %2255 = vmatpush.bf16.msra.mxu0 0
      %2256 = vmatpush.bf16.msra.mxu0 0
      %2257 = vmatpush.bf16.msra.mxu0 0
      %2258 = vmatpush.bf16.msra.mxu0 %v2235
      %2259 = vmatmul.bf16.gmra.mxu0 %v2211
      %v2260 = vpop.f32.mrf.mxu0
      %v2261 = vadd.f32 0.0, %v2260
      %v2262 = vpop.f32.mrf.mxu0
      %v2263 = vadd.f32 0.0, %v2262
      %2264 = vmatmul.bf16.gmra.mxu0 %v2214
      %v2265 = vpop.f32.mrf.mxu0
      %v2266 = vadd.f32 0.0, %v2265
      %v2267 = vpop.f32.mrf.mxu0
      %v2268 = vadd.f32 0.0, %v2267
      %2269 = vmatmul.bf16.gmra.mxu0 %v2217
      %v2270 = vpop.f32.mrf.mxu0
      %v2271 = vadd.f32 0.0, %v2270
      %v2272 = vpop.f32.mrf.mxu0
      %v2273 = vadd.f32 0.0, %v2272
      %2274 = vmatmul.bf16.gmra.mxu0 %v2220
      %v2275 = vpop.f32.mrf.mxu0
      %v2276 = vadd.f32 0.0, %v2275
      %v2277 = vpop.f32.mrf.mxu0
      %v2278 = vadd.f32 0.0, %v2277
      %2279 = vmatmul.bf16.gmra.mxu0 %v2223
      %v2280 = vpop.f32.mrf.mxu0
      %v2281 = vadd.f32 0.0, %v2280
      %v2282 = vpop.f32.mrf.mxu0
      %v2283 = vadd.f32 0.0, %v2282
      %2284 = vmatmul.bf16.gmra.mxu0 %v2226
      %v2285 = vpop.f32.mrf.mxu0
      %v2286 = vadd.f32 0.0, %v2285
      %v2287 = vpop.f32.mrf.mxu0
      %v2288 = vadd.f32 0.0, %v2287
      %2289 = vmatmul.bf16.gmra.mxu0 %v2229
      %v2290 = vpop.f32.mrf.mxu0
      %v2291 = vadd.f32 0.0, %v2290
      %v2292 = vpop.f32.mrf.mxu0
      %v2293 = vadd.f32 0.0, %v2292
      %2294 = vmatmul.bf16.gmra.mxu0 %v2232
      %v2295 = vpop.f32.mrf.mxu0
      %v2296 = vadd.f32 0.0, %v2295
      %v2297 = vpop.f32.mrf.mxu0
      %v2298 = vadd.f32 0.0, %v2297
      %2299 = vdwg.mxu0
      %2300 = vmatpush.bf16.msra.mxu0 0
      %2301 = vmatpush.bf16.msra.mxu0 0
      %2302 = vmatpush.bf16.msra.mxu0 0
      %2303 = vmatpush.bf16.msra.mxu0 0
      %2304 = vmatpush.bf16.msra.mxu0 0
      %2305 = vmatpush.bf16.msra.mxu0 0
      %2306 = vmatpush.bf16.msra.mxu0 0
      %2307 = vmatpush.bf16.msra.mxu0 %v2237
      %2308 = vmatmul.bf16.gmra.mxu0 %v2211
      %v2309 = vpop.f32.mrf.mxu0
      %v2310 = vadd.f32 0.0, %v2309
      %v2311 = vpop.f32.mrf.mxu0
      %v2312 = vadd.f32 0.0, %v2311
      %2313 = vmatmul.bf16.gmra.mxu0 %v2214
      %v2314 = vpop.f32.mrf.mxu0
      %v2315 = vadd.f32 0.0, %v2314
      %v2316 = vpop.f32.mrf.mxu0
      %v2317 = vadd.f32 0.0, %v2316
      %2318 = vmatmul.bf16.gmra.mxu0 %v2217
      %v2319 = vpop.f32.mrf.mxu0
      %v2320 = vadd.f32 0.0, %v2319
      %v2321 = vpop.f32.mrf.mxu0
      %v2322 = vadd.f32 0.0, %v2321
      %2323 = vmatmul.bf16.gmra.mxu0 %v2220
      %v2324 = vpop.f32.mrf.mxu0
      %v2325 = vadd.f32 0.0, %v2324
      %v2326 = vpop.f32.mrf.mxu0
      %v2327 = vadd.f32 0.0, %v2326
      %2328 = vmatmul.bf16.gmra.mxu0 %v2223
      %v2329 = vpop.f32.mrf.mxu0
      %v2330 = vadd.f32 0.0, %v2329
      %v2331 = vpop.f32.mrf.mxu0
      %v2332 = vadd.f32 0.0, %v2331
      %2333 = vmatmul.bf16.gmra.mxu0 %v2226
      %v2334 = vpop.f32.mrf.mxu0
      %v2335 = vadd.f32 0.0, %v2334
      %v2336 = vpop.f32.mrf.mxu0
      %v2337 = vadd.f32 0.0, %v2336
      %2338 = vmatmul.bf16.gmra.mxu0 %v2229
      %v2339 = vpop.f32.mrf.mxu0
      %v2340 = vadd.f32 0.0, %v2339
      %v2341 = vpop.f32.mrf.mxu0
      %v2342 = vadd.f32 0.0, %v2341
      %2343 = vmatmul.bf16.gmra.mxu0 %v2232
      %v2344 = vpop.f32.mrf.mxu0
      %v2345 = vadd.f32 0.0, %v2344
      %v2346 = vpop.f32.mrf.mxu0
      %v2347 = vadd.f32 0.0, %v2346
      %2348 = vdwg.mxu0
      %2349 = vmatpush.bf16.msra.mxu0 0
      %2350 = vmatpush.bf16.msra.mxu0 0
      %2351 = vmatpush.bf16.msra.mxu0 0
      %2352 = vmatpush.bf16.msra.mxu0 0
      %2353 = vmatpush.bf16.msra.mxu0 0
      %2354 = vmatpush.bf16.msra.mxu0 0
      %2355 = vmatpush.bf16.msra.mxu0 0
      %2356 = vmatpush.bf16.msra.mxu0 %v2239
      %2357 = vmatmul.bf16.gmra.mxu0 %v2211
      %v2358 = vpop.f32.mrf.mxu0
      %v2359 = vadd.f32 0.0, %v2358
      %v2360 = vpop.f32.mrf.mxu0
      %v2361 = vadd.f32 0.0, %v2360
      %2362 = vmatmul.bf16.gmra.mxu0 %v2214
      %v2363 = vpop.f32.mrf.mxu0
      %v2364 = vadd.f32 0.0, %v2363
      %v2365 = vpop.f32.mrf.mxu0
      %v2366 = vadd.f32 0.0, %v2365
      %2367 = vmatmul.bf16.gmra.mxu0 %v2217
      %v2368 = vpop.f32.mrf.mxu0
      %v2369 = vadd.f32 0.0, %v2368
      %v2370 = vpop.f32.mrf.mxu0
      %v2371 = vadd.f32 0.0, %v2370
      %2372 = vmatmul.bf16.gmra.mxu0 %v2220
      %v2373 = vpop.f32.mrf.mxu0
      %v2374 = vadd.f32 0.0, %v2373
      %v2375 = vpop.f32.mrf.mxu0
      %v2376 = vadd.f32 0.0, %v2375
      %2377 = vmatmul.bf16.gmra.mxu0 %v2223
      %v2378 = vpop.f32.mrf.mxu0
      %v2379 = vadd.f32 0.0, %v2378
      %v2380 = vpop.f32.mrf.mxu0
      %v2381 = vadd.f32 0.0, %v2380
      %2382 = vmatmul.bf16.gmra.mxu0 %v2226
      %v2383 = vpop.f32.mrf.mxu0
      %v2384 = vadd.f32 0.0, %v2383
      %v2385 = vpop.f32.mrf.mxu0
      %v2386 = vadd.f32 0.0, %v2385
      %2387 = vmatmul.bf16.gmra.mxu0 %v2229
      %v2388 = vpop.f32.mrf.mxu0
      %v2389 = vadd.f32 0.0, %v2388
      %v2390 = vpop.f32.mrf.mxu0
      %v2391 = vadd.f32 0.0, %v2390
      %2392 = vmatmul.bf16.gmra.mxu0 %v2232
      %v2393 = vpop.f32.mrf.mxu0
      %v2394 = vadd.f32 0.0, %v2393
      %v2395 = vpop.f32.mrf.mxu0
      %v2396 = vadd.f32 0.0, %v2395
      %2397 = vdwg.mxu0
      %2398 = vmatpush.bf16.msra.mxu0 0
      %2399 = vmatpush.bf16.msra.mxu0 0
      %2400 = vmatpush.bf16.msra.mxu0 0
      %2401 = vmatpush.bf16.msra.mxu0 0
      %2402 = vmatpush.bf16.msra.mxu0 0
      %2403 = vmatpush.bf16.msra.mxu0 0
      %2404 = vmatpush.bf16.msra.mxu0 0
      %2405 = vmatpush.bf16.msra.mxu0 %v2241
      %2406 = vmatmul.bf16.gmra.mxu0 %v2211
      %v2407 = vpop.f32.mrf.mxu0
      %v2408 = vadd.f32 0.0, %v2407
      %v2409 = vpop.f32.mrf.mxu0
      %v2410 = vadd.f32 0.0, %v2409
      %2411 = vmatmul.bf16.gmra.mxu0 %v2214
      %v2412 = vpop.f32.mrf.mxu0
      %v2413 = vadd.f32 0.0, %v2412
      %v2414 = vpop.f32.mrf.mxu0
      %v2415 = vadd.f32 0.0, %v2414
      %2416 = vmatmul.bf16.gmra.mxu0 %v2217
      %v2417 = vpop.f32.mrf.mxu0
      %v2418 = vadd.f32 0.0, %v2417
      %v2419 = vpop.f32.mrf.mxu0
      %v2420 = vadd.f32 0.0, %v2419
      %2421 = vmatmul.bf16.gmra.mxu0 %v2220
      %v2422 = vpop.f32.mrf.mxu0
      %v2423 = vadd.f32 0.0, %v2422
      %v2424 = vpop.f32.mrf.mxu0
      %v2425 = vadd.f32 0.0, %v2424
      %2426 = vmatmul.bf16.gmra.mxu0 %v2223
      %v2427 = vpop.f32.mrf.mxu0
      %v2428 = vadd.f32 0.0, %v2427
      %v2429 = vpop.f32.mrf.mxu0
      %v2430 = vadd.f32 0.0, %v2429
      %2431 = vmatmul.bf16.gmra.mxu0 %v2226
      %v2432 = vpop.f32.mrf.mxu0
      %v2433 = vadd.f32 0.0, %v2432
      %v2434 = vpop.f32.mrf.mxu0
      %v2435 = vadd.f32 0.0, %v2434
      %2436 = vmatmul.bf16.gmra.mxu0 %v2229
      %v2437 = vpop.f32.mrf.mxu0
      %v2438 = vadd.f32 0.0, %v2437
      %v2439 = vpop.f32.mrf.mxu0
      %v2440 = vadd.f32 0.0, %v2439
      %2441 = vmatmul.bf16.gmra.mxu0 %v2232
      %v2442 = vpop.f32.mrf.mxu0
      %v2443 = vadd.f32 0.0, %v2442
      %v2444 = vpop.f32.mrf.mxu0
      %v2445 = vadd.f32 0.0, %v2444
      %2446 = vdwg.mxu0
      %2447 = vmatpush.bf16.msra.mxu0 0
      %2448 = vmatpush.bf16.msra.mxu0 0
      %2449 = vmatpush.bf16.msra.mxu0 0
      %2450 = vmatpush.bf16.msra.mxu0 0
      %2451 = vmatpush.bf16.msra.mxu0 0
      %2452 = vmatpush.bf16.msra.mxu0 0
      %2453 = vmatpush.bf16.msra.mxu0 0
      %2454 = vmatpush.bf16.msra.mxu0 %v2243
      %2455 = vmatmul.bf16.gmra.mxu0 %v2211
      %v2456 = vpop.f32.mrf.mxu0
      %v2457 = vadd.f32 0.0, %v2456
      %v2458 = vpop.f32.mrf.mxu0
      %v2459 = vadd.f32 0.0, %v2458
      %2460 = vmatmul.bf16.gmra.mxu0 %v2214
      %v2461 = vpop.f32.mrf.mxu0
      %v2462 = vadd.f32 0.0, %v2461
      %v2463 = vpop.f32.mrf.mxu0
      %v2464 = vadd.f32 0.0, %v2463
      %2465 = vmatmul.bf16.gmra.mxu0 %v2217
      %v2466 = vpop.f32.mrf.mxu0
      %v2467 = vadd.f32 0.0, %v2466
      %v2468 = vpop.f32.mrf.mxu0
      %v2469 = vadd.f32 0.0, %v2468
      %2470 = vmatmul.bf16.gmra.mxu0 %v2220
      %v2471 = vpop.f32.mrf.mxu0
      %v2472 = vadd.f32 0.0, %v2471
      %v2473 = vpop.f32.mrf.mxu0
      %v2474 = vadd.f32 0.0, %v2473
      %2475 = vmatmul.bf16.gmra.mxu0 %v2223
      %v2476 = vpop.f32.mrf.mxu0
      %v2477 = vadd.f32 0.0, %v2476
      %v2478 = vpop.f32.mrf.mxu0
      %v2479 = vadd.f32 0.0, %v2478
      %2480 = vmatmul.bf16.gmra.mxu0 %v2226
      %v2481 = vpop.f32.mrf.mxu0
      %v2482 = vadd.f32 0.0, %v2481
      %v2483 = vpop.f32.mrf.mxu0
      %v2484 = vadd.f32 0.0, %v2483
      %2485 = vmatmul.bf16.gmra.mxu0 %v2229
      %v2486 = vpop.f32.mrf.mxu0
      %v2487 = vadd.f32 0.0, %v2486
      %v2488 = vpop.f32.mrf.mxu0
      %v2489 = vadd.f32 0.0, %v2488
      %2490 = vmatmul.bf16.gmra.mxu0 %v2232
      %v2491 = vpop.f32.mrf.mxu0
      %v2492 = vadd.f32 0.0, %v2491
      %v2493 = vpop.f32.mrf.mxu0
      %v2494 = vadd.f32 0.0, %v2493
      %2495 = vdwg.mxu0
      %2496 = vmatpush.bf16.msra.mxu0 0
      %2497 = vmatpush.bf16.msra.mxu0 0
      %2498 = vmatpush.bf16.msra.mxu0 0
      %2499 = vmatpush.bf16.msra.mxu0 0
      %2500 = vmatpush.bf16.msra.mxu0 0
      %2501 = vmatpush.bf16.msra.mxu0 0
      %2502 = vmatpush.bf16.msra.mxu0 0
      %2503 = vmatpush.bf16.msra.mxu0 %v2245
      %2504 = vmatmul.bf16.gmra.mxu0 %v2211
      %v2505 = vpop.f32.mrf.mxu0
      %v2506 = vadd.f32 0.0, %v2505
      %v2507 = vpop.f32.mrf.mxu0
      %v2508 = vadd.f32 0.0, %v2507
      %2509 = vmatmul.bf16.gmra.mxu0 %v2214
      %v2510 = vpop.f32.mrf.mxu0
      %v2511 = vadd.f32 0.0, %v2510
      %v2512 = vpop.f32.mrf.mxu0
      %v2513 = vadd.f32 0.0, %v2512
      %2514 = vmatmul.bf16.gmra.mxu0 %v2217
      %v2515 = vpop.f32.mrf.mxu0
      %v2516 = vadd.f32 0.0, %v2515
      %v2517 = vpop.f32.mrf.mxu0
      %v2518 = vadd.f32 0.0, %v2517
      %2519 = vmatmul.bf16.gmra.mxu0 %v2220
      %v2520 = vpop.f32.mrf.mxu0
      %v2521 = vadd.f32 0.0, %v2520
      %v2522 = vpop.f32.mrf.mxu0
      %v2523 = vadd.f32 0.0, %v2522
      %2524 = vmatmul.bf16.gmra.mxu0 %v2223
      %v2525 = vpop.f32.mrf.mxu0
      %v2526 = vadd.f32 0.0, %v2525
      %v2527 = vpop.f32.mrf.mxu0
      %v2528 = vadd.f32 0.0, %v2527
      %2529 = vmatmul.bf16.gmra.mxu0 %v2226
      %v2530 = vpop.f32.mrf.mxu0
      %v2531 = vadd.f32 0.0, %v2530
      %v2532 = vpop.f32.mrf.mxu0
      %v2533 = vadd.f32 0.0, %v2532
      %2534 = vmatmul.bf16.gmra.mxu0 %v2229
      %v2535 = vpop.f32.mrf.mxu0
      %v2536 = vadd.f32 0.0, %v2535
      %v2537 = vpop.f32.mrf.mxu0
      %v2538 = vadd.f32 0.0, %v2537
      %2539 = vmatmul.bf16.gmra.mxu0 %v2232
      %v2540 = vpop.f32.mrf.mxu0
      %v2541 = vadd.f32 0.0, %v2540
      %v2542 = vpop.f32.mrf.mxu0
      %v2543 = vadd.f32 0.0, %v2542
      %2544 = vdwg.mxu0
      %2545 = vmatpush.bf16.msra.mxu0 0
      %2546 = vmatpush.bf16.msra.mxu0 0
      %2547 = vmatpush.bf16.msra.mxu0 0
      %2548 = vmatpush.bf16.msra.mxu0 0
      %2549 = vmatpush.bf16.msra.mxu0 0
      %2550 = vmatpush.bf16.msra.mxu0 0
      %2551 = vmatpush.bf16.msra.mxu0 0
      %2552 = vmatpush.bf16.msra.mxu0 %v2247
      %2553 = vmatmul.bf16.gmra.mxu0 %v2211
      %v2554 = vpop.f32.mrf.mxu0
      %v2555 = vadd.f32 0.0, %v2554
      %v2556 = vpop.f32.mrf.mxu0
      %v2557 = vadd.f32 0.0, %v2556
      %2558 = vmatmul.bf16.gmra.mxu0 %v2214
      %v2559 = vpop.f32.mrf.mxu0
      %v2560 = vadd.f32 0.0, %v2559
      %v2561 = vpop.f32.mrf.mxu0
      %v2562 = vadd.f32 0.0, %v2561
      %2563 = vmatmul.bf16.gmra.mxu0 %v2217
      %v2564 = vpop.f32.mrf.mxu0
      %v2565 = vadd.f32 0.0, %v2564
      %v2566 = vpop.f32.mrf.mxu0
      %v2567 = vadd.f32 0.0, %v2566
      %2568 = vmatmul.bf16.gmra.mxu0 %v2220
      %v2569 = vpop.f32.mrf.mxu0
      %v2570 = vadd.f32 0.0, %v2569
      %v2571 = vpop.f32.mrf.mxu0
      %v2572 = vadd.f32 0.0, %v2571
      %2573 = vmatmul.bf16.gmra.mxu0 %v2223
      %v2574 = vpop.f32.mrf.mxu0
      %v2575 = vadd.f32 0.0, %v2574
      %v2576 = vpop.f32.mrf.mxu0
      %v2577 = vadd.f32 0.0, %v2576
      %2578 = vmatmul.bf16.gmra.mxu0 %v2226
      %v2579 = vpop.f32.mrf.mxu0
      %v2580 = vadd.f32 0.0, %v2579
      %v2581 = vpop.f32.mrf.mxu0
      %v2582 = vadd.f32 0.0, %v2581
      %2583 = vmatmul.bf16.gmra.mxu0 %v2229
      %v2584 = vpop.f32.mrf.mxu0
      %v2585 = vadd.f32 0.0, %v2584
      %v2586 = vpop.f32.mrf.mxu0
      %v2587 = vadd.f32 0.0, %v2586
      %2588 = vmatmul.bf16.gmra.mxu0 %v2232
      %v2589 = vpop.f32.mrf.mxu0
      %v2590 = vadd.f32 0.0, %v2589
      %v2591 = vpop.f32.mrf.mxu0
      %v2592 = vadd.f32 0.0, %v2591
      %2593 = vdwg.mxu0
      %2594 = vmatpush.bf16.msra.mxu0 0
      %2595 = vmatpush.bf16.msra.mxu0 0
      %2596 = vmatpush.bf16.msra.mxu0 0
      %2597 = vmatpush.bf16.msra.mxu0 0
      %2598 = vmatpush.bf16.msra.mxu0 0
      %2599 = vmatpush.bf16.msra.mxu0 0
      %2600 = vmatpush.bf16.msra.mxu0 0
      %2601 = vmatpush.bf16.msra.mxu0 %v2249
      %2602 = vmatmul.bf16.gmra.mxu0 %v2211
      %v2603 = vpop.f32.mrf.mxu0
      %v2604 = vadd.f32 0.0, %v2603
      %v2605 = vpop.f32.mrf.mxu0
      %v2606 = vadd.f32 0.0, %v2605
      %2607 = vmatmul.bf16.gmra.mxu0 %v2214
      %v2608 = vpop.f32.mrf.mxu0
      %v2609 = vadd.f32 0.0, %v2608
      %v2610 = vpop.f32.mrf.mxu0
      %v2611 = vadd.f32 0.0, %v2610
      %2612 = vmatmul.bf16.gmra.mxu0 %v2217
      %v2613 = vpop.f32.mrf.mxu0
      %v2614 = vadd.f32 0.0, %v2613
      %v2615 = vpop.f32.mrf.mxu0
      %v2616 = vadd.f32 0.0, %v2615
      %2617 = vmatmul.bf16.gmra.mxu0 %v2220
      %v2618 = vpop.f32.mrf.mxu0
      %v2619 = vadd.f32 0.0, %v2618
      %v2620 = vpop.f32.mrf.mxu0
      %v2621 = vadd.f32 0.0, %v2620
      %2622 = vmatmul.bf16.gmra.mxu0 %v2223
      %v2623 = vpop.f32.mrf.mxu0
      %v2624 = vadd.f32 0.0, %v2623
      %v2625 = vpop.f32.mrf.mxu0
      %v2626 = vadd.f32 0.0, %v2625
      %2627 = vmatmul.bf16.gmra.mxu0 %v2226
      %v2628 = vpop.f32.mrf.mxu0
      %v2629 = vadd.f32 0.0, %v2628
      %v2630 = vpop.f32.mrf.mxu0
      %v2631 = vadd.f32 0.0, %v2630
      %2632 = vmatmul.bf16.gmra.mxu0 %v2229
      %v2633 = vpop.f32.mrf.mxu0
      %v2634 = vadd.f32 0.0, %v2633
      %v2635 = vpop.f32.mrf.mxu0
      %v2636 = vadd.f32 0.0, %v2635
      %2637 = vmatmul.bf16.gmra.mxu0 %v2232
      %v2638 = vpop.f32.mrf.mxu0
      %v2639 = vadd.f32 0.0, %v2638
      %v2640 = vpop.f32.mrf.mxu0
      %v2641 = vadd.f32 0.0, %v2640
      %2642 = vdwg.mxu0
      %v2643 = vadd.f32 %v1760, %v2261
      %v2644 = vadd.f32 %v1809, %v2310
      %v2645 = vadd.f32 %v1858, %v2359
      %v2646 = vadd.f32 %v1907, %v2408
      %v2647 = vadd.f32 %v1956, %v2457
      %v2648 = vadd.f32 %v2005, %v2506
      %v2649 = vadd.f32 %v2054, %v2555
      %v2650 = vadd.f32 %v2103, %v2604
      %v2651 = vadd.f32 %v1762, %v2263
      %v2652 = vadd.f32 %v1811, %v2312
      %v2653 = vadd.f32 %v1860, %v2361
      %v2654 = vadd.f32 %v1909, %v2410
      %v2655 = vadd.f32 %v1958, %v2459
      %v2656 = vadd.f32 %v2007, %v2508
      %v2657 = vadd.f32 %v2056, %v2557
      %v2658 = vadd.f32 %v2105, %v2606
      %v2659 = vadd.f32 %v1765, %v2266
      %v2660 = vadd.f32 %v1814, %v2315
      %v2661 = vadd.f32 %v1863, %v2364
      %v2662 = vadd.f32 %v1912, %v2413
      %v2663 = vadd.f32 %v1961, %v2462
      %v2664 = vadd.f32 %v2010, %v2511
      %v2665 = vadd.f32 %v2059, %v2560
      %v2666 = vadd.f32 %v2108, %v2609
      %v2667 = vadd.f32 %v1767, %v2268
      %v2668 = vadd.f32 %v1816, %v2317
      %v2669 = vadd.f32 %v1865, %v2366
      %v2670 = vadd.f32 %v1914, %v2415
      %v2671 = vadd.f32 %v1963, %v2464
      %v2672 = vadd.f32 %v2012, %v2513
      %v2673 = vadd.f32 %v2061, %v2562
      %v2674 = vadd.f32 %v2110, %v2611
      %v2675 = vadd.f32 %v1770, %v2271
      %v2676 = vadd.f32 %v1819, %v2320
      %v2677 = vadd.f32 %v1868, %v2369
      %v2678 = vadd.f32 %v1917, %v2418
      %v2679 = vadd.f32 %v1966, %v2467
      %v2680 = vadd.f32 %v2015, %v2516
      %v2681 = vadd.f32 %v2064, %v2565
      %v2682 = vadd.f32 %v2113, %v2614
      %v2683 = vadd.f32 %v1772, %v2273
      %v2684 = vadd.f32 %v1821, %v2322
      %v2685 = vadd.f32 %v1870, %v2371
      %v2686 = vadd.f32 %v1919, %v2420
      %v2687 = vadd.f32 %v1968, %v2469
      %v2688 = vadd.f32 %v2017, %v2518
      %v2689 = vadd.f32 %v2066, %v2567
      %v2690 = vadd.f32 %v2115, %v2616
      %v2691 = vadd.f32 %v1775, %v2276
      %v2692 = vadd.f32 %v1824, %v2325
      %v2693 = vadd.f32 %v1873, %v2374
      %v2694 = vadd.f32 %v1922, %v2423
      %v2695 = vadd.f32 %v1971, %v2472
      %v2696 = vadd.f32 %v2020, %v2521
      %v2697 = vadd.f32 %v2069, %v2570
      %v2698 = vadd.f32 %v2118, %v2619
      %v2699 = vadd.f32 %v1777, %v2278
      %v2700 = vadd.f32 %v1826, %v2327
      %v2701 = vadd.f32 %v1875, %v2376
      %v2702 = vadd.f32 %v1924, %v2425
      %v2703 = vadd.f32 %v1973, %v2474
      %v2704 = vadd.f32 %v2022, %v2523
      %v2705 = vadd.f32 %v2071, %v2572
      %v2706 = vadd.f32 %v2120, %v2621
      %v2707 = vadd.f32 %v1780, %v2281
      %v2708 = vadd.f32 %v1829, %v2330
      %v2709 = vadd.f32 %v1878, %v2379
      %v2710 = vadd.f32 %v1927, %v2428
      %v2711 = vadd.f32 %v1976, %v2477
      %v2712 = vadd.f32 %v2025, %v2526
      %v2713 = vadd.f32 %v2074, %v2575
      %v2714 = vadd.f32 %v2123, %v2624
      %v2715 = vadd.f32 %v1782, %v2283
      %v2716 = vadd.f32 %v1831, %v2332
      %v2717 = vadd.f32 %v1880, %v2381
      %v2718 = vadd.f32 %v1929, %v2430
      %v2719 = vadd.f32 %v1978, %v2479
      %v2720 = vadd.f32 %v2027, %v2528
      %v2721 = vadd.f32 %v2076, %v2577
      %v2722 = vadd.f32 %v2125, %v2626
      %v2723 = vadd.f32 %v1785, %v2286
      %v2724 = vadd.f32 %v1834, %v2335
      %v2725 = vadd.f32 %v1883, %v2384
      %v2726 = vadd.f32 %v1932, %v2433
      %v2727 = vadd.f32 %v1981, %v2482
      %v2728 = vadd.f32 %v2030, %v2531
      %v2729 = vadd.f32 %v2079, %v2580
      %v2730 = vadd.f32 %v2128, %v2629
      %v2731 = vadd.f32 %v1787, %v2288
      %v2732 = vadd.f32 %v1836, %v2337
      %v2733 = vadd.f32 %v1885, %v2386
      %v2734 = vadd.f32 %v1934, %v2435
      %v2735 = vadd.f32 %v1983, %v2484
      %v2736 = vadd.f32 %v2032, %v2533
      %v2737 = vadd.f32 %v2081, %v2582
      %v2738 = vadd.f32 %v2130, %v2631
      %v2739 = vadd.f32 %v1790, %v2291
      %v2740 = vadd.f32 %v1839, %v2340
      %v2741 = vadd.f32 %v1888, %v2389
      %v2742 = vadd.f32 %v1937, %v2438
      %v2743 = vadd.f32 %v1986, %v2487
      %v2744 = vadd.f32 %v2035, %v2536
      %v2745 = vadd.f32 %v2084, %v2585
      %v2746 = vadd.f32 %v2133, %v2634
      %v2747 = vadd.f32 %v1792, %v2293
      %v2748 = vadd.f32 %v1841, %v2342
      %v2749 = vadd.f32 %v1890, %v2391
      %v2750 = vadd.f32 %v1939, %v2440
      %v2751 = vadd.f32 %v1988, %v2489
      %v2752 = vadd.f32 %v2037, %v2538
      %v2753 = vadd.f32 %v2086, %v2587
      %v2754 = vadd.f32 %v2135, %v2636
      %v2755 = vadd.f32 %v1795, %v2296
      %v2756 = vadd.f32 %v1844, %v2345
      %v2757 = vadd.f32 %v1893, %v2394
      %v2758 = vadd.f32 %v1942, %v2443
      %v2759 = vadd.f32 %v1991, %v2492
      %v2760 = vadd.f32 %v2040, %v2541
      %v2761 = vadd.f32 %v2089, %v2590
      %v2762 = vadd.f32 %v2138, %v2639
      %v2763 = vadd.f32 %v1797, %v2298
      %v2764 = vadd.f32 %v1846, %v2347
      %v2765 = vadd.f32 %v1895, %v2396
      %v2766 = vadd.f32 %v1944, %v2445
      %v2767 = vadd.f32 %v1993, %v2494
      %v2768 = vadd.f32 %v2042, %v2543
      %v2769 = vadd.f32 %v2091, %v2592
      %v2770 = vadd.f32 %v2140, %v2641
      %v2771 = vld [vmem:[%s7] sm:$0x1]
      %v2772 = vunpack.c.l.bf16 %v2771
      %v2773 = vperm.slane %v2772, 0
      %2775 = vset.pattern.permute.xlu0 0
      %2776 = vperm.xlu0 %2775, %v446
      %v2777 = vpop.permute.xlu0 %2776
      %2780 = vset.pattern.permute.xlu0 0
      %2781 = vperm.xlu0 %2780, %v447
      %v2782 = vpop.permute.xlu0 %2781
      %2785 = vset.pattern.permute.xlu0 0
      %2786 = vperm.xlu0 %2785, %v448
      %v2787 = vpop.permute.xlu0 %2786
      %2790 = vset.pattern.permute.xlu0 0
      %2791 = vperm.xlu0 %2790, %v449
      %v2792 = vpop.permute.xlu0 %2791
      %2795 = vset.pattern.permute.xlu0 0
      %2796 = vperm.xlu0 %2795, %v450
      %v2797 = vpop.permute.xlu0 %2796
      %2800 = vset.pattern.permute.xlu0 0
      %2801 = vperm.xlu0 %2800, %v451
      %v2802 = vpop.permute.xlu0 %2801
      %2805 = vset.pattern.permute.xlu0 0
      %2806 = vperm.xlu0 %2805, %v452
      %v2807 = vpop.permute.xlu0 %2806
      %2810 = vset.pattern.permute.xlu0 0
      %2811 = vperm.xlu0 %2810, %v453
      %v2812 = vpop.permute.xlu0 %2811
      %2815 = vset.pattern.permute.xlu0 0
      %2816 = vperm.xlu0 %2815, %v454
      %v2817 = vpop.permute.xlu0 %2816
      %2820 = vset.pattern.permute.xlu0 0
      %2821 = vperm.xlu0 %2820, %v455
      %v2822 = vpop.permute.xlu0 %2821
      %2825 = vset.pattern.permute.xlu0 0
      %2826 = vperm.xlu0 %2825, %v456
      %v2827 = vpop.permute.xlu0 %2826
      %2830 = vset.pattern.permute.xlu0 0
      %2831 = vperm.xlu0 %2830, %v457
      %v2832 = vpop.permute.xlu0 %2831
      %2835 = vset.pattern.permute.xlu0 0
      %2836 = vperm.xlu0 %2835, %v458
      %v2837 = vpop.permute.xlu0 %2836
      %2840 = vset.pattern.permute.xlu0 0
      %2841 = vperm.xlu0 %2840, %v459
      %v2842 = vpop.permute.xlu0 %2841
      %2845 = vset.pattern.permute.xlu0 0
      %2846 = vperm.xlu0 %2845, %v460
      %v2847 = vpop.permute.xlu0 %2846
      %2850 = vset.pattern.permute.xlu0 0
      %2851 = vperm.xlu0 %2850, %v461
      %v2852 = vpop.permute.xlu0 %2851
      %v2854 = vmul.f32 %v2777, %v2643
      %v2855 = vmul.f32 %v2782, %v2651
      %v2856 = vmul.f32 %v2787, %v2659
      %v2857 = vmul.f32 %v2792, %v2667
      %v2858 = vmul.f32 %v2797, %v2675
      %v2859 = vmul.f32 %v2802, %v2683
      %v2860 = vmul.f32 %v2807, %v2691
      %v2861 = vmul.f32 %v2812, %v2699
      %v2862 = vmul.f32 %v2817, %v2707
      %v2863 = vmul.f32 %v2822, %v2715
      %v2864 = vmul.f32 %v2827, %v2723
      %v2865 = vmul.f32 %v2832, %v2731
      %v2866 = vmul.f32 %v2837, %v2739
      %v2867 = vmul.f32 %v2842, %v2747
      %v2868 = vmul.f32 %v2847, %v2755
      %v2869 = vmul.f32 %v2852, %v2763
      %v2870 = vadd.f32 %v2773, %v2854
      %v2871 = vadd.f32 %v2773, %v2855
      %v2872 = vadd.f32 %v2773, %v2856
      %v2873 = vadd.f32 %v2773, %v2857
      %v2874 = vadd.f32 %v2773, %v2858
      %v2875 = vadd.f32 %v2773, %v2859
      %v2876 = vadd.f32 %v2773, %v2860
      %v2877 = vadd.f32 %v2773, %v2861
      %v2878 = vadd.f32 %v2773, %v2862
      %v2879 = vadd.f32 %v2773, %v2863
      %v2880 = vadd.f32 %v2773, %v2864
      %v2881 = vadd.f32 %v2773, %v2865
      %v2882 = vadd.f32 %v2773, %v2866
      %v2883 = vadd.f32 %v2773, %v2867
      %v2884 = vadd.f32 %v2773, %v2868
      %v2885 = vadd.f32 %v2773, %v2869
      %2886 = vset.pattern.permute.xlu0 1
      %2887 = vperm.xlu0 %2886, %v446
      %v2888 = vpop.permute.xlu0 %2887
      %2890 = vset.pattern.permute.xlu0 1
      %2891 = vperm.xlu0 %2890, %v447
      %v2892 = vpop.permute.xlu0 %2891
      %2894 = vset.pattern.permute.xlu0 1
      %2895 = vperm.xlu0 %2894, %v448
      %v2896 = vpop.permute.xlu0 %2895
      %2898 = vset.pattern.permute.xlu0 1
      %2899 = vperm.xlu0 %2898, %v449
      %v2900 = vpop.permute.xlu0 %2899
      %2902 = vset.pattern.permute.xlu0 1
      %2903 = vperm.xlu0 %2902, %v450
      %v2904 = vpop.permute.xlu0 %2903
      %2906 = vset.pattern.permute.xlu0 1
      %2907 = vperm.xlu0 %2906, %v451
      %v2908 = vpop.permute.xlu0 %2907
      %2910 = vset.pattern.permute.xlu0 1
      %2911 = vperm.xlu0 %2910, %v452
      %v2912 = vpop.permute.xlu0 %2911
      %2914 = vset.pattern.permute.xlu0 1
      %2915 = vperm.xlu0 %2914, %v453
      %v2916 = vpop.permute.xlu0 %2915
      %2918 = vset.pattern.permute.xlu0 1
      %2919 = vperm.xlu0 %2918, %v454
      %v2920 = vpop.permute.xlu0 %2919
      %2922 = vset.pattern.permute.xlu0 1
      %2923 = vperm.xlu0 %2922, %v455
      %v2924 = vpop.permute.xlu0 %2923
      %2926 = vset.pattern.permute.xlu0 1
      %2927 = vperm.xlu0 %2926, %v456
      %v2928 = vpop.permute.xlu0 %2927
      %2930 = vset.pattern.permute.xlu0 1
      %2931 = vperm.xlu0 %2930, %v457
      %v2932 = vpop.permute.xlu0 %2931
      %2934 = vset.pattern.permute.xlu0 1
      %2935 = vperm.xlu0 %2934, %v458
      %v2936 = vpop.permute.xlu0 %2935
      %2938 = vset.pattern.permute.xlu0 1
      %2939 = vperm.xlu0 %2938, %v459
      %v2940 = vpop.permute.xlu0 %2939
      %2942 = vset.pattern.permute.xlu0 1
      %2943 = vperm.xlu0 %2942, %v460
      %v2944 = vpop.permute.xlu0 %2943
      %2946 = vset.pattern.permute.xlu0 1
      %2947 = vperm.xlu0 %2946, %v461
      %v2948 = vpop.permute.xlu0 %2947
      %v2950 = vmul.f32 %v2888, %v2644
      %v2951 = vmul.f32 %v2892, %v2652
      %v2952 = vmul.f32 %v2896, %v2660
      %v2953 = vmul.f32 %v2900, %v2668
      %v2954 = vmul.f32 %v2904, %v2676
      %v2955 = vmul.f32 %v2908, %v2684
      %v2956 = vmul.f32 %v2912, %v2692
      %v2957 = vmul.f32 %v2916, %v2700
      %v2958 = vmul.f32 %v2920, %v2708
      %v2959 = vmul.f32 %v2924, %v2716
      %v2960 = vmul.f32 %v2928, %v2724
      %v2961 = vmul.f32 %v2932, %v2732
      %v2962 = vmul.f32 %v2936, %v2740
      %v2963 = vmul.f32 %v2940, %v2748
      %v2964 = vmul.f32 %v2944, %v2756
      %v2965 = vmul.f32 %v2948, %v2764
      %v2966 = vadd.f32 %v2870, %v2950
      %v2967 = vadd.f32 %v2871, %v2951
      %v2968 = vadd.f32 %v2872, %v2952
      %v2969 = vadd.f32 %v2873, %v2953
      %v2970 = vadd.f32 %v2874, %v2954
      %v2971 = vadd.f32 %v2875, %v2955
      %v2972 = vadd.f32 %v2876, %v2956
      %v2973 = vadd.f32 %v2877, %v2957
      %v2974 = vadd.f32 %v2878, %v2958
      %v2975 = vadd.f32 %v2879, %v2959
      %v2976 = vadd.f32 %v2880, %v2960
      %v2977 = vadd.f32 %v2881, %v2961
      %v2978 = vadd.f32 %v2882, %v2962
      %v2979 = vadd.f32 %v2883, %v2963
      %v2980 = vadd.f32 %v2884, %v2964
      %v2981 = vadd.f32 %v2885, %v2965
      %2982 = vset.pattern.permute.xlu0 2
      %2983 = vperm.xlu0 %2982, %v446
      %v2984 = vpop.permute.xlu0 %2983
      %2986 = vset.pattern.permute.xlu0 2
      %2987 = vperm.xlu0 %2986, %v447
      %v2988 = vpop.permute.xlu0 %2987
      %2990 = vset.pattern.permute.xlu0 2
      %2991 = vperm.xlu0 %2990, %v448
      %v2992 = vpop.permute.xlu0 %2991
      %2994 = vset.pattern.permute.xlu0 2
      %2995 = vperm.xlu0 %2994, %v449
      %v2996 = vpop.permute.xlu0 %2995
      %2998 = vset.pattern.permute.xlu0 2
      %2999 = vperm.xlu0 %2998, %v450
      %v3000 = vpop.permute.xlu0 %2999
      %3002 = vset.pattern.permute.xlu0 2
      %3003 = vperm.xlu0 %3002, %v451
      %v3004 = vpop.permute.xlu0 %3003
      %3006 = vset.pattern.permute.xlu0 2
      %3007 = vperm.xlu0 %3006, %v452
      %v3008 = vpop.permute.xlu0 %3007
      %3010 = vset.pattern.permute.xlu0 2
      %3011 = vperm.xlu0 %3010, %v453
      %v3012 = vpop.permute.xlu0 %3011
      %3014 = vset.pattern.permute.xlu0 2
      %3015 = vperm.xlu0 %3014, %v454
      %v3016 = vpop.permute.xlu0 %3015
      %3018 = vset.pattern.permute.xlu0 2
      %3019 = vperm.xlu0 %3018, %v455
      %v3020 = vpop.permute.xlu0 %3019
      %3022 = vset.pattern.permute.xlu0 2
      %3023 = vperm.xlu0 %3022, %v456
      %v3024 = vpop.permute.xlu0 %3023
      %3026 = vset.pattern.permute.xlu0 2
      %3027 = vperm.xlu0 %3026, %v457
      %v3028 = vpop.permute.xlu0 %3027
      %3030 = vset.pattern.permute.xlu0 2
      %3031 = vperm.xlu0 %3030, %v458
      %v3032 = vpop.permute.xlu0 %3031
      %3034 = vset.pattern.permute.xlu0 2
      %3035 = vperm.xlu0 %3034, %v459
      %v3036 = vpop.permute.xlu0 %3035
      %3038 = vset.pattern.permute.xlu0 2
      %3039 = vperm.xlu0 %3038, %v460
      %v3040 = vpop.permute.xlu0 %3039
      %3042 = vset.pattern.permute.xlu0 2
      %3043 = vperm.xlu0 %3042, %v461
      %v3044 = vpop.permute.xlu0 %3043
      %v3046 = vmul.f32 %v2984, %v2645
      %v3047 = vmul.f32 %v2988, %v2653
      %v3048 = vmul.f32 %v2992, %v2661
      %v3049 = vmul.f32 %v2996, %v2669
      %v3050 = vmul.f32 %v3000, %v2677
      %v3051 = vmul.f32 %v3004, %v2685
      %v3052 = vmul.f32 %v3008, %v2693
      %v3053 = vmul.f32 %v3012, %v2701
      %v3054 = vmul.f32 %v3016, %v2709
      %v3055 = vmul.f32 %v3020, %v2717
      %v3056 = vmul.f32 %v3024, %v2725
      %v3057 = vmul.f32 %v3028, %v2733
      %v3058 = vmul.f32 %v3032, %v2741
      %v3059 = vmul.f32 %v3036, %v2749
      %v3060 = vmul.f32 %v3040, %v2757
      %v3061 = vmul.f32 %v3044, %v2765
      %v3062 = vadd.f32 %v2966, %v3046
      %v3063 = vadd.f32 %v2967, %v3047
      %v3064 = vadd.f32 %v2968, %v3048
      %v3065 = vadd.f32 %v2969, %v3049
      %v3066 = vadd.f32 %v2970, %v3050
      %v3067 = vadd.f32 %v2971, %v3051
      %v3068 = vadd.f32 %v2972, %v3052
      %v3069 = vadd.f32 %v2973, %v3053
      %v3070 = vadd.f32 %v2974, %v3054
      %v3071 = vadd.f32 %v2975, %v3055
      %v3072 = vadd.f32 %v2976, %v3056
      %v3073 = vadd.f32 %v2977, %v3057
      %v3074 = vadd.f32 %v2978, %v3058
      %v3075 = vadd.f32 %v2979, %v3059
      %v3076 = vadd.f32 %v2980, %v3060
      %v3077 = vadd.f32 %v2981, %v3061
      %3078 = vset.pattern.permute.xlu0 3
      %3079 = vperm.xlu0 %3078, %v446
      %v3080 = vpop.permute.xlu0 %3079
      %3082 = vset.pattern.permute.xlu0 3
      %3083 = vperm.xlu0 %3082, %v447
      %v3084 = vpop.permute.xlu0 %3083
      %3086 = vset.pattern.permute.xlu0 3
      %3087 = vperm.xlu0 %3086, %v448
      %v3088 = vpop.permute.xlu0 %3087
      %3090 = vset.pattern.permute.xlu0 3
      %3091 = vperm.xlu0 %3090, %v449
      %v3092 = vpop.permute.xlu0 %3091
      %3094 = vset.pattern.permute.xlu0 3
      %3095 = vperm.xlu0 %3094, %v450
      %v3096 = vpop.permute.xlu0 %3095
      %3098 = vset.pattern.permute.xlu0 3
      %3099 = vperm.xlu0 %3098, %v451
      %v3100 = vpop.permute.xlu0 %3099
      %3102 = vset.pattern.permute.xlu0 3
      %3103 = vperm.xlu0 %3102, %v452
      %v3104 = vpop.permute.xlu0 %3103
      %3106 = vset.pattern.permute.xlu0 3
      %3107 = vperm.xlu0 %3106, %v453
      %v3108 = vpop.permute.xlu0 %3107
      %3110 = vset.pattern.permute.xlu0 3
      %3111 = vperm.xlu0 %3110, %v454
      %v3112 = vpop.permute.xlu0 %3111
      %3114 = vset.pattern.permute.xlu0 3
      %3115 = vperm.xlu0 %3114, %v455
      %v3116 = vpop.permute.xlu0 %3115
      %3118 = vset.pattern.permute.xlu0 3
      %3119 = vperm.xlu0 %3118, %v456
      %v3120 = vpop.permute.xlu0 %3119
      %3122 = vset.pattern.permute.xlu0 3
      %3123 = vperm.xlu0 %3122, %v457
      %v3124 = vpop.permute.xlu0 %3123
      %3126 = vset.pattern.permute.xlu0 3
      %3127 = vperm.xlu0 %3126, %v458
      %v3128 = vpop.permute.xlu0 %3127
      %3130 = vset.pattern.permute.xlu0 3
      %3131 = vperm.xlu0 %3130, %v459
      %v3132 = vpop.permute.xlu0 %3131
      %3134 = vset.pattern.permute.xlu0 3
      %3135 = vperm.xlu0 %3134, %v460
      %v3136 = vpop.permute.xlu0 %3135
      %3138 = vset.pattern.permute.xlu0 3
      %3139 = vperm.xlu0 %3138, %v461
      %v3140 = vpop.permute.xlu0 %3139
      %v3142 = vmul.f32 %v3080, %v2646
      %v3143 = vmul.f32 %v3084, %v2654
      %v3144 = vmul.f32 %v3088, %v2662
      %v3145 = vmul.f32 %v3092, %v2670
      %v3146 = vmul.f32 %v3096, %v2678
      %v3147 = vmul.f32 %v3100, %v2686
      %v3148 = vmul.f32 %v3104, %v2694
      %v3149 = vmul.f32 %v3108, %v2702
      %v3150 = vmul.f32 %v3112, %v2710
      %v3151 = vmul.f32 %v3116, %v2718
      %v3152 = vmul.f32 %v3120, %v2726
      %v3153 = vmul.f32 %v3124, %v2734
      %v3154 = vmul.f32 %v3128, %v2742
      %v3155 = vmul.f32 %v3132, %v2750
      %v3156 = vmul.f32 %v3136, %v2758
      %v3157 = vmul.f32 %v3140, %v2766
      %v3158 = vadd.f32 %v3062, %v3142
      %v3159 = vadd.f32 %v3063, %v3143
      %v3160 = vadd.f32 %v3064, %v3144
      %v3161 = vadd.f32 %v3065, %v3145
      %v3162 = vadd.f32 %v3066, %v3146
      %v3163 = vadd.f32 %v3067, %v3147
      %v3164 = vadd.f32 %v3068, %v3148
      %v3165 = vadd.f32 %v3069, %v3149
      %v3166 = vadd.f32 %v3070, %v3150
      %v3167 = vadd.f32 %v3071, %v3151
      %v3168 = vadd.f32 %v3072, %v3152
      %v3169 = vadd.f32 %v3073, %v3153
      %v3170 = vadd.f32 %v3074, %v3154
      %v3171 = vadd.f32 %v3075, %v3155
      %v3172 = vadd.f32 %v3076, %v3156
      %v3173 = vadd.f32 %v3077, %v3157
      %3174 = vset.pattern.permute.xlu0 4
      %3175 = vperm.xlu0 %3174, %v446
      %v3176 = vpop.permute.xlu0 %3175
      %3178 = vset.pattern.permute.xlu0 4
      %3179 = vperm.xlu0 %3178, %v447
      %v3180 = vpop.permute.xlu0 %3179
      %3182 = vset.pattern.permute.xlu0 4
      %3183 = vperm.xlu0 %3182, %v448
      %v3184 = vpop.permute.xlu0 %3183
      %3186 = vset.pattern.permute.xlu0 4
      %3187 = vperm.xlu0 %3186, %v449
      %v3188 = vpop.permute.xlu0 %3187
      %3190 = vset.pattern.permute.xlu0 4
      %3191 = vperm.xlu0 %3190, %v450
      %v3192 = vpop.permute.xlu0 %3191
      %3194 = vset.pattern.permute.xlu0 4
      %3195 = vperm.xlu0 %3194, %v451
      %v3196 = vpop.permute.xlu0 %3195
      %3198 = vset.pattern.permute.xlu0 4
      %3199 = vperm.xlu0 %3198, %v452
      %v3200 = vpop.permute.xlu0 %3199
      %3202 = vset.pattern.permute.xlu0 4
      %3203 = vperm.xlu0 %3202, %v453
      %v3204 = vpop.permute.xlu0 %3203
      %3206 = vset.pattern.permute.xlu0 4
      %3207 = vperm.xlu0 %3206, %v454
      %v3208 = vpop.permute.xlu0 %3207
      %3210 = vset.pattern.permute.xlu0 4
      %3211 = vperm.xlu0 %3210, %v455
      %v3212 = vpop.permute.xlu0 %3211
      %3214 = vset.pattern.permute.xlu0 4
      %3215 = vperm.xlu0 %3214, %v456
      %v3216 = vpop.permute.xlu0 %3215
      %3218 = vset.pattern.permute.xlu0 4
      %3219 = vperm.xlu0 %3218, %v457
      %v3220 = vpop.permute.xlu0 %3219
      %3222 = vset.pattern.permute.xlu0 4
      %3223 = vperm.xlu0 %3222, %v458
      %v3224 = vpop.permute.xlu0 %3223
      %3226 = vset.pattern.permute.xlu0 4
      %3227 = vperm.xlu0 %3226, %v459
      %v3228 = vpop.permute.xlu0 %3227
      %3230 = vset.pattern.permute.xlu0 4
      %3231 = vperm.xlu0 %3230, %v460
      %v3232 = vpop.permute.xlu0 %3231
      %3234 = vset.pattern.permute.xlu0 4
      %3235 = vperm.xlu0 %3234, %v461
      %v3236 = vpop.permute.xlu0 %3235
      %v3238 = vmul.f32 %v3176, %v2647
      %v3239 = vmul.f32 %v3180, %v2655
      %v3240 = vmul.f32 %v3184, %v2663
      %v3241 = vmul.f32 %v3188, %v2671
      %v3242 = vmul.f32 %v3192, %v2679
      %v3243 = vmul.f32 %v3196, %v2687
      %v3244 = vmul.f32 %v3200, %v2695
      %v3245 = vmul.f32 %v3204, %v2703
      %v3246 = vmul.f32 %v3208, %v2711
      %v3247 = vmul.f32 %v3212, %v2719
      %v3248 = vmul.f32 %v3216, %v2727
      %v3249 = vmul.f32 %v3220, %v2735
      %v3250 = vmul.f32 %v3224, %v2743
      %v3251 = vmul.f32 %v3228, %v2751
      %v3252 = vmul.f32 %v3232, %v2759
      %v3253 = vmul.f32 %v3236, %v2767
      %v3254 = vadd.f32 %v3158, %v3238
      %v3255 = vadd.f32 %v3159, %v3239
      %v3256 = vadd.f32 %v3160, %v3240
      %v3257 = vadd.f32 %v3161, %v3241
      %v3258 = vadd.f32 %v3162, %v3242
      %v3259 = vadd.f32 %v3163, %v3243
      %v3260 = vadd.f32 %v3164, %v3244
      %v3261 = vadd.f32 %v3165, %v3245
      %v3262 = vadd.f32 %v3166, %v3246
      %v3263 = vadd.f32 %v3167, %v3247
      %v3264 = vadd.f32 %v3168, %v3248
      %v3265 = vadd.f32 %v3169, %v3249
      %v3266 = vadd.f32 %v3170, %v3250
      %v3267 = vadd.f32 %v3171, %v3251
      %v3268 = vadd.f32 %v3172, %v3252
      %v3269 = vadd.f32 %v3173, %v3253
      %3270 = vset.pattern.permute.xlu0 5
      %3271 = vperm.xlu0 %3270, %v446
      %v3272 = vpop.permute.xlu0 %3271
      %3274 = vset.pattern.permute.xlu0 5
      %3275 = vperm.xlu0 %3274, %v447
      %v3276 = vpop.permute.xlu0 %3275
      %3278 = vset.pattern.permute.xlu0 5
      %3279 = vperm.xlu0 %3278, %v448
      %v3280 = vpop.permute.xlu0 %3279
      %3282 = vset.pattern.permute.xlu0 5
      %3283 = vperm.xlu0 %3282, %v449
      %v3284 = vpop.permute.xlu0 %3283
      %3286 = vset.pattern.permute.xlu0 5
      %3287 = vperm.xlu0 %3286, %v450
      %v3288 = vpop.permute.xlu0 %3287
      %3290 = vset.pattern.permute.xlu0 5
      %3291 = vperm.xlu0 %3290, %v451
      %v3292 = vpop.permute.xlu0 %3291
      %3294 = vset.pattern.permute.xlu0 5
      %3295 = vperm.xlu0 %3294, %v452
      %v3296 = vpop.permute.xlu0 %3295
      %3298 = vset.pattern.permute.xlu0 5
      %3299 = vperm.xlu0 %3298, %v453
      %v3300 = vpop.permute.xlu0 %3299
      %3302 = vset.pattern.permute.xlu0 5
      %3303 = vperm.xlu0 %3302, %v454
      %v3304 = vpop.permute.xlu0 %3303
      %3306 = vset.pattern.permute.xlu0 5
      %3307 = vperm.xlu0 %3306, %v455
      %v3308 = vpop.permute.xlu0 %3307
      %3310 = vset.pattern.permute.xlu0 5
      %3311 = vperm.xlu0 %3310, %v456
      %v3312 = vpop.permute.xlu0 %3311
      %3314 = vset.pattern.permute.xlu0 5
      %3315 = vperm.xlu0 %3314, %v457
      %v3316 = vpop.permute.xlu0 %3315
      %3318 = vset.pattern.permute.xlu0 5
      %3319 = vperm.xlu0 %3318, %v458
      %v3320 = vpop.permute.xlu0 %3319
      %3322 = vset.pattern.permute.xlu0 5
      %3323 = vperm.xlu0 %3322, %v459
      %v3324 = vpop.permute.xlu0 %3323
      %3326 = vset.pattern.permute.xlu0 5
      %3327 = vperm.xlu0 %3326, %v460
      %v3328 = vpop.permute.xlu0 %3327
      %3330 = vset.pattern.permute.xlu0 5
      %3331 = vperm.xlu0 %3330, %v461
      %v3332 = vpop.permute.xlu0 %3331
      %v3334 = vmul.f32 %v3272, %v2648
      %v3335 = vmul.f32 %v3276, %v2656
      %v3336 = vmul.f32 %v3280, %v2664
      %v3337 = vmul.f32 %v3284, %v2672
      %v3338 = vmul.f32 %v3288, %v2680
      %v3339 = vmul.f32 %v3292, %v2688
      %v3340 = vmul.f32 %v3296, %v2696
      %v3341 = vmul.f32 %v3300, %v2704
      %v3342 = vmul.f32 %v3304, %v2712
      %v3343 = vmul.f32 %v3308, %v2720
      %v3344 = vmul.f32 %v3312, %v2728
      %v3345 = vmul.f32 %v3316, %v2736
      %v3346 = vmul.f32 %v3320, %v2744
      %v3347 = vmul.f32 %v3324, %v2752
      %v3348 = vmul.f32 %v3328, %v2760
      %v3349 = vmul.f32 %v3332, %v2768
      %v3350 = vadd.f32 %v3254, %v3334
      %v3351 = vadd.f32 %v3255, %v3335
      %v3352 = vadd.f32 %v3256, %v3336
      %v3353 = vadd.f32 %v3257, %v3337
      %v3354 = vadd.f32 %v3258, %v3338
      %v3355 = vadd.f32 %v3259, %v3339
      %v3356 = vadd.f32 %v3260, %v3340
      %v3357 = vadd.f32 %v3261, %v3341
      %v3358 = vadd.f32 %v3262, %v3342
      %v3359 = vadd.f32 %v3263, %v3343
      %v3360 = vadd.f32 %v3264, %v3344
      %v3361 = vadd.f32 %v3265, %v3345
      %v3362 = vadd.f32 %v3266, %v3346
      %v3363 = vadd.f32 %v3267, %v3347
      %v3364 = vadd.f32 %v3268, %v3348
      %v3365 = vadd.f32 %v3269, %v3349
      %3366 = vset.pattern.permute.xlu0 6
      %3367 = vperm.xlu0 %3366, %v446
      %v3368 = vpop.permute.xlu0 %3367
      %3370 = vset.pattern.permute.xlu0 6
      %3371 = vperm.xlu0 %3370, %v447
      %v3372 = vpop.permute.xlu0 %3371
      %3374 = vset.pattern.permute.xlu0 6
      %3375 = vperm.xlu0 %3374, %v448
      %v3376 = vpop.permute.xlu0 %3375
      %3378 = vset.pattern.permute.xlu0 6
      %3379 = vperm.xlu0 %3378, %v449
      %v3380 = vpop.permute.xlu0 %3379
      %3382 = vset.pattern.permute.xlu0 6
      %3383 = vperm.xlu0 %3382, %v450
      %v3384 = vpop.permute.xlu0 %3383
      %3386 = vset.pattern.permute.xlu0 6
      %3387 = vperm.xlu0 %3386, %v451
      %v3388 = vpop.permute.xlu0 %3387
      %3390 = vset.pattern.permute.xlu0 6
      %3391 = vperm.xlu0 %3390, %v452
      %v3392 = vpop.permute.xlu0 %3391
      %3394 = vset.pattern.permute.xlu0 6
      %3395 = vperm.xlu0 %3394, %v453
      %v3396 = vpop.permute.xlu0 %3395
      %3398 = vset.pattern.permute.xlu0 6
      %3399 = vperm.xlu0 %3398, %v454
      %v3400 = vpop.permute.xlu0 %3399
      %3402 = vset.pattern.permute.xlu0 6
      %3403 = vperm.xlu0 %3402, %v455
      %v3404 = vpop.permute.xlu0 %3403
      %3406 = vset.pattern.permute.xlu0 6
      %3407 = vperm.xlu0 %3406, %v456
      %v3408 = vpop.permute.xlu0 %3407
      %3410 = vset.pattern.permute.xlu0 6
      %3411 = vperm.xlu0 %3410, %v457
      %v3412 = vpop.permute.xlu0 %3411
      %3414 = vset.pattern.permute.xlu0 6
      %3415 = vperm.xlu0 %3414, %v458
      %v3416 = vpop.permute.xlu0 %3415
      %3418 = vset.pattern.permute.xlu0 6
      %3419 = vperm.xlu0 %3418, %v459
      %v3420 = vpop.permute.xlu0 %3419
      %3422 = vset.pattern.permute.xlu0 6
      %3423 = vperm.xlu0 %3422, %v460
      %v3424 = vpop.permute.xlu0 %3423
      %3426 = vset.pattern.permute.xlu0 6
      %3427 = vperm.xlu0 %3426, %v461
      %v3428 = vpop.permute.xlu0 %3427
      %v3430 = vmul.f32 %v3368, %v2649
      %v3431 = vmul.f32 %v3372, %v2657
      %v3432 = vmul.f32 %v3376, %v2665
      %v3433 = vmul.f32 %v3380, %v2673
      %v3434 = vmul.f32 %v3384, %v2681
      %v3435 = vmul.f32 %v3388, %v2689
      %v3436 = vmul.f32 %v3392, %v2697
      %v3437 = vmul.f32 %v3396, %v2705
      %v3438 = vmul.f32 %v3400, %v2713
      %v3439 = vmul.f32 %v3404, %v2721
      %v3440 = vmul.f32 %v3408, %v2729
      %v3441 = vmul.f32 %v3412, %v2737
      %v3442 = vmul.f32 %v3416, %v2745
      %v3443 = vmul.f32 %v3420, %v2753
      %v3444 = vmul.f32 %v3424, %v2761
      %v3445 = vmul.f32 %v3428, %v2769
      %v3446 = vadd.f32 %v3350, %v3430
      %v3447 = vadd.f32 %v3351, %v3431
      %v3448 = vadd.f32 %v3352, %v3432
      %v3449 = vadd.f32 %v3353, %v3433
      %v3450 = vadd.f32 %v3354, %v3434
      %v3451 = vadd.f32 %v3355, %v3435
      %v3452 = vadd.f32 %v3356, %v3436
      %v3453 = vadd.f32 %v3357, %v3437
      %v3454 = vadd.f32 %v3358, %v3438
      %v3455 = vadd.f32 %v3359, %v3439
      %v3456 = vadd.f32 %v3360, %v3440
      %v3457 = vadd.f32 %v3361, %v3441
      %v3458 = vadd.f32 %v3362, %v3442
      %v3459 = vadd.f32 %v3363, %v3443
      %v3460 = vadd.f32 %v3364, %v3444
      %v3461 = vadd.f32 %v3365, %v3445
      %3462 = vset.pattern.permute.xlu0 7
      %3463 = vperm.xlu0 %3462, %v446
      %v3464 = vpop.permute.xlu0 %3463
      %3466 = vset.pattern.permute.xlu0 7
      %3467 = vperm.xlu0 %3466, %v447
      %v3468 = vpop.permute.xlu0 %3467
      %3470 = vset.pattern.permute.xlu0 7
      %3471 = vperm.xlu0 %3470, %v448
      %v3472 = vpop.permute.xlu0 %3471
      %3474 = vset.pattern.permute.xlu0 7
      %3475 = vperm.xlu0 %3474, %v449
      %v3476 = vpop.permute.xlu0 %3475
      %3478 = vset.pattern.permute.xlu0 7
      %3479 = vperm.xlu0 %3478, %v450
      %v3480 = vpop.permute.xlu0 %3479
      %3482 = vset.pattern.permute.xlu0 7
      %3483 = vperm.xlu0 %3482, %v451
      %v3484 = vpop.permute.xlu0 %3483
      %3486 = vset.pattern.permute.xlu0 7
      %3487 = vperm.xlu0 %3486, %v452
      %v3488 = vpop.permute.xlu0 %3487
      %3490 = vset.pattern.permute.xlu0 7
      %3491 = vperm.xlu0 %3490, %v453
      %v3492 = vpop.permute.xlu0 %3491
      %3494 = vset.pattern.permute.xlu0 7
      %3495 = vperm.xlu0 %3494, %v454
      %v3496 = vpop.permute.xlu0 %3495
      %3498 = vset.pattern.permute.xlu0 7
      %3499 = vperm.xlu0 %3498, %v455
      %v3500 = vpop.permute.xlu0 %3499
      %3502 = vset.pattern.permute.xlu0 7
      %3503 = vperm.xlu0 %3502, %v456
      %v3504 = vpop.permute.xlu0 %3503
      %3506 = vset.pattern.permute.xlu0 7
      %3507 = vperm.xlu0 %3506, %v457
      %v3508 = vpop.permute.xlu0 %3507
      %3510 = vset.pattern.permute.xlu0 7
      %3511 = vperm.xlu0 %3510, %v458
      %v3512 = vpop.permute.xlu0 %3511
      %3514 = vset.pattern.permute.xlu0 7
      %3515 = vperm.xlu0 %3514, %v459
      %v3516 = vpop.permute.xlu0 %3515
      %3518 = vset.pattern.permute.xlu0 7
      %3519 = vperm.xlu0 %3518, %v460
      %v3520 = vpop.permute.xlu0 %3519
      %3522 = vset.pattern.permute.xlu0 7
      %3523 = vperm.xlu0 %3522, %v461
      %v3524 = vpop.permute.xlu0 %3523
      %v3526 = vmul.f32 %v3464, %v2650
      %v3527 = vmul.f32 %v3468, %v2658
      %v3528 = vmul.f32 %v3472, %v2666
      %v3529 = vmul.f32 %v3476, %v2674
      %v3530 = vmul.f32 %v3480, %v2682
      %v3531 = vmul.f32 %v3484, %v2690
      %v3532 = vmul.f32 %v3488, %v2698
      %v3533 = vmul.f32 %v3492, %v2706
      %v3534 = vmul.f32 %v3496, %v2714
      %v3535 = vmul.f32 %v3500, %v2722
      %v3536 = vmul.f32 %v3504, %v2730
      %v3537 = vmul.f32 %v3508, %v2738
      %v3538 = vmul.f32 %v3512, %v2746
      %v3539 = vmul.f32 %v3516, %v2754
      %v3540 = vmul.f32 %v3520, %v2762
      %v3541 = vmul.f32 %v3524, %v2770
      %v3542 = vadd.f32 %v3446, %v3526
      %v3543 = vadd.f32 %v3447, %v3527
      %v3544 = vadd.f32 %v3448, %v3528
      %v3545 = vadd.f32 %v3449, %v3529
      %v3546 = vadd.f32 %v3450, %v3530
      %v3547 = vadd.f32 %v3451, %v3531
      %v3548 = vadd.f32 %v3452, %v3532
      %v3549 = vadd.f32 %v3453, %v3533
      %v3550 = vadd.f32 %v3454, %v3534
      %v3551 = vadd.f32 %v3455, %v3535
      %v3552 = vadd.f32 %v3456, %v3536
      %v3553 = vadd.f32 %v3457, %v3537
      %v3554 = vadd.f32 %v3458, %v3538
      %v3555 = vadd.f32 %v3459, %v3539
      %v3556 = vadd.f32 %v3460, %v3540
      %v3557 = vadd.f32 %v3461, %v3541
      %v3558 = vxor.u32 %v3542, 2147483648
      %v3559 = vxor.u32 %v3543, 2147483648
      %v3560 = vxor.u32 %v3544, 2147483648
      %v3561 = vxor.u32 %v3545, 2147483648
      %v3562 = vxor.u32 %v3546, 2147483648
      %v3563 = vxor.u32 %v3547, 2147483648
      %v3564 = vxor.u32 %v3548, 2147483648
      %v3565 = vxor.u32 %v3549, 2147483648
      %v3566 = vxor.u32 %v3550, 2147483648
      %v3567 = vxor.u32 %v3551, 2147483648
      %v3568 = vxor.u32 %v3552, 2147483648
      %v3569 = vxor.u32 %v3553, 2147483648
      %v3570 = vxor.u32 %v3554, 2147483648
      %v3571 = vxor.u32 %v3555, 2147483648
      %v3572 = vxor.u32 %v3556, 2147483648
      %v3573 = vxor.u32 %v3557, 2147483648
      %v3574 = vmul.f32 %v3558, 1.442695
      %v3575 = vpow.pop %v3574
      %v3576 = vmul.f32 %v3559, 1.442695
      %v3577 = vpow.pop %v3576
      %v3578 = vmul.f32 %v3560, 1.442695
      %v3579 = vpow.pop %v3578
      %v3580 = vmul.f32 %v3561, 1.442695
      %v3581 = vpow.pop %v3580
      %v3582 = vmul.f32 %v3562, 1.442695
      %v3583 = vpow.pop %v3582
      %v3584 = vmul.f32 %v3563, 1.442695
      %v3585 = vpow.pop %v3584
      %v3586 = vmul.f32 %v3564, 1.442695
      %v3587 = vpow.pop %v3586
      %v3588 = vmul.f32 %v3565, 1.442695
      %v3589 = vpow.pop %v3588
      %v3590 = vmul.f32 %v3566, 1.442695
      %v3591 = vpow.pop %v3590
      %v3592 = vmul.f32 %v3567, 1.442695
      %v3593 = vpow.pop %v3592
      %v3594 = vmul.f32 %v3568, 1.442695
      %v3595 = vpow.pop %v3594
      %v3596 = vmul.f32 %v3569, 1.442695
      %v3597 = vpow.pop %v3596
      %v3598 = vmul.f32 %v3570, 1.442695
      %v3599 = vpow.pop %v3598
      %v3600 = vmul.f32 %v3571, 1.442695
      %v3601 = vpow.pop %v3600
      %v3602 = vmul.f32 %v3572, 1.442695
      %v3603 = vpow.pop %v3602
      %v3604 = vmul.f32 %v3573, 1.442695
      %v3605 = vpow.pop %v3604
      %v3606 = vadd.f32 %v3575, 1.0
      %v3607 = vadd.f32 %v3577, 1.0
      %v3608 = vadd.f32 %v3579, 1.0
      %v3609 = vadd.f32 %v3581, 1.0
      %v3610 = vadd.f32 %v3583, 1.0
      %v3611 = vadd.f32 %v3585, 1.0
      %v3612 = vadd.f32 %v3587, 1.0
      %v3613 = vadd.f32 %v3589, 1.0
      %v3614 = vadd.f32 %v3591, 1.0
      %v3615 = vadd.f32 %v3593, 1.0
      %v3616 = vadd.f32 %v3595, 1.0
      %v3617 = vadd.f32 %v3597, 1.0
      %v3618 = vadd.f32 %v3599, 1.0
      %v3619 = vadd.f32 %v3601, 1.0
      %v3620 = vadd.f32 %v3603, 1.0
      %v3621 = vadd.f32 %v3605, 1.0
      %v3622 = vrcp.pop %v3606
      %v3623 = vmul.f32 %v3606, %v3622
      %v3624 = vsub.f32 1.0, %v3623
      %v3625 = vmul.f32 %v3622, %v3624
      %v3626 = vadd.f32 %v3622, %v3625
      %vm3627 = vweird.f32 %v3606
      %vm3628 = vweird.f32 %v3622
      %vm3629 = vmor %vm3627, %vm3628
      %v3630 = vsel %vm3629, %v3622, %v3626
      %v3631 = vand.u32 2147483647, %v3606
      %vm3632 = vcmp.eq.f32.partialorder %v3631, 8.507059e+37
      %v3633 = vand.u32 %v3606, 2147483648
      %v3634 = vor.u32 1.1754944e-38, %v3633
      %v3635 = vsel %vm3632, %v3634, %v3630
      %v3636 = vmul.f32 1.0, %v3635
      %v3637 = vrcp.pop %v3607
      %v3638 = vmul.f32 %v3607, %v3637
      %v3639 = vsub.f32 1.0, %v3638
      %v3640 = vmul.f32 %v3637, %v3639
      %v3641 = vadd.f32 %v3637, %v3640
      %vm3642 = vweird.f32 %v3607
      %vm3643 = vweird.f32 %v3637
      %vm3644 = vmor %vm3642, %vm3643
      %v3645 = vsel %vm3644, %v3637, %v3641
      %v3646 = vand.u32 2147483647, %v3607
      %vm3647 = vcmp.eq.f32.partialorder %v3646, 8.507059e+37
      %v3648 = vand.u32 %v3607, 2147483648
      %v3649 = vor.u32 1.1754944e-38, %v3648
      %v3650 = vsel %vm3647, %v3649, %v3645
      %v3651 = vmul.f32 1.0, %v3650
      %v3652 = vrcp.pop %v3608
      %v3653 = vmul.f32 %v3608, %v3652
      %v3654 = vsub.f32 1.0, %v3653
      %v3655 = vmul.f32 %v3652, %v3654
      %v3656 = vadd.f32 %v3652, %v3655
      %vm3657 = vweird.f32 %v3608
      %vm3658 = vweird.f32 %v3652
      %vm3659 = vmor %vm3657, %vm3658
      %v3660 = vsel %vm3659, %v3652, %v3656
      %v3661 = vand.u32 2147483647, %v3608
      %vm3662 = vcmp.eq.f32.partialorder %v3661, 8.507059e+37
      %v3663 = vand.u32 %v3608, 2147483648
      %v3664 = vor.u32 1.1754944e-38, %v3663
      %v3665 = vsel %vm3662, %v3664, %v3660
      %v3666 = vmul.f32 1.0, %v3665
      %v3667 = vrcp.pop %v3609
      %v3668 = vmul.f32 %v3609, %v3667
      %v3669 = vsub.f32 1.0, %v3668
      %v3670 = vmul.f32 %v3667, %v3669
      %v3671 = vadd.f32 %v3667, %v3670
      %vm3672 = vweird.f32 %v3609
      %vm3673 = vweird.f32 %v3667
      %vm3674 = vmor %vm3672, %vm3673
      %v3675 = vsel %vm3674, %v3667, %v3671
      %v3676 = vand.u32 2147483647, %v3609
      %vm3677 = vcmp.eq.f32.partialorder %v3676, 8.507059e+37
      %v3678 = vand.u32 %v3609, 2147483648
      %v3679 = vor.u32 1.1754944e-38, %v3678
      %v3680 = vsel %vm3677, %v3679, %v3675
      %v3681 = vmul.f32 1.0, %v3680
      %v3682 = vrcp.pop %v3610
      %v3683 = vmul.f32 %v3610, %v3682
      %v3684 = vsub.f32 1.0, %v3683
      %v3685 = vmul.f32 %v3682, %v3684
      %v3686 = vadd.f32 %v3682, %v3685
      %vm3687 = vweird.f32 %v3610
      %vm3688 = vweird.f32 %v3682
      %vm3689 = vmor %vm3687, %vm3688
      %v3690 = vsel %vm3689, %v3682, %v3686
      %v3691 = vand.u32 2147483647, %v3610
      %vm3692 = vcmp.eq.f32.partialorder %v3691, 8.507059e+37
      %v3693 = vand.u32 %v3610, 2147483648
      %v3694 = vor.u32 1.1754944e-38, %v3693
      %v3695 = vsel %vm3692, %v3694, %v3690
      %v3696 = vmul.f32 1.0, %v3695
      %v3697 = vrcp.pop %v3611
      %v3698 = vmul.f32 %v3611, %v3697
      %v3699 = vsub.f32 1.0, %v3698
      %v3700 = vmul.f32 %v3697, %v3699
      %v3701 = vadd.f32 %v3697, %v3700
      %vm3702 = vweird.f32 %v3611
      %vm3703 = vweird.f32 %v3697
      %vm3704 = vmor %vm3702, %vm3703
      %v3705 = vsel %vm3704, %v3697, %v3701
      %v3706 = vand.u32 2147483647, %v3611
      %vm3707 = vcmp.eq.f32.partialorder %v3706, 8.507059e+37
      %v3708 = vand.u32 %v3611, 2147483648
      %v3709 = vor.u32 1.1754944e-38, %v3708
      %v3710 = vsel %vm3707, %v3709, %v3705
      %v3711 = vmul.f32 1.0, %v3710
      %v3712 = vrcp.pop %v3612
      %v3713 = vmul.f32 %v3612, %v3712
      %v3714 = vsub.f32 1.0, %v3713
      %v3715 = vmul.f32 %v3712, %v3714
      %v3716 = vadd.f32 %v3712, %v3715
      %vm3717 = vweird.f32 %v3612
      %vm3718 = vweird.f32 %v3712
      %vm3719 = vmor %vm3717, %vm3718
      %v3720 = vsel %vm3719, %v3712, %v3716
      %v3721 = vand.u32 2147483647, %v3612
      %vm3722 = vcmp.eq.f32.partialorder %v3721, 8.507059e+37
      %v3723 = vand.u32 %v3612, 2147483648
      %v3724 = vor.u32 1.1754944e-38, %v3723
      %v3725 = vsel %vm3722, %v3724, %v3720
      %v3726 = vmul.f32 1.0, %v3725
      %v3727 = vrcp.pop %v3613
      %v3728 = vmul.f32 %v3613, %v3727
      %v3729 = vsub.f32 1.0, %v3728
      %v3730 = vmul.f32 %v3727, %v3729
      %v3731 = vadd.f32 %v3727, %v3730
      %vm3732 = vweird.f32 %v3613
      %vm3733 = vweird.f32 %v3727
      %vm3734 = vmor %vm3732, %vm3733
      %v3735 = vsel %vm3734, %v3727, %v3731
      %v3736 = vand.u32 2147483647, %v3613
      %vm3737 = vcmp.eq.f32.partialorder %v3736, 8.507059e+37
      %v3738 = vand.u32 %v3613, 2147483648
      %v3739 = vor.u32 1.1754944e-38, %v3738
      %v3740 = vsel %vm3737, %v3739, %v3735
      %v3741 = vmul.f32 1.0, %v3740
      %v3742 = vrcp.pop %v3614
      %v3743 = vmul.f32 %v3614, %v3742
      %v3744 = vsub.f32 1.0, %v3743
      %v3745 = vmul.f32 %v3742, %v3744
      %v3746 = vadd.f32 %v3742, %v3745
      %vm3747 = vweird.f32 %v3614
      %vm3748 = vweird.f32 %v3742
      %vm3749 = vmor %vm3747, %vm3748
      %v3750 = vsel %vm3749, %v3742, %v3746
      %v3751 = vand.u32 2147483647, %v3614
      %vm3752 = vcmp.eq.f32.partialorder %v3751, 8.507059e+37
      %v3753 = vand.u32 %v3614, 2147483648
      %v3754 = vor.u32 1.1754944e-38, %v3753
      %v3755 = vsel %vm3752, %v3754, %v3750
      %v3756 = vmul.f32 1.0, %v3755
      %v3757 = vrcp.pop %v3615
      %v3758 = vmul.f32 %v3615, %v3757
      %v3759 = vsub.f32 1.0, %v3758
      %v3760 = vmul.f32 %v3757, %v3759
      %v3761 = vadd.f32 %v3757, %v3760
      %vm3762 = vweird.f32 %v3615
      %vm3763 = vweird.f32 %v3757
      %vm3764 = vmor %vm3762, %vm3763
      %v3765 = vsel %vm3764, %v3757, %v3761
      %v3766 = vand.u32 2147483647, %v3615
      %vm3767 = vcmp.eq.f32.partialorder %v3766, 8.507059e+37
      %v3768 = vand.u32 %v3615, 2147483648
      %v3769 = vor.u32 1.1754944e-38, %v3768
      %v3770 = vsel %vm3767, %v3769, %v3765
      %v3771 = vmul.f32 1.0, %v3770
      %v3772 = vrcp.pop %v3616
      %v3773 = vmul.f32 %v3616, %v3772
      %v3774 = vsub.f32 1.0, %v3773
      %v3775 = vmul.f32 %v3772, %v3774
      %v3776 = vadd.f32 %v3772, %v3775
      %vm3777 = vweird.f32 %v3616
      %vm3778 = vweird.f32 %v3772
      %vm3779 = vmor %vm3777, %vm3778
      %v3780 = vsel %vm3779, %v3772, %v3776
      %v3781 = vand.u32 2147483647, %v3616
      %vm3782 = vcmp.eq.f32.partialorder %v3781, 8.507059e+37
      %v3783 = vand.u32 %v3616, 2147483648
      %v3784 = vor.u32 1.1754944e-38, %v3783
      %v3785 = vsel %vm3782, %v3784, %v3780
      %v3786 = vmul.f32 1.0, %v3785
      %v3787 = vrcp.pop %v3617
      %v3788 = vmul.f32 %v3617, %v3787
      %v3789 = vsub.f32 1.0, %v3788
      %v3790 = vmul.f32 %v3787, %v3789
      %v3791 = vadd.f32 %v3787, %v3790
      %vm3792 = vweird.f32 %v3617
      %vm3793 = vweird.f32 %v3787
      %vm3794 = vmor %vm3792, %vm3793
      %v3795 = vsel %vm3794, %v3787, %v3791
      %v3796 = vand.u32 2147483647, %v3617
      %vm3797 = vcmp.eq.f32.partialorder %v3796, 8.507059e+37
      %v3798 = vand.u32 %v3617, 2147483648
      %v3799 = vor.u32 1.1754944e-38, %v3798
      %v3800 = vsel %vm3797, %v3799, %v3795
      %v3801 = vmul.f32 1.0, %v3800
      %v3802 = vrcp.pop %v3618
      %v3803 = vmul.f32 %v3618, %v3802
      %v3804 = vsub.f32 1.0, %v3803
      %v3805 = vmul.f32 %v3802, %v3804
      %v3806 = vadd.f32 %v3802, %v3805
      %vm3807 = vweird.f32 %v3618
      %vm3808 = vweird.f32 %v3802
      %vm3809 = vmor %vm3807, %vm3808
      %v3810 = vsel %vm3809, %v3802, %v3806
      %v3811 = vand.u32 2147483647, %v3618
      %vm3812 = vcmp.eq.f32.partialorder %v3811, 8.507059e+37
      %v3813 = vand.u32 %v3618, 2147483648
      %v3814 = vor.u32 1.1754944e-38, %v3813
      %v3815 = vsel %vm3812, %v3814, %v3810
      %v3816 = vmul.f32 1.0, %v3815
      %v3817 = vrcp.pop %v3619
      %v3818 = vmul.f32 %v3619, %v3817
      %v3819 = vsub.f32 1.0, %v3818
      %v3820 = vmul.f32 %v3817, %v3819
      %v3821 = vadd.f32 %v3817, %v3820
      %vm3822 = vweird.f32 %v3619
      %vm3823 = vweird.f32 %v3817
      %vm3824 = vmor %vm3822, %vm3823
      %v3825 = vsel %vm3824, %v3817, %v3821
      %v3826 = vand.u32 2147483647, %v3619
      %vm3827 = vcmp.eq.f32.partialorder %v3826, 8.507059e+37
      %v3828 = vand.u32 %v3619, 2147483648
      %v3829 = vor.u32 1.1754944e-38, %v3828
      %v3830 = vsel %vm3827, %v3829, %v3825
      %v3831 = vmul.f32 1.0, %v3830
      %v3832 = vrcp.pop %v3620
      %v3833 = vmul.f32 %v3620, %v3832
      %v3834 = vsub.f32 1.0, %v3833
      %v3835 = vmul.f32 %v3832, %v3834
      %v3836 = vadd.f32 %v3832, %v3835
      %vm3837 = vweird.f32 %v3620
      %vm3838 = vweird.f32 %v3832
      %vm3839 = vmor %vm3837, %vm3838
      %v3840 = vsel %vm3839, %v3832, %v3836
      %v3841 = vand.u32 2147483647, %v3620
      %vm3842 = vcmp.eq.f32.partialorder %v3841, 8.507059e+37
      %v3843 = vand.u32 %v3620, 2147483648
      %v3844 = vor.u32 1.1754944e-38, %v3843
      %v3845 = vsel %vm3842, %v3844, %v3840
      %v3846 = vmul.f32 1.0, %v3845
      %v3847 = vrcp.pop %v3621
      %v3848 = vmul.f32 %v3621, %v3847
      %v3849 = vsub.f32 1.0, %v3848
      %v3850 = vmul.f32 %v3847, %v3849
      %v3851 = vadd.f32 %v3847, %v3850
      %vm3852 = vweird.f32 %v3621
      %vm3853 = vweird.f32 %v3847
      %vm3854 = vmor %vm3852, %vm3853
      %v3855 = vsel %vm3854, %v3847, %v3851
      %v3856 = vand.u32 2147483647, %v3621
      %vm3857 = vcmp.eq.f32.partialorder %v3856, 8.507059e+37
      %v3858 = vand.u32 %v3621, 2147483648
      %v3859 = vor.u32 1.1754944e-38, %v3858
      %v3860 = vsel %vm3857, %v3859, %v3855
      %v3861 = vmul.f32 1.0, %v3860
      %v3862 = vmul.f32 %v3542, %v3636
      %v3863 = vmul.f32 %v3543, %v3651
      %v3864 = vmul.f32 %v3544, %v3666
      %v3865 = vmul.f32 %v3545, %v3681
      %v3866 = vmul.f32 %v3546, %v3696
      %v3867 = vmul.f32 %v3547, %v3711
      %v3868 = vmul.f32 %v3548, %v3726
      %v3869 = vmul.f32 %v3549, %v3741
      %v3870 = vmul.f32 %v3550, %v3756
      %v3871 = vmul.f32 %v3551, %v3771
      %v3872 = vmul.f32 %v3552, %v3786
      %v3873 = vmul.f32 %v3553, %v3801
      %v3874 = vmul.f32 %v3554, %v3816
      %v3875 = vmul.f32 %v3555, %v3831
      %v3876 = vmul.f32 %v3556, %v3846
      %v3877 = vmul.f32 %v3557, %v3861
      %v3878 = vpack.c.bf16 %v3863, %v3862
      %v3879 = vpack.c.bf16 %v3865, %v3864
      %v3880 = vpack.c.bf16 %v3867, %v3866
      %v3881 = vpack.c.bf16 %v3869, %v3868
      %v3882 = vpack.c.bf16 %v3871, %v3870
      %v3883 = vpack.c.bf16 %v3873, %v3872
      %v3884 = vpack.c.bf16 %v3875, %v3874
      %v3885 = vpack.c.bf16 %v3877, %v3876
      %v3886 = vld [vmem:[%s8] sm:$0xff]
      %v3887 = vld [vmem:[%s8 + $0x8] sm:$0xff]
      %v3888 = vld [vmem:[%s8 + $0x10] sm:$0xff]
      %v3889 = vld [vmem:[%s8 + $0x18] sm:$0xff]
      %v3890 = vld [vmem:[%s8 + $0x20] sm:$0xff]
      %v3891 = vld [vmem:[%s8 + $0x28] sm:$0xff]
      %v3892 = vld [vmem:[%s8 + $0x30] sm:$0xff]
      %v3893 = vld [vmem:[%s8 + $0x38] sm:$0xff]
      %v3894 = vld [vmem:[%s8 + $0x40] sm:$0xff]
      %v3895 = vld [vmem:[%s8 + $0x48] sm:$0xff]
      %v3896 = vld [vmem:[%s8 + $0x50] sm:$0xff]
      %v3897 = vld [vmem:[%s8 + $0x58] sm:$0xff]
      %v3898 = vld [vmem:[%s8 + $0x60] sm:$0xff]
      %v3899 = vld [vmem:[%s8 + $0x68] sm:$0xff]
      %v3900 = vld [vmem:[%s8 + $0x70] sm:$0xff]
      %v3901 = vld [vmem:[%s8 + $0x78] sm:$0xff]
      %v3902 = vld [vmem:[%s8 + $0x80] sm:$0xff]
      %v3903 = vld [vmem:[%s8 + $0x88] sm:$0xff]
      %v3904 = vld [vmem:[%s8 + $0x90] sm:$0xff]
      %v3905 = vld [vmem:[%s8 + $0x98] sm:$0xff]
      %v3906 = vld [vmem:[%s8 + $0xa0] sm:$0xff]
      %v3907 = vld [vmem:[%s8 + $0xa8] sm:$0xff]
      %v3908 = vld [vmem:[%s8 + $0xb0] sm:$0xff]
      %v3909 = vld [vmem:[%s8 + $0xb8] sm:$0xff]
      %v3910 = vld [vmem:[%s8 + $0xc0] sm:$0xff]
      %v3911 = vld [vmem:[%s8 + $0xc8] sm:$0xff]
      %v3912 = vld [vmem:[%s8 + $0xd0] sm:$0xff]
      %v3913 = vld [vmem:[%s8 + $0xd8] sm:$0xff]
      %v3914 = vld [vmem:[%s8 + $0xe0] sm:$0xff]
      %v3915 = vld [vmem:[%s8 + $0xe8] sm:$0xff]
      %v3916 = vld [vmem:[%s8 + $0xf0] sm:$0xff]
      %v3917 = vld [vmem:[%s8 + $0xf8] sm:$0xff]
      %v3918 = vld [vmem:[%s8 + $0x100] sm:$0xff]
      %v3919 = vld [vmem:[%s8 + $0x108] sm:$0xff]
      %v3920 = vld [vmem:[%s8 + $0x110] sm:$0xff]
      %v3921 = vld [vmem:[%s8 + $0x118] sm:$0xff]
      %v3922 = vld [vmem:[%s8 + $0x120] sm:$0xff]
      %v3923 = vld [vmem:[%s8 + $0x128] sm:$0xff]
      %v3924 = vld [vmem:[%s8 + $0x130] sm:$0xff]
      %v3925 = vld [vmem:[%s8 + $0x138] sm:$0xff]
      %v3926 = vld [vmem:[%s8 + $0x140] sm:$0xff]
      %v3927 = vld [vmem:[%s8 + $0x148] sm:$0xff]
      %v3928 = vld [vmem:[%s8 + $0x150] sm:$0xff]
      %v3929 = vld [vmem:[%s8 + $0x158] sm:$0xff]
      %v3930 = vld [vmem:[%s8 + $0x160] sm:$0xff]
      %v3931 = vld [vmem:[%s8 + $0x168] sm:$0xff]
      %v3932 = vld [vmem:[%s8 + $0x170] sm:$0xff]
      %v3933 = vld [vmem:[%s8 + $0x178] sm:$0xff]
      %v3934 = vld [vmem:[%s8 + $0x180] sm:$0xff]
      %v3935 = vld [vmem:[%s8 + $0x188] sm:$0xff]
      %v3936 = vld [vmem:[%s8 + $0x190] sm:$0xff]
      %v3937 = vld [vmem:[%s8 + $0x198] sm:$0xff]
      %v3938 = vld [vmem:[%s8 + $0x1a0] sm:$0xff]
      %v3939 = vld [vmem:[%s8 + $0x1a8] sm:$0xff]
      %v3940 = vld [vmem:[%s8 + $0x1b0] sm:$0xff]
      %v3941 = vld [vmem:[%s8 + $0x1b8] sm:$0xff]
      %v3942 = vld [vmem:[%s8 + $0x1c0] sm:$0xff]
      %v3943 = vld [vmem:[%s8 + $0x1c8] sm:$0xff]
      %v3944 = vld [vmem:[%s8 + $0x1d0] sm:$0xff]
      %v3945 = vld [vmem:[%s8 + $0x1d8] sm:$0xff]
      %v3946 = vld [vmem:[%s8 + $0x1e0] sm:$0xff]
      %v3947 = vld [vmem:[%s8 + $0x1e8] sm:$0xff]
      %v3948 = vld [vmem:[%s8 + $0x1f0] sm:$0xff]
      %v3949 = vld [vmem:[%s8 + $0x1f8] sm:$0xff]
      %v4014 = vunpack.c.l.b16 %v3886
      %v4015 = vunpack.c.h.b16 %v3886
      %v4016 = vunpack.c.l.b16 %v3887
      %v4017 = vunpack.c.h.b16 %v3887
      %v4018 = vunpack.c.l.b16 %v3888
      %v4019 = vunpack.c.h.b16 %v3888
      %v4020 = vunpack.c.l.b16 %v3889
      %v4021 = vunpack.c.h.b16 %v3889
      %v4022 = vunpack.c.l.b16 %v3890
      %v4023 = vunpack.c.h.b16 %v3890
      %v4024 = vunpack.c.l.b16 %v3891
      %v4025 = vunpack.c.h.b16 %v3891
      %v4026 = vunpack.c.l.b16 %v3892
      %v4027 = vunpack.c.h.b16 %v3892
      %v4028 = vunpack.c.l.b16 %v3893
      %v4029 = vunpack.c.h.b16 %v3893
      %v4030 = vunpack.c.l.b16 %v3894
      %v4031 = vunpack.c.h.b16 %v3894
      %v4032 = vunpack.c.l.b16 %v3895
      %v4033 = vunpack.c.h.b16 %v3895
      %v4034 = vunpack.c.l.b16 %v3896
      %v4035 = vunpack.c.h.b16 %v3896
      %v4036 = vunpack.c.l.b16 %v3897
      %v4037 = vunpack.c.h.b16 %v3897
      %v4038 = vunpack.c.l.b16 %v3898
      %v4039 = vunpack.c.h.b16 %v3898
      %v4040 = vunpack.c.l.b16 %v3899
      %v4041 = vunpack.c.h.b16 %v3899
      %v4042 = vunpack.c.l.b16 %v3900
      %v4043 = vunpack.c.h.b16 %v3900
      %v4044 = vunpack.c.l.b16 %v3901
      %v4045 = vunpack.c.h.b16 %v3901
      %v4046 = vunpack.c.l.b16 %v3902
      %v4047 = vunpack.c.h.b16 %v3902
      %v4048 = vunpack.c.l.b16 %v3903
      %v4049 = vunpack.c.h.b16 %v3903
      %v4050 = vunpack.c.l.b16 %v3904
      %v4051 = vunpack.c.h.b16 %v3904
      %v4052 = vunpack.c.l.b16 %v3905
      %v4053 = vunpack.c.h.b16 %v3905
      %v4054 = vunpack.c.l.b16 %v3906
      %v4055 = vunpack.c.h.b16 %v3906
      %v4056 = vunpack.c.l.b16 %v3907
      %v4057 = vunpack.c.h.b16 %v3907
      %v4058 = vunpack.c.l.b16 %v3908
      %v4059 = vunpack.c.h.b16 %v3908
      %v4060 = vunpack.c.l.b16 %v3909
      %v4061 = vunpack.c.h.b16 %v3909
      %v4062 = vunpack.c.l.b16 %v3910
      %v4063 = vunpack.c.h.b16 %v3910
      %v4064 = vunpack.c.l.b16 %v3911
      %v4065 = vunpack.c.h.b16 %v3911
      %v4066 = vunpack.c.l.b16 %v3912
      %v4067 = vunpack.c.h.b16 %v3912
      %v4068 = vunpack.c.l.b16 %v3913
      %v4069 = vunpack.c.h.b16 %v3913
      %v4070 = vunpack.c.l.b16 %v3914
      %v4071 = vunpack.c.h.b16 %v3914
      %v4072 = vunpack.c.l.b16 %v3915
      %v4073 = vunpack.c.h.b16 %v3915
      %v4074 = vunpack.c.l.b16 %v3916
      %v4075 = vunpack.c.h.b16 %v3916
      %v4076 = vunpack.c.l.b16 %v3917
      %v4077 = vunpack.c.h.b16 %v3917
      %v4078 = vunpack.c.l.b16 %v3918
      %v4079 = vunpack.c.h.b16 %v3918
      %v4080 = vunpack.c.l.b16 %v3919
      %v4081 = vunpack.c.h.b16 %v3919
      %v4082 = vunpack.c.l.b16 %v3920
      %v4083 = vunpack.c.h.b16 %v3920
      %v4084 = vunpack.c.l.b16 %v3921
      %v4085 = vunpack.c.h.b16 %v3921
      %v4086 = vunpack.c.l.b16 %v3922
      %v4087 = vunpack.c.h.b16 %v3922
      %v4088 = vunpack.c.l.b16 %v3923
      %v4089 = vunpack.c.h.b16 %v3923
      %v4090 = vunpack.c.l.b16 %v3924
      %v4091 = vunpack.c.h.b16 %v3924
      %v4092 = vunpack.c.l.b16 %v3925
      %v4093 = vunpack.c.h.b16 %v3925
      %v4094 = vunpack.c.l.b16 %v3926
      %v4095 = vunpack.c.h.b16 %v3926
      %v4096 = vunpack.c.l.b16 %v3927
      %v4097 = vunpack.c.h.b16 %v3927
      %v4098 = vunpack.c.l.b16 %v3928
      %v4099 = vunpack.c.h.b16 %v3928
      %v4100 = vunpack.c.l.b16 %v3929
      %v4101 = vunpack.c.h.b16 %v3929
      %v4102 = vunpack.c.l.b16 %v3930
      %v4103 = vunpack.c.h.b16 %v3930
      %v4104 = vunpack.c.l.b16 %v3931
      %v4105 = vunpack.c.h.b16 %v3931
      %v4106 = vunpack.c.l.b16 %v3932
      %v4107 = vunpack.c.h.b16 %v3932
      %v4108 = vunpack.c.l.b16 %v3933
      %v4109 = vunpack.c.h.b16 %v3933
      %v4110 = vunpack.c.l.b16 %v3934
      %v4111 = vunpack.c.h.b16 %v3934
      %v4112 = vunpack.c.l.b16 %v3935
      %v4113 = vunpack.c.h.b16 %v3935
      %v4114 = vunpack.c.l.b16 %v3936
      %v4115 = vunpack.c.h.b16 %v3936
      %v4116 = vunpack.c.l.b16 %v3937
      %v4117 = vunpack.c.h.b16 %v3937
      %v4118 = vunpack.c.l.b16 %v3938
      %v4119 = vunpack.c.h.b16 %v3938
      %v4120 = vunpack.c.l.b16 %v3939
      %v4121 = vunpack.c.h.b16 %v3939
      %v4122 = vunpack.c.l.b16 %v3940
      %v4123 = vunpack.c.h.b16 %v3940
      %v4124 = vunpack.c.l.b16 %v3941
      %v4125 = vunpack.c.h.b16 %v3941
      %v4126 = vunpack.c.l.b16 %v3942
      %v4127 = vunpack.c.h.b16 %v3942
      %v4128 = vunpack.c.l.b16 %v3943
      %v4129 = vunpack.c.h.b16 %v3943
      %v4130 = vunpack.c.l.b16 %v3944
      %v4131 = vunpack.c.h.b16 %v3944
      %v4132 = vunpack.c.l.b16 %v3945
      %v4133 = vunpack.c.h.b16 %v3945
      %v4134 = vunpack.c.l.b16 %v3946
      %v4135 = vunpack.c.h.b16 %v3946
      %v4136 = vunpack.c.l.b16 %v3947
      %v4137 = vunpack.c.h.b16 %v3947
      %v4138 = vunpack.c.l.b16 %v3948
      %v4139 = vunpack.c.h.b16 %v3948
      %v4140 = vunpack.c.l.b16 %v3949
      %v4141 = vunpack.c.h.b16 %v3949
      %v4142 = vpack.c.b16 %v4022, %v4014
      %v4143 = vpack.c.b16 %v4023, %v4015
      %v4144 = vpack.c.b16 %v4024, %v4016
      %v4145 = vpack.c.b16 %v4025, %v4017
      %v4146 = vpack.c.b16 %v4026, %v4018
      %v4147 = vpack.c.b16 %v4027, %v4019
      %v4148 = vpack.c.b16 %v4028, %v4020
      %v4149 = vpack.c.b16 %v4029, %v4021
      %v4150 = vpack.c.b16 %v4038, %v4030
      %v4151 = vpack.c.b16 %v4039, %v4031
      %v4152 = vpack.c.b16 %v4040, %v4032
      %v4153 = vpack.c.b16 %v4041, %v4033
      %v4154 = vpack.c.b16 %v4042, %v4034
      %v4155 = vpack.c.b16 %v4043, %v4035
      %v4156 = vpack.c.b16 %v4044, %v4036
      %v4157 = vpack.c.b16 %v4045, %v4037
      %v4158 = vpack.c.b16 %v4054, %v4046
      %v4159 = vpack.c.b16 %v4055, %v4047
      %v4160 = vpack.c.b16 %v4056, %v4048
      %v4161 = vpack.c.b16 %v4057, %v4049
      %v4162 = vpack.c.b16 %v4058, %v4050
      %v4163 = vpack.c.b16 %v4059, %v4051
      %v4164 = vpack.c.b16 %v4060, %v4052
      %v4165 = vpack.c.b16 %v4061, %v4053
      %v4166 = vpack.c.b16 %v4070, %v4062
      %v4167 = vpack.c.b16 %v4071, %v4063
      %v4168 = vpack.c.b16 %v4072, %v4064
      %v4169 = vpack.c.b16 %v4073, %v4065
      %v4170 = vpack.c.b16 %v4074, %v4066
      %v4171 = vpack.c.b16 %v4075, %v4067
      %v4172 = vpack.c.b16 %v4076, %v4068
      %v4173 = vpack.c.b16 %v4077, %v4069
      %v4174 = vpack.c.b16 %v4086, %v4078
      %v4175 = vpack.c.b16 %v4087, %v4079
      %v4176 = vpack.c.b16 %v4088, %v4080
      %v4177 = vpack.c.b16 %v4089, %v4081
      %v4178 = vpack.c.b16 %v4090, %v4082
      %v4179 = vpack.c.b16 %v4091, %v4083
      %v4180 = vpack.c.b16 %v4092, %v4084
      %v4181 = vpack.c.b16 %v4093, %v4085
      %v4182 = vpack.c.b16 %v4102, %v4094
      %v4183 = vpack.c.b16 %v4103, %v4095
      %v4184 = vpack.c.b16 %v4104, %v4096
      %v4185 = vpack.c.b16 %v4105, %v4097
      %v4186 = vpack.c.b16 %v4106, %v4098
      %v4187 = vpack.c.b16 %v4107, %v4099
      %v4188 = vpack.c.b16 %v4108, %v4100
      %v4189 = vpack.c.b16 %v4109, %v4101
      %v4190 = vpack.c.b16 %v4118, %v4110
      %v4191 = vpack.c.b16 %v4119, %v4111
      %v4192 = vpack.c.b16 %v4120, %v4112
      %v4193 = vpack.c.b16 %v4121, %v4113
      %v4194 = vpack.c.b16 %v4122, %v4114
      %v4195 = vpack.c.b16 %v4123, %v4115
      %v4196 = vpack.c.b16 %v4124, %v4116
      %v4197 = vpack.c.b16 %v4125, %v4117
      %v4198 = vpack.c.b16 %v4134, %v4126
      %v4199 = vpack.c.b16 %v4135, %v4127
      %v4200 = vpack.c.b16 %v4136, %v4128
      %v4201 = vpack.c.b16 %v4137, %v4129
      %v4202 = vpack.c.b16 %v4138, %v4130
      %v4203 = vpack.c.b16 %v4139, %v4131
      %v4204 = vpack.c.b16 %v4140, %v4132
      %v4205 = vpack.c.b16 %v4141, %v4133
      %4270 = vmatpush.bf16.msra.mxu0 %v4198
      %4271 = vmatpush.bf16.msra.mxu0 %v4190
      %4272 = vmatpush.bf16.msra.mxu0 %v4182
      %4273 = vmatpush.bf16.msra.mxu0 %v4174
      %4274 = vmatpush.bf16.msra.mxu0 %v4166
      %4275 = vmatpush.bf16.msra.mxu0 %v4158
      %4276 = vmatpush.bf16.msra.mxu0 %v4150
      %4277 = vmatpush.bf16.msra.mxu0 %v4142
      %4278 = vmatmul.bf16.gmra.mxu0 %v3878
      %v4279 = vpop.f32.mrf.mxu0
      %v4280 = vadd.f32 0.0, %v4279
      %v4281 = vpop.f32.mrf.mxu0
      %v4282 = vadd.f32 0.0, %v4281
      %4283 = vmatmul.bf16.gmra.mxu0 %v3879
      %v4284 = vpop.f32.mrf.mxu0
      %v4285 = vadd.f32 0.0, %v4284
      %v4286 = vpop.f32.mrf.mxu0
      %v4287 = vadd.f32 0.0, %v4286
      %4288 = vmatmul.bf16.gmra.mxu0 %v3880
      %v4289 = vpop.f32.mrf.mxu0
      %v4290 = vadd.f32 0.0, %v4289
      %v4291 = vpop.f32.mrf.mxu0
      %v4292 = vadd.f32 0.0, %v4291
      %4293 = vmatmul.bf16.gmra.mxu0 %v3881
      %v4294 = vpop.f32.mrf.mxu0
      %v4295 = vadd.f32 0.0, %v4294
      %v4296 = vpop.f32.mrf.mxu0
      %v4297 = vadd.f32 0.0, %v4296
      %4298 = vmatmul.bf16.gmra.mxu0 %v3882
      %v4299 = vpop.f32.mrf.mxu0
      %v4300 = vadd.f32 0.0, %v4299
      %v4301 = vpop.f32.mrf.mxu0
      %v4302 = vadd.f32 0.0, %v4301
      %4303 = vmatmul.bf16.gmra.mxu0 %v3883
      %v4304 = vpop.f32.mrf.mxu0
      %v4305 = vadd.f32 0.0, %v4304
      %v4306 = vpop.f32.mrf.mxu0
      %v4307 = vadd.f32 0.0, %v4306
      %4308 = vmatmul.bf16.gmra.mxu0 %v3884
      %v4309 = vpop.f32.mrf.mxu0
      %v4310 = vadd.f32 0.0, %v4309
      %v4311 = vpop.f32.mrf.mxu0
      %v4312 = vadd.f32 0.0, %v4311
      %4313 = vmatmul.bf16.gmra.mxu0 %v3885
      %v4314 = vpop.f32.mrf.mxu0
      %v4315 = vadd.f32 0.0, %v4314
      %v4316 = vpop.f32.mrf.mxu0
      %v4317 = vadd.f32 0.0, %v4316
      %4318 = vdwg.mxu0
      %4319 = vmatpush.bf16.msra.mxu0 %v4199
      %4320 = vmatpush.bf16.msra.mxu0 %v4191
      %4321 = vmatpush.bf16.msra.mxu0 %v4183
      %4322 = vmatpush.bf16.msra.mxu0 %v4175
      %4323 = vmatpush.bf16.msra.mxu0 %v4167
      %4324 = vmatpush.bf16.msra.mxu0 %v4159
      %4325 = vmatpush.bf16.msra.mxu0 %v4151
      %4326 = vmatpush.bf16.msra.mxu0 %v4143
      %4327 = vmatmul.bf16.gmra.mxu0 %v3878
      %v4328 = vpop.f32.mrf.mxu0
      %v4329 = vadd.f32 0.0, %v4328
      %v4330 = vpop.f32.mrf.mxu0
      %v4331 = vadd.f32 0.0, %v4330
      %4332 = vmatmul.bf16.gmra.mxu0 %v3879
      %v4333 = vpop.f32.mrf.mxu0
      %v4334 = vadd.f32 0.0, %v4333
      %v4335 = vpop.f32.mrf.mxu0
      %v4336 = vadd.f32 0.0, %v4335
      %4337 = vmatmul.bf16.gmra.mxu0 %v3880
      %v4338 = vpop.f32.mrf.mxu0
      %v4339 = vadd.f32 0.0, %v4338
      %v4340 = vpop.f32.mrf.mxu0
      %v4341 = vadd.f32 0.0, %v4340
      %4342 = vmatmul.bf16.gmra.mxu0 %v3881
      %v4343 = vpop.f32.mrf.mxu0
      %v4344 = vadd.f32 0.0, %v4343
      %v4345 = vpop.f32.mrf.mxu0
      %v4346 = vadd.f32 0.0, %v4345
      %4347 = vmatmul.bf16.gmra.mxu0 %v3882
      %v4348 = vpop.f32.mrf.mxu0
      %v4349 = vadd.f32 0.0, %v4348
      %v4350 = vpop.f32.mrf.mxu0
      %v4351 = vadd.f32 0.0, %v4350
      %4352 = vmatmul.bf16.gmra.mxu0 %v3883
      %v4353 = vpop.f32.mrf.mxu0
      %v4354 = vadd.f32 0.0, %v4353
      %v4355 = vpop.f32.mrf.mxu0
      %v4356 = vadd.f32 0.0, %v4355
      %4357 = vmatmul.bf16.gmra.mxu0 %v3884
      %v4358 = vpop.f32.mrf.mxu0
      %v4359 = vadd.f32 0.0, %v4358
      %v4360 = vpop.f32.mrf.mxu0
      %v4361 = vadd.f32 0.0, %v4360
      %4362 = vmatmul.bf16.gmra.mxu0 %v3885
      %v4363 = vpop.f32.mrf.mxu0
      %v4364 = vadd.f32 0.0, %v4363
      %v4365 = vpop.f32.mrf.mxu0
      %v4366 = vadd.f32 0.0, %v4365
      %4367 = vdwg.mxu0
      %4368 = vmatpush.bf16.msra.mxu0 %v4200
      %4369 = vmatpush.bf16.msra.mxu0 %v4192
      %4370 = vmatpush.bf16.msra.mxu0 %v4184
      %4371 = vmatpush.bf16.msra.mxu0 %v4176
      %4372 = vmatpush.bf16.msra.mxu0 %v4168
      %4373 = vmatpush.bf16.msra.mxu0 %v4160
      %4374 = vmatpush.bf16.msra.mxu0 %v4152
      %4375 = vmatpush.bf16.msra.mxu0 %v4144
      %4376 = vmatmul.bf16.gmra.mxu0 %v3878
      %v4377 = vpop.f32.mrf.mxu0
      %v4378 = vadd.f32 0.0, %v4377
      %v4379 = vpop.f32.mrf.mxu0
      %v4380 = vadd.f32 0.0, %v4379
      %4381 = vmatmul.bf16.gmra.mxu0 %v3879
      %v4382 = vpop.f32.mrf.mxu0
      %v4383 = vadd.f32 0.0, %v4382
      %v4384 = vpop.f32.mrf.mxu0
      %v4385 = vadd.f32 0.0, %v4384
      %4386 = vmatmul.bf16.gmra.mxu0 %v3880
      %v4387 = vpop.f32.mrf.mxu0
      %v4388 = vadd.f32 0.0, %v4387
      %v4389 = vpop.f32.mrf.mxu0
      %v4390 = vadd.f32 0.0, %v4389
      %4391 = vmatmul.bf16.gmra.mxu0 %v3881
      %v4392 = vpop.f32.mrf.mxu0
      %v4393 = vadd.f32 0.0, %v4392
      %v4394 = vpop.f32.mrf.mxu0
      %v4395 = vadd.f32 0.0, %v4394
      %4396 = vmatmul.bf16.gmra.mxu0 %v3882
      %v4397 = vpop.f32.mrf.mxu0
      %v4398 = vadd.f32 0.0, %v4397
      %v4399 = vpop.f32.mrf.mxu0
      %v4400 = vadd.f32 0.0, %v4399
      %4401 = vmatmul.bf16.gmra.mxu0 %v3883
      %v4402 = vpop.f32.mrf.mxu0
      %v4403 = vadd.f32 0.0, %v4402
      %v4404 = vpop.f32.mrf.mxu0
      %v4405 = vadd.f32 0.0, %v4404
      %4406 = vmatmul.bf16.gmra.mxu0 %v3884
      %v4407 = vpop.f32.mrf.mxu0
      %v4408 = vadd.f32 0.0, %v4407
      %v4409 = vpop.f32.mrf.mxu0
      %v4410 = vadd.f32 0.0, %v4409
      %4411 = vmatmul.bf16.gmra.mxu0 %v3885
      %v4412 = vpop.f32.mrf.mxu0
      %v4413 = vadd.f32 0.0, %v4412
      %v4414 = vpop.f32.mrf.mxu0
      %v4415 = vadd.f32 0.0, %v4414
      %4416 = vdwg.mxu0
      %4417 = vmatpush.bf16.msra.mxu0 %v4201
      %4418 = vmatpush.bf16.msra.mxu0 %v4193
      %4419 = vmatpush.bf16.msra.mxu0 %v4185
      %4420 = vmatpush.bf16.msra.mxu0 %v4177
      %4421 = vmatpush.bf16.msra.mxu0 %v4169
      %4422 = vmatpush.bf16.msra.mxu0 %v4161
      %4423 = vmatpush.bf16.msra.mxu0 %v4153
      %4424 = vmatpush.bf16.msra.mxu0 %v4145
      %4425 = vmatmul.bf16.gmra.mxu0 %v3878
      %v4426 = vpop.f32.mrf.mxu0
      %v4427 = vadd.f32 0.0, %v4426
      %v4428 = vpop.f32.mrf.mxu0
      %v4429 = vadd.f32 0.0, %v4428
      %4430 = vmatmul.bf16.gmra.mxu0 %v3879
      %v4431 = vpop.f32.mrf.mxu0
      %v4432 = vadd.f32 0.0, %v4431
      %v4433 = vpop.f32.mrf.mxu0
      %v4434 = vadd.f32 0.0, %v4433
      %4435 = vmatmul.bf16.gmra.mxu0 %v3880
      %v4436 = vpop.f32.mrf.mxu0
      %v4437 = vadd.f32 0.0, %v4436
      %v4438 = vpop.f32.mrf.mxu0
      %v4439 = vadd.f32 0.0, %v4438
      %4440 = vmatmul.bf16.gmra.mxu0 %v3881
      %v4441 = vpop.f32.mrf.mxu0
      %v4442 = vadd.f32 0.0, %v4441
      %v4443 = vpop.f32.mrf.mxu0
      %v4444 = vadd.f32 0.0, %v4443
      %4445 = vmatmul.bf16.gmra.mxu0 %v3882
      %v4446 = vpop.f32.mrf.mxu0
      %v4447 = vadd.f32 0.0, %v4446
      %v4448 = vpop.f32.mrf.mxu0
      %v4449 = vadd.f32 0.0, %v4448
      %4450 = vmatmul.bf16.gmra.mxu0 %v3883
      %v4451 = vpop.f32.mrf.mxu0
      %v4452 = vadd.f32 0.0, %v4451
      %v4453 = vpop.f32.mrf.mxu0
      %v4454 = vadd.f32 0.0, %v4453
      %4455 = vmatmul.bf16.gmra.mxu0 %v3884
      %v4456 = vpop.f32.mrf.mxu0
      %v4457 = vadd.f32 0.0, %v4456
      %v4458 = vpop.f32.mrf.mxu0
      %v4459 = vadd.f32 0.0, %v4458
      %4460 = vmatmul.bf16.gmra.mxu0 %v3885
      %v4461 = vpop.f32.mrf.mxu0
      %v4462 = vadd.f32 0.0, %v4461
      %v4463 = vpop.f32.mrf.mxu0
      %v4464 = vadd.f32 0.0, %v4463
      %4465 = vdwg.mxu0
      %4466 = vmatpush.bf16.msra.mxu0 %v4202
      %4467 = vmatpush.bf16.msra.mxu0 %v4194
      %4468 = vmatpush.bf16.msra.mxu0 %v4186
      %4469 = vmatpush.bf16.msra.mxu0 %v4178
      %4470 = vmatpush.bf16.msra.mxu0 %v4170
      %4471 = vmatpush.bf16.msra.mxu0 %v4162
      %4472 = vmatpush.bf16.msra.mxu0 %v4154
      %4473 = vmatpush.bf16.msra.mxu0 %v4146
      %4474 = vmatmul.bf16.gmra.mxu0 %v3878
      %v4475 = vpop.f32.mrf.mxu0
      %v4476 = vadd.f32 0.0, %v4475
      %v4477 = vpop.f32.mrf.mxu0
      %v4478 = vadd.f32 0.0, %v4477
      %4479 = vmatmul.bf16.gmra.mxu0 %v3879
      %v4480 = vpop.f32.mrf.mxu0
      %v4481 = vadd.f32 0.0, %v4480
      %v4482 = vpop.f32.mrf.mxu0
      %v4483 = vadd.f32 0.0, %v4482
      %4484 = vmatmul.bf16.gmra.mxu0 %v3880
      %v4485 = vpop.f32.mrf.mxu0
      %v4486 = vadd.f32 0.0, %v4485
      %v4487 = vpop.f32.mrf.mxu0
      %v4488 = vadd.f32 0.0, %v4487
      %4489 = vmatmul.bf16.gmra.mxu0 %v3881
      %v4490 = vpop.f32.mrf.mxu0
      %v4491 = vadd.f32 0.0, %v4490
      %v4492 = vpop.f32.mrf.mxu0
      %v4493 = vadd.f32 0.0, %v4492
      %4494 = vmatmul.bf16.gmra.mxu0 %v3882
      %v4495 = vpop.f32.mrf.mxu0
      %v4496 = vadd.f32 0.0, %v4495
      %v4497 = vpop.f32.mrf.mxu0
      %v4498 = vadd.f32 0.0, %v4497
      %4499 = vmatmul.bf16.gmra.mxu0 %v3883
      %v4500 = vpop.f32.mrf.mxu0
      %v4501 = vadd.f32 0.0, %v4500
      %v4502 = vpop.f32.mrf.mxu0
      %v4503 = vadd.f32 0.0, %v4502
      %4504 = vmatmul.bf16.gmra.mxu0 %v3884
      %v4505 = vpop.f32.mrf.mxu0
      %v4506 = vadd.f32 0.0, %v4505
      %v4507 = vpop.f32.mrf.mxu0
      %v4508 = vadd.f32 0.0, %v4507
      %4509 = vmatmul.bf16.gmra.mxu0 %v3885
      %v4510 = vpop.f32.mrf.mxu0
      %v4511 = vadd.f32 0.0, %v4510
      %v4512 = vpop.f32.mrf.mxu0
      %v4513 = vadd.f32 0.0, %v4512
      %4514 = vdwg.mxu0
      %4515 = vmatpush.bf16.msra.mxu0 %v4203
      %4516 = vmatpush.bf16.msra.mxu0 %v4195
      %4517 = vmatpush.bf16.msra.mxu0 %v4187
      %4518 = vmatpush.bf16.msra.mxu0 %v4179
      %4519 = vmatpush.bf16.msra.mxu0 %v4171
      %4520 = vmatpush.bf16.msra.mxu0 %v4163
      %4521 = vmatpush.bf16.msra.mxu0 %v4155
      %4522 = vmatpush.bf16.msra.mxu0 %v4147
      %4523 = vmatmul.bf16.gmra.mxu0 %v3878
      %v4524 = vpop.f32.mrf.mxu0
      %v4525 = vadd.f32 0.0, %v4524
      %v4526 = vpop.f32.mrf.mxu0
      %v4527 = vadd.f32 0.0, %v4526
      %4528 = vmatmul.bf16.gmra.mxu0 %v3879
      %v4529 = vpop.f32.mrf.mxu0
      %v4530 = vadd.f32 0.0, %v4529
      %v4531 = vpop.f32.mrf.mxu0
      %v4532 = vadd.f32 0.0, %v4531
      %4533 = vmatmul.bf16.gmra.mxu0 %v3880
      %v4534 = vpop.f32.mrf.mxu0
      %v4535 = vadd.f32 0.0, %v4534
      %v4536 = vpop.f32.mrf.mxu0
      %v4537 = vadd.f32 0.0, %v4536
      %4538 = vmatmul.bf16.gmra.mxu0 %v3881
      %v4539 = vpop.f32.mrf.mxu0
      %v4540 = vadd.f32 0.0, %v4539
      %v4541 = vpop.f32.mrf.mxu0
      %v4542 = vadd.f32 0.0, %v4541
      %4543 = vmatmul.bf16.gmra.mxu0 %v3882
      %v4544 = vpop.f32.mrf.mxu0
      %v4545 = vadd.f32 0.0, %v4544
      %v4546 = vpop.f32.mrf.mxu0
      %v4547 = vadd.f32 0.0, %v4546
      %4548 = vmatmul.bf16.gmra.mxu0 %v3883
      %v4549 = vpop.f32.mrf.mxu0
      %v4550 = vadd.f32 0.0, %v4549
      %v4551 = vpop.f32.mrf.mxu0
      %v4552 = vadd.f32 0.0, %v4551
      %4553 = vmatmul.bf16.gmra.mxu0 %v3884
      %v4554 = vpop.f32.mrf.mxu0
      %v4555 = vadd.f32 0.0, %v4554
      %v4556 = vpop.f32.mrf.mxu0
      %v4557 = vadd.f32 0.0, %v4556
      %4558 = vmatmul.bf16.gmra.mxu0 %v3885
      %v4559 = vpop.f32.mrf.mxu0
      %v4560 = vadd.f32 0.0, %v4559
      %v4561 = vpop.f32.mrf.mxu0
      %v4562 = vadd.f32 0.0, %v4561
      %4563 = vdwg.mxu0
      %4564 = vmatpush.bf16.msra.mxu0 %v4204
      %4565 = vmatpush.bf16.msra.mxu0 %v4196
      %4566 = vmatpush.bf16.msra.mxu0 %v4188
      %4567 = vmatpush.bf16.msra.mxu0 %v4180
      %4568 = vmatpush.bf16.msra.mxu0 %v4172
      %4569 = vmatpush.bf16.msra.mxu0 %v4164
      %4570 = vmatpush.bf16.msra.mxu0 %v4156
      %4571 = vmatpush.bf16.msra.mxu0 %v4148
      %4572 = vmatmul.bf16.gmra.mxu0 %v3878
      %v4573 = vpop.f32.mrf.mxu0
      %v4574 = vadd.f32 0.0, %v4573
      %v4575 = vpop.f32.mrf.mxu0
      %v4576 = vadd.f32 0.0, %v4575
      %4577 = vmatmul.bf16.gmra.mxu0 %v3879
      %v4578 = vpop.f32.mrf.mxu0
      %v4579 = vadd.f32 0.0, %v4578
      %v4580 = vpop.f32.mrf.mxu0
      %v4581 = vadd.f32 0.0, %v4580
      %4582 = vmatmul.bf16.gmra.mxu0 %v3880
      %v4583 = vpop.f32.mrf.mxu0
      %v4584 = vadd.f32 0.0, %v4583
      %v4585 = vpop.f32.mrf.mxu0
      %v4586 = vadd.f32 0.0, %v4585
      %4587 = vmatmul.bf16.gmra.mxu0 %v3881
      %v4588 = vpop.f32.mrf.mxu0
      %v4589 = vadd.f32 0.0, %v4588
      %v4590 = vpop.f32.mrf.mxu0
      %v4591 = vadd.f32 0.0, %v4590
      %4592 = vmatmul.bf16.gmra.mxu0 %v3882
      %v4593 = vpop.f32.mrf.mxu0
      %v4594 = vadd.f32 0.0, %v4593
      %v4595 = vpop.f32.mrf.mxu0
      %v4596 = vadd.f32 0.0, %v4595
      %4597 = vmatmul.bf16.gmra.mxu0 %v3883
      %v4598 = vpop.f32.mrf.mxu0
      %v4599 = vadd.f32 0.0, %v4598
      %v4600 = vpop.f32.mrf.mxu0
      %v4601 = vadd.f32 0.0, %v4600
      %4602 = vmatmul.bf16.gmra.mxu0 %v3884
      %v4603 = vpop.f32.mrf.mxu0
      %v4604 = vadd.f32 0.0, %v4603
      %v4605 = vpop.f32.mrf.mxu0
      %v4606 = vadd.f32 0.0, %v4605
      %4607 = vmatmul.bf16.gmra.mxu0 %v3885
      %v4608 = vpop.f32.mrf.mxu0
      %v4609 = vadd.f32 0.0, %v4608
      %v4610 = vpop.f32.mrf.mxu0
      %v4611 = vadd.f32 0.0, %v4610
      %4612 = vdwg.mxu0
      %4613 = vmatpush.bf16.msra.mxu0 %v4205
      %4614 = vmatpush.bf16.msra.mxu0 %v4197
      %4615 = vmatpush.bf16.msra.mxu0 %v4189
      %4616 = vmatpush.bf16.msra.mxu0 %v4181
      %4617 = vmatpush.bf16.msra.mxu0 %v4173
      %4618 = vmatpush.bf16.msra.mxu0 %v4165
      %4619 = vmatpush.bf16.msra.mxu0 %v4157
      %4620 = vmatpush.bf16.msra.mxu0 %v4149
      %4621 = vmatmul.bf16.gmra.mxu0 %v3878
      %v4622 = vpop.f32.mrf.mxu0
      %v4623 = vadd.f32 0.0, %v4622
      %v4624 = vpop.f32.mrf.mxu0
      %v4625 = vadd.f32 0.0, %v4624
      %4626 = vmatmul.bf16.gmra.mxu0 %v3879
      %v4627 = vpop.f32.mrf.mxu0
      %v4628 = vadd.f32 0.0, %v4627
      %v4629 = vpop.f32.mrf.mxu0
      %v4630 = vadd.f32 0.0, %v4629
      %4631 = vmatmul.bf16.gmra.mxu0 %v3880
      %v4632 = vpop.f32.mrf.mxu0
      %v4633 = vadd.f32 0.0, %v4632
      %v4634 = vpop.f32.mrf.mxu0
      %v4635 = vadd.f32 0.0, %v4634
      %4636 = vmatmul.bf16.gmra.mxu0 %v3881
      %v4637 = vpop.f32.mrf.mxu0
      %v4638 = vadd.f32 0.0, %v4637
      %v4639 = vpop.f32.mrf.mxu0
      %v4640 = vadd.f32 0.0, %v4639
      %4641 = vmatmul.bf16.gmra.mxu0 %v3882
      %v4642 = vpop.f32.mrf.mxu0
      %v4643 = vadd.f32 0.0, %v4642
      %v4644 = vpop.f32.mrf.mxu0
      %v4645 = vadd.f32 0.0, %v4644
      %4646 = vmatmul.bf16.gmra.mxu0 %v3883
      %v4647 = vpop.f32.mrf.mxu0
      %v4648 = vadd.f32 0.0, %v4647
      %v4649 = vpop.f32.mrf.mxu0
      %v4650 = vadd.f32 0.0, %v4649
      %4651 = vmatmul.bf16.gmra.mxu0 %v3884
      %v4652 = vpop.f32.mrf.mxu0
      %v4653 = vadd.f32 0.0, %v4652
      %v4654 = vpop.f32.mrf.mxu0
      %v4655 = vadd.f32 0.0, %v4654
      %4656 = vmatmul.bf16.gmra.mxu0 %v3885
      %v4657 = vpop.f32.mrf.mxu0
      %v4658 = vadd.f32 0.0, %v4657
      %v4659 = vpop.f32.mrf.mxu0
      %v4660 = vadd.f32 0.0, %v4659
      %4661 = vdwg.mxu0
      %v4662 = vld [vmem:[%s9] sm:$0x1]
      %v4663 = vunpack.c.l.bf16 %v4662
      %v4664 = vperm.slane %v4663, 0
      %v4665 = vmul.f32 %v2777, %v4280
      %v4666 = vmul.f32 %v2782, %v4282
      %v4667 = vmul.f32 %v2787, %v4285
      %v4668 = vmul.f32 %v2792, %v4287
      %v4669 = vmul.f32 %v2797, %v4290
      %v4670 = vmul.f32 %v2802, %v4292
      %v4671 = vmul.f32 %v2807, %v4295
      %v4672 = vmul.f32 %v2812, %v4297
      %v4673 = vmul.f32 %v2817, %v4300
      %v4674 = vmul.f32 %v2822, %v4302
      %v4675 = vmul.f32 %v2827, %v4305
      %v4676 = vmul.f32 %v2832, %v4307
      %v4677 = vmul.f32 %v2837, %v4310
      %v4678 = vmul.f32 %v2842, %v4312
      %v4679 = vmul.f32 %v2847, %v4315
      %v4680 = vmul.f32 %v2852, %v4317
      %v4681 = vadd.f32 %v4664, %v4665
      %v4682 = vadd.f32 %v4664, %v4666
      %v4683 = vadd.f32 %v4664, %v4667
      %v4684 = vadd.f32 %v4664, %v4668
      %v4685 = vadd.f32 %v4664, %v4669
      %v4686 = vadd.f32 %v4664, %v4670
      %v4687 = vadd.f32 %v4664, %v4671
      %v4688 = vadd.f32 %v4664, %v4672
      %v4689 = vadd.f32 %v4664, %v4673
      %v4690 = vadd.f32 %v4664, %v4674
      %v4691 = vadd.f32 %v4664, %v4675
      %v4692 = vadd.f32 %v4664, %v4676
      %v4693 = vadd.f32 %v4664, %v4677
      %v4694 = vadd.f32 %v4664, %v4678
      %v4695 = vadd.f32 %v4664, %v4679
      %v4696 = vadd.f32 %v4664, %v4680
      %v4697 = vmul.f32 %v2888, %v4329
      %v4698 = vmul.f32 %v2892, %v4331
      %v4699 = vmul.f32 %v2896, %v4334
      %v4700 = vmul.f32 %v2900, %v4336
      %v4701 = vmul.f32 %v2904, %v4339
      %v4702 = vmul.f32 %v2908, %v4341
      %v4703 = vmul.f32 %v2912, %v4344
      %v4704 = vmul.f32 %v2916, %v4346
      %v4705 = vmul.f32 %v2920, %v4349
      %v4706 = vmul.f32 %v2924, %v4351
      %v4707 = vmul.f32 %v2928, %v4354
      %v4708 = vmul.f32 %v2932, %v4356
      %v4709 = vmul.f32 %v2936, %v4359
      %v4710 = vmul.f32 %v2940, %v4361
      %v4711 = vmul.f32 %v2944, %v4364
      %v4712 = vmul.f32 %v2948, %v4366
      %v4713 = vadd.f32 %v4681, %v4697
      %v4714 = vadd.f32 %v4682, %v4698
      %v4715 = vadd.f32 %v4683, %v4699
      %v4716 = vadd.f32 %v4684, %v4700
      %v4717 = vadd.f32 %v4685, %v4701
      %v4718 = vadd.f32 %v4686, %v4702
      %v4719 = vadd.f32 %v4687, %v4703
      %v4720 = vadd.f32 %v4688, %v4704
      %v4721 = vadd.f32 %v4689, %v4705
      %v4722 = vadd.f32 %v4690, %v4706
      %v4723 = vadd.f32 %v4691, %v4707
      %v4724 = vadd.f32 %v4692, %v4708
      %v4725 = vadd.f32 %v4693, %v4709
      %v4726 = vadd.f32 %v4694, %v4710
      %v4727 = vadd.f32 %v4695, %v4711
      %v4728 = vadd.f32 %v4696, %v4712
      %v4729 = vmul.f32 %v2984, %v4378
      %v4730 = vmul.f32 %v2988, %v4380
      %v4731 = vmul.f32 %v2992, %v4383
      %v4732 = vmul.f32 %v2996, %v4385
      %v4733 = vmul.f32 %v3000, %v4388
      %v4734 = vmul.f32 %v3004, %v4390
      %v4735 = vmul.f32 %v3008, %v4393
      %v4736 = vmul.f32 %v3012, %v4395
      %v4737 = vmul.f32 %v3016, %v4398
      %v4738 = vmul.f32 %v3020, %v4400
      %v4739 = vmul.f32 %v3024, %v4403
      %v4740 = vmul.f32 %v3028, %v4405
      %v4741 = vmul.f32 %v3032, %v4408
      %v4742 = vmul.f32 %v3036, %v4410
      %v4743 = vmul.f32 %v3040, %v4413
      %v4744 = vmul.f32 %v3044, %v4415
      %v4745 = vadd.f32 %v4713, %v4729
      %v4746 = vadd.f32 %v4714, %v4730
      %v4747 = vadd.f32 %v4715, %v4731
      %v4748 = vadd.f32 %v4716, %v4732
      %v4749 = vadd.f32 %v4717, %v4733
      %v4750 = vadd.f32 %v4718, %v4734
      %v4751 = vadd.f32 %v4719, %v4735
      %v4752 = vadd.f32 %v4720, %v4736
      %v4753 = vadd.f32 %v4721, %v4737
      %v4754 = vadd.f32 %v4722, %v4738
      %v4755 = vadd.f32 %v4723, %v4739
      %v4756 = vadd.f32 %v4724, %v4740
      %v4757 = vadd.f32 %v4725, %v4741
      %v4758 = vadd.f32 %v4726, %v4742
      %v4759 = vadd.f32 %v4727, %v4743
      %v4760 = vadd.f32 %v4728, %v4744
      %v4761 = vmul.f32 %v3080, %v4427
      %v4762 = vmul.f32 %v3084, %v4429
      %v4763 = vmul.f32 %v3088, %v4432
      %v4764 = vmul.f32 %v3092, %v4434
      %v4765 = vmul.f32 %v3096, %v4437
      %v4766 = vmul.f32 %v3100, %v4439
      %v4767 = vmul.f32 %v3104, %v4442
      %v4768 = vmul.f32 %v3108, %v4444
      %v4769 = vmul.f32 %v3112, %v4447
      %v4770 = vmul.f32 %v3116, %v4449
      %v4771 = vmul.f32 %v3120, %v4452
      %v4772 = vmul.f32 %v3124, %v4454
      %v4773 = vmul.f32 %v3128, %v4457
      %v4774 = vmul.f32 %v3132, %v4459
      %v4775 = vmul.f32 %v3136, %v4462
      %v4776 = vmul.f32 %v3140, %v4464
      %v4777 = vadd.f32 %v4745, %v4761
      %v4778 = vadd.f32 %v4746, %v4762
      %v4779 = vadd.f32 %v4747, %v4763
      %v4780 = vadd.f32 %v4748, %v4764
      %v4781 = vadd.f32 %v4749, %v4765
      %v4782 = vadd.f32 %v4750, %v4766
      %v4783 = vadd.f32 %v4751, %v4767
      %v4784 = vadd.f32 %v4752, %v4768
      %v4785 = vadd.f32 %v4753, %v4769
      %v4786 = vadd.f32 %v4754, %v4770
      %v4787 = vadd.f32 %v4755, %v4771
      %v4788 = vadd.f32 %v4756, %v4772
      %v4789 = vadd.f32 %v4757, %v4773
      %v4790 = vadd.f32 %v4758, %v4774
      %v4791 = vadd.f32 %v4759, %v4775
      %v4792 = vadd.f32 %v4760, %v4776
      %v4793 = vmul.f32 %v3176, %v4476
      %v4794 = vmul.f32 %v3180, %v4478
      %v4795 = vmul.f32 %v3184, %v4481
      %v4796 = vmul.f32 %v3188, %v4483
      %v4797 = vmul.f32 %v3192, %v4486
      %v4798 = vmul.f32 %v3196, %v4488
      %v4799 = vmul.f32 %v3200, %v4491
      %v4800 = vmul.f32 %v3204, %v4493
      %v4801 = vmul.f32 %v3208, %v4496
      %v4802 = vmul.f32 %v3212, %v4498
      %v4803 = vmul.f32 %v3216, %v4501
      %v4804 = vmul.f32 %v3220, %v4503
      %v4805 = vmul.f32 %v3224, %v4506
      %v4806 = vmul.f32 %v3228, %v4508
      %v4807 = vmul.f32 %v3232, %v4511
      %v4808 = vmul.f32 %v3236, %v4513
      %v4809 = vadd.f32 %v4777, %v4793
      %v4810 = vadd.f32 %v4778, %v4794
      %v4811 = vadd.f32 %v4779, %v4795
      %v4812 = vadd.f32 %v4780, %v4796
      %v4813 = vadd.f32 %v4781, %v4797
      %v4814 = vadd.f32 %v4782, %v4798
      %v4815 = vadd.f32 %v4783, %v4799
      %v4816 = vadd.f32 %v4784, %v4800
      %v4817 = vadd.f32 %v4785, %v4801
      %v4818 = vadd.f32 %v4786, %v4802
      %v4819 = vadd.f32 %v4787, %v4803
      %v4820 = vadd.f32 %v4788, %v4804
      %v4821 = vadd.f32 %v4789, %v4805
      %v4822 = vadd.f32 %v4790, %v4806
      %v4823 = vadd.f32 %v4791, %v4807
      %v4824 = vadd.f32 %v4792, %v4808
      %v4825 = vmul.f32 %v3272, %v4525
      %v4826 = vmul.f32 %v3276, %v4527
      %v4827 = vmul.f32 %v3280, %v4530
      %v4828 = vmul.f32 %v3284, %v4532
      %v4829 = vmul.f32 %v3288, %v4535
      %v4830 = vmul.f32 %v3292, %v4537
      %v4831 = vmul.f32 %v3296, %v4540
      %v4832 = vmul.f32 %v3300, %v4542
      %v4833 = vmul.f32 %v3304, %v4545
      %v4834 = vmul.f32 %v3308, %v4547
      %v4835 = vmul.f32 %v3312, %v4550
      %v4836 = vmul.f32 %v3316, %v4552
      %v4837 = vmul.f32 %v3320, %v4555
      %v4838 = vmul.f32 %v3324, %v4557
      %v4839 = vmul.f32 %v3328, %v4560
      %v4840 = vmul.f32 %v3332, %v4562
      %v4841 = vadd.f32 %v4809, %v4825
      %v4842 = vadd.f32 %v4810, %v4826
      %v4843 = vadd.f32 %v4811, %v4827
      %v4844 = vadd.f32 %v4812, %v4828
      %v4845 = vadd.f32 %v4813, %v4829
      %v4846 = vadd.f32 %v4814, %v4830
      %v4847 = vadd.f32 %v4815, %v4831
      %v4848 = vadd.f32 %v4816, %v4832
      %v4849 = vadd.f32 %v4817, %v4833
      %v4850 = vadd.f32 %v4818, %v4834
      %v4851 = vadd.f32 %v4819, %v4835
      %v4852 = vadd.f32 %v4820, %v4836
      %v4853 = vadd.f32 %v4821, %v4837
      %v4854 = vadd.f32 %v4822, %v4838
      %v4855 = vadd.f32 %v4823, %v4839
      %v4856 = vadd.f32 %v4824, %v4840
      %v4857 = vmul.f32 %v3368, %v4574
      %v4858 = vmul.f32 %v3372, %v4576
      %v4859 = vmul.f32 %v3376, %v4579
      %v4860 = vmul.f32 %v3380, %v4581
      %v4861 = vmul.f32 %v3384, %v4584
      %v4862 = vmul.f32 %v3388, %v4586
      %v4863 = vmul.f32 %v3392, %v4589
      %v4864 = vmul.f32 %v3396, %v4591
      %v4865 = vmul.f32 %v3400, %v4594
      %v4866 = vmul.f32 %v3404, %v4596
      %v4867 = vmul.f32 %v3408, %v4599
      %v4868 = vmul.f32 %v3412, %v4601
      %v4869 = vmul.f32 %v3416, %v4604
      %v4870 = vmul.f32 %v3420, %v4606
      %v4871 = vmul.f32 %v3424, %v4609
      %v4872 = vmul.f32 %v3428, %v4611
      %v4873 = vadd.f32 %v4841, %v4857
      %v4874 = vadd.f32 %v4842, %v4858
      %v4875 = vadd.f32 %v4843, %v4859
      %v4876 = vadd.f32 %v4844, %v4860
      %v4877 = vadd.f32 %v4845, %v4861
      %v4878 = vadd.f32 %v4846, %v4862
      %v4879 = vadd.f32 %v4847, %v4863
      %v4880 = vadd.f32 %v4848, %v4864
      %v4881 = vadd.f32 %v4849, %v4865
      %v4882 = vadd.f32 %v4850, %v4866
      %v4883 = vadd.f32 %v4851, %v4867
      %v4884 = vadd.f32 %v4852, %v4868
      %v4885 = vadd.f32 %v4853, %v4869
      %v4886 = vadd.f32 %v4854, %v4870
      %v4887 = vadd.f32 %v4855, %v4871
      %v4888 = vadd.f32 %v4856, %v4872
      %v4889 = vmul.f32 %v3464, %v4623
      %v4890 = vmul.f32 %v3468, %v4625
      %v4891 = vmul.f32 %v3472, %v4628
      %v4892 = vmul.f32 %v3476, %v4630
      %v4893 = vmul.f32 %v3480, %v4633
      %v4894 = vmul.f32 %v3484, %v4635
      %v4895 = vmul.f32 %v3488, %v4638
      %v4896 = vmul.f32 %v3492, %v4640
      %v4897 = vmul.f32 %v3496, %v4643
      %v4898 = vmul.f32 %v3500, %v4645
      %v4899 = vmul.f32 %v3504, %v4648
      %v4900 = vmul.f32 %v3508, %v4650
      %v4901 = vmul.f32 %v3512, %v4653
      %v4902 = vmul.f32 %v3516, %v4655
      %v4903 = vmul.f32 %v3520, %v4658
      %v4904 = vmul.f32 %v3524, %v4660
      %v4905 = vadd.f32 %v4873, %v4889
      %v4906 = vadd.f32 %v4874, %v4890
      %v4907 = vadd.f32 %v4875, %v4891
      %v4908 = vadd.f32 %v4876, %v4892
      %v4909 = vadd.f32 %v4877, %v4893
      %v4910 = vadd.f32 %v4878, %v4894
      %v4911 = vadd.f32 %v4879, %v4895
      %v4912 = vadd.f32 %v4880, %v4896
      %v4913 = vadd.f32 %v4881, %v4897
      %v4914 = vadd.f32 %v4882, %v4898
      %v4915 = vadd.f32 %v4883, %v4899
      %v4916 = vadd.f32 %v4884, %v4900
      %v4917 = vadd.f32 %v4885, %v4901
      %v4918 = vadd.f32 %v4886, %v4902
      %v4919 = vadd.f32 %v4887, %v4903
      %v4920 = vadd.f32 %v4888, %v4904
      %v4921 = vxor.u32 %v4905, 2147483648
      %v4922 = vxor.u32 %v4906, 2147483648
      %v4923 = vxor.u32 %v4907, 2147483648
      %v4924 = vxor.u32 %v4908, 2147483648
      %v4925 = vxor.u32 %v4909, 2147483648
      %v4926 = vxor.u32 %v4910, 2147483648
      %v4927 = vxor.u32 %v4911, 2147483648
      %v4928 = vxor.u32 %v4912, 2147483648
      %v4929 = vxor.u32 %v4913, 2147483648
      %v4930 = vxor.u32 %v4914, 2147483648
      %v4931 = vxor.u32 %v4915, 2147483648
      %v4932 = vxor.u32 %v4916, 2147483648
      %v4933 = vxor.u32 %v4917, 2147483648
      %v4934 = vxor.u32 %v4918, 2147483648
      %v4935 = vxor.u32 %v4919, 2147483648
      %v4936 = vxor.u32 %v4920, 2147483648
      %v4937 = vmul.f32 %v4921, 1.442695
      %v4938 = vpow.pop %v4937
      %v4939 = vmul.f32 %v4922, 1.442695
      %v4940 = vpow.pop %v4939
      %v4941 = vmul.f32 %v4923, 1.442695
      %v4942 = vpow.pop %v4941
      %v4943 = vmul.f32 %v4924, 1.442695
      %v4944 = vpow.pop %v4943
      %v4945 = vmul.f32 %v4925, 1.442695
      %v4946 = vpow.pop %v4945
      %v4947 = vmul.f32 %v4926, 1.442695
      %v4948 = vpow.pop %v4947
      %v4949 = vmul.f32 %v4927, 1.442695
      %v4950 = vpow.pop %v4949
      %v4951 = vmul.f32 %v4928, 1.442695
      %v4952 = vpow.pop %v4951
      %v4953 = vmul.f32 %v4929, 1.442695
      %v4954 = vpow.pop %v4953
      %v4955 = vmul.f32 %v4930, 1.442695
      %v4956 = vpow.pop %v4955
      %v4957 = vmul.f32 %v4931, 1.442695
      %v4958 = vpow.pop %v4957
      %v4959 = vmul.f32 %v4932, 1.442695
      %v4960 = vpow.pop %v4959
      %v4961 = vmul.f32 %v4933, 1.442695
      %v4962 = vpow.pop %v4961
      %v4963 = vmul.f32 %v4934, 1.442695
      %v4964 = vpow.pop %v4963
      %v4965 = vmul.f32 %v4935, 1.442695
      %v4966 = vpow.pop %v4965
      %v4967 = vmul.f32 %v4936, 1.442695
      %v4968 = vpow.pop %v4967
      %v4969 = vadd.f32 %v4938, 1.0
      %v4970 = vadd.f32 %v4940, 1.0
      %v4971 = vadd.f32 %v4942, 1.0
      %v4972 = vadd.f32 %v4944, 1.0
      %v4973 = vadd.f32 %v4946, 1.0
      %v4974 = vadd.f32 %v4948, 1.0
      %v4975 = vadd.f32 %v4950, 1.0
      %v4976 = vadd.f32 %v4952, 1.0
      %v4977 = vadd.f32 %v4954, 1.0
      %v4978 = vadd.f32 %v4956, 1.0
      %v4979 = vadd.f32 %v4958, 1.0
      %v4980 = vadd.f32 %v4960, 1.0
      %v4981 = vadd.f32 %v4962, 1.0
      %v4982 = vadd.f32 %v4964, 1.0
      %v4983 = vadd.f32 %v4966, 1.0
      %v4984 = vadd.f32 %v4968, 1.0
      %v4985 = vrcp.pop %v4969
      %v4986 = vmul.f32 %v4969, %v4985
      %v4987 = vsub.f32 1.0, %v4986
      %v4988 = vmul.f32 %v4985, %v4987
      %v4989 = vadd.f32 %v4985, %v4988
      %vm4990 = vweird.f32 %v4969
      %vm4991 = vweird.f32 %v4985
      %vm4992 = vmor %vm4990, %vm4991
      %v4993 = vsel %vm4992, %v4985, %v4989
      %v4994 = vand.u32 2147483647, %v4969
      %vm4995 = vcmp.eq.f32.partialorder %v4994, 8.507059e+37
      %v4996 = vand.u32 %v4969, 2147483648
      %v4997 = vor.u32 1.1754944e-38, %v4996
      %v4998 = vsel %vm4995, %v4997, %v4993
      %v4999 = vmul.f32 1.0, %v4998
      %v5000 = vrcp.pop %v4970
      %v5001 = vmul.f32 %v4970, %v5000
      %v5002 = vsub.f32 1.0, %v5001
      %v5003 = vmul.f32 %v5000, %v5002
      %v5004 = vadd.f32 %v5000, %v5003
      %vm5005 = vweird.f32 %v4970
      %vm5006 = vweird.f32 %v5000
      %vm5007 = vmor %vm5005, %vm5006
      %v5008 = vsel %vm5007, %v5000, %v5004
      %v5009 = vand.u32 2147483647, %v4970
      %vm5010 = vcmp.eq.f32.partialorder %v5009, 8.507059e+37
      %v5011 = vand.u32 %v4970, 2147483648
      %v5012 = vor.u32 1.1754944e-38, %v5011
      %v5013 = vsel %vm5010, %v5012, %v5008
      %v5014 = vmul.f32 1.0, %v5013
      %v5015 = vrcp.pop %v4971
      %v5016 = vmul.f32 %v4971, %v5015
      %v5017 = vsub.f32 1.0, %v5016
      %v5018 = vmul.f32 %v5015, %v5017
      %v5019 = vadd.f32 %v5015, %v5018
      %vm5020 = vweird.f32 %v4971
      %vm5021 = vweird.f32 %v5015
      %vm5022 = vmor %vm5020, %vm5021
      %v5023 = vsel %vm5022, %v5015, %v5019
      %v5024 = vand.u32 2147483647, %v4971
      %vm5025 = vcmp.eq.f32.partialorder %v5024, 8.507059e+37
      %v5026 = vand.u32 %v4971, 2147483648
      %v5027 = vor.u32 1.1754944e-38, %v5026
      %v5028 = vsel %vm5025, %v5027, %v5023
      %v5029 = vmul.f32 1.0, %v5028
      %v5030 = vrcp.pop %v4972
      %v5031 = vmul.f32 %v4972, %v5030
      %v5032 = vsub.f32 1.0, %v5031
      %v5033 = vmul.f32 %v5030, %v5032
      %v5034 = vadd.f32 %v5030, %v5033
      %vm5035 = vweird.f32 %v4972
      %vm5036 = vweird.f32 %v5030
      %vm5037 = vmor %vm5035, %vm5036
      %v5038 = vsel %vm5037, %v5030, %v5034
      %v5039 = vand.u32 2147483647, %v4972
      %vm5040 = vcmp.eq.f32.partialorder %v5039, 8.507059e+37
      %v5041 = vand.u32 %v4972, 2147483648
      %v5042 = vor.u32 1.1754944e-38, %v5041
      %v5043 = vsel %vm5040, %v5042, %v5038
      %v5044 = vmul.f32 1.0, %v5043
      %v5045 = vrcp.pop %v4973
      %v5046 = vmul.f32 %v4973, %v5045
      %v5047 = vsub.f32 1.0, %v5046
      %v5048 = vmul.f32 %v5045, %v5047
      %v5049 = vadd.f32 %v5045, %v5048
      %vm5050 = vweird.f32 %v4973
      %vm5051 = vweird.f32 %v5045
      %vm5052 = vmor %vm5050, %vm5051
      %v5053 = vsel %vm5052, %v5045, %v5049
      %v5054 = vand.u32 2147483647, %v4973
      %vm5055 = vcmp.eq.f32.partialorder %v5054, 8.507059e+37
      %v5056 = vand.u32 %v4973, 2147483648
      %v5057 = vor.u32 1.1754944e-38, %v5056
      %v5058 = vsel %vm5055, %v5057, %v5053
      %v5059 = vmul.f32 1.0, %v5058
      %v5060 = vrcp.pop %v4974
      %v5061 = vmul.f32 %v4974, %v5060
      %v5062 = vsub.f32 1.0, %v5061
      %v5063 = vmul.f32 %v5060, %v5062
      %v5064 = vadd.f32 %v5060, %v5063
      %vm5065 = vweird.f32 %v4974
      %vm5066 = vweird.f32 %v5060
      %vm5067 = vmor %vm5065, %vm5066
      %v5068 = vsel %vm5067, %v5060, %v5064
      %v5069 = vand.u32 2147483647, %v4974
      %vm5070 = vcmp.eq.f32.partialorder %v5069, 8.507059e+37
      %v5071 = vand.u32 %v4974, 2147483648
      %v5072 = vor.u32 1.1754944e-38, %v5071
      %v5073 = vsel %vm5070, %v5072, %v5068
      %v5074 = vmul.f32 1.0, %v5073
      %v5075 = vrcp.pop %v4975
      %v5076 = vmul.f32 %v4975, %v5075
      %v5077 = vsub.f32 1.0, %v5076
      %v5078 = vmul.f32 %v5075, %v5077
      %v5079 = vadd.f32 %v5075, %v5078
      %vm5080 = vweird.f32 %v4975
      %vm5081 = vweird.f32 %v5075
      %vm5082 = vmor %vm5080, %vm5081
      %v5083 = vsel %vm5082, %v5075, %v5079
      %v5084 = vand.u32 2147483647, %v4975
      %vm5085 = vcmp.eq.f32.partialorder %v5084, 8.507059e+37
      %v5086 = vand.u32 %v4975, 2147483648
      %v5087 = vor.u32 1.1754944e-38, %v5086
      %v5088 = vsel %vm5085, %v5087, %v5083
      %v5089 = vmul.f32 1.0, %v5088
      %v5090 = vrcp.pop %v4976
      %v5091 = vmul.f32 %v4976, %v5090
      %v5092 = vsub.f32 1.0, %v5091
      %v5093 = vmul.f32 %v5090, %v5092
      %v5094 = vadd.f32 %v5090, %v5093
      %vm5095 = vweird.f32 %v4976
      %vm5096 = vweird.f32 %v5090
      %vm5097 = vmor %vm5095, %vm5096
      %v5098 = vsel %vm5097, %v5090, %v5094
      %v5099 = vand.u32 2147483647, %v4976
      %vm5100 = vcmp.eq.f32.partialorder %v5099, 8.507059e+37
      %v5101 = vand.u32 %v4976, 2147483648
      %v5102 = vor.u32 1.1754944e-38, %v5101
      %v5103 = vsel %vm5100, %v5102, %v5098
      %v5104 = vmul.f32 1.0, %v5103
      %v5105 = vrcp.pop %v4977
      %v5106 = vmul.f32 %v4977, %v5105
      %v5107 = vsub.f32 1.0, %v5106
      %v5108 = vmul.f32 %v5105, %v5107
      %v5109 = vadd.f32 %v5105, %v5108
      %vm5110 = vweird.f32 %v4977
      %vm5111 = vweird.f32 %v5105
      %vm5112 = vmor %vm5110, %vm5111
      %v5113 = vsel %vm5112, %v5105, %v5109
      %v5114 = vand.u32 2147483647, %v4977
      %vm5115 = vcmp.eq.f32.partialorder %v5114, 8.507059e+37
      %v5116 = vand.u32 %v4977, 2147483648
      %v5117 = vor.u32 1.1754944e-38, %v5116
      %v5118 = vsel %vm5115, %v5117, %v5113
      %v5119 = vmul.f32 1.0, %v5118
      %v5120 = vrcp.pop %v4978
      %v5121 = vmul.f32 %v4978, %v5120
      %v5122 = vsub.f32 1.0, %v5121
      %v5123 = vmul.f32 %v5120, %v5122
      %v5124 = vadd.f32 %v5120, %v5123
      %vm5125 = vweird.f32 %v4978
      %vm5126 = vweird.f32 %v5120
      %vm5127 = vmor %vm5125, %vm5126
      %v5128 = vsel %vm5127, %v5120, %v5124
      %v5129 = vand.u32 2147483647, %v4978
      %vm5130 = vcmp.eq.f32.partialorder %v5129, 8.507059e+37
      %v5131 = vand.u32 %v4978, 2147483648
      %v5132 = vor.u32 1.1754944e-38, %v5131
      %v5133 = vsel %vm5130, %v5132, %v5128
      %v5134 = vmul.f32 1.0, %v5133
      %v5135 = vrcp.pop %v4979
      %v5136 = vmul.f32 %v4979, %v5135
      %v5137 = vsub.f32 1.0, %v5136
      %v5138 = vmul.f32 %v5135, %v5137
      %v5139 = vadd.f32 %v5135, %v5138
      %vm5140 = vweird.f32 %v4979
      %vm5141 = vweird.f32 %v5135
      %vm5142 = vmor %vm5140, %vm5141
      %v5143 = vsel %vm5142, %v5135, %v5139
      %v5144 = vand.u32 2147483647, %v4979
      %vm5145 = vcmp.eq.f32.partialorder %v5144, 8.507059e+37
      %v5146 = vand.u32 %v4979, 2147483648
      %v5147 = vor.u32 1.1754944e-38, %v5146
      %v5148 = vsel %vm5145, %v5147, %v5143
      %v5149 = vmul.f32 1.0, %v5148
      %v5150 = vrcp.pop %v4980
      %v5151 = vmul.f32 %v4980, %v5150
      %v5152 = vsub.f32 1.0, %v5151
      %v5153 = vmul.f32 %v5150, %v5152
      %v5154 = vadd.f32 %v5150, %v5153
      %vm5155 = vweird.f32 %v4980
      %vm5156 = vweird.f32 %v5150
      %vm5157 = vmor %vm5155, %vm5156
      %v5158 = vsel %vm5157, %v5150, %v5154
      %v5159 = vand.u32 2147483647, %v4980
      %vm5160 = vcmp.eq.f32.partialorder %v5159, 8.507059e+37
      %v5161 = vand.u32 %v4980, 2147483648
      %v5162 = vor.u32 1.1754944e-38, %v5161
      %v5163 = vsel %vm5160, %v5162, %v5158
      %v5164 = vmul.f32 1.0, %v5163
      %v5165 = vrcp.pop %v4981
      %v5166 = vmul.f32 %v4981, %v5165
      %v5167 = vsub.f32 1.0, %v5166
      %v5168 = vmul.f32 %v5165, %v5167
      %v5169 = vadd.f32 %v5165, %v5168
      %vm5170 = vweird.f32 %v4981
      %vm5171 = vweird.f32 %v5165
      %vm5172 = vmor %vm5170, %vm5171
      %v5173 = vsel %vm5172, %v5165, %v5169
      %v5174 = vand.u32 2147483647, %v4981
      %vm5175 = vcmp.eq.f32.partialorder %v5174, 8.507059e+37
      %v5176 = vand.u32 %v4981, 2147483648
      %v5177 = vor.u32 1.1754944e-38, %v5176
      %v5178 = vsel %vm5175, %v5177, %v5173
      %v5179 = vmul.f32 1.0, %v5178
      %v5180 = vrcp.pop %v4982
      %v5181 = vmul.f32 %v4982, %v5180
      %v5182 = vsub.f32 1.0, %v5181
      %v5183 = vmul.f32 %v5180, %v5182
      %v5184 = vadd.f32 %v5180, %v5183
      %vm5185 = vweird.f32 %v4982
      %vm5186 = vweird.f32 %v5180
      %vm5187 = vmor %vm5185, %vm5186
      %v5188 = vsel %vm5187, %v5180, %v5184
      %v5189 = vand.u32 2147483647, %v4982
      %vm5190 = vcmp.eq.f32.partialorder %v5189, 8.507059e+37
      %v5191 = vand.u32 %v4982, 2147483648
      %v5192 = vor.u32 1.1754944e-38, %v5191
      %v5193 = vsel %vm5190, %v5192, %v5188
      %v5194 = vmul.f32 1.0, %v5193
      %v5195 = vrcp.pop %v4983
      %v5196 = vmul.f32 %v4983, %v5195
      %v5197 = vsub.f32 1.0, %v5196
      %v5198 = vmul.f32 %v5195, %v5197
      %v5199 = vadd.f32 %v5195, %v5198
      %vm5200 = vweird.f32 %v4983
      %vm5201 = vweird.f32 %v5195
      %vm5202 = vmor %vm5200, %vm5201
      %v5203 = vsel %vm5202, %v5195, %v5199
      %v5204 = vand.u32 2147483647, %v4983
      %vm5205 = vcmp.eq.f32.partialorder %v5204, 8.507059e+37
      %v5206 = vand.u32 %v4983, 2147483648
      %v5207 = vor.u32 1.1754944e-38, %v5206
      %v5208 = vsel %vm5205, %v5207, %v5203
      %v5209 = vmul.f32 1.0, %v5208
      %v5210 = vrcp.pop %v4984
      %v5211 = vmul.f32 %v4984, %v5210
      %v5212 = vsub.f32 1.0, %v5211
      %v5213 = vmul.f32 %v5210, %v5212
      %v5214 = vadd.f32 %v5210, %v5213
      %vm5215 = vweird.f32 %v4984
      %vm5216 = vweird.f32 %v5210
      %vm5217 = vmor %vm5215, %vm5216
      %v5218 = vsel %vm5217, %v5210, %v5214
      %v5219 = vand.u32 2147483647, %v4984
      %vm5220 = vcmp.eq.f32.partialorder %v5219, 8.507059e+37
      %v5221 = vand.u32 %v4984, 2147483648
      %v5222 = vor.u32 1.1754944e-38, %v5221
      %v5223 = vsel %vm5220, %v5222, %v5218
      %v5224 = vmul.f32 1.0, %v5223
      %v5225 = vmul.f32 %v4905, %v4999
      %v5226 = vmul.f32 %v4906, %v5014
      %v5227 = vmul.f32 %v4907, %v5029
      %v5228 = vmul.f32 %v4908, %v5044
      %v5229 = vmul.f32 %v4909, %v5059
      %v5230 = vmul.f32 %v4910, %v5074
      %v5231 = vmul.f32 %v4911, %v5089
      %v5232 = vmul.f32 %v4912, %v5104
      %v5233 = vmul.f32 %v4913, %v5119
      %v5234 = vmul.f32 %v4914, %v5134
      %v5235 = vmul.f32 %v4915, %v5149
      %v5236 = vmul.f32 %v4916, %v5164
      %v5237 = vmul.f32 %v4917, %v5179
      %v5238 = vmul.f32 %v4918, %v5194
      %v5239 = vmul.f32 %v4919, %v5209
      %v5240 = vmul.f32 %v4920, %v5224
      %v5241 = vpack.c.bf16 %v5225, %v5225
      %v5242 = vpack.c.bf16 %v5226, %v5226
      %v5243 = vpack.c.bf16 %v5227, %v5227
      %v5244 = vpack.c.bf16 %v5228, %v5228
      %v5245 = vpack.c.bf16 %v5229, %v5229
      %v5246 = vpack.c.bf16 %v5230, %v5230
      %v5247 = vpack.c.bf16 %v5231, %v5231
      %v5248 = vpack.c.bf16 %v5232, %v5232
      %v5249 = vpack.c.bf16 %v5233, %v5233
      %v5250 = vpack.c.bf16 %v5234, %v5234
      %v5251 = vpack.c.bf16 %v5235, %v5235
      %v5252 = vpack.c.bf16 %v5236, %v5236
      %v5253 = vpack.c.bf16 %v5237, %v5237
      %v5254 = vpack.c.bf16 %v5238, %v5238
      %v5255 = vpack.c.bf16 %v5239, %v5239
      %v5256 = vpack.c.bf16 %v5240, %v5240
      %5257 = vst [vmem:[%s427] sm:$0xf] %v5241
      %5258 = vst [vmem:[%s427 + $0x4] sm:$0xf] %v5242
      %5259 = vst [vmem:[%s427 + $0x8] sm:$0xf] %v5243
      %5260 = vst [vmem:[%s427 + $0xc] sm:$0xf] %v5244
      %5261 = vst [vmem:[%s427 + $0x10] sm:$0xf] %v5245
      %5262 = vst [vmem:[%s427 + $0x14] sm:$0xf] %v5246
      %5263 = vst [vmem:[%s427 + $0x18] sm:$0xf] %v5247
      %5264 = vst [vmem:[%s427 + $0x1c] sm:$0xf] %v5248
      %5265 = vst [vmem:[%s427 + $0x20] sm:$0xf] %v5249
      %5266 = vst [vmem:[%s427 + $0x24] sm:$0xf] %v5250
      %5267 = vst [vmem:[%s427 + $0x28] sm:$0xf] %v5251
      %5268 = vst [vmem:[%s427 + $0x2c] sm:$0xf] %v5252
      %5269 = vst [vmem:[%s427 + $0x30] sm:$0xf] %v5253
      %5270 = vst [vmem:[%s427 + $0x34] sm:$0xf] %v5254
      %5271 = vst [vmem:[%s427 + $0x38] sm:$0xf] %v5255
      %5272 = vst [vmem:[%s427 + $0x3c] sm:$0xf] %v5256
      %s5273 = smul.u32 16, %s21
      %p5274 = scmp.lt.s32.totalorder %s5273, 31
      %s5275 = scalar_select %p5274, %s5273, 31
      %s5276 = smul.addr %s5275, 4
      %s5277 = scalar_lea.vmem %s10, %s5276
      // Predicated region
      $region61: #{segnn_graph_layers_forward.8} parent=59 // pred_check
        %p5278 = pneg %p269
      $region62: #{segnn_graph_layers_forward.8} parent=59 // pred_check_branch
        %5280 = sbr.rel (%p5278) target = $region64
      $region63: #{segnn_graph_layers_forward.8} parent=59 // pred_region
        %s5281 = smul.u32 16, %s21
      $region64: #{segnn_graph_layers_forward.8} parent=59 // pred_fallthru
        _
    $region60: #{segnn_graph_layers_forward.8} parent=5 // pred_fallthru
      _
    %p5282 = scmp.le.s32.totalorder 2, %s16
    // Predicated region
    $region65: #{segnn_graph_layers_forward.8} parent=5 // pred_check
      %p5283 = pneg %p5282
    $region66: #{segnn_graph_layers_forward.8} parent=5 // pred_check_branch
      %5285 = sbr.rel (%p5283) target = $region68
    $region67: #{segnn_graph_layers_forward.8} parent=5 // pred_region
      %s5286 = ssub.s32 %s16, 2
      // Predicated region
      $region69: #{segnn_graph_layers_forward.8} parent=67 // pred_check
        %p5287 = pneg %p275
      $region70: #{segnn_graph_layers_forward.8} parent=67 // pred_check_branch
        %5289 = sbr.rel (%p5287) target = $region72
      $region71: #{segnn_graph_layers_forward.8} parent=67 // pred_region
        %s5290 = smul.u32 16, %s22
        %p5291 = scmp.lt.s32.totalorder %s5290, 31
        %s5292 = scalar_select %p5291, %s5290, 31
        %s5293 = smul.addr %s5292, 4
        %s5294 = scalar_lea.vmem %s10, %s5293
      $region72: #{segnn_graph_layers_forward.8} parent=67 // pred_fallthru
        _
    $region68: #{segnn_graph_layers_forward.8} parent=5 // pred_fallthru
      _
  $region6: #{segnn_graph_layers_forward.8} parent=0 // loop_footer
    %s20 = sadd.s32 1, %s16
  $region7: #{segnn_graph_layers_forward.8} parent=0 // loop_footer_branch
    %15 = sbr.rel target = $region3
  $region8: #{segnn_graph_layers_forward.8} parent=0 // loop_exit
    _

</llo_original>
